<compile_context>
chip_gen: v7x
topology: tpu7x:2x2x1
jax: 0.10.0
libtpu: 0.0.40
codegen_flags: <defaults>
</compile_context>

<pallas_src>
import functools
import math

import jax
import jax.numpy as jnp
from jax.experimental import pallas as pl


NHEAD = 4
ENC_KEYS = ('wqkv', 'bqkv', 'wo', 'bo', 'g1', 'be1', 'w1', 'b1', 'w2', 'b2', 'g2', 'be2')


# ----------------------------------------------------------------------------
# In-kernel helpers
# ----------------------------------------------------------------------------
def _layernorm_padded(x, gamma, beta, d_real, eps=1e-5):
    """LayerNorm over the first d_real lanes of a lane-padded (rows, DP) array.

    Requires the padded lanes of x to be exactly zero (guaranteed by zero-padded
    weights / gamma / beta).  gamma/beta are zero in the padded lanes so the output's
    padded lanes are zero as well.
    """
    dp = x.shape[-1]
    lane = jax.lax.broadcasted_iota(jnp.int32, (1, dp), 1)
    lane_mask = (lane < d_real).astype(jnp.float32)              # (1, DP)
    mu = jnp.sum(x, axis=-1, keepdims=True) * (1.0 / d_real)
    d = (x - mu) * lane_mask
    var = jnp.sum(d * d, axis=-1, keepdims=True) * (1.0 / d_real)
    return (x - mu) * jax.lax.rsqrt(var + eps) * gamma + beta


def _encoder_layer(x, bias, w, *, nhead, d_real):
    """One post-LN PyTorch TransformerEncoderLayer on a lane-padded, batch-flattened x.

    x    : (rows, DP) f32, padded lanes exactly zero
    bias : (rows, rows) f32 additive attention bias (0 valid / -1e30 masked,
           block-diagonal across the flattened batch)
    w    : tuple of 12 weight refs (bf16 matmul weights, f32 biases / LN params)
    """
    (wqkv, bqkv, wo, bo, g1, be1, w1, b1, w2, b2, g2, be2) = w
    dp = x.shape[-1]
    dh = dp // nhead                                             # padded head dim (32)

    xb = x.astype(jnp.bfloat16)
    qkv = jnp.dot(xb, wqkv[...], preferred_element_type=jnp.float32) + bqkv[...]
    q = qkv[:, 0:dp].astype(jnp.bfloat16)                        # scale already folded in
    k = qkv[:, dp:2 * dp].astype(jnp.bfloat16)
    v = qkv[:, 2 * dp:3 * dp].astype(jnp.bfloat16)

    nt_dims = (((1,), (1,)), ((), ()))                           # q @ k^T without transpose
    attn = jnp.zeros_like(x)                                     # f32 (rows, DP)
    for h in range(nhead):                                       # static loop over heads
        sl = slice(h * dh, (h + 1) * dh)
        s = jax.lax.dot_general(q[:, sl], k[:, sl], nt_dims,
                                preferred_element_type=jnp.float32) + bias
        s = s - jnp.max(s, axis=-1, keepdims=True)
        p = jnp.exp(s)
        p = p * pl.reciprocal(jnp.sum(p, axis=-1, keepdims=True), approx=True)
        ctx = jnp.dot(p.astype(jnp.bfloat16), v[:, sl],
                      preferred_element_type=jnp.float32)        # (rows, dh)
        # fold the head concat into per-head row blocks of the output projection
        attn = attn + jnp.dot(ctx.astype(jnp.bfloat16), wo[h * dh:(h + 1) * dh, :],
                              preferred_element_type=jnp.float32)
    attn = attn + bo[...]

    x1 = _layernorm_padded(x + attn, g1[...], be1[...], d_real)

    ff = jnp.dot(x1.astype(jnp.bfloat16), w1[...],
                 preferred_element_type=jnp.float32) + b1[...]
    ff = jnp.maximum(ff, 0.0)
    ff = jnp.dot(ff.astype(jnp.bfloat16), w2[...],
                 preferred_element_type=jnp.float32) + b2[...]

    return _layernorm_padded(x1 + ff, g2[...], be2[...], d_real)


# ----------------------------------------------------------------------------
# Single fused kernel: encoder1 + encoder2 + get_last_visit + id_proj + final
# Linear + sigmoid + BCE-with-logits (mean).
# ----------------------------------------------------------------------------
def rec_forward_kernel(x1_ref, bias1_ref, x2_ref, bias2_ref, mask_ref, mask2_ref,
                       *rest, nhead, d_real):
    enc1 = rest[0:12]
    enc2 = rest[12:24]
    (wid_ref, wfid_ref, wfx_ref, bf_ref, labels_ref,
     logits_ref, yprob_ref, loss_ref) = rest[24:32]

    B, S = mask_ref.shape
    S2 = mask2_ref.shape[1]

    # self.gru(patient_id) and PredJoint.rnns(joint_emb) — batch-flattened
    h1 = _encoder_layer(x1_ref[...], bias1_ref[...], enc1, nhead=nhead, d_real=d_real)
    h2 = _encoder_layer(x2_ref[...], bias2_ref[...], enc2, nhead=nhead, d_real=d_real)

    # get_last_visit via one-hot gather matmul (index clamped to >= 0)
    def last_rows(hf, mask, seq_len):
        n = hf.shape[0]
        idx = jnp.maximum(
            jnp.sum(mask, axis=-1, keepdims=True).astype(jnp.int32) - 1, 0)   # (B,1)
        row_b = jax.lax.broadcasted_iota(jnp.int32, (B, n), 0)
        col = jax.lax.broadcasted_iota(jnp.int32, (B, n), 1)
        onehot = (col == row_b * seq_len + idx).astype(jnp.float32)           # (B, n)
        return jnp.dot(onehot, hf, preferred_element_type=jnp.float32)        # (B, DP)

    last1 = last_rows(h1, mask_ref[...], S)
    last2 = last_rows(h2, mask2_ref[...], S2)

    # id_proj (bias-free Linear 3E -> E)
    id_vec = jnp.dot(last1.astype(jnp.bfloat16), wid_ref[...],
                     preferred_element_type=jnp.float32)                      # (B, E)

    # fina_proj on cat([id, x], -1), split into two dots (avoids the lane concat)
    logits = (jnp.dot(id_vec.astype(jnp.bfloat16), wfid_ref[...],
                      preferred_element_type=jnp.float32)
              + jnp.dot(last2.astype(jnp.bfloat16), wfx_ref[...],
                        preferred_element_type=jnp.float32)
              + bf_ref[...])                                                  # (B, V)

    logits_ref[...] = logits
    yprob_ref[...] = jax.nn.sigmoid(logits)

    # numerically stable binary_cross_entropy_with_logits, mean reduction
    y = labels_ref[...]
    loss_el = jnp.maximum(logits, 0.0) - logits * y + jnp.log1p(jnp.exp(-jnp.abs(logits)))
    loss_ref[...] = jnp.reshape(jnp.mean(loss_el), (1, 1))


# ----------------------------------------------------------------------------
# Wrapper: mask preprocessing, lane padding, CLZ token, single pallas_call.
# ----------------------------------------------------------------------------
def _attn_bias(mask_f):
    """(B,S) validity mask -> (B*S, B*S) additive bias for batch-flattened attention.

    0 where the key is in the same batch element and valid, -1e30 otherwise.
    """
    B, S = mask_f.shape
    bid = jnp.repeat(jnp.arange(B, dtype=jnp.int32), S)          # (B*S,)
    kvalid = mask_f.reshape(-1) > 0.5
    ok = (bid[:, None] == bid[None, :]) & kvalid[None, :]
    return jnp.where(ok, 0.0, -1e30).astype(jnp.float32)


@jax.jit
def rec_layer_forward(patient_id, cond_emb, proc_emb, drug_emb, labels, mask_bool, params):
    B, S, D = patient_id.shape                  # D = real d_model (96)
    DP = params['gru']['wqkv'].shape[0]         # padded d_model (128)
    mask_f = mask_bool.astype(jnp.float32)

    # encoder-1 input: lane-pad and flatten batch
    x1 = jnp.pad(patient_id, ((0, 0), (0, 0), (0, DP - D))).reshape(B * S, DP)
    bias1 = _attn_bias(mask_f)

    # joint_emb = cat(features); PredJoint prepends CLZ token and CLZ mask
    joint = jnp.concatenate([cond_emb, proc_emb, drug_emb], axis=-1)          # (B,S,D)
    joint = jnp.pad(joint, ((0, 0), (0, 0), (0, DP - D)))
    clz = jnp.broadcast_to(params['clz'][None, :, :], (B, 1, DP))
    joint = jnp.concatenate([clz, joint], axis=1)                             # (B,S+1,DP)
    mask2_f = jnp.concatenate([jnp.ones((B, 1), jnp.float32), mask_f], axis=1)
    x2 = joint.reshape(B * (S + 1), DP)
    bias2 = _attn_bias(mask2_f)

    enc1 = tuple(params['gru'][k] for k in ENC_KEYS)
    enc2 = tuple(params['pj'][k] for k in ENC_KEYS)

    V = params['bf'].shape[1]
    out_shapes = (jax.ShapeDtypeStruct((B, V), jnp.float32),    # logits
                  jax.ShapeDtypeStruct((B, V), jnp.float32),    # y_prob
                  jax.ShapeDtypeStruct((1, 1), jnp.float32))    # loss

    logits, y_prob, loss = pl.pallas_call(
        functools.partial(rec_forward_kernel, nhead=NHEAD, d_real=D),
        out_shape=out_shapes,
    )(x1, bias1, x2, bias2, mask_f, mask2_f, *enc1, *enc2,
      params['wid'], params['wf_id'], params['wf_x'], params['bf'], labels)

    return loss[0, 0], y_prob


# ----------------------------------------------------------------------------
# Parameter init (module shapes) + padding / bf16 prep for the kernel
# ----------------------------------------------------------------------------
def _dense(key, shape, scale=0.02):
    return scale * jax.random.normal(key, shape, dtype=jnp.float32)


def init_encoder_params(key, d_model, dff):
    """Unpadded f32 params of one PyTorch TransformerEncoderLayer (pre-transposed)."""
    ks = jax.random.split(key, 8)
    return dict(
        wqkv_t=_dense(ks[0], (d_model, 3 * d_model)),   # in_proj_weight.T
        bqkv=_dense(ks[1], (1, 3 * d_model)),
        wo_t=_dense(ks[2], (d_model, d_model)),         # out_proj.weight.T
        bo=_dense(ks[3], (1, d_model)),
        g1=jnp.ones((1, d_model), jnp.float32),
        be1=jnp.zeros((1, d_model), jnp.float32),
        w1_t=_dense(ks[4], (d_model, dff)),             # linear1.weight.T
        b1=_dense(ks[5], (1, dff)),
        w2_t=_dense(ks[6], (dff, d_model)),             # linear2.weight.T
        b2=_dense(ks[7], (1, d_model)),
        g2=jnp.ones((1, d_model), jnp.float32),
        be2=jnp.zeros((1, d_model), jnp.float32),
    )


def pad_encoder_params(p, *, d_real, dp, nhead):
    """Repack per head (dh 24->32), lane-pad to dp, fold 1/sqrt(24) into Q, cast bf16."""
    dh = d_real // nhead
    dhp = dp // nhead
    scale = 1.0 / math.sqrt(dh)                         # PyTorch uses the REAL head dim

    wqkv = p['wqkv_t']                                  # (d, 3d), cols = [Q | K | V]
    bqkv = p['bqkv'][0]
    wqkv_p = jnp.zeros((dp, 3 * dp), jnp.float32)
    bqkv_p = jnp.zeros((3 * dp,), jnp.float32)
    for part in range(3):                               # 0=Q (scale folded), 1=K, 2=V
        fac = scale if part == 0 else 1.0
        for h in range(nhead):
            src = part * d_real + h * dh
            dst = part * dp + h * dhp
            wqkv_p = wqkv_p.at[:d_real, dst:dst + dh].set(wqkv[:, src:src + dh] * fac)
            bqkv_p = bqkv_p.at[dst:dst + dh].set(bqkv[src:src + dh] * fac)

    wo = p['wo_t']                                      # rows = concatenated head outputs
    wo_p = jnp.zeros((dp, dp), jnp.float32)
    for h in range(nhead):
        wo_p = wo_p.at[h * dhp:h * dhp + dh, :d_real].set(wo[h * dh:(h + 1) * dh, :])

    pad_rows = lambda w: jnp.pad(w, ((0, dp - d_real), (0, 0)))
    pad_cols = lambda w: jnp.pad(w, ((0, 0), (0, dp - d_real)))

    return dict(
        wqkv=wqkv_p.astype(jnp.bfloat16),
        bqkv=bqkv_p.reshape(1, 3 * dp),
        wo=wo_p.astype(jnp.bfloat16),
        bo=pad_cols(p['bo']),
        g1=pad_cols(p['g1']),        # padded gamma/beta lanes are 0 -> padded lanes stay 0
        be1=pad_cols(p['be1']),
        w1=pad_rows(p['w1_t']).astype(jnp.bfloat16),
        b1=p['b1'],
        w2=pad_cols(p['w2_t']).astype(jnp.bfloat16),
        b2=pad_cols(p['b2']),
        g2=pad_cols(p['g2']),
        be2=pad_cols(p['be2']),
    )


def prepare_params(raw, *, d_real, dp, nhead, emb):
    wf = raw['wf_t']                                    # ((F+1)*E, V): first E rows = id
    return dict(
        gru=pad_encoder_params(raw['gru'], d_real=d_real, dp=dp, nhead=nhead),
        pj=pad_encoder_params(raw['pj'], d_real=d_real, dp=dp, nhead=nhead),
        clz=jnp.pad(raw['clz_token'], ((0, 0), (0, dp - d_real))),
        wid=jnp.pad(raw['wid_t'], ((0, dp - d_real), (0, 0))).astype(jnp.bfloat16),
        wf_id=wf[:emb, :].astype(jnp.bfloat16),
        wf_x=jnp.pad(wf[emb:, :], ((0, dp - d_real), (0, 0))).astype(jnp.bfloat16),
        bf=raw['bf'],
    )


# ----------------------------------------------------------------------------
if __name__ == "__main__":
    # feature_num=3 (required by d_model = 3*embedding_dim in self.gru), embedding_dim=32
    B, S, E, F, V = 2, 8, 32, 3, 256
    D = F * E               # real d_model of both encoders = 96
    DP = 128                # lane-padded d_model
    DFF = 2048              # PyTorch TransformerEncoderLayer default dim_feedforward

    key = jax.random.PRNGKey(0)
    keys = jax.random.split(key, 12)

    raw_params = dict(
        gru=init_encoder_params(keys[0], D, DFF),       # RecLayer.gru
        pj=init_encoder_params(keys[1], D, DFF),        # PredJoint.rnns
        clz_token=_dense(keys[2], (1, D)),              # PredJoint.clz_token
        wid_t=_dense(keys[3], (D, E)),                  # id_proj Linear(3E->E, bias=False).T
        wf_t=_dense(keys[4], ((F + 1) * E, V)),         # fina_proj Linear(4E->V).T
        bf=_dense(keys[10], (1, V)),                    # fina_proj bias
    )
    params = prepare_params(raw_params, d_real=D, dp=DP, nhead=NHEAD, emb=E)

    patient_id = jax.random.normal(keys[5], (B, S, D), dtype=jnp.float32)
    cond_emb = jax.random.normal(keys[6], (B, S, E), dtype=jnp.float32)
    proc_emb = jax.random.normal(keys[7], (B, S, E), dtype=jnp.float32)
    drug_emb = jax.random.normal(keys[8], (B, S, E), dtype=jnp.float32)
    labels = (jax.random.uniform(keys[9], (B, V)) < 0.1).astype(jnp.float32)

    lengths = jnp.array([8, 5], dtype=jnp.int32)        # per-patient valid visit counts
    mask = jnp.arange(S)[None, :] < lengths[:, None]    # bool (B, S), True = valid

    loss, y_prob = rec_layer_forward(patient_id, cond_emb, proc_emb, drug_emb,
                                     labels, mask, params)
    jax.block_until_ready((loss, y_prob))
    assert y_prob.shape == (B, V)
    assert bool(jnp.isfinite(loss))
    print("KERNEL_OK")
</pallas_src>

<mosaic_0001>
module attributes {stable_mosaic.version = 11 : i64} {
  func.func @rec_forward_kernel(%arg0: memref<16x128xf32, #tpu.memory_space<vmem>>, %arg1: memref<16x16xf32, #tpu.memory_space<vmem>>, %arg2: memref<18x128xf32, #tpu.memory_space<vmem>>, %arg3: memref<18x18xf32, #tpu.memory_space<vmem>>, %arg4: memref<2x8xf32, #tpu.memory_space<vmem>>, %arg5: memref<2x9xf32, #tpu.memory_space<vmem>>, %arg6: memref<128x384xbf16, #tpu.memory_space<vmem>>, %arg7: memref<1x384xf32, #tpu.memory_space<vmem>>, %arg8: memref<128x128xbf16, #tpu.memory_space<vmem>>, %arg9: memref<1x128xf32, #tpu.memory_space<vmem>>, %arg10: memref<1x128xf32, #tpu.memory_space<vmem>>, %arg11: memref<1x128xf32, #tpu.memory_space<vmem>>, %arg12: memref<128x2048xbf16, #tpu.memory_space<vmem>>, %arg13: memref<1x2048xf32, #tpu.memory_space<vmem>>, %arg14: memref<2048x128xbf16, #tpu.memory_space<vmem>>, %arg15: memref<1x128xf32, #tpu.memory_space<vmem>>, %arg16: memref<1x128xf32, #tpu.memory_space<vmem>>, %arg17: memref<1x128xf32, #tpu.memory_space<vmem>>, %arg18: memref<128x384xbf16, #tpu.memory_space<vmem>>, %arg19: memref<1x384xf32, #tpu.memory_space<vmem>>, %arg20: memref<128x128xbf16, #tpu.memory_space<vmem>>, %arg21: memref<1x128xf32, #tpu.memory_space<vmem>>, %arg22: memref<1x128xf32, #tpu.memory_space<vmem>>, %arg23: memref<1x128xf32, #tpu.memory_space<vmem>>, %arg24: memref<128x2048xbf16, #tpu.memory_space<vmem>>, %arg25: memref<1x2048xf32, #tpu.memory_space<vmem>>, %arg26: memref<2048x128xbf16, #tpu.memory_space<vmem>>, %arg27: memref<1x128xf32, #tpu.memory_space<vmem>>, %arg28: memref<1x128xf32, #tpu.memory_space<vmem>>, %arg29: memref<1x128xf32, #tpu.memory_space<vmem>>, %arg30: memref<128x32xbf16, #tpu.memory_space<vmem>>, %arg31: memref<32x256xbf16, #tpu.memory_space<vmem>>, %arg32: memref<128x256xbf16, #tpu.memory_space<vmem>>, %arg33: memref<1x256xf32, #tpu.memory_space<vmem>>, %arg34: memref<2x256xf32, #tpu.memory_space<vmem>>, %arg35: memref<2x256xf32, #tpu.memory_space<vmem>>, %arg36: memref<2x256xf32, #tpu.memory_space<vmem>>, %arg37: memref<1x1xf32, #tpu.memory_space<vmem>>) attributes {dimension_semantics = [], scalar_prefetch = 0 : i64, scratch_operands = 0 : i64, tpu.core_type = #tpu.core_type<tc>} {
    %c0 = arith.constant 0 : index
    %c0_0 = arith.constant 0 : index
    %0 = vector.load %arg0[%c0, %c0_0] : memref<16x128xf32, #tpu.memory_space<vmem>>, vector<16x128xf32>
    %c0_1 = arith.constant 0 : index
    %c0_2 = arith.constant 0 : index
    %1 = vector.load %arg1[%c0_1, %c0_2] : memref<16x16xf32, #tpu.memory_space<vmem>>, vector<16x16xf32>
    %2 = arith.truncf %0 : vector<16x128xf32> to vector<16x128xbf16>
    %c0_3 = arith.constant 0 : index
    %c0_4 = arith.constant 0 : index
    %3 = vector.load %arg6[%c0_3, %c0_4] : memref<128x384xbf16, #tpu.memory_space<vmem>>, vector<128x384xbf16>
    %cst = arith.constant dense<0.000000e+00> : vector<16x384xf32>
    %4 = tpu.matmul %2, %3, %cst {dimension_numbers = #tpu.dot_dimension_numbers<[1], [0], [0], [1], [0, 0, 1, 1], [], []>} : vector<16x128xbf16>, vector<128x384xbf16>, vector<16x384xf32> -> vector<16x384xf32>
    %c0_5 = arith.constant 0 : index
    %c0_6 = arith.constant 0 : index
    %5 = vector.load %arg7[%c0_5, %c0_6] : memref<1x384xf32, #tpu.memory_space<vmem>>, vector<1x384xf32>
    %6 = vector.broadcast %5 : vector<1x384xf32> to vector<16x384xf32>
    %7 = arith.addf %4, %6 : vector<16x384xf32>
    %8 = vector.extract_strided_slice %7 {offsets = [0, 0], sizes = [16, 128], strides = [1, 1]} : vector<16x384xf32> to vector<16x128xf32>
    %9 = arith.truncf %8 : vector<16x128xf32> to vector<16x128xbf16>
    %10 = vector.extract_strided_slice %7 {offsets = [0, 128], sizes = [16, 128], strides = [1, 1]} : vector<16x384xf32> to vector<16x128xf32>
    %11 = arith.truncf %10 : vector<16x128xf32> to vector<16x128xbf16>
    %12 = vector.extract_strided_slice %7 {offsets = [0, 256], sizes = [16, 128], strides = [1, 1]} : vector<16x384xf32> to vector<16x128xf32>
    %13 = arith.truncf %12 : vector<16x128xf32> to vector<16x128xbf16>
    %cst_7 = arith.constant 0.000000e+00 : f32
    %14 = vector.broadcast %cst_7 : f32 to vector<16x128xf32>
    %15 = vector.extract_strided_slice %9 {offsets = [0, 0], sizes = [16, 32], strides = [1, 1]} : vector<16x128xbf16> to vector<16x32xbf16>
    %16 = vector.extract_strided_slice %11 {offsets = [0, 0], sizes = [16, 32], strides = [1, 1]} : vector<16x128xbf16> to vector<16x32xbf16>
    %cst_8 = arith.constant dense<0.000000e+00> : vector<16x16xf32>
    %17 = tpu.matmul %15, %16, %cst_8 {dimension_numbers = #tpu.dot_dimension_numbers<[1], [1], [0], [0], [0, 0, 1, 0], [], []>} : vector<16x32xbf16>, vector<16x32xbf16>, vector<16x16xf32> -> vector<16x16xf32>
    %18 = arith.addf %17, %1 : vector<16x16xf32>
    %cst_9 = arith.constant dense<0xFF800000> : vector<16xf32>
    %19 = vector.multi_reduction <maximumf>, %18, %cst_9 [1] : vector<16x16xf32> to vector<16xf32>
    %20 = vector.shape_cast %19 : vector<16xf32> to vector<16x1xf32>
    %21 = vector.broadcast %20 : vector<16x1xf32> to vector<16x16xf32>
    %22 = arith.subf %18, %21 : vector<16x16xf32>
    %23 = math.exp %22 : vector<16x16xf32>
    %cst_10 = arith.constant dense<0.000000e+00> : vector<16xf32>
    %24 = vector.multi_reduction <add>, %23, %cst_10 [1] : vector<16x16xf32> to vector<16xf32>
    %25 = vector.shape_cast %24 : vector<16xf32> to vector<16x1xf32>
    %26 = tpu.reciprocal %25 {approx = true} : vector<16x1xf32> -> vector<16x1xf32>
    %27 = vector.broadcast %26 : vector<16x1xf32> to vector<16x16xf32>
    %28 = arith.mulf %23, %27 : vector<16x16xf32>
    %29 = arith.truncf %28 : vector<16x16xf32> to vector<16x16xbf16>
    %30 = vector.extract_strided_slice %13 {offsets = [0, 0], sizes = [16, 32], strides = [1, 1]} : vector<16x128xbf16> to vector<16x32xbf16>
    %cst_11 = arith.constant dense<0.000000e+00> : vector<16x32xf32>
    %31 = tpu.matmul %29, %30, %cst_11 {dimension_numbers = #tpu.dot_dimension_numbers<[1], [0], [0], [1], [0, 0, 1, 1], [], []>} : vector<16x16xbf16>, vector<16x32xbf16>, vector<16x32xf32> -> vector<16x32xf32>
    %32 = arith.truncf %31 : vector<16x32xf32> to vector<16x32xbf16>
    %c0_12 = arith.constant 0 : index
    %c0_13 = arith.constant 0 : index
    %33 = vector.load %arg8[%c0_12, %c0_13] : memref<128x128xbf16, #tpu.memory_space<vmem>>, vector<32x128xbf16>
    %cst_14 = arith.constant dense<0.000000e+00> : vector<16x128xf32>
    %34 = tpu.matmul %32, %33, %cst_14 {dimension_numbers = #tpu.dot_dimension_numbers<[1], [0], [0], [1], [0, 0, 1, 1], [], []>} : vector<16x32xbf16>, vector<32x128xbf16>, vector<16x128xf32> -> vector<16x128xf32>
    %35 = arith.addf %14, %34 : vector<16x128xf32>
    %36 = vector.extract_strided_slice %9 {offsets = [0, 32], sizes = [16, 32], strides = [1, 1]} : vector<16x128xbf16> to vector<16x32xbf16>
    %37 = vector.extract_strided_slice %11 {offsets = [0, 32], sizes = [16, 32], strides = [1, 1]} : vector<16x128xbf16> to vector<16x32xbf16>
    %cst_15 = arith.constant dense<0.000000e+00> : vector<16x16xf32>
    %38 = tpu.matmul %36, %37, %cst_15 {dimension_numbers = #tpu.dot_dimension_numbers<[1], [1], [0], [0], [0, 0, 1, 0], [], []>} : vector<16x32xbf16>, vector<16x32xbf16>, vector<16x16xf32> -> vector<16x16xf32>
    %39 = arith.addf %38, %1 : vector<16x16xf32>
    %cst_16 = arith.constant dense<0xFF800000> : vector<16xf32>
    %40 = vector.multi_reduction <maximumf>, %39, %cst_16 [1] : vector<16x16xf32> to vector<16xf32>
    %41 = vector.shape_cast %40 : vector<16xf32> to vector<16x1xf32>
    %42 = vector.broadcast %41 : vector<16x1xf32> to vector<16x16xf32>
    %43 = arith.subf %39, %42 : vector<16x16xf32>
    %44 = math.exp %43 : vector<16x16xf32>
    %cst_17 = arith.constant dense<0.000000e+00> : vector<16xf32>
    %45 = vector.multi_reduction <add>, %44, %cst_17 [1] : vector<16x16xf32> to vector<16xf32>
    %46 = vector.shape_cast %45 : vector<16xf32> to vector<16x1xf32>
    %47 = tpu.reciprocal %46 {approx = true} : vector<16x1xf32> -> vector<16x1xf32>
    %48 = vector.broadcast %47 : vector<16x1xf32> to vector<16x16xf32>
    %49 = arith.mulf %44, %48 : vector<16x16xf32>
    %50 = arith.truncf %49 : vector<16x16xf32> to vector<16x16xbf16>
    %51 = vector.extract_strided_slice %13 {offsets = [0, 32], sizes = [16, 32], strides = [1, 1]} : vector<16x128xbf16> to vector<16x32xbf16>
    %cst_18 = arith.constant dense<0.000000e+00> : vector<16x32xf32>
    %52 = tpu.matmul %50, %51, %cst_18 {dimension_numbers = #tpu.dot_dimension_numbers<[1], [0], [0], [1], [0, 0, 1, 1], [], []>} : vector<16x16xbf16>, vector<16x32xbf16>, vector<16x32xf32> -> vector<16x32xf32>
    %53 = arith.truncf %52 : vector<16x32xf32> to vector<16x32xbf16>
    %c32 = arith.constant 32 : index
    %c0_19 = arith.constant 0 : index
    %54 = vector.load %arg8[%c32, %c0_19] : memref<128x128xbf16, #tpu.memory_space<vmem>>, vector<32x128xbf16>
    %cst_20 = arith.constant dense<0.000000e+00> : vector<16x128xf32>
    %55 = tpu.matmul %53, %54, %cst_20 {dimension_numbers = #tpu.dot_dimension_numbers<[1], [0], [0], [1], [0, 0, 1, 1], [], []>} : vector<16x32xbf16>, vector<32x128xbf16>, vector<16x128xf32> -> vector<16x128xf32>
    %56 = arith.addf %35, %55 : vector<16x128xf32>
    %57 = vector.extract_strided_slice %9 {offsets = [0, 64], sizes = [16, 32], strides = [1, 1]} : vector<16x128xbf16> to vector<16x32xbf16>
    %58 = vector.extract_strided_slice %11 {offsets = [0, 64], sizes = [16, 32], strides = [1, 1]} : vector<16x128xbf16> to vector<16x32xbf16>
    %cst_21 = arith.constant dense<0.000000e+00> : vector<16x16xf32>
    %59 = tpu.matmul %57, %58, %cst_21 {dimension_numbers = #tpu.dot_dimension_numbers<[1], [1], [0], [0], [0, 0, 1, 0], [], []>} : vector<16x32xbf16>, vector<16x32xbf16>, vector<16x16xf32> -> vector<16x16xf32>
    %60 = arith.addf %59, %1 : vector<16x16xf32>
    %cst_22 = arith.constant dense<0xFF800000> : vector<16xf32>
    %61 = vector.multi_reduction <maximumf>, %60, %cst_22 [1] : vector<16x16xf32> to vector<16xf32>
    %62 = vector.shape_cast %61 : vector<16xf32> to vector<16x1xf32>
    %63 = vector.broadcast %62 : vector<16x1xf32> to vector<16x16xf32>
    %64 = arith.subf %60, %63 : vector<16x16xf32>
    %65 = math.exp %64 : vector<16x16xf32>
    %cst_23 = arith.constant dense<0.000000e+00> : vector<16xf32>
    %66 = vector.multi_reduction <add>, %65, %cst_23 [1] : vector<16x16xf32> to vector<16xf32>
    %67 = vector.shape_cast %66 : vector<16xf32> to vector<16x1xf32>
    %68 = tpu.reciprocal %67 {approx = true} : vector<16x1xf32> -> vector<16x1xf32>
    %69 = vector.broadcast %68 : vector<16x1xf32> to vector<16x16xf32>
    %70 = arith.mulf %65, %69 : vector<16x16xf32>
    %71 = arith.truncf %70 : vector<16x16xf32> to vector<16x16xbf16>
    %72 = vector.extract_strided_slice %13 {offsets = [0, 64], sizes = [16, 32], strides = [1, 1]} : vector<16x128xbf16> to vector<16x32xbf16>
    %cst_24 = arith.constant dense<0.000000e+00> : vector<16x32xf32>
    %73 = tpu.matmul %71, %72, %cst_24 {dimension_numbers = #tpu.dot_dimension_numbers<[1], [0], [0], [1], [0, 0, 1, 1], [], []>} : vector<16x16xbf16>, vector<16x32xbf16>, vector<16x32xf32> -> vector<16x32xf32>
    %74 = arith.truncf %73 : vector<16x32xf32> to vector<16x32xbf16>
    %c64 = arith.constant 64 : index
    %c0_25 = arith.constant 0 : index
    %75 = vector.load %arg8[%c64, %c0_25] : memref<128x128xbf16, #tpu.memory_space<vmem>>, vector<32x128xbf16>
    %cst_26 = arith.constant dense<0.000000e+00> : vector<16x128xf32>
    %76 = tpu.matmul %74, %75, %cst_26 {dimension_numbers = #tpu.dot_dimension_numbers<[1], [0], [0], [1], [0, 0, 1, 1], [], []>} : vector<16x32xbf16>, vector<32x128xbf16>, vector<16x128xf32> -> vector<16x128xf32>
    %77 = arith.addf %56, %76 : vector<16x128xf32>
    %78 = vector.extract_strided_slice %9 {offsets = [0, 96], sizes = [16, 32], strides = [1, 1]} : vector<16x128xbf16> to vector<16x32xbf16>
    %79 = vector.extract_strided_slice %11 {offsets = [0, 96], sizes = [16, 32], strides = [1, 1]} : vector<16x128xbf16> to vector<16x32xbf16>
    %cst_27 = arith.constant dense<0.000000e+00> : vector<16x16xf32>
    %80 = tpu.matmul %78, %79, %cst_27 {dimension_numbers = #tpu.dot_dimension_numbers<[1], [1], [0], [0], [0, 0, 1, 0], [], []>} : vector<16x32xbf16>, vector<16x32xbf16>, vector<16x16xf32> -> vector<16x16xf32>
    %81 = arith.addf %80, %1 : vector<16x16xf32>
    %cst_28 = arith.constant dense<0xFF800000> : vector<16xf32>
    %82 = vector.multi_reduction <maximumf>, %81, %cst_28 [1] : vector<16x16xf32> to vector<16xf32>
    %83 = vector.shape_cast %82 : vector<16xf32> to vector<16x1xf32>
    %84 = vector.broadcast %83 : vector<16x1xf32> to vector<16x16xf32>
    %85 = arith.subf %81, %84 : vector<16x16xf32>
    %86 = math.exp %85 : vector<16x16xf32>
    %cst_29 = arith.constant dense<0.000000e+00> : vector<16xf32>
    %87 = vector.multi_reduction <add>, %86, %cst_29 [1] : vector<16x16xf32> to vector<16xf32>
    %88 = vector.shape_cast %87 : vector<16xf32> to vector<16x1xf32>
    %89 = tpu.reciprocal %88 {approx = true} : vector<16x1xf32> -> vector<16x1xf32>
    %90 = vector.broadcast %89 : vector<16x1xf32> to vector<16x16xf32>
    %91 = arith.mulf %86, %90 : vector<16x16xf32>
    %92 = arith.truncf %91 : vector<16x16xf32> to vector<16x16xbf16>
    %93 = vector.extract_strided_slice %13 {offsets = [0, 96], sizes = [16, 32], strides = [1, 1]} : vector<16x128xbf16> to vector<16x32xbf16>
    %cst_30 = arith.constant dense<0.000000e+00> : vector<16x32xf32>
    %94 = tpu.matmul %92, %93, %cst_30 {dimension_numbers = #tpu.dot_dimension_numbers<[1], [0], [0], [1], [0, 0, 1, 1], [], []>} : vector<16x16xbf16>, vector<16x32xbf16>, vector<16x32xf32> -> vector<16x32xf32>
    %95 = arith.truncf %94 : vector<16x32xf32> to vector<16x32xbf16>
    %c96 = arith.constant 96 : index
    %c0_31 = arith.constant 0 : index
    %96 = vector.load %arg8[%c96, %c0_31] : memref<128x128xbf16, #tpu.memory_space<vmem>>, vector<32x128xbf16>
    %cst_32 = arith.constant dense<0.000000e+00> : vector<16x128xf32>
    %97 = tpu.matmul %95, %96, %cst_32 {dimension_numbers = #tpu.dot_dimension_numbers<[1], [0], [0], [1], [0, 0, 1, 1], [], []>} : vector<16x32xbf16>, vector<32x128xbf16>, vector<16x128xf32> -> vector<16x128xf32>
    %98 = arith.addf %77, %97 : vector<16x128xf32>
    %c0_33 = arith.constant 0 : index
    %c0_34 = arith.constant 0 : index
    %99 = vector.load %arg9[%c0_33, %c0_34] : memref<1x128xf32, #tpu.memory_space<vmem>>, vector<1x128xf32>
    %100 = vector.broadcast %99 : vector<1x128xf32> to vector<16x128xf32>
    %101 = arith.addf %98, %100 : vector<16x128xf32>
    %102 = arith.addf %0, %101 : vector<16x128xf32>
    %c0_35 = arith.constant 0 : index
    %c0_36 = arith.constant 0 : index
    %103 = vector.load %arg10[%c0_35, %c0_36] : memref<1x128xf32, #tpu.memory_space<vmem>>, vector<1x128xf32>
    %c0_37 = arith.constant 0 : index
    %c0_38 = arith.constant 0 : index
    %104 = vector.load %arg11[%c0_37, %c0_38] : memref<1x128xf32, #tpu.memory_space<vmem>>, vector<1x128xf32>
    %105 = tpu.iota {dimensions = array<i32: 1>} : vector<1x128xi32>
    %c96_i32 = arith.constant 96 : i32
    %106 = vector.broadcast %c96_i32 : i32 to vector<1x128xi32>
    %107 = arith.cmpi slt, %105, %106 : vector<1x128xi32>
    %108 = arith.extui %107 : vector<1x128xi1> to vector<1x128xi32>
    %109 = arith.sitofp %108 : vector<1x128xi32> to vector<1x128xf32>
    %cst_39 = arith.constant dense<0.000000e+00> : vector<16xf32>
    %110 = vector.multi_reduction <add>, %102, %cst_39 [1] : vector<16x128xf32> to vector<16xf32>
    %111 = vector.shape_cast %110 : vector<16xf32> to vector<16x1xf32>
    %cst_40 = arith.constant 0.010416667 : f32
    %112 = vector.broadcast %cst_40 : f32 to vector<16x1xf32>
    %113 = arith.mulf %111, %112 : vector<16x1xf32>
    %114 = vector.broadcast %113 : vector<16x1xf32> to vector<16x128xf32>
    %115 = arith.subf %102, %114 : vector<16x128xf32>
    %116 = vector.broadcast %109 : vector<1x128xf32> to vector<16x128xf32>
    %117 = arith.mulf %115, %116 : vector<16x128xf32>
    %118 = arith.mulf %117, %117 : vector<16x128xf32>
    %cst_41 = arith.constant dense<0.000000e+00> : vector<16xf32>
    %119 = vector.multi_reduction <add>, %118, %cst_41 [1] : vector<16x128xf32> to vector<16xf32>
    %120 = vector.shape_cast %119 : vector<16xf32> to vector<16x1xf32>
    %cst_42 = arith.constant 0.010416667 : f32
    %121 = vector.broadcast %cst_42 : f32 to vector<16x1xf32>
    %122 = arith.mulf %120, %121 : vector<16x1xf32>
    %123 = vector.broadcast %113 : vector<16x1xf32> to vector<16x128xf32>
    %124 = arith.subf %102, %123 : vector<16x128xf32>
    %cst_43 = arith.constant 9.99999974E-6 : f32
    %125 = vector.broadcast %cst_43 : f32 to vector<16x1xf32>
    %126 = arith.addf %122, %125 : vector<16x1xf32>
    %127 = math.rsqrt %126 : vector<16x1xf32>
    %128 = vector.broadcast %127 : vector<16x1xf32> to vector<16x128xf32>
    %129 = arith.mulf %124, %128 : vector<16x128xf32>
    %130 = vector.broadcast %103 : vector<1x128xf32> to vector<16x128xf32>
    %131 = arith.mulf %129, %130 : vector<16x128xf32>
    %132 = vector.broadcast %104 : vector<1x128xf32> to vector<16x128xf32>
    %133 = arith.addf %131, %132 : vector<16x128xf32>
    %134 = arith.truncf %133 : vector<16x128xf32> to vector<16x128xbf16>
    %c0_44 = arith.constant 0 : index
    %c0_45 = arith.constant 0 : index
    %135 = vector.load %arg12[%c0_44, %c0_45] : memref<128x2048xbf16, #tpu.memory_space<vmem>>, vector<128x2048xbf16>
    %cst_46 = arith.constant dense<0.000000e+00> : vector<16x2048xf32>
    %136 = tpu.matmul %134, %135, %cst_46 {dimension_numbers = #tpu.dot_dimension_numbers<[1], [0], [0], [1], [0, 0, 1, 1], [], []>} : vector<16x128xbf16>, vector<128x2048xbf16>, vector<16x2048xf32> -> vector<16x2048xf32>
    %c0_47 = arith.constant 0 : index
    %c0_48 = arith.constant 0 : index
    %137 = vector.load %arg13[%c0_47, %c0_48] : memref<1x2048xf32, #tpu.memory_space<vmem>>, vector<1x2048xf32>
    %138 = vector.broadcast %137 : vector<1x2048xf32> to vector<16x2048xf32>
    %139 = arith.addf %136, %138 : vector<16x2048xf32>
    %cst_49 = arith.constant 0.000000e+00 : f32
    %140 = vector.broadcast %cst_49 : f32 to vector<16x2048xf32>
    %141 = arith.maximumf %139, %140 : vector<16x2048xf32>
    %142 = arith.truncf %141 : vector<16x2048xf32> to vector<16x2048xbf16>
    %c0_50 = arith.constant 0 : index
    %c0_51 = arith.constant 0 : index
    %143 = vector.load %arg14[%c0_50, %c0_51] : memref<2048x128xbf16, #tpu.memory_space<vmem>>, vector<2048x128xbf16>
    %cst_52 = arith.constant dense<0.000000e+00> : vector<16x128xf32>
    %144 = tpu.matmul %142, %143, %cst_52 {dimension_numbers = #tpu.dot_dimension_numbers<[1], [0], [0], [1], [0, 0, 1, 1], [], []>} : vector<16x2048xbf16>, vector<2048x128xbf16>, vector<16x128xf32> -> vector<16x128xf32>
    %c0_53 = arith.constant 0 : index
    %c0_54 = arith.constant 0 : index
    %145 = vector.load %arg15[%c0_53, %c0_54] : memref<1x128xf32, #tpu.memory_space<vmem>>, vector<1x128xf32>
    %146 = vector.broadcast %145 : vector<1x128xf32> to vector<16x128xf32>
    %147 = arith.addf %144, %146 : vector<16x128xf32>
    %148 = arith.addf %133, %147 : vector<16x128xf32>
    %c0_55 = arith.constant 0 : index
    %c0_56 = arith.constant 0 : index
    %149 = vector.load %arg16[%c0_55, %c0_56] : memref<1x128xf32, #tpu.memory_space<vmem>>, vector<1x128xf32>
    %c0_57 = arith.constant 0 : index
    %c0_58 = arith.constant 0 : index
    %150 = vector.load %arg17[%c0_57, %c0_58] : memref<1x128xf32, #tpu.memory_space<vmem>>, vector<1x128xf32>
    %151 = tpu.iota {dimensions = array<i32: 1>} : vector<1x128xi32>
    %c96_i32_59 = arith.constant 96 : i32
    %152 = vector.broadcast %c96_i32_59 : i32 to vector<1x128xi32>
    %153 = arith.cmpi slt, %151, %152 : vector<1x128xi32>
    %154 = arith.extui %153 : vector<1x128xi1> to vector<1x128xi32>
    %155 = arith.sitofp %154 : vector<1x128xi32> to vector<1x128xf32>
    %cst_60 = arith.constant dense<0.000000e+00> : vector<16xf32>
    %156 = vector.multi_reduction <add>, %148, %cst_60 [1] : vector<16x128xf32> to vector<16xf32>
    %157 = vector.shape_cast %156 : vector<16xf32> to vector<16x1xf32>
    %cst_61 = arith.constant 0.010416667 : f32
    %158 = vector.broadcast %cst_61 : f32 to vector<16x1xf32>
    %159 = arith.mulf %157, %158 : vector<16x1xf32>
    %160 = vector.broadcast %159 : vector<16x1xf32> to vector<16x128xf32>
    %161 = arith.subf %148, %160 : vector<16x128xf32>
    %162 = vector.broadcast %155 : vector<1x128xf32> to vector<16x128xf32>
    %163 = arith.mulf %161, %162 : vector<16x128xf32>
    %164 = arith.mulf %163, %163 : vector<16x128xf32>
    %cst_62 = arith.constant dense<0.000000e+00> : vector<16xf32>
    %165 = vector.multi_reduction <add>, %164, %cst_62 [1] : vector<16x128xf32> to vector<16xf32>
    %166 = vector.shape_cast %165 : vector<16xf32> to vector<16x1xf32>
    %cst_63 = arith.constant 0.010416667 : f32
    %167 = vector.broadcast %cst_63 : f32 to vector<16x1xf32>
    %168 = arith.mulf %166, %167 : vector<16x1xf32>
    %169 = vector.broadcast %159 : vector<16x1xf32> to vector<16x128xf32>
    %170 = arith.subf %148, %169 : vector<16x128xf32>
    %cst_64 = arith.constant 9.99999974E-6 : f32
    %171 = vector.broadcast %cst_64 : f32 to vector<16x1xf32>
    %172 = arith.addf %168, %171 : vector<16x1xf32>
    %173 = math.rsqrt %172 : vector<16x1xf32>
    %174 = vector.broadcast %173 : vector<16x1xf32> to vector<16x128xf32>
    %175 = arith.mulf %170, %174 : vector<16x128xf32>
    %176 = vector.broadcast %149 : vector<1x128xf32> to vector<16x128xf32>
    %177 = arith.mulf %175, %176 : vector<16x128xf32>
    %178 = vector.broadcast %150 : vector<1x128xf32> to vector<16x128xf32>
    %179 = arith.addf %177, %178 : vector<16x128xf32>
    %c0_65 = arith.constant 0 : index
    %c0_66 = arith.constant 0 : index
    %180 = vector.load %arg2[%c0_65, %c0_66] : memref<18x128xf32, #tpu.memory_space<vmem>>, vector<18x128xf32>
    %c0_67 = arith.constant 0 : index
    %c0_68 = arith.constant 0 : index
    %181 = vector.load %arg3[%c0_67, %c0_68] : memref<18x18xf32, #tpu.memory_space<vmem>>, vector<18x18xf32>
    %182 = arith.truncf %180 : vector<18x128xf32> to vector<18x128xbf16>
    %c0_69 = arith.constant 0 : index
    %c0_70 = arith.constant 0 : index
    %183 = vector.load %arg18[%c0_69, %c0_70] : memref<128x384xbf16, #tpu.memory_space<vmem>>, vector<128x384xbf16>
    %cst_71 = arith.constant dense<0.000000e+00> : vector<18x384xf32>
    %184 = tpu.matmul %182, %183, %cst_71 {dimension_numbers = #tpu.dot_dimension_numbers<[1], [0], [0], [1], [0, 0, 1, 1], [], []>} : vector<18x128xbf16>, vector<128x384xbf16>, vector<18x384xf32> -> vector<18x384xf32>
    %c0_72 = arith.constant 0 : index
    %c0_73 = arith.constant 0 : index
    %185 = vector.load %arg19[%c0_72, %c0_73] : memref<1x384xf32, #tpu.memory_space<vmem>>, vector<1x384xf32>
    %186 = vector.broadcast %185 : vector<1x384xf32> to vector<18x384xf32>
    %187 = arith.addf %184, %186 : vector<18x384xf32>
    %188 = vector.extract_strided_slice %187 {offsets = [0, 0], sizes = [18, 128], strides = [1, 1]} : vector<18x384xf32> to vector<18x128xf32>
    %189 = arith.truncf %188 : vector<18x128xf32> to vector<18x128xbf16>
    %190 = vector.extract_strided_slice %187 {offsets = [0, 128], sizes = [18, 128], strides = [1, 1]} : vector<18x384xf32> to vector<18x128xf32>
    %191 = arith.truncf %190 : vector<18x128xf32> to vector<18x128xbf16>
    %192 = vector.extract_strided_slice %187 {offsets = [0, 256], sizes = [18, 128], strides = [1, 1]} : vector<18x384xf32> to vector<18x128xf32>
    %193 = arith.truncf %192 : vector<18x128xf32> to vector<18x128xbf16>
    %cst_74 = arith.constant 0.000000e+00 : f32
    %194 = vector.broadcast %cst_74 : f32 to vector<18x128xf32>
    %195 = vector.extract_strided_slice %189 {offsets = [0, 0], sizes = [18, 32], strides = [1, 1]} : vector<18x128xbf16> to vector<18x32xbf16>
    %196 = vector.extract_strided_slice %191 {offsets = [0, 0], sizes = [18, 32], strides = [1, 1]} : vector<18x128xbf16> to vector<18x32xbf16>
    %cst_75 = arith.constant dense<0.000000e+00> : vector<18x18xf32>
    %197 = tpu.matmul %195, %196, %cst_75 {dimension_numbers = #tpu.dot_dimension_numbers<[1], [1], [0], [0], [0, 0, 1, 0], [], []>} : vector<18x32xbf16>, vector<18x32xbf16>, vector<18x18xf32> -> vector<18x18xf32>
    %198 = arith.addf %197, %181 : vector<18x18xf32>
    %cst_76 = arith.constant dense<0xFF800000> : vector<18xf32>
    %199 = vector.multi_reduction <maximumf>, %198, %cst_76 [1] : vector<18x18xf32> to vector<18xf32>
    %200 = vector.shape_cast %199 : vector<18xf32> to vector<18x1xf32>
    %201 = vector.broadcast %200 : vector<18x1xf32> to vector<18x18xf32>
    %202 = arith.subf %198, %201 : vector<18x18xf32>
    %203 = math.exp %202 : vector<18x18xf32>
    %cst_77 = arith.constant dense<0.000000e+00> : vector<18xf32>
    %204 = vector.multi_reduction <add>, %203, %cst_77 [1] : vector<18x18xf32> to vector<18xf32>
    %205 = vector.shape_cast %204 : vector<18xf32> to vector<18x1xf32>
    %206 = tpu.reciprocal %205 {approx = true} : vector<18x1xf32> -> vector<18x1xf32>
    %207 = vector.broadcast %206 : vector<18x1xf32> to vector<18x18xf32>
    %208 = arith.mulf %203, %207 : vector<18x18xf32>
    %209 = arith.truncf %208 : vector<18x18xf32> to vector<18x18xbf16>
    %210 = vector.extract_strided_slice %193 {offsets = [0, 0], sizes = [18, 32], strides = [1, 1]} : vector<18x128xbf16> to vector<18x32xbf16>
    %cst_78 = arith.constant dense<0.000000e+00> : vector<18x32xf32>
    %211 = tpu.matmul %209, %210, %cst_78 {dimension_numbers = #tpu.dot_dimension_numbers<[1], [0], [0], [1], [0, 0, 1, 1], [], []>} : vector<18x18xbf16>, vector<18x32xbf16>, vector<18x32xf32> -> vector<18x32xf32>
    %212 = arith.truncf %211 : vector<18x32xf32> to vector<18x32xbf16>
    %c0_79 = arith.constant 0 : index
    %c0_80 = arith.constant 0 : index
    %213 = vector.load %arg20[%c0_79, %c0_80] : memref<128x128xbf16, #tpu.memory_space<vmem>>, vector<32x128xbf16>
    %cst_81 = arith.constant dense<0.000000e+00> : vector<18x128xf32>
    %214 = tpu.matmul %212, %213, %cst_81 {dimension_numbers = #tpu.dot_dimension_numbers<[1], [0], [0], [1], [0, 0, 1, 1], [], []>} : vector<18x32xbf16>, vector<32x128xbf16>, vector<18x128xf32> -> vector<18x128xf32>
    %215 = arith.addf %194, %214 : vector<18x128xf32>
    %216 = vector.extract_strided_slice %189 {offsets = [0, 32], sizes = [18, 32], strides = [1, 1]} : vector<18x128xbf16> to vector<18x32xbf16>
    %217 = vector.extract_strided_slice %191 {offsets = [0, 32], sizes = [18, 32], strides = [1, 1]} : vector<18x128xbf16> to vector<18x32xbf16>
    %cst_82 = arith.constant dense<0.000000e+00> : vector<18x18xf32>
    %218 = tpu.matmul %216, %217, %cst_82 {dimension_numbers = #tpu.dot_dimension_numbers<[1], [1], [0], [0], [0, 0, 1, 0], [], []>} : vector<18x32xbf16>, vector<18x32xbf16>, vector<18x18xf32> -> vector<18x18xf32>
    %219 = arith.addf %218, %181 : vector<18x18xf32>
    %cst_83 = arith.constant dense<0xFF800000> : vector<18xf32>
    %220 = vector.multi_reduction <maximumf>, %219, %cst_83 [1] : vector<18x18xf32> to vector<18xf32>
    %221 = vector.shape_cast %220 : vector<18xf32> to vector<18x1xf32>
    %222 = vector.broadcast %221 : vector<18x1xf32> to vector<18x18xf32>
    %223 = arith.subf %219, %222 : vector<18x18xf32>
    %224 = math.exp %223 : vector<18x18xf32>
    %cst_84 = arith.constant dense<0.000000e+00> : vector<18xf32>
    %225 = vector.multi_reduction <add>, %224, %cst_84 [1] : vector<18x18xf32> to vector<18xf32>
    %226 = vector.shape_cast %225 : vector<18xf32> to vector<18x1xf32>
    %227 = tpu.reciprocal %226 {approx = true} : vector<18x1xf32> -> vector<18x1xf32>
    %228 = vector.broadcast %227 : vector<18x1xf32> to vector<18x18xf32>
    %229 = arith.mulf %224, %228 : vector<18x18xf32>
    %230 = arith.truncf %229 : vector<18x18xf32> to vector<18x18xbf16>
    %231 = vector.extract_strided_slice %193 {offsets = [0, 32], sizes = [18, 32], strides = [1, 1]} : vector<18x128xbf16> to vector<18x32xbf16>
    %cst_85 = arith.constant dense<0.000000e+00> : vector<18x32xf32>
    %232 = tpu.matmul %230, %231, %cst_85 {dimension_numbers = #tpu.dot_dimension_numbers<[1], [0], [0], [1], [0, 0, 1, 1], [], []>} : vector<18x18xbf16>, vector<18x32xbf16>, vector<18x32xf32> -> vector<18x32xf32>
    %233 = arith.truncf %232 : vector<18x32xf32> to vector<18x32xbf16>
    %c32_86 = arith.constant 32 : index
    %c0_87 = arith.constant 0 : index
    %234 = vector.load %arg20[%c32_86, %c0_87] : memref<128x128xbf16, #tpu.memory_space<vmem>>, vector<32x128xbf16>
    %cst_88 = arith.constant dense<0.000000e+00> : vector<18x128xf32>
    %235 = tpu.matmul %233, %234, %cst_88 {dimension_numbers = #tpu.dot_dimension_numbers<[1], [0], [0], [1], [0, 0, 1, 1], [], []>} : vector<18x32xbf16>, vector<32x128xbf16>, vector<18x128xf32> -> vector<18x128xf32>
    %236 = arith.addf %215, %235 : vector<18x128xf32>
    %237 = vector.extract_strided_slice %189 {offsets = [0, 64], sizes = [18, 32], strides = [1, 1]} : vector<18x128xbf16> to vector<18x32xbf16>
    %238 = vector.extract_strided_slice %191 {offsets = [0, 64], sizes = [18, 32], strides = [1, 1]} : vector<18x128xbf16> to vector<18x32xbf16>
    %cst_89 = arith.constant dense<0.000000e+00> : vector<18x18xf32>
    %239 = tpu.matmul %237, %238, %cst_89 {dimension_numbers = #tpu.dot_dimension_numbers<[1], [1], [0], [0], [0, 0, 1, 0], [], []>} : vector<18x32xbf16>, vector<18x32xbf16>, vector<18x18xf32> -> vector<18x18xf32>
    %240 = arith.addf %239, %181 : vector<18x18xf32>
    %cst_90 = arith.constant dense<0xFF800000> : vector<18xf32>
    %241 = vector.multi_reduction <maximumf>, %240, %cst_90 [1] : vector<18x18xf32> to vector<18xf32>
    %242 = vector.shape_cast %241 : vector<18xf32> to vector<18x1xf32>
    %243 = vector.broadcast %242 : vector<18x1xf32> to vector<18x18xf32>
    %244 = arith.subf %240, %243 : vector<18x18xf32>
    %245 = math.exp %244 : vector<18x18xf32>
    %cst_91 = arith.constant dense<0.000000e+00> : vector<18xf32>
    %246 = vector.multi_reduction <add>, %245, %cst_91 [1] : vector<18x18xf32> to vector<18xf32>
    %247 = vector.shape_cast %246 : vector<18xf32> to vector<18x1xf32>
    %248 = tpu.reciprocal %247 {approx = true} : vector<18x1xf32> -> vector<18x1xf32>
    %249 = vector.broadcast %248 : vector<18x1xf32> to vector<18x18xf32>
    %250 = arith.mulf %245, %249 : vector<18x18xf32>
    %251 = arith.truncf %250 : vector<18x18xf32> to vector<18x18xbf16>
    %252 = vector.extract_strided_slice %193 {offsets = [0, 64], sizes = [18, 32], strides = [1, 1]} : vector<18x128xbf16> to vector<18x32xbf16>
    %cst_92 = arith.constant dense<0.000000e+00> : vector<18x32xf32>
    %253 = tpu.matmul %251, %252, %cst_92 {dimension_numbers = #tpu.dot_dimension_numbers<[1], [0], [0], [1], [0, 0, 1, 1], [], []>} : vector<18x18xbf16>, vector<18x32xbf16>, vector<18x32xf32> -> vector<18x32xf32>
    %254 = arith.truncf %253 : vector<18x32xf32> to vector<18x32xbf16>
    %c64_93 = arith.constant 64 : index
    %c0_94 = arith.constant 0 : index
    %255 = vector.load %arg20[%c64_93, %c0_94] : memref<128x128xbf16, #tpu.memory_space<vmem>>, vector<32x128xbf16>
    %cst_95 = arith.constant dense<0.000000e+00> : vector<18x128xf32>
    %256 = tpu.matmul %254, %255, %cst_95 {dimension_numbers = #tpu.dot_dimension_numbers<[1], [0], [0], [1], [0, 0, 1, 1], [], []>} : vector<18x32xbf16>, vector<32x128xbf16>, vector<18x128xf32> -> vector<18x128xf32>
    %257 = arith.addf %236, %256 : vector<18x128xf32>
    %258 = vector.extract_strided_slice %189 {offsets = [0, 96], sizes = [18, 32], strides = [1, 1]} : vector<18x128xbf16> to vector<18x32xbf16>
    %259 = vector.extract_strided_slice %191 {offsets = [0, 96], sizes = [18, 32], strides = [1, 1]} : vector<18x128xbf16> to vector<18x32xbf16>
    %cst_96 = arith.constant dense<0.000000e+00> : vector<18x18xf32>
    %260 = tpu.matmul %258, %259, %cst_96 {dimension_numbers = #tpu.dot_dimension_numbers<[1], [1], [0], [0], [0, 0, 1, 0], [], []>} : vector<18x32xbf16>, vector<18x32xbf16>, vector<18x18xf32> -> vector<18x18xf32>
    %261 = arith.addf %260, %181 : vector<18x18xf32>
    %cst_97 = arith.constant dense<0xFF800000> : vector<18xf32>
    %262 = vector.multi_reduction <maximumf>, %261, %cst_97 [1] : vector<18x18xf32> to vector<18xf32>
    %263 = vector.shape_cast %262 : vector<18xf32> to vector<18x1xf32>
    %264 = vector.broadcast %263 : vector<18x1xf32> to vector<18x18xf32>
    %265 = arith.subf %261, %264 : vector<18x18xf32>
    %266 = math.exp %265 : vector<18x18xf32>
    %cst_98 = arith.constant dense<0.000000e+00> : vector<18xf32>
    %267 = vector.multi_reduction <add>, %266, %cst_98 [1] : vector<18x18xf32> to vector<18xf32>
    %268 = vector.shape_cast %267 : vector<18xf32> to vector<18x1xf32>
    %269 = tpu.reciprocal %268 {approx = true} : vector<18x1xf32> -> vector<18x1xf32>
    %270 = vector.broadcast %269 : vector<18x1xf32> to vector<18x18xf32>
    %271 = arith.mulf %266, %270 : vector<18x18xf32>
    %272 = arith.truncf %271 : vector<18x18xf32> to vector<18x18xbf16>
    %273 = vector.extract_strided_slice %193 {offsets = [0, 96], sizes = [18, 32], strides = [1, 1]} : vector<18x128xbf16> to vector<18x32xbf16>
    %cst_99 = arith.constant dense<0.000000e+00> : vector<18x32xf32>
    %274 = tpu.matmul %272, %273, %cst_99 {dimension_numbers = #tpu.dot_dimension_numbers<[1], [0], [0], [1], [0, 0, 1, 1], [], []>} : vector<18x18xbf16>, vector<18x32xbf16>, vector<18x32xf32> -> vector<18x32xf32>
    %275 = arith.truncf %274 : vector<18x32xf32> to vector<18x32xbf16>
    %c96_100 = arith.constant 96 : index
    %c0_101 = arith.constant 0 : index
    %276 = vector.load %arg20[%c96_100, %c0_101] : memref<128x128xbf16, #tpu.memory_space<vmem>>, vector<32x128xbf16>
    %cst_102 = arith.constant dense<0.000000e+00> : vector<18x128xf32>
    %277 = tpu.matmul %275, %276, %cst_102 {dimension_numbers = #tpu.dot_dimension_numbers<[1], [0], [0], [1], [0, 0, 1, 1], [], []>} : vector<18x32xbf16>, vector<32x128xbf16>, vector<18x128xf32> -> vector<18x128xf32>
    %278 = arith.addf %257, %277 : vector<18x128xf32>
    %c0_103 = arith.constant 0 : index
    %c0_104 = arith.constant 0 : index
    %279 = vector.load %arg21[%c0_103, %c0_104] : memref<1x128xf32, #tpu.memory_space<vmem>>, vector<1x128xf32>
    %280 = vector.broadcast %279 : vector<1x128xf32> to vector<18x128xf32>
    %281 = arith.addf %278, %280 : vector<18x128xf32>
    %282 = arith.addf %180, %281 : vector<18x128xf32>
    %c0_105 = arith.constant 0 : index
    %c0_106 = arith.constant 0 : index
    %283 = vector.load %arg22[%c0_105, %c0_106] : memref<1x128xf32, #tpu.memory_space<vmem>>, vector<1x128xf32>
    %c0_107 = arith.constant 0 : index
    %c0_108 = arith.constant 0 : index
    %284 = vector.load %arg23[%c0_107, %c0_108] : memref<1x128xf32, #tpu.memory_space<vmem>>, vector<1x128xf32>
    %285 = tpu.iota {dimensions = array<i32: 1>} : vector<1x128xi32>
    %c96_i32_109 = arith.constant 96 : i32
    %286 = vector.broadcast %c96_i32_109 : i32 to vector<1x128xi32>
    %287 = arith.cmpi slt, %285, %286 : vector<1x128xi32>
    %288 = arith.extui %287 : vector<1x128xi1> to vector<1x128xi32>
    %289 = arith.sitofp %288 : vector<1x128xi32> to vector<1x128xf32>
    %cst_110 = arith.constant dense<0.000000e+00> : vector<18xf32>
    %290 = vector.multi_reduction <add>, %282, %cst_110 [1] : vector<18x128xf32> to vector<18xf32>
    %291 = vector.shape_cast %290 : vector<18xf32> to vector<18x1xf32>
    %cst_111 = arith.constant 0.010416667 : f32
    %292 = vector.broadcast %cst_111 : f32 to vector<18x1xf32>
    %293 = arith.mulf %291, %292 : vector<18x1xf32>
    %294 = vector.broadcast %293 : vector<18x1xf32> to vector<18x128xf32>
    %295 = arith.subf %282, %294 : vector<18x128xf32>
    %296 = vector.broadcast %289 : vector<1x128xf32> to vector<18x128xf32>
    %297 = arith.mulf %295, %296 : vector<18x128xf32>
    %298 = arith.mulf %297, %297 : vector<18x128xf32>
    %cst_112 = arith.constant dense<0.000000e+00> : vector<18xf32>
    %299 = vector.multi_reduction <add>, %298, %cst_112 [1] : vector<18x128xf32> to vector<18xf32>
    %300 = vector.shape_cast %299 : vector<18xf32> to vector<18x1xf32>
    %cst_113 = arith.constant 0.010416667 : f32
    %301 = vector.broadcast %cst_113 : f32 to vector<18x1xf32>
    %302 = arith.mulf %300, %301 : vector<18x1xf32>
    %303 = vector.broadcast %293 : vector<18x1xf32> to vector<18x128xf32>
    %304 = arith.subf %282, %303 : vector<18x128xf32>
    %cst_114 = arith.constant 9.99999974E-6 : f32
    %305 = vector.broadcast %cst_114 : f32 to vector<18x1xf32>
    %306 = arith.addf %302, %305 : vector<18x1xf32>
    %307 = math.rsqrt %306 : vector<18x1xf32>
    %308 = vector.broadcast %307 : vector<18x1xf32> to vector<18x128xf32>
    %309 = arith.mulf %304, %308 : vector<18x128xf32>
    %310 = vector.broadcast %283 : vector<1x128xf32> to vector<18x128xf32>
    %311 = arith.mulf %309, %310 : vector<18x128xf32>
    %312 = vector.broadcast %284 : vector<1x128xf32> to vector<18x128xf32>
    %313 = arith.addf %311, %312 : vector<18x128xf32>
    %314 = arith.truncf %313 : vector<18x128xf32> to vector<18x128xbf16>
    %c0_115 = arith.constant 0 : index
    %c0_116 = arith.constant 0 : index
    %315 = vector.load %arg24[%c0_115, %c0_116] : memref<128x2048xbf16, #tpu.memory_space<vmem>>, vector<128x2048xbf16>
    %cst_117 = arith.constant dense<0.000000e+00> : vector<18x2048xf32>
    %316 = tpu.matmul %314, %315, %cst_117 {dimension_numbers = #tpu.dot_dimension_numbers<[1], [0], [0], [1], [0, 0, 1, 1], [], []>} : vector<18x128xbf16>, vector<128x2048xbf16>, vector<18x2048xf32> -> vector<18x2048xf32>
    %c0_118 = arith.constant 0 : index
    %c0_119 = arith.constant 0 : index
    %317 = vector.load %arg25[%c0_118, %c0_119] : memref<1x2048xf32, #tpu.memory_space<vmem>>, vector<1x2048xf32>
    %318 = vector.broadcast %317 : vector<1x2048xf32> to vector<18x2048xf32>
    %319 = arith.addf %316, %318 : vector<18x2048xf32>
    %cst_120 = arith.constant 0.000000e+00 : f32
    %320 = vector.broadcast %cst_120 : f32 to vector<18x2048xf32>
    %321 = arith.maximumf %319, %320 : vector<18x2048xf32>
    %322 = arith.truncf %321 : vector<18x2048xf32> to vector<18x2048xbf16>
    %c0_121 = arith.constant 0 : index
    %c0_122 = arith.constant 0 : index
    %323 = vector.load %arg26[%c0_121, %c0_122] : memref<2048x128xbf16, #tpu.memory_space<vmem>>, vector<2048x128xbf16>
    %cst_123 = arith.constant dense<0.000000e+00> : vector<18x128xf32>
    %324 = tpu.matmul %322, %323, %cst_123 {dimension_numbers = #tpu.dot_dimension_numbers<[1], [0], [0], [1], [0, 0, 1, 1], [], []>} : vector<18x2048xbf16>, vector<2048x128xbf16>, vector<18x128xf32> -> vector<18x128xf32>
    %c0_124 = arith.constant 0 : index
    %c0_125 = arith.constant 0 : index
    %325 = vector.load %arg27[%c0_124, %c0_125] : memref<1x128xf32, #tpu.memory_space<vmem>>, vector<1x128xf32>
    %326 = vector.broadcast %325 : vector<1x128xf32> to vector<18x128xf32>
    %327 = arith.addf %324, %326 : vector<18x128xf32>
    %328 = arith.addf %313, %327 : vector<18x128xf32>
    %c0_126 = arith.constant 0 : index
    %c0_127 = arith.constant 0 : index
    %329 = vector.load %arg28[%c0_126, %c0_127] : memref<1x128xf32, #tpu.memory_space<vmem>>, vector<1x128xf32>
    %c0_128 = arith.constant 0 : index
    %c0_129 = arith.constant 0 : index
    %330 = vector.load %arg29[%c0_128, %c0_129] : memref<1x128xf32, #tpu.memory_space<vmem>>, vector<1x128xf32>
    %331 = tpu.iota {dimensions = array<i32: 1>} : vector<1x128xi32>
    %c96_i32_130 = arith.constant 96 : i32
    %332 = vector.broadcast %c96_i32_130 : i32 to vector<1x128xi32>
    %333 = arith.cmpi slt, %331, %332 : vector<1x128xi32>
    %334 = arith.extui %333 : vector<1x128xi1> to vector<1x128xi32>
    %335 = arith.sitofp %334 : vector<1x128xi32> to vector<1x128xf32>
    %cst_131 = arith.constant dense<0.000000e+00> : vector<18xf32>
    %336 = vector.multi_reduction <add>, %328, %cst_131 [1] : vector<18x128xf32> to vector<18xf32>
    %337 = vector.shape_cast %336 : vector<18xf32> to vector<18x1xf32>
    %cst_132 = arith.constant 0.010416667 : f32
    %338 = vector.broadcast %cst_132 : f32 to vector<18x1xf32>
    %339 = arith.mulf %337, %338 : vector<18x1xf32>
    %340 = vector.broadcast %339 : vector<18x1xf32> to vector<18x128xf32>
    %341 = arith.subf %328, %340 : vector<18x128xf32>
    %342 = vector.broadcast %335 : vector<1x128xf32> to vector<18x128xf32>
    %343 = arith.mulf %341, %342 : vector<18x128xf32>
    %344 = arith.mulf %343, %343 : vector<18x128xf32>
    %cst_133 = arith.constant dense<0.000000e+00> : vector<18xf32>
    %345 = vector.multi_reduction <add>, %344, %cst_133 [1] : vector<18x128xf32> to vector<18xf32>
    %346 = vector.shape_cast %345 : vector<18xf32> to vector<18x1xf32>
    %cst_134 = arith.constant 0.010416667 : f32
    %347 = vector.broadcast %cst_134 : f32 to vector<18x1xf32>
    %348 = arith.mulf %346, %347 : vector<18x1xf32>
    %349 = vector.broadcast %339 : vector<18x1xf32> to vector<18x128xf32>
    %350 = arith.subf %328, %349 : vector<18x128xf32>
    %cst_135 = arith.constant 9.99999974E-6 : f32
    %351 = vector.broadcast %cst_135 : f32 to vector<18x1xf32>
    %352 = arith.addf %348, %351 : vector<18x1xf32>
    %353 = math.rsqrt %352 : vector<18x1xf32>
    %354 = vector.broadcast %353 : vector<18x1xf32> to vector<18x128xf32>
    %355 = arith.mulf %350, %354 : vector<18x128xf32>
    %356 = vector.broadcast %329 : vector<1x128xf32> to vector<18x128xf32>
    %357 = arith.mulf %355, %356 : vector<18x128xf32>
    %358 = vector.broadcast %330 : vector<1x128xf32> to vector<18x128xf32>
    %359 = arith.addf %357, %358 : vector<18x128xf32>
    %c0_136 = arith.constant 0 : index
    %c0_137 = arith.constant 0 : index
    %360 = vector.load %arg4[%c0_136, %c0_137] : memref<2x8xf32, #tpu.memory_space<vmem>>, vector<2x8xf32>
    %cst_138 = arith.constant dense<0.000000e+00> : vector<2xf32>
    %361 = vector.multi_reduction <add>, %360, %cst_138 [1] : vector<2x8xf32> to vector<2xf32>
    %362 = vector.shape_cast %361 : vector<2xf32> to vector<2x1xf32>
    %363 = arith.fptosi %362 : vector<2x1xf32> to vector<2x1xi32>
    %c1_i32 = arith.constant 1 : i32
    %364 = vector.broadcast %c1_i32 : i32 to vector<2x1xi32>
    %365 = arith.subi %363, %364 : vector<2x1xi32>
    %c0_i32 = arith.constant 0 : i32
    %366 = vector.broadcast %c0_i32 : i32 to vector<2x1xi32>
    %367 = arith.maxsi %365, %366 : vector<2x1xi32>
    %368 = tpu.iota {dimensions = array<i32: 0>} : vector<2x16xi32>
    %369 = tpu.iota {dimensions = array<i32: 1>} : vector<2x16xi32>
    %c8_i32 = arith.constant 8 : i32
    %370 = vector.broadcast %c8_i32 : i32 to vector<2x16xi32>
    %371 = arith.muli %368, %370 : vector<2x16xi32>
    %372 = vector.broadcast %367 : vector<2x1xi32> to vector<2x16xi32>
    %373 = arith.addi %371, %372 : vector<2x16xi32>
    %374 = arith.cmpi eq, %369, %373 : vector<2x16xi32>
    %375 = arith.extui %374 : vector<2x16xi1> to vector<2x16xi32>
    %376 = arith.sitofp %375 : vector<2x16xi32> to vector<2x16xf32>
    %cst_139 = arith.constant dense<0.000000e+00> : vector<2x128xf32>
    %377 = tpu.matmul %376, %179, %cst_139 {dimension_numbers = #tpu.dot_dimension_numbers<[1], [0], [0], [1], [0, 0, 1, 1], [], []>} : vector<2x16xf32>, vector<16x128xf32>, vector<2x128xf32> -> vector<2x128xf32>
    %c0_140 = arith.constant 0 : index
    %c0_141 = arith.constant 0 : index
    %378 = vector.load %arg5[%c0_140, %c0_141] : memref<2x9xf32, #tpu.memory_space<vmem>>, vector<2x9xf32>
    %cst_142 = arith.constant dense<0.000000e+00> : vector<2xf32>
    %379 = vector.multi_reduction <add>, %378, %cst_142 [1] : vector<2x9xf32> to vector<2xf32>
    %380 = vector.shape_cast %379 : vector<2xf32> to vector<2x1xf32>
    %381 = arith.fptosi %380 : vector<2x1xf32> to vector<2x1xi32>
    %c1_i32_143 = arith.constant 1 : i32
    %382 = vector.broadcast %c1_i32_143 : i32 to vector<2x1xi32>
    %383 = arith.subi %381, %382 : vector<2x1xi32>
    %c0_i32_144 = arith.constant 0 : i32
    %384 = vector.broadcast %c0_i32_144 : i32 to vector<2x1xi32>
    %385 = arith.maxsi %383, %384 : vector<2x1xi32>
    %386 = tpu.iota {dimensions = array<i32: 0>} : vector<2x18xi32>
    %387 = tpu.iota {dimensions = array<i32: 1>} : vector<2x18xi32>
    %c9_i32 = arith.constant 9 : i32
    %388 = vector.broadcast %c9_i32 : i32 to vector<2x18xi32>
    %389 = arith.muli %386, %388 : vector<2x18xi32>
    %390 = vector.broadcast %385 : vector<2x1xi32> to vector<2x18xi32>
    %391 = arith.addi %389, %390 : vector<2x18xi32>
    %392 = arith.cmpi eq, %387, %391 : vector<2x18xi32>
    %393 = arith.extui %392 : vector<2x18xi1> to vector<2x18xi32>
    %394 = arith.sitofp %393 : vector<2x18xi32> to vector<2x18xf32>
    %cst_145 = arith.constant dense<0.000000e+00> : vector<2x128xf32>
    %395 = tpu.matmul %394, %359, %cst_145 {dimension_numbers = #tpu.dot_dimension_numbers<[1], [0], [0], [1], [0, 0, 1, 1], [], []>} : vector<2x18xf32>, vector<18x128xf32>, vector<2x128xf32> -> vector<2x128xf32>
    %396 = arith.truncf %377 : vector<2x128xf32> to vector<2x128xbf16>
    %c0_146 = arith.constant 0 : index
    %c0_147 = arith.constant 0 : index
    %397 = vector.load %arg30[%c0_146, %c0_147] : memref<128x32xbf16, #tpu.memory_space<vmem>>, vector<128x32xbf16>
    %cst_148 = arith.constant dense<0.000000e+00> : vector<2x32xf32>
    %398 = tpu.matmul %396, %397, %cst_148 {dimension_numbers = #tpu.dot_dimension_numbers<[1], [0], [0], [1], [0, 0, 1, 1], [], []>} : vector<2x128xbf16>, vector<128x32xbf16>, vector<2x32xf32> -> vector<2x32xf32>
    %399 = arith.truncf %398 : vector<2x32xf32> to vector<2x32xbf16>
    %c0_149 = arith.constant 0 : index
    %c0_150 = arith.constant 0 : index
    %400 = vector.load %arg31[%c0_149, %c0_150] : memref<32x256xbf16, #tpu.memory_space<vmem>>, vector<32x256xbf16>
    %cst_151 = arith.constant dense<0.000000e+00> : vector<2x256xf32>
    %401 = tpu.matmul %399, %400, %cst_151 {dimension_numbers = #tpu.dot_dimension_numbers<[1], [0], [0], [1], [0, 0, 1, 1], [], []>} : vector<2x32xbf16>, vector<32x256xbf16>, vector<2x256xf32> -> vector<2x256xf32>
    %402 = arith.truncf %395 : vector<2x128xf32> to vector<2x128xbf16>
    %c0_152 = arith.constant 0 : index
    %c0_153 = arith.constant 0 : index
    %403 = vector.load %arg32[%c0_152, %c0_153] : memref<128x256xbf16, #tpu.memory_space<vmem>>, vector<128x256xbf16>
    %cst_154 = arith.constant dense<0.000000e+00> : vector<2x256xf32>
    %404 = tpu.matmul %402, %403, %cst_154 {dimension_numbers = #tpu.dot_dimension_numbers<[1], [0], [0], [1], [0, 0, 1, 1], [], []>} : vector<2x128xbf16>, vector<128x256xbf16>, vector<2x256xf32> -> vector<2x256xf32>
    %405 = arith.addf %401, %404 : vector<2x256xf32>
    %c0_155 = arith.constant 0 : index
    %c0_156 = arith.constant 0 : index
    %406 = vector.load %arg33[%c0_155, %c0_156] : memref<1x256xf32, #tpu.memory_space<vmem>>, vector<1x256xf32>
    %407 = vector.broadcast %406 : vector<1x256xf32> to vector<2x256xf32>
    %408 = arith.addf %405, %407 : vector<2x256xf32>
    %c0_157 = arith.constant 0 : index
    %c0_158 = arith.constant 0 : index
    %409 = vector.load %arg35[%c0_157, %c0_158] : memref<2x256xf32, #tpu.memory_space<vmem>>, vector<2x256xf32>
    tpu.vector_store %arg35[%c0_157, %c0_158], %408 {strides = array<i32>} : memref<2x256xf32, #tpu.memory_space<vmem>>, vector<2x256xf32>,
    %410 = arith.negf %408 : vector<2x256xf32>
    %411 = math.exp %410 : vector<2x256xf32>
    %cst_159 = arith.constant 1.000000e+00 : f32
    %412 = vector.broadcast %cst_159 : f32 to vector<2x256xf32>
    %413 = arith.addf %412, %411 : vector<2x256xf32>
    %414 = arith.divf %412, %413 : vector<2x256xf32>
    %c0_160 = arith.constant 0 : index
    %c0_161 = arith.constant 0 : index
    %415 = vector.load %arg36[%c0_160, %c0_161] : memref<2x256xf32, #tpu.memory_space<vmem>>, vector<2x256xf32>
    tpu.vector_store %arg36[%c0_160, %c0_161], %414 {strides = array<i32>} : memref<2x256xf32, #tpu.memory_space<vmem>>, vector<2x256xf32>,
    %c0_162 = arith.constant 0 : index
    %c0_163 = arith.constant 0 : index
    %416 = vector.load %arg34[%c0_162, %c0_163] : memref<2x256xf32, #tpu.memory_space<vmem>>, vector<2x256xf32>
    %cst_164 = arith.constant 0.000000e+00 : f32
    %417 = vector.broadcast %cst_164 : f32 to vector<2x256xf32>
    %418 = arith.maximumf %408, %417 : vector<2x256xf32>
    %419 = arith.mulf %408, %416 : vector<2x256xf32>
    %420 = arith.subf %418, %419 : vector<2x256xf32>
    %421 = math.absf %408 : vector<2x256xf32>
    %cst_165 = arith.constant 0.000000e+00 : f32
    %422 = vector.broadcast %cst_165 : f32 to vector<2x256xf32>
    %423 = arith.subf %422, %421 : vector<2x256xf32>
    %424 = math.exp %423 : vector<2x256xf32>
    %425 = math.log1p %424 : vector<2x256xf32>
    %426 = arith.addf %420, %425 : vector<2x256xf32>
    %427 = vector.shape_cast %426 : vector<2x256xf32> to vector<1x2x256xf32>
    %cst_166 = arith.constant dense<0.000000e+00> : vector<1xf32>
    %428 = vector.multi_reduction <add>, %427, %cst_166 [1, 2] : vector<1x2x256xf32> to vector<1xf32>
    %429 = vector.shape_cast %428 : vector<1xf32> to vector<1x1x1xf32>
    %430 = vector.extract %429[0, 0, 0] : f32 from vector<1x1x1xf32>
    %cst_167 = arith.constant 5.120000e+02 : f32
    %431 = arith.divf %430, %cst_167 : f32
    %432 = vector.broadcast %431 : f32 to vector<1x1xf32>
    %c0_168 = arith.constant 0 : index
    %c0_169 = arith.constant 0 : index
    %433 = vector.load %arg37[%c0_168, %c0_169] : memref<1x1xf32, #tpu.memory_space<vmem>>, vector<1x1xf32>
    tpu.vector_store %arg37[%c0_168, %c0_169], %432 {strides = array<i32>} : memref<1x1xf32, #tpu.memory_space<vmem>>, vector<1x1xf32>,
    return
  }
}

</mosaic_0001>

<llo_original>
// kernel: eq.22
$region0: #{eq.22}
  %s0 = inlined_call_operand.vmem [shape: s32[2,9], index: 0, kind: input, shape index: {}]
  %s1 = inlined_call_operand.vmem [shape: s32[18], index: 1, kind: output, shape index: {}]
  $region1: #{eq.22} parent=0
    #allocation0 [shape = 'u8[4096]{0}', space=vmem, size = 0x1000, scoped, tag = 'scoped mem for output reshape']
    #allocation1 [shape = 'u8[4096]{0}', space=vmem, size = 0x1000, scoped, tag = 'scoped mem for input reshape']
    %s3 = sshllo.u32 0, 2
    %v4 = vld [vmem:[%s0] sm:%s3]
    %5 = vst [vmem:[#allocation1] sm:%s3] %v4
    %v6 = vld [vmem:[#allocation1] sm:$0x1]
    %vm7 = vcmask 72704
    %8 = vst.msk [vmem:[#allocation0] sm:$0x1] %vm7, %v6
    %s9 = scalar_lea.vmem [#allocation1], 1
    %v10 = vld [vmem:[%s9] sm:$0x1]
    %11 = vrot.lane.b32.xlu0 %v10, 9
    %v12 = vpop.permute.xlu0 %11
    %vm13 = vcmask 146504
    %14 = vst.msk [vmem:[#allocation0] sm:$0x1] %vm13, %v12
    %s16 = sshllo.u32 0, 1
    %v18 = vld [vmem:[#allocation0] sm:%s16]
    %s19 = sshllo.u32 0, 1
    %20 = vst [vmem:[%s1] sm:%s19] %v18

// kernel: eq.15
$region0: #{eq.15}
  %s0 = inlined_call_operand.vmem [shape: s32[2,8], index: 0, kind: input, shape index: {}]
  %s1 = inlined_call_operand.vmem [shape: s32[16], index: 1, kind: output, shape index: {}]
  $region1: #{eq.15} parent=0
    #allocation0 [shape = 'u8[4096]{0}', space=vmem, size = 0x1000, scoped, tag = 'scoped mem for output reshape']
    #allocation1 [shape = 'u8[4096]{0}', space=vmem, size = 0x1000, scoped, tag = 'scoped mem for input reshape']
    %s3 = sshllo.u32 0, 2
    %v4 = vld [vmem:[%s0] sm:%s3]
    %5 = vst [vmem:[#allocation1] sm:%s3] %v4
    %v6 = vld [vmem:[#allocation1] sm:$0x1]
    %vm7 = vcmask 64512
    %8 = vst.msk [vmem:[#allocation0] sm:$0x1] %vm7, %v6
    %s9 = scalar_lea.vmem [#allocation1], 1
    %v10 = vld [vmem:[%s9] sm:$0x1]
    %11 = vrot.lane.b32.xlu0 %v10, 8
    %v12 = vpop.permute.xlu0 %11
    %vm13 = vcmask 130112
    %14 = vst.msk [vmem:[#allocation0] sm:$0x1] %vm13, %v12
    %s16 = sshllo.u32 0, 1
    %v18 = vld [vmem:[#allocation0] sm:%s16]
    %s19 = sshllo.u32 0, 1
    %20 = vst [vmem:[%s1] sm:%s19] %v18

// kernel: rec_layer_forward.1
$region0: #{rec_layer_forward.1}
  #allocation0 [shape = 'u32[]', space=smem, size = 0x4, offset = 0x4, fixed_abs, tag = 'smem constant byte address 0x4 - core index']
  #allocation1 [shape = 'u32[144,128]{1,0:T(1,128)}', space=vmem, size = 0x12000, scoped, tag = 'internal scratch']
  %s0 = inlined_call_operand.smem [shape: u32[38], index: -1, kind: input, shape index: {}]
  %s1 = sld [smem:[%s0]]
  %s2 = scalar_lea.smem %s0, 1
  %s3 = sld [smem:[%s2]]
  %s4 = scalar_lea.smem %s0, 2
  %s5 = sld [smem:[%s4]]
  %s6 = scalar_lea.smem %s0, 3
  %s7 = sld [smem:[%s6]]
  %s8 = scalar_lea.smem %s0, 4
  %s9 = sld [smem:[%s8]]
  %s10 = scalar_lea.smem %s0, 5
  %s11 = sld [smem:[%s10]]
  %s12 = scalar_lea.smem %s0, 6
  %s13 = sld [smem:[%s12]]
  %s14 = scalar_lea.smem %s0, 7
  %s15 = sld [smem:[%s14]]
  %s16 = scalar_lea.smem %s0, 8
  %s17 = sld [smem:[%s16]]
  %s18 = scalar_lea.smem %s0, 9
  %s19 = sld [smem:[%s18]]
  %s20 = scalar_lea.smem %s0, 10
  %s21 = sld [smem:[%s20]]
  %s22 = scalar_lea.smem %s0, 11
  %s23 = sld [smem:[%s22]]
  %s24 = scalar_lea.smem %s0, 12
  %s25 = sld [smem:[%s24]]
  %s26 = scalar_lea.smem %s0, 13
  %s27 = sld [smem:[%s26]]
  %s28 = scalar_lea.smem %s0, 14
  %s29 = sld [smem:[%s28]]
  %s30 = scalar_lea.smem %s0, 15
  %s31 = sld [smem:[%s30]]
  %s32 = scalar_lea.smem %s0, 16
  %s33 = sld [smem:[%s32]]
  %s34 = scalar_lea.smem %s0, 17
  %s35 = sld [smem:[%s34]]
  %s36 = scalar_lea.smem %s0, 18
  %s37 = sld [smem:[%s36]]
  %s38 = scalar_lea.smem %s0, 19
  %s39 = sld [smem:[%s38]]
  %s40 = scalar_lea.smem %s0, 20
  %s41 = sld [smem:[%s40]]
  %s42 = scalar_lea.smem %s0, 21
  %s43 = sld [smem:[%s42]]
  %s44 = scalar_lea.smem %s0, 22
  %s45 = sld [smem:[%s44]]
  %s46 = scalar_lea.smem %s0, 23
  %s47 = sld [smem:[%s46]]
  %s48 = scalar_lea.smem %s0, 24
  %s49 = sld [smem:[%s48]]
  %s50 = scalar_lea.smem %s0, 25
  %s51 = sld [smem:[%s50]]
  %s52 = scalar_lea.smem %s0, 26
  %s53 = sld [smem:[%s52]]
  %s54 = scalar_lea.smem %s0, 27
  %s55 = sld [smem:[%s54]]
  %s56 = scalar_lea.smem %s0, 28
  %s57 = sld [smem:[%s56]]
  %s58 = scalar_lea.smem %s0, 29
  %s59 = sld [smem:[%s58]]
  %s60 = scalar_lea.smem %s0, 30
  %s61 = sld [smem:[%s60]]
  %s62 = scalar_lea.smem %s0, 31
  %s63 = sld [smem:[%s62]]
  %s64 = scalar_lea.smem %s0, 32
  %s65 = sld [smem:[%s64]]
  %s66 = scalar_lea.smem %s0, 33
  %s67 = sld [smem:[%s66]]
  %s68 = scalar_lea.smem %s0, 34
  %s69 = sld [smem:[%s68]]
  %s70 = scalar_lea.smem %s0, 35
  %s71 = sld [smem:[%s70]]
  %s72 = scalar_lea.smem %s0, 36
  %s73 = sld [smem:[%s72]]
  %s74 = scalar_lea.smem %s0, 37
  %s75 = sld [smem:[%s74]]
  %76 = xla_tuple %s71, %s73, %s75
  %s77 = sld [smem:[#allocation0]]
  $region258: #{rec_layer_forward.1} parent=0
    _
  %s79 = ssub.s32 1, %s77
  %s80 = scalar_select 0, %s79, %s77
  $region1: #{rec_layer_forward.1} parent=0
    #allocation2 [shape = 'u8[32768]{0}', space=vmem, size = 0x8000, scoped, tag = 'input window, operand 8, single buffered']
    #allocation3 [shape = 's32[1]{0}', space=sflag, size = 0x4, scoped, tag = 'scoped memory for rec_layer_forward.1']
    #allocation4 [shape = 's32[1]{0}', space=sflag, size = 0x4, scoped, tag = 'scoped memory for rec_layer_forward.1']
    #allocation5 [shape = 'u8[512]{0}', space=vmem, size = 0x400, scoped, tag = 'input window, operand 9, single buffered']
    #allocation6 [shape = 's32[1]{0}', space=sflag, size = 0x4, scoped, tag = 'scoped memory for rec_layer_forward.1']
    #allocation7 [shape = 'u8[512]{0}', space=vmem, size = 0x400, scoped, tag = 'input window, operand 10, single buffered']
    #allocation8 [shape = 'u8[512]{0}', space=vmem, size = 0x400, scoped, tag = 'input window, operand 11, single buffered']
    #allocation9 [shape = 's32[1]{0}', space=sflag, size = 0x4, scoped, tag = 'scoped memory for rec_layer_forward.1']
    #allocation10 [shape = 'u8[524288]{0}', space=vmem, size = 0x80000, scoped, tag = 'input window, operand 12, single buffered']
    #allocation11 [shape = 'u8[8192]{0}', space=vmem, size = 0x2000, scoped, tag = 'input window, operand 13, single buffered']
    #allocation12 [shape = 's32[1]{0}', space=sflag, size = 0x4, scoped, tag = 'scoped memory for rec_layer_forward.1']
    #allocation13 [shape = 'u8[524288]{0}', space=vmem, size = 0x80000, scoped, tag = 'input window, operand 14, single buffered']
    #allocation14 [shape = 'u8[512]{0}', space=vmem, size = 0x400, scoped, tag = 'input window, operand 15, single buffered']
    #allocation15 [shape = 's32[1]{0}', space=sflag, size = 0x4, scoped, tag = 'scoped memory for rec_layer_forward.1']
    #allocation16 [shape = 'u8[512]{0}', space=vmem, size = 0x400, scoped, tag = 'input window, operand 16, single buffered']
    #allocation17 [shape = 'u8[512]{0}', space=vmem, size = 0x400, scoped, tag = 'input window, operand 17, single buffered']
    #allocation18 [shape = 's32[1]{0}', space=sflag, size = 0x4, scoped, tag = 'scoped memory for rec_layer_forward.1']
    #allocation19 [shape = 'u8[1536]{0}', space=vmem, size = 0x800, scoped, tag = 'input window, operand 19, single buffered']
    #allocation20 [shape = 'u8[512]{0}', space=vmem, size = 0x400, scoped, tag = 'input window, operand 21, single buffered']
    #allocation21 [shape = 's32[1]{0}', space=sflag, size = 0x4, scoped, tag = 'scoped memory for rec_layer_forward.1']
    #allocation22 [shape = 'u8[512]{0}', space=vmem, size = 0x400, scoped, tag = 'input window, operand 22, single buffered']
    #allocation23 [shape = 'u8[512]{0}', space=vmem, size = 0x400, scoped, tag = 'input window, operand 23, single buffered']
    #allocation24 [shape = 's32[1]{0}', space=sflag, size = 0x4, scoped, tag = 'scoped memory for rec_layer_forward.1']
    #allocation25 [shape = 'u8[524288]{0}', space=vmem, size = 0x80000, scoped, tag = 'input window, operand 24, single buffered']
    #allocation26 [shape = 'u8[8192]{0}', space=vmem, size = 0x2000, scoped, tag = 'input window, operand 25, single buffered']
    #allocation27 [shape = 's32[1]{0}', space=sflag, size = 0x4, scoped, tag = 'scoped memory for rec_layer_forward.1']
    #allocation28 [shape = 'u8[524288]{0}', space=vmem, size = 0x80000, scoped, tag = 'input window, operand 26, single buffered']
    #allocation29 [shape = 'u8[512]{0}', space=vmem, size = 0x400, scoped, tag = 'input window, operand 27, single buffered']
    #allocation30 [shape = 's32[1]{0}', space=sflag, size = 0x4, scoped, tag = 'scoped memory for rec_layer_forward.1']
    #allocation31 [shape = 'u8[512]{0}', space=vmem, size = 0x400, scoped, tag = 'input window, operand 28, single buffered']
    #allocation32 [shape = 'u8[512]{0}', space=vmem, size = 0x400, scoped, tag = 'input window, operand 29, single buffered']
    #allocation33 [shape = 's32[1]{0}', space=sflag, size = 0x4, scoped, tag = 'scoped memory for rec_layer_forward.1']
    #allocation34 [shape = 'u8[65536]{0}', space=vmem, size = 0x10000, scoped, tag = 'input window, operand 32, single buffered']
    #allocation35 [shape = 'u8[1024]{0}', space=vmem, size = 0x400, scoped, tag = 'input window, operand 33, single buffered']
    #allocation36 [shape = 's32[1]{0}', space=sflag, size = 0x4, scoped, tag = 'scoped memory for rec_layer_forward.1']
    #allocation37 [shape = 'u8[2048]{0}', space=vmem, size = 0x800, scoped, tag = 'input window, operand 34, single buffered']
    #allocation38 [shape = 'u8[2048]{0}', space=vmem, size = 0x800, scoped, tag = 'output window, operand 0, single buffered']
    #allocation39 [shape = 'u8[2048]{0}', space=vmem, size = 0x800, scoped, tag = 'output window, operand 1, single buffered']
    #allocation40 [shape = 's32[1]{0}', space=sflag, size = 0x4, scoped, tag = 'scoped memory for rec_layer_forward.1']
    #allocation41 [shape = 'u8[512]{0}', space=vmem, size = 0x400, scoped, tag = 'output window, operand 2, single buffered']
    %81 = vsyncpa [#allocation3], 0
    %82 = vsyncpa [#allocation6], 0
    %83 = vsyncpa [#allocation9], 0
    %84 = vsyncpa [#allocation12], 0
    %85 = vsyncpa [#allocation15], 0
    %86 = vsyncpa [#allocation18], 0
    %87 = vsyncpa [#allocation21], 0
    %88 = vsyncpa [#allocation24], 0
    %89 = vsyncpa [#allocation27], 0
    %90 = vsyncpa [#allocation30], 0
    %91 = vsyncpa [#allocation33], 0
    %92 = vsyncpa [#allocation36], 0
    %93 = vsyncpa [#allocation4], 0
    %94 = vsyncpa [#allocation40], 0
    // Predicated region
    $region2: #{rec_layer_forward.1} parent=1 // pred_check
      _
    $region3: #{rec_layer_forward.1} parent=1 // pred_check_branch
      %96 = sbr.rel (0) target = $region5
    $region4: #{rec_layer_forward.1} parent=1 // pred_region
      _
    $region5: #{rec_layer_forward.1} parent=1 // pred_fallthru
      _
    // Predicated region
    $region6: #{rec_layer_forward.1} parent=1 // pred_check
      _
    $region7: #{rec_layer_forward.1} parent=1 // pred_check_branch
      %98 = sbr.rel (0) target = $region9
    $region8: #{rec_layer_forward.1} parent=1 // pred_region
      _
    $region9: #{rec_layer_forward.1} parent=1 // pred_fallthru
      _
    // Predicated region
    $region10: #{rec_layer_forward.1} parent=1 // pred_check
      _
    $region11: #{rec_layer_forward.1} parent=1 // pred_check_branch
      %100 = sbr.rel (0) target = $region13
    $region12: #{rec_layer_forward.1} parent=1 // pred_region
      _
    $region13: #{rec_layer_forward.1} parent=1 // pred_fallthru
      _
    // Predicated region
    $region14: #{rec_layer_forward.1} parent=1 // pred_check
      _
    $region15: #{rec_layer_forward.1} parent=1 // pred_check_branch
      %102 = sbr.rel (0) target = $region17
    $region16: #{rec_layer_forward.1} parent=1 // pred_region
      _
    $region17: #{rec_layer_forward.1} parent=1 // pred_fallthru
      _
    // Predicated region
    $region18: #{rec_layer_forward.1} parent=1 // pred_check
      _
    $region19: #{rec_layer_forward.1} parent=1 // pred_check_branch
      %104 = sbr.rel (0) target = $region21
    $region20: #{rec_layer_forward.1} parent=1 // pred_region
      _
    $region21: #{rec_layer_forward.1} parent=1 // pred_fallthru
      _
    // Predicated region
    $region22: #{rec_layer_forward.1} parent=1 // pred_check
      _
    $region23: #{rec_layer_forward.1} parent=1 // pred_check_branch
      %106 = sbr.rel (0) target = $region25
    $region24: #{rec_layer_forward.1} parent=1 // pred_region
      _
    $region25: #{rec_layer_forward.1} parent=1 // pred_fallthru
      _
    // Predicated region
    $region26: #{rec_layer_forward.1} parent=1 // pred_check
      _
    $region27: #{rec_layer_forward.1} parent=1 // pred_check_branch
      %108 = sbr.rel (0) target = $region29
    $region28: #{rec_layer_forward.1} parent=1 // pred_region
      _
    $region29: #{rec_layer_forward.1} parent=1 // pred_fallthru
      _
    // Predicated region
    $region30: #{rec_layer_forward.1} parent=1 // pred_check
      _
    $region31: #{rec_layer_forward.1} parent=1 // pred_check_branch
      %110 = sbr.rel (0) target = $region33
    $region32: #{rec_layer_forward.1} parent=1 // pred_region
      _
    $region33: #{rec_layer_forward.1} parent=1 // pred_fallthru
      _
    // Predicated region
    $region34: #{rec_layer_forward.1} parent=1 // pred_check
      _
    $region35: #{rec_layer_forward.1} parent=1 // pred_check_branch
      %112 = sbr.rel (0) target = $region37
    $region36: #{rec_layer_forward.1} parent=1 // pred_region
      %s114 = ssub.s32 1024, 1024
      %115 = vsyncadd [#allocation3], %s114
      %s116 = sshll.u32 [#allocation2], 4
      %s117 = int_to_ptr.vmem [resolvable:$true] %s116
      %122 = dma.hbm_to_vmem [thread:$0]  %s17, 1024, %s117, [#allocation3], 64, 64, 4
    $region37: #{rec_layer_forward.1} parent=1 // pred_fallthru
      _
    // Predicated region
    $region38: #{rec_layer_forward.1} parent=1 // pred_check
      _
    $region39: #{rec_layer_forward.1} parent=1 // pred_check_branch
      %124 = sbr.rel (0) target = $region41
    $region40: #{rec_layer_forward.1} parent=1 // pred_region
      %s126 = ssub.s32 16, 16
      %127 = vsyncadd [#allocation6], %s126
      %s129 = sshll.u32 [#allocation5], 4
      %s130 = int_to_ptr.vmem [resolvable:$true] %s129
      %132 = dma.hbm_to_vmem [thread:$0]  %s19, 16, %s130, [#allocation6]
    $region41: #{rec_layer_forward.1} parent=1 // pred_fallthru
      _
    // Predicated region
    $region42: #{rec_layer_forward.1} parent=1 // pred_check
      _
    $region43: #{rec_layer_forward.1} parent=1 // pred_check_branch
      %134 = sbr.rel (0) target = $region45
    $region44: #{rec_layer_forward.1} parent=1 // pred_region
      %s136 = ssub.s32 16, 16
      %137 = vsyncadd [#allocation6], %s136
      %s139 = sshll.u32 [#allocation7], 4
      %s140 = int_to_ptr.vmem [resolvable:$true] %s139
      %142 = dma.hbm_to_vmem [thread:$0]  %s21, 16, %s140, [#allocation6]
    $region45: #{rec_layer_forward.1} parent=1 // pred_fallthru
      _
    // Predicated region
    $region46: #{rec_layer_forward.1} parent=1 // pred_check
      _
    $region47: #{rec_layer_forward.1} parent=1 // pred_check_branch
      %144 = sbr.rel (0) target = $region49
    $region48: #{rec_layer_forward.1} parent=1 // pred_region
      %s146 = ssub.s32 16, 16
      %147 = vsyncadd [#allocation9], %s146
      %s149 = sshll.u32 [#allocation8], 4
      %s150 = int_to_ptr.vmem [resolvable:$true] %s149
      %152 = dma.hbm_to_vmem [thread:$0]  %s23, 16, %s150, [#allocation9]
    $region49: #{rec_layer_forward.1} parent=1 // pred_fallthru
      _
    // Predicated region
    $region50: #{rec_layer_forward.1} parent=1 // pred_check
      _
    $region51: #{rec_layer_forward.1} parent=1 // pred_check_branch
      %154 = sbr.rel (0) target = $region53
    $region52: #{rec_layer_forward.1} parent=1 // pred_region
      %s156 = ssub.s32 16384, 16384
      %157 = vsyncadd [#allocation9], %s156
      %s158 = sshll.u32 [#allocation10], 4
      %s159 = int_to_ptr.vmem [resolvable:$true] %s158
      %164 = dma.hbm_to_vmem [thread:$0]  %s25, 16384, %s159, [#allocation9], 1024, 1024, 64
    $region53: #{rec_layer_forward.1} parent=1 // pred_fallthru
      _
    // Predicated region
    $region54: #{rec_layer_forward.1} parent=1 // pred_check
      _
    $region55: #{rec_layer_forward.1} parent=1 // pred_check_branch
      %166 = sbr.rel (0) target = $region57
    $region56: #{rec_layer_forward.1} parent=1 // pred_region
      %s168 = ssub.s32 256, 256
      %169 = vsyncadd [#allocation12], %s168
      %s171 = sshll.u32 [#allocation11], 4
      %s172 = int_to_ptr.vmem [resolvable:$true] %s171
      %174 = dma.hbm_to_vmem [thread:$0]  %s27, 256, %s172, [#allocation12]
    $region57: #{rec_layer_forward.1} parent=1 // pred_fallthru
      _
    // Predicated region
    $region58: #{rec_layer_forward.1} parent=1 // pred_check
      _
    $region59: #{rec_layer_forward.1} parent=1 // pred_check_branch
      %176 = sbr.rel (0) target = $region61
    $region60: #{rec_layer_forward.1} parent=1 // pred_region
      %s178 = ssub.s32 16384, 16384
      %179 = vsyncadd [#allocation12], %s178
      %s180 = sshll.u32 [#allocation13], 4
      %s181 = int_to_ptr.vmem [resolvable:$true] %s180
      %186 = dma.hbm_to_vmem [thread:$0]  %s29, 16384, %s181, [#allocation12], 64, 64, 4
    $region61: #{rec_layer_forward.1} parent=1 // pred_fallthru
      _
    // Predicated region
    $region62: #{rec_layer_forward.1} parent=1 // pred_check
      _
    $region63: #{rec_layer_forward.1} parent=1 // pred_check_branch
      %188 = sbr.rel (0) target = $region65
    $region64: #{rec_layer_forward.1} parent=1 // pred_region
      %s190 = ssub.s32 16, 16
      %191 = vsyncadd [#allocation15], %s190
      %s193 = sshll.u32 [#allocation14], 4
      %s194 = int_to_ptr.vmem [resolvable:$true] %s193
      %196 = dma.hbm_to_vmem [thread:$0]  %s31, 16, %s194, [#allocation15]
    $region65: #{rec_layer_forward.1} parent=1 // pred_fallthru
      _
    // Predicated region
    $region66: #{rec_layer_forward.1} parent=1 // pred_check
      _
    $region67: #{rec_layer_forward.1} parent=1 // pred_check_branch
      %198 = sbr.rel (0) target = $region69
    $region68: #{rec_layer_forward.1} parent=1 // pred_region
      %s200 = ssub.s32 16, 16
      %201 = vsyncadd [#allocation15], %s200
      %s203 = sshll.u32 [#allocation16], 4
      %s204 = int_to_ptr.vmem [resolvable:$true] %s203
      %206 = dma.hbm_to_vmem [thread:$0]  %s33, 16, %s204, [#allocation15]
    $region69: #{rec_layer_forward.1} parent=1 // pred_fallthru
      _
    // Predicated region
    $region70: #{rec_layer_forward.1} parent=1 // pred_check
      _
    $region71: #{rec_layer_forward.1} parent=1 // pred_check_branch
      %208 = sbr.rel (0) target = $region73
    $region72: #{rec_layer_forward.1} parent=1 // pred_region
      %s210 = ssub.s32 16, 16
      %211 = vsyncadd [#allocation18], %s210
      %s213 = sshll.u32 [#allocation17], 4
      %s214 = int_to_ptr.vmem [resolvable:$true] %s213
      %216 = dma.hbm_to_vmem [thread:$0]  %s35, 16, %s214, [#allocation18]
    $region73: #{rec_layer_forward.1} parent=1 // pred_fallthru
      _
    // Predicated region
    $region74: #{rec_layer_forward.1} parent=1 // pred_check
      _
    $region75: #{rec_layer_forward.1} parent=1 // pred_check_branch
      %218 = sbr.rel (0) target = $region77
    $region76: #{rec_layer_forward.1} parent=1 // pred_region
      _
    $region77: #{rec_layer_forward.1} parent=1 // pred_fallthru
      _
    // Predicated region
    $region78: #{rec_layer_forward.1} parent=1 // pred_check
      _
    $region79: #{rec_layer_forward.1} parent=1 // pred_check_branch
      %220 = sbr.rel (0) target = $region81
    $region80: #{rec_layer_forward.1} parent=1 // pred_region
      %s222 = ssub.s32 48, 48
      %223 = vsyncadd [#allocation18], %s222
      %s225 = sshll.u32 [#allocation19], 4
      %s226 = int_to_ptr.vmem [resolvable:$true] %s225
      %228 = dma.hbm_to_vmem [thread:$0]  %s39, 48, %s226, [#allocation18]
    $region81: #{rec_layer_forward.1} parent=1 // pred_fallthru
      _
    // Predicated region
    $region82: #{rec_layer_forward.1} parent=1 // pred_check
      _
    $region83: #{rec_layer_forward.1} parent=1 // pred_check_branch
      %230 = sbr.rel (0) target = $region85
    $region84: #{rec_layer_forward.1} parent=1 // pred_region
      _
    $region85: #{rec_layer_forward.1} parent=1 // pred_fallthru
      _
    // Predicated region
    $region86: #{rec_layer_forward.1} parent=1 // pred_check
      _
    $region87: #{rec_layer_forward.1} parent=1 // pred_check_branch
      %232 = sbr.rel (0) target = $region89
    $region88: #{rec_layer_forward.1} parent=1 // pred_region
      %s234 = ssub.s32 16, 16
      %235 = vsyncadd [#allocation21], %s234
      %s237 = sshll.u32 [#allocation20], 4
      %s238 = int_to_ptr.vmem [resolvable:$true] %s237
      %240 = dma.hbm_to_vmem [thread:$0]  %s43, 16, %s238, [#allocation21]
    $region89: #{rec_layer_forward.1} parent=1 // pred_fallthru
      _
    // Predicated region
    $region90: #{rec_layer_forward.1} parent=1 // pred_check
      _
    $region91: #{rec_layer_forward.1} parent=1 // pred_check_branch
      %242 = sbr.rel (0) target = $region93
    $region92: #{rec_layer_forward.1} parent=1 // pred_region
      %s244 = ssub.s32 16, 16
      %245 = vsyncadd [#allocation21], %s244
      %s247 = sshll.u32 [#allocation22], 4
      %s248 = int_to_ptr.vmem [resolvable:$true] %s247
      %250 = dma.hbm_to_vmem [thread:$0]  %s45, 16, %s248, [#allocation21]
    $region93: #{rec_layer_forward.1} parent=1 // pred_fallthru
      _
    // Predicated region
    $region94: #{rec_layer_forward.1} parent=1 // pred_check
      _
    $region95: #{rec_layer_forward.1} parent=1 // pred_check_branch
      %252 = sbr.rel (0) target = $region97
    $region96: #{rec_layer_forward.1} parent=1 // pred_region
      %s254 = ssub.s32 16, 16
      %255 = vsyncadd [#allocation24], %s254
      %s257 = sshll.u32 [#allocation23], 4
      %s258 = int_to_ptr.vmem [resolvable:$true] %s257
      %260 = dma.hbm_to_vmem [thread:$0]  %s47, 16, %s258, [#allocation24]
    $region97: #{rec_layer_forward.1} parent=1 // pred_fallthru
      _
    // Predicated region
    $region98: #{rec_layer_forward.1} parent=1 // pred_check
      _
    $region99: #{rec_layer_forward.1} parent=1 // pred_check_branch
      %262 = sbr.rel (0) target = $region101
    $region100: #{rec_layer_forward.1} parent=1 // pred_region
      %s264 = ssub.s32 16384, 16384
      %265 = vsyncadd [#allocation24], %s264
      %s266 = sshll.u32 [#allocation25], 4
      %s267 = int_to_ptr.vmem [resolvable:$true] %s266
      %272 = dma.hbm_to_vmem [thread:$0]  %s49, 16384, %s267, [#allocation24], 1024, 1024, 64
    $region101: #{rec_layer_forward.1} parent=1 // pred_fallthru
      _
    // Predicated region
    $region102: #{rec_layer_forward.1} parent=1 // pred_check
      _
    $region103: #{rec_layer_forward.1} parent=1 // pred_check_branch
      %274 = sbr.rel (0) target = $region105
    $region104: #{rec_layer_forward.1} parent=1 // pred_region
      %s276 = ssub.s32 256, 256
      %277 = vsyncadd [#allocation27], %s276
      %s279 = sshll.u32 [#allocation26], 4
      %s280 = int_to_ptr.vmem [resolvable:$true] %s279
      %282 = dma.hbm_to_vmem [thread:$0]  %s51, 256, %s280, [#allocation27]
    $region105: #{rec_layer_forward.1} parent=1 // pred_fallthru
      _
    // Predicated region
    $region106: #{rec_layer_forward.1} parent=1 // pred_check
      _
    $region107: #{rec_layer_forward.1} parent=1 // pred_check_branch
      %284 = sbr.rel (0) target = $region109
    $region108: #{rec_layer_forward.1} parent=1 // pred_region
      %s286 = ssub.s32 16384, 16384
      %287 = vsyncadd [#allocation27], %s286
      %s288 = sshll.u32 [#allocation28], 4
      %s289 = int_to_ptr.vmem [resolvable:$true] %s288
      %294 = dma.hbm_to_vmem [thread:$0]  %s53, 16384, %s289, [#allocation27], 64, 64, 4
    $region109: #{rec_layer_forward.1} parent=1 // pred_fallthru
      _
    // Predicated region
    $region110: #{rec_layer_forward.1} parent=1 // pred_check
      _
    $region111: #{rec_layer_forward.1} parent=1 // pred_check_branch
      %296 = sbr.rel (0) target = $region113
    $region112: #{rec_layer_forward.1} parent=1 // pred_region
      %s298 = ssub.s32 16, 16
      %299 = vsyncadd [#allocation30], %s298
      %s301 = sshll.u32 [#allocation29], 4
      %s302 = int_to_ptr.vmem [resolvable:$true] %s301
      %304 = dma.hbm_to_vmem [thread:$0]  %s55, 16, %s302, [#allocation30]
    $region113: #{rec_layer_forward.1} parent=1 // pred_fallthru
      _
    // Predicated region
    $region114: #{rec_layer_forward.1} parent=1 // pred_check
      _
    $region115: #{rec_layer_forward.1} parent=1 // pred_check_branch
      %306 = sbr.rel (0) target = $region117
    $region116: #{rec_layer_forward.1} parent=1 // pred_region
      %s308 = ssub.s32 16, 16
      %309 = vsyncadd [#allocation30], %s308
      %s311 = sshll.u32 [#allocation31], 4
      %s312 = int_to_ptr.vmem [resolvable:$true] %s311
      %314 = dma.hbm_to_vmem [thread:$0]  %s57, 16, %s312, [#allocation30]
    $region117: #{rec_layer_forward.1} parent=1 // pred_fallthru
      _
    // Predicated region
    $region118: #{rec_layer_forward.1} parent=1 // pred_check
      _
    $region119: #{rec_layer_forward.1} parent=1 // pred_check_branch
      %316 = sbr.rel (0) target = $region121
    $region120: #{rec_layer_forward.1} parent=1 // pred_region
      %s318 = ssub.s32 16, 16
      %319 = vsyncadd [#allocation33], %s318
      %s321 = sshll.u32 [#allocation32], 4
      %s322 = int_to_ptr.vmem [resolvable:$true] %s321
      %324 = dma.hbm_to_vmem [thread:$0]  %s59, 16, %s322, [#allocation33]
    $region121: #{rec_layer_forward.1} parent=1 // pred_fallthru
      _
    // Predicated region
    $region122: #{rec_layer_forward.1} parent=1 // pred_check
      _
    $region123: #{rec_layer_forward.1} parent=1 // pred_check_branch
      %326 = sbr.rel (0) target = $region125
    $region124: #{rec_layer_forward.1} parent=1 // pred_region
      _
    $region125: #{rec_layer_forward.1} parent=1 // pred_fallthru
      _
    // Predicated region
    $region126: #{rec_layer_forward.1} parent=1 // pred_check
      _
    $region127: #{rec_layer_forward.1} parent=1 // pred_check_branch
      %328 = sbr.rel (0) target = $region129
    $region128: #{rec_layer_forward.1} parent=1 // pred_region
      _
    $region129: #{rec_layer_forward.1} parent=1 // pred_fallthru
      _
    // Predicated region
    $region130: #{rec_layer_forward.1} parent=1 // pred_check
      _
    $region131: #{rec_layer_forward.1} parent=1 // pred_check_branch
      %330 = sbr.rel (0) target = $region133
    $region132: #{rec_layer_forward.1} parent=1 // pred_region
      %s332 = ssub.s32 2048, 2048
      %333 = vsyncadd [#allocation33], %s332
      %s334 = sshll.u32 [#allocation34], 4
      %s335 = int_to_ptr.vmem [resolvable:$true] %s334
      %340 = dma.hbm_to_vmem [thread:$0]  %s65, 2048, %s335, [#allocation33], 128, 128, 8
    $region133: #{rec_layer_forward.1} parent=1 // pred_fallthru
      _
    // Predicated region
    $region134: #{rec_layer_forward.1} parent=1 // pred_check
      _
    $region135: #{rec_layer_forward.1} parent=1 // pred_check_branch
      %342 = sbr.rel (0) target = $region137
    $region136: #{rec_layer_forward.1} parent=1 // pred_region
      %s344 = ssub.s32 32, 32
      %345 = vsyncadd [#allocation36], %s344
      %s347 = sshll.u32 [#allocation35], 4
      %s348 = int_to_ptr.vmem [resolvable:$true] %s347
      %350 = dma.hbm_to_vmem [thread:$0]  %s67, 32, %s348, [#allocation36]
    $region137: #{rec_layer_forward.1} parent=1 // pred_fallthru
      _
    // Predicated region
    $region138: #{rec_layer_forward.1} parent=1 // pred_check
      _
    $region139: #{rec_layer_forward.1} parent=1 // pred_check_branch
      %352 = sbr.rel (0) target = $region141
    $region140: #{rec_layer_forward.1} parent=1 // pred_region
      %s354 = ssub.s32 64, 64
      %355 = vsyncadd [#allocation36], %s354
      %s357 = sshll.u32 [#allocation37], 4
      %s358 = int_to_ptr.vmem [resolvable:$true] %s357
      %360 = dma.hbm_to_vmem [thread:$0]  %s69, 64, %s358, [#allocation36]
    $region141: #{rec_layer_forward.1} parent=1 // pred_fallthru
      _
    // Predicated region
    $region142: #{rec_layer_forward.1} parent=1 // pred_check
      _
    $region143: #{rec_layer_forward.1} parent=1 // pred_check_branch
      %362 = sbr.rel (0) target = $region145
    $region144: #{rec_layer_forward.1} parent=1 // pred_region
      %363 = dma.done [#allocation3], 1024
    $region145: #{rec_layer_forward.1} parent=1 // pred_fallthru
      _
    // Predicated region
    $region146: #{rec_layer_forward.1} parent=1 // pred_check
      _
    $region147: #{rec_layer_forward.1} parent=1 // pred_check_branch
      %365 = sbr.rel (0) target = $region149
    $region148: #{rec_layer_forward.1} parent=1 // pred_region
      %366 = dma.done [#allocation6], 16
    $region149: #{rec_layer_forward.1} parent=1 // pred_fallthru
      _
    // Predicated region
    $region150: #{rec_layer_forward.1} parent=1 // pred_check
      _
    $region151: #{rec_layer_forward.1} parent=1 // pred_check_branch
      %368 = sbr.rel (0) target = $region153
    $region152: #{rec_layer_forward.1} parent=1 // pred_region
      %369 = dma.done [#allocation6], 16
    $region153: #{rec_layer_forward.1} parent=1 // pred_fallthru
      _
    // Predicated region
    $region154: #{rec_layer_forward.1} parent=1 // pred_check
      _
    $region155: #{rec_layer_forward.1} parent=1 // pred_check_branch
      %371 = sbr.rel (0) target = $region157
    $region156: #{rec_layer_forward.1} parent=1 // pred_region
      %372 = dma.done [#allocation9], 16
    $region157: #{rec_layer_forward.1} parent=1 // pred_fallthru
      _
    // Predicated region
    $region158: #{rec_layer_forward.1} parent=1 // pred_check
      _
    $region159: #{rec_layer_forward.1} parent=1 // pred_check_branch
      %374 = sbr.rel (0) target = $region161
    $region160: #{rec_layer_forward.1} parent=1 // pred_region
      %375 = dma.done [#allocation9], 16384
    $region161: #{rec_layer_forward.1} parent=1 // pred_fallthru
      _
    // Predicated region
    $region162: #{rec_layer_forward.1} parent=1 // pred_check
      _
    $region163: #{rec_layer_forward.1} parent=1 // pred_check_branch
      %377 = sbr.rel (0) target = $region165
    $region164: #{rec_layer_forward.1} parent=1 // pred_region
      %378 = dma.done [#allocation12], 256
    $region165: #{rec_layer_forward.1} parent=1 // pred_fallthru
      _
    // Predicated region
    $region166: #{rec_layer_forward.1} parent=1 // pred_check
      _
    $region167: #{rec_layer_forward.1} parent=1 // pred_check_branch
      %380 = sbr.rel (0) target = $region169
    $region168: #{rec_layer_forward.1} parent=1 // pred_region
      %381 = dma.done [#allocation12], 16384
    $region169: #{rec_layer_forward.1} parent=1 // pred_fallthru
      _
    // Predicated region
    $region170: #{rec_layer_forward.1} parent=1 // pred_check
      _
    $region171: #{rec_layer_forward.1} parent=1 // pred_check_branch
      %383 = sbr.rel (0) target = $region173
    $region172: #{rec_layer_forward.1} parent=1 // pred_region
      %384 = dma.done [#allocation15], 16
    $region173: #{rec_layer_forward.1} parent=1 // pred_fallthru
      _
    // Predicated region
    $region174: #{rec_layer_forward.1} parent=1 // pred_check
      _
    $region175: #{rec_layer_forward.1} parent=1 // pred_check_branch
      %386 = sbr.rel (0) target = $region177
    $region176: #{rec_layer_forward.1} parent=1 // pred_region
      %387 = dma.done [#allocation15], 16
    $region177: #{rec_layer_forward.1} parent=1 // pred_fallthru
      _
    // Predicated region
    $region178: #{rec_layer_forward.1} parent=1 // pred_check
      _
    $region179: #{rec_layer_forward.1} parent=1 // pred_check_branch
      %389 = sbr.rel (0) target = $region181
    $region180: #{rec_layer_forward.1} parent=1 // pred_region
      %390 = dma.done [#allocation18], 16
    $region181: #{rec_layer_forward.1} parent=1 // pred_fallthru
      _
    // Predicated region
    $region182: #{rec_layer_forward.1} parent=1 // pred_check
      _
    $region183: #{rec_layer_forward.1} parent=1 // pred_check_branch
      %392 = sbr.rel (0) target = $region185
    $region184: #{rec_layer_forward.1} parent=1 // pred_region
      %393 = dma.done [#allocation18], 48
    $region185: #{rec_layer_forward.1} parent=1 // pred_fallthru
      _
    // Predicated region
    $region186: #{rec_layer_forward.1} parent=1 // pred_check
      _
    $region187: #{rec_layer_forward.1} parent=1 // pred_check_branch
      %395 = sbr.rel (0) target = $region189
    $region188: #{rec_layer_forward.1} parent=1 // pred_region
      %396 = dma.done [#allocation21], 16
    $region189: #{rec_layer_forward.1} parent=1 // pred_fallthru
      _
    // Predicated region
    $region190: #{rec_layer_forward.1} parent=1 // pred_check
      _
    $region191: #{rec_layer_forward.1} parent=1 // pred_check_branch
      %398 = sbr.rel (0) target = $region193
    $region192: #{rec_layer_forward.1} parent=1 // pred_region
      %399 = dma.done [#allocation21], 16
    $region193: #{rec_layer_forward.1} parent=1 // pred_fallthru
      _
    // Predicated region
    $region194: #{rec_layer_forward.1} parent=1 // pred_check
      _
    $region195: #{rec_layer_forward.1} parent=1 // pred_check_branch
      %401 = sbr.rel (0) target = $region197
    $region196: #{rec_layer_forward.1} parent=1 // pred_region
      %402 = dma.done [#allocation24], 16
    $region197: #{rec_layer_forward.1} parent=1 // pred_fallthru
      _
    // Predicated region
    $region198: #{rec_layer_forward.1} parent=1 // pred_check
      _
    $region199: #{rec_layer_forward.1} parent=1 // pred_check_branch
      %404 = sbr.rel (0) target = $region201
    $region200: #{rec_layer_forward.1} parent=1 // pred_region
      %405 = dma.done [#allocation24], 16384
    $region201: #{rec_layer_forward.1} parent=1 // pred_fallthru
      _
    // Predicated region
    $region202: #{rec_layer_forward.1} parent=1 // pred_check
      _
    $region203: #{rec_layer_forward.1} parent=1 // pred_check_branch
      %407 = sbr.rel (0) target = $region205
    $region204: #{rec_layer_forward.1} parent=1 // pred_region
      %408 = dma.done [#allocation27], 256
    $region205: #{rec_layer_forward.1} parent=1 // pred_fallthru
      _
    // Predicated region
    $region206: #{rec_layer_forward.1} parent=1 // pred_check
      _
    $region207: #{rec_layer_forward.1} parent=1 // pred_check_branch
      %410 = sbr.rel (0) target = $region209
    $region208: #{rec_layer_forward.1} parent=1 // pred_region
      %411 = dma.done [#allocation27], 16384
    $region209: #{rec_layer_forward.1} parent=1 // pred_fallthru
      _
    // Predicated region
    $region210: #{rec_layer_forward.1} parent=1 // pred_check
      _
    $region211: #{rec_layer_forward.1} parent=1 // pred_check_branch
      %413 = sbr.rel (0) target = $region213
    $region212: #{rec_layer_forward.1} parent=1 // pred_region
      %414 = dma.done [#allocation30], 16
    $region213: #{rec_layer_forward.1} parent=1 // pred_fallthru
      _
    // Predicated region
    $region214: #{rec_layer_forward.1} parent=1 // pred_check
      _
    $region215: #{rec_layer_forward.1} parent=1 // pred_check_branch
      %416 = sbr.rel (0) target = $region217
    $region216: #{rec_layer_forward.1} parent=1 // pred_region
      %417 = dma.done [#allocation30], 16
    $region217: #{rec_layer_forward.1} parent=1 // pred_fallthru
      _
    // Predicated region
    $region218: #{rec_layer_forward.1} parent=1 // pred_check
      _
    $region219: #{rec_layer_forward.1} parent=1 // pred_check_branch
      %419 = sbr.rel (0) target = $region221
    $region220: #{rec_layer_forward.1} parent=1 // pred_region
      %420 = dma.done [#allocation33], 16
    $region221: #{rec_layer_forward.1} parent=1 // pred_fallthru
      _
    // Predicated region
    $region222: #{rec_layer_forward.1} parent=1 // pred_check
      _
    $region223: #{rec_layer_forward.1} parent=1 // pred_check_branch
      %422 = sbr.rel (0) target = $region225
    $region224: #{rec_layer_forward.1} parent=1 // pred_region
      %423 = dma.done [#allocation33], 2048
    $region225: #{rec_layer_forward.1} parent=1 // pred_fallthru
      _
    // Predicated region
    $region226: #{rec_layer_forward.1} parent=1 // pred_check
      _
    $region227: #{rec_layer_forward.1} parent=1 // pred_check_branch
      %425 = sbr.rel (0) target = $region229
    $region228: #{rec_layer_forward.1} parent=1 // pred_region
      %426 = dma.done [#allocation36], 32
    $region229: #{rec_layer_forward.1} parent=1 // pred_fallthru
      _
    // Predicated region
    $region230: #{rec_layer_forward.1} parent=1 // pred_check
      _
    $region231: #{rec_layer_forward.1} parent=1 // pred_check_branch
      %428 = sbr.rel (0) target = $region233
    $region232: #{rec_layer_forward.1} parent=1 // pred_region
      %429 = dma.done [#allocation36], 64
    $region233: #{rec_layer_forward.1} parent=1 // pred_fallthru
      _
    %v431 = vld [vmem:[%s1] sm:$0xff]
    %v432 = vld [vmem:[%s1 + $0x8] sm:$0xff]
    %v433 = vld [vmem:[%s3] sm:$0xff]
    %v434 = vld [vmem:[%s3 + $0x8] sm:$0xff]
    %v435 = vpack.c.bf16 %v432, %v431
    %v436 = vld [vmem:[%s13] sm:$0xff]
    %v437 = vld [vmem:[%s13 + $0x8] sm:$0xf]
    %v438 = vld [vmem:[%s13 + $0xc] sm:$0xff]
    %v439 = vld [vmem:[%s13 + $0x14] sm:$0xf]
    %v440 = vld [vmem:[%s13 + $0x18] sm:$0xff]
    %v441 = vld [vmem:[%s13 + $0x20] sm:$0xf]
    %v442 = vld [vmem:[%s13 + $0x24] sm:$0xff]
    %v443 = vld [vmem:[%s13 + $0x2c] sm:$0xf]
    %v444 = vld [vmem:[%s13 + $0x30] sm:$0xff]
    %v445 = vld [vmem:[%s13 + $0x38] sm:$0xf]
    %v446 = vld [vmem:[%s13 + $0x3c] sm:$0xff]
    %v447 = vld [vmem:[%s13 + $0x44] sm:$0xf]
    %v448 = vld [vmem:[%s13 + $0x48] sm:$0xff]
    %v449 = vld [vmem:[%s13 + $0x50] sm:$0xf]
    %v450 = vld [vmem:[%s13 + $0x54] sm:$0xff]
    %v451 = vld [vmem:[%s13 + $0x5c] sm:$0xf]
    %v452 = vld [vmem:[%s13 + $0x60] sm:$0xff]
    %v453 = vld [vmem:[%s13 + $0x68] sm:$0xf]
    %v454 = vld [vmem:[%s13 + $0x6c] sm:$0xff]
    %v455 = vld [vmem:[%s13 + $0x74] sm:$0xf]
    %v456 = vld [vmem:[%s13 + $0x78] sm:$0xff]
    %v457 = vld [vmem:[%s13 + $0x80] sm:$0xf]
    %v458 = vld [vmem:[%s13 + $0x84] sm:$0xff]
    %v459 = vld [vmem:[%s13 + $0x8c] sm:$0xf]
    %v460 = vld [vmem:[%s13 + $0x90] sm:$0xff]
    %v461 = vld [vmem:[%s13 + $0x98] sm:$0xf]
    %v462 = vld [vmem:[%s13 + $0x9c] sm:$0xff]
    %v463 = vld [vmem:[%s13 + $0xa4] sm:$0xf]
    %v464 = vld [vmem:[%s13 + $0xa8] sm:$0xff]
    %v465 = vld [vmem:[%s13 + $0xb0] sm:$0xf]
    %v466 = vld [vmem:[%s13 + $0xb4] sm:$0xff]
    %v467 = vld [vmem:[%s13 + $0xbc] sm:$0xf]
    %v468 = vld [vmem:[%s15] sm:$0x7]
    %v470 = vlaneseq
    %v471 = vshrl.u32 %v470, 7
    %v472 = vsub.s32 0, %v471
    %v473 = vrot.slane %v468, %v472
    %v474 = vlaneseq
    %v475 = vshrl.u32 %v474, 7
    %v476 = vsub.s32 1, %v475
    %v477 = vrot.slane %v468, %v476
    %v478 = vlaneseq
    %v479 = vshrl.u32 %v478, 7
    %v480 = vsub.s32 2, %v479
    %v481 = vrot.slane %v468, %v480
    %v517 = vunpack.c.l.b16 %v436
    %v518 = vunpack.c.h.b16 %v436
    %v519 = vunpack.c.l.b16 %v437
    %v520 = vunpack.c.l.b16 %v438
    %v521 = vunpack.c.h.b16 %v438
    %v522 = vunpack.c.l.b16 %v439
    %v523 = vunpack.c.l.b16 %v440
    %v524 = vunpack.c.h.b16 %v440
    %v525 = vunpack.c.l.b16 %v441
    %v526 = vunpack.c.l.b16 %v442
    %v527 = vunpack.c.h.b16 %v442
    %v528 = vunpack.c.l.b16 %v443
    %v529 = vunpack.c.l.b16 %v444
    %v530 = vunpack.c.h.b16 %v444
    %v531 = vunpack.c.l.b16 %v445
    %v532 = vunpack.c.l.b16 %v446
    %v533 = vunpack.c.h.b16 %v446
    %v534 = vunpack.c.l.b16 %v447
    %v535 = vunpack.c.l.b16 %v448
    %v536 = vunpack.c.h.b16 %v448
    %v537 = vunpack.c.l.b16 %v449
    %v538 = vunpack.c.l.b16 %v450
    %v539 = vunpack.c.h.b16 %v450
    %v540 = vunpack.c.l.b16 %v451
    %v541 = vunpack.c.l.b16 %v452
    %v542 = vunpack.c.h.b16 %v452
    %v543 = vunpack.c.l.b16 %v453
    %v544 = vunpack.c.l.b16 %v454
    %v545 = vunpack.c.h.b16 %v454
    %v546 = vunpack.c.l.b16 %v455
    %v547 = vunpack.c.l.b16 %v456
    %v548 = vunpack.c.h.b16 %v456
    %v549 = vunpack.c.l.b16 %v457
    %v550 = vunpack.c.l.b16 %v458
    %v551 = vunpack.c.h.b16 %v458
    %v552 = vunpack.c.l.b16 %v459
    %v553 = vunpack.c.l.b16 %v460
    %v554 = vunpack.c.h.b16 %v460
    %v555 = vunpack.c.l.b16 %v461
    %v556 = vunpack.c.l.b16 %v462
    %v557 = vunpack.c.h.b16 %v462
    %v558 = vunpack.c.l.b16 %v463
    %v559 = vunpack.c.l.b16 %v464
    %v560 = vunpack.c.h.b16 %v464
    %v561 = vunpack.c.l.b16 %v465
    %v562 = vunpack.c.l.b16 %v466
    %v563 = vunpack.c.h.b16 %v466
    %v564 = vunpack.c.l.b16 %v467
    %v565 = vpack.c.b16 %v520, %v517
    %v566 = vpack.c.b16 %v521, %v518
    %v567 = vpack.c.b16 %v522, %v519
    %v568 = vpack.c.b16 %v526, %v523
    %v569 = vpack.c.b16 %v527, %v524
    %v570 = vpack.c.b16 %v528, %v525
    %v571 = vpack.c.b16 %v532, %v529
    %v572 = vpack.c.b16 %v533, %v530
    %v573 = vpack.c.b16 %v534, %v531
    %v574 = vpack.c.b16 %v538, %v535
    %v575 = vpack.c.b16 %v539, %v536
    %v576 = vpack.c.b16 %v540, %v537
    %v577 = vpack.c.b16 %v544, %v541
    %v578 = vpack.c.b16 %v545, %v542
    %v579 = vpack.c.b16 %v546, %v543
    %v580 = vpack.c.b16 %v550, %v547
    %v581 = vpack.c.b16 %v551, %v548
    %v582 = vpack.c.b16 %v552, %v549
    %v583 = vpack.c.b16 %v556, %v553
    %v584 = vpack.c.b16 %v557, %v554
    %v585 = vpack.c.b16 %v558, %v555
    %v586 = vpack.c.b16 %v562, %v559
    %v587 = vpack.c.b16 %v563, %v560
    %v588 = vpack.c.b16 %v564, %v561
    %613 = vmatprep.subr.bf16.mxu0 %v566
    %614 = vmatpush1.bf16.msra.mxu0 %v565
    %615 = vmatprep.subr.bf16.mxu0 %v569
    %616 = vmatpush1.bf16.msra.mxu0 %v568
    %617 = vmatprep.subr.bf16.mxu0 %v572
    %618 = vmatpush1.bf16.msra.mxu0 %v571
    %619 = vmatprep.subr.bf16.mxu0 %v575
    %620 = vmatpush1.bf16.msra.mxu0 %v574
    %621 = vmatprep.subr.bf16.mxu0 %v578
    %622 = vmatpush1.bf16.msra.mxu0 %v577
    %623 = vmatprep.subr.bf16.mxu0 %v581
    %624 = vmatpush1.bf16.msra.mxu0 %v580
    %625 = vmatprep.subr.bf16.mxu0 %v584
    %626 = vmatpush1.bf16.msra.mxu0 %v583
    %627 = vmatprep.subr.bf16.mxu0 %v587
    %628 = vmatpush1.bf16.msra.mxu0 %v586
    %629 = vmatprep.subr.bf16.mxu0 0
    %630 = vmatpush1.bf16.msra.mxu0 0
    %631 = vmatprep.subr.bf16.mxu0 0
    %632 = vmatpush1.bf16.msra.mxu0 0
    %633 = vmatprep.subr.bf16.mxu0 0
    %634 = vmatpush1.bf16.msra.mxu0 0
    %635 = vmatprep.subr.bf16.mxu0 0
    %636 = vmatpush1.bf16.msra.mxu0 0
    %637 = vmatprep.subr.bf16.mxu0 0
    %638 = vmatpush1.bf16.msra.mxu0 0
    %639 = vmatprep.subr.bf16.mxu0 0
    %640 = vmatpush1.bf16.msra.mxu0 0
    %641 = vmatprep.subr.bf16.mxu0 0
    %642 = vmatpush1.bf16.msra.mxu0 0
    %643 = vmatprep.subr.bf16.mxu0 0
    %644 = vmatpush1.bf16.msra.mxu0 0
    %645 = vmatprep.mubr.bf16.mxu0 0
    %646 = vmatmul.mubr.bf16.gmra.mrb[0].mxu0 %v435
    %v647 = vpop.f32.mrb[0].mxu0
    %v648 = vadd.f32 %v473, %v647
    %v649 = vpop.f32.mrb[0].mxu0
    %v650 = vadd.f32 %v477, %v649
    %v651 = vpop.f32.mrb[0].mxu0
    %v652 = vadd.f32 %v473, %v651
    %v653 = vpop.f32.mrb[0].mxu0
    %v654 = vadd.f32 %v477, %v653
    %655 = vdwg.mxu0
    %656 = vmatprep.subr.bf16.mxu0 0
    %657 = vmatpush1.bf16.msra.mxu0 %v567
    %658 = vmatprep.subr.bf16.mxu0 0
    %659 = vmatpush1.bf16.msra.mxu0 %v570
    %660 = vmatprep.subr.bf16.mxu0 0
    %661 = vmatpush1.bf16.msra.mxu0 %v573
    %662 = vmatprep.subr.bf16.mxu0 0
    %663 = vmatpush1.bf16.msra.mxu0 %v576
    %664 = vmatprep.subr.bf16.mxu0 0
    %665 = vmatpush1.bf16.msra.mxu0 %v579
    %666 = vmatprep.subr.bf16.mxu0 0
    %667 = vmatpush1.bf16.msra.mxu0 %v582
    %668 = vmatprep.subr.bf16.mxu0 0
    %669 = vmatpush1.bf16.msra.mxu0 %v585
    %670 = vmatprep.subr.bf16.mxu0 0
    %671 = vmatpush1.bf16.msra.mxu0 %v588
    %672 = vmatprep.subr.bf16.mxu0 0
    %673 = vmatpush1.bf16.msra.mxu0 0
    %674 = vmatprep.subr.bf16.mxu0 0
    %675 = vmatpush1.bf16.msra.mxu0 0
    %676 = vmatprep.subr.bf16.mxu0 0
    %677 = vmatpush1.bf16.msra.mxu0 0
    %678 = vmatprep.subr.bf16.mxu0 0
    %679 = vmatpush1.bf16.msra.mxu0 0
    %680 = vmatprep.subr.bf16.mxu0 0
    %681 = vmatpush1.bf16.msra.mxu0 0
    %682 = vmatprep.subr.bf16.mxu0 0
    %683 = vmatpush1.bf16.msra.mxu0 0
    %684 = vmatprep.subr.bf16.mxu0 0
    %685 = vmatpush1.bf16.msra.mxu0 0
    %686 = vmatprep.subr.bf16.mxu0 0
    %687 = vmatpush1.bf16.msra.mxu0 0
    %688 = vmatprep.mubr.bf16.mxu0 0
    %689 = vmatmul.mubr.bf16.gmra.mrb[0].mxu0 %v435
    %v690 = vpop.f32.mrb[0].mxu0
    %v691 = vadd.f32 %v481, %v690
    %v692 = vpop.f32.mrb[0].mxu0
    %v693 = vpop.f32.mrb[0].mxu0
    %v694 = vadd.f32 %v481, %v693
    %v695 = vpop.f32.mrb[0].mxu0
    %696 = vdwg.mxu0
    %v697 = vpack.c.bf16 %v652, %v648
    %v698 = vpack.c.bf16 %v654, %v650
    %v699 = vpack.c.bf16 %v694, %v691
    %vm700 = vcmask 261120
    %v702 = vsel %vm700, %v697, 0
    %v705 = vsel %vm700, %v698, 0
    %707 = vmatprep.subr.bf16.mxu0 0
    %708 = vmatpush1.bf16.xpose.msra.mxu0 %v705
    %709 = vmatprep.subr.bf16.mxu0 0
    %710 = vmatpush1.bf16.xpose.msra.mxu0 0
    %711 = vmatprep.subr.bf16.mxu0 0
    %712 = vmatpush1.bf16.xpose.msra.mxu0 0
    %713 = vmatprep.subr.bf16.mxu0 0
    %714 = vmatpush1.bf16.xpose.msra.mxu0 0
    %715 = vmatprep.subr.bf16.mxu0 0
    %716 = vmatpush1.bf16.xpose.msra.mxu0 0
    %717 = vmatprep.subr.bf16.mxu0 0
    %718 = vmatpush1.bf16.xpose.msra.mxu0 0
    %719 = vmatprep.subr.bf16.mxu0 0
    %720 = vmatpush1.bf16.xpose.msra.mxu0 0
    %721 = vmatprep.subr.bf16.mxu0 0
    %722 = vmatpush1.bf16.xpose.msra.mxu0 0
    %723 = vmatprep.subr.bf16.mxu0 0
    %724 = vmatpush1.bf16.xpose.msra.mxu0 0
    %725 = vmatprep.subr.bf16.mxu0 0
    %726 = vmatpush1.bf16.xpose.msra.mxu0 0
    %727 = vmatprep.subr.bf16.mxu0 0
    %728 = vmatpush1.bf16.xpose.msra.mxu0 0
    %729 = vmatprep.subr.bf16.mxu0 0
    %730 = vmatpush1.bf16.xpose.msra.mxu0 0
    %731 = vmatprep.subr.bf16.mxu0 0
    %732 = vmatpush1.bf16.xpose.msra.mxu0 0
    %733 = vmatprep.subr.bf16.mxu0 0
    %734 = vmatpush1.bf16.xpose.msra.mxu0 0
    %735 = vmatprep.subr.bf16.mxu0 0
    %736 = vmatpush1.bf16.xpose.msra.mxu0 0
    %737 = vmatprep.subr.bf16.mxu0 0
    %738 = vmatpush1.bf16.xpose.msra.mxu0 0
    %739 = vmatprep.mubr.bf16.mxu0 0
    %740 = vmatmul.mubr.bf16.gmra.mrb[0].mxu0 %v702
    %v741 = vpop.f32.mrb[0].mxu0
    %v742 = vadd.f32 %v433, %v741
    %v743 = vpop.f32.mrb[0].mxu0
    %v744 = vpop.f32.mrb[0].mxu0
    %v745 = vadd.f32 %v434, %v744
    %v746 = vpop.f32.mrb[0].mxu0
    %747 = vdwg.mxu0
    %vm748 = vcmask 130048
    %v749 = vsel %vm748, %v742, -inf
    %750 = vmax.xlane.f32.xlu0 %v749
    %v751 = vpop.xlane.xlu0 %750
    %v752 = vsel %vm748, %v745, -inf
    %753 = vmax.xlane.f32.xlu0 %v752
    %v754 = vpop.xlane.xlu0 %753
    %v755 = vsub.f32 %v742, %v751
    %v756 = vsub.f32 %v745, %v754
    %v757 = vmul.f32 %v755, 1.442695
    %v758 = vpow.pop %v757
    %v759 = vmul.f32 %v756, 1.442695
    %v760 = vpow.pop %v759
    %v761 = vsel %vm748, %v758, 0.0
    %762 = vadd.xlane.f32.xlu0 %v761
    %v763 = vpop.xlane.xlu0 %762
    %v764 = vsel %vm748, %v760, 0.0
    %765 = vadd.xlane.f32.xlu0 %v764
    %v766 = vpop.xlane.xlu0 %765
    %v767 = vrcp.pop %v763
    %v768 = vrcp.pop %v766
    %v769 = vmul.f32 %v758, %v767
    %v770 = vmul.f32 %v760, %v768
    %v771 = vpack.c.bf16 %v770, %v769
    %v773 = vsel %vm748, %v771, 0
    %775 = vmatprep.subr.bf16.mxu0 0
    %776 = vmatpush1.bf16.msra.mxu0 %v699
    %777 = vmatprep.subr.bf16.mxu0 0
    %778 = vmatpush1.bf16.msra.mxu0 0
    %779 = vmatprep.subr.bf16.mxu0 0
    %780 = vmatpush1.bf16.msra.mxu0 0
    %781 = vmatprep.subr.bf16.mxu0 0
    %782 = vmatpush1.bf16.msra.mxu0 0
    %783 = vmatprep.subr.bf16.mxu0 0
    %784 = vmatpush1.bf16.msra.mxu0 0
    %785 = vmatprep.subr.bf16.mxu0 0
    %786 = vmatpush1.bf16.msra.mxu0 0
    %787 = vmatprep.subr.bf16.mxu0 0
    %788 = vmatpush1.bf16.msra.mxu0 0
    %789 = vmatprep.subr.bf16.mxu0 0
    %790 = vmatpush1.bf16.msra.mxu0 0
    %791 = vmatprep.subr.bf16.mxu0 0
    %792 = vmatpush1.bf16.msra.mxu0 0
    %793 = vmatprep.subr.bf16.mxu0 0
    %794 = vmatpush1.bf16.msra.mxu0 0
    %795 = vmatprep.subr.bf16.mxu0 0
    %796 = vmatpush1.bf16.msra.mxu0 0
    %797 = vmatprep.subr.bf16.mxu0 0
    %798 = vmatpush1.bf16.msra.mxu0 0
    %799 = vmatprep.subr.bf16.mxu0 0
    %800 = vmatpush1.bf16.msra.mxu0 0
    %801 = vmatprep.subr.bf16.mxu0 0
    %802 = vmatpush1.bf16.msra.mxu0 0
    %803 = vmatprep.subr.bf16.mxu0 0
    %804 = vmatpush1.bf16.msra.mxu0 0
    %805 = vmatprep.subr.bf16.mxu0 0
    %806 = vmatpush1.bf16.msra.mxu0 0
    %807 = vmatprep.mubr.bf16.mxu0 0
    %808 = vmatmul.mubr.bf16.gmra.mrb[0].mxu0 %v773
    %v809 = vpop.f32.mrb[0].mxu0
    %v810 = vadd.f32 0.0, %v809
    %v811 = vpop.f32.mrb[0].mxu0
    %v812 = vpop.f32.mrb[0].mxu0
    %v813 = vadd.f32 0.0, %v812
    %v814 = vpop.f32.mrb[0].mxu0
    %815 = vdwg.mxu0
    %v816 = vpack.c.bf16 %v813, %v810
    %v817 = vld [vmem:[#allocation2] sm:$0xf]
    %v818 = vld [vmem:[#allocation2 + $0x4] sm:$0xf]
    %v819 = vld [vmem:[#allocation2 + $0x8] sm:$0xf]
    %v820 = vld [vmem:[#allocation2 + $0xc] sm:$0xf]
    %822 = vrot.lane.b32.xlu0 %v697, 96
    %v823 = vpop.permute.xlu0 %822
    %825 = vrot.lane.b32.xlu0 %v698, 96
    %v826 = vpop.permute.xlu0 %825
    %v828 = vsel %vm700, %v823, 0
    %v831 = vsel %vm700, %v826, 0
    %833 = vmatprep.subr.bf16.mxu0 0
    %834 = vmatpush1.bf16.xpose.msra.mxu0 %v831
    %835 = vmatprep.subr.bf16.mxu0 0
    %836 = vmatpush1.bf16.xpose.msra.mxu0 0
    %837 = vmatprep.subr.bf16.mxu0 0
    %838 = vmatpush1.bf16.xpose.msra.mxu0 0
    %839 = vmatprep.subr.bf16.mxu0 0
    %840 = vmatpush1.bf16.xpose.msra.mxu0 0
    %841 = vmatprep.subr.bf16.mxu0 0
    %842 = vmatpush1.bf16.xpose.msra.mxu0 0
    %843 = vmatprep.subr.bf16.mxu0 0
    %844 = vmatpush1.bf16.xpose.msra.mxu0 0
    %845 = vmatprep.subr.bf16.mxu0 0
    %846 = vmatpush1.bf16.xpose.msra.mxu0 0
    %847 = vmatprep.subr.bf16.mxu0 0
    %848 = vmatpush1.bf16.xpose.msra.mxu0 0
    %849 = vmatprep.subr.bf16.mxu0 0
    %850 = vmatpush1.bf16.xpose.msra.mxu0 0
    %851 = vmatprep.subr.bf16.mxu0 0
    %852 = vmatpush1.bf16.xpose.msra.mxu0 0
    %853 = vmatprep.subr.bf16.mxu0 0
    %854 = vmatpush1.bf16.xpose.msra.mxu0 0
    %855 = vmatprep.subr.bf16.mxu0 0
    %856 = vmatpush1.bf16.xpose.msra.mxu0 0
    %857 = vmatprep.subr.bf16.mxu0 0
    %858 = vmatpush1.bf16.xpose.msra.mxu0 0
    %859 = vmatprep.subr.bf16.mxu0 0
    %860 = vmatpush1.bf16.xpose.msra.mxu0 0
    %861 = vmatprep.subr.bf16.mxu0 0
    %862 = vmatpush1.bf16.xpose.msra.mxu0 0
    %863 = vmatprep.subr.bf16.mxu0 0
    %864 = vmatpush1.bf16.xpose.msra.mxu0 0
    %865 = vmatprep.mubr.bf16.mxu0 0
    %866 = vmatmul.mubr.bf16.gmra.mrb[0].mxu0 %v828
    %v867 = vpop.f32.mrb[0].mxu0
    %v868 = vadd.f32 %v433, %v867
    %v869 = vpop.f32.mrb[0].mxu0
    %v870 = vpop.f32.mrb[0].mxu0
    %v871 = vadd.f32 %v434, %v870
    %v872 = vpop.f32.mrb[0].mxu0
    %873 = vdwg.mxu0
    %v874 = vsel %vm748, %v868, -inf
    %875 = vmax.xlane.f32.xlu0 %v874
    %v876 = vpop.xlane.xlu0 %875
    %v877 = vsel %vm748, %v871, -inf
    %878 = vmax.xlane.f32.xlu0 %v877
    %v879 = vpop.xlane.xlu0 %878
    %v880 = vsub.f32 %v868, %v876
    %v881 = vsub.f32 %v871, %v879
    %v882 = vmul.f32 %v880, 1.442695
    %v883 = vpow.pop %v882
    %v884 = vmul.f32 %v881, 1.442695
    %v885 = vpow.pop %v884
    %v886 = vsel %vm748, %v883, 0.0
    %887 = vadd.xlane.f32.xlu0 %v886
    %v888 = vpop.xlane.xlu0 %887
    %v889 = vsel %vm748, %v885, 0.0
    %890 = vadd.xlane.f32.xlu0 %v889
    %v891 = vpop.xlane.xlu0 %890
    %v892 = vrcp.pop %v888
    %v893 = vrcp.pop %v891
    %v894 = vmul.f32 %v883, %v892
    %v895 = vmul.f32 %v885, %v893
    %v896 = vpack.c.bf16 %v895, %v894
    %898 = vrot.lane.b32.xlu0 %v699, 96
    %v899 = vpop.permute.xlu0 %898
    %v902 = vsel %vm748, %v896, 0
    %904 = vmatprep.subr.bf16.mxu0 0
    %905 = vmatpush1.bf16.msra.mxu0 %v899
    %906 = vmatprep.subr.bf16.mxu0 0
    %907 = vmatpush1.bf16.msra.mxu0 0
    %908 = vmatprep.subr.bf16.mxu0 0
    %909 = vmatpush1.bf16.msra.mxu0 0
    %910 = vmatprep.subr.bf16.mxu0 0
    %911 = vmatpush1.bf16.msra.mxu0 0
    %912 = vmatprep.subr.bf16.mxu0 0
    %913 = vmatpush1.bf16.msra.mxu0 0
    %914 = vmatprep.subr.bf16.mxu0 0
    %915 = vmatpush1.bf16.msra.mxu0 0
    %916 = vmatprep.subr.bf16.mxu0 0
    %917 = vmatpush1.bf16.msra.mxu0 0
    %918 = vmatprep.subr.bf16.mxu0 0
    %919 = vmatpush1.bf16.msra.mxu0 0
    %920 = vmatprep.subr.bf16.mxu0 0
    %921 = vmatpush1.bf16.msra.mxu0 0
    %922 = vmatprep.subr.bf16.mxu0 0
    %923 = vmatpush1.bf16.msra.mxu0 0
    %924 = vmatprep.subr.bf16.mxu0 0
    %925 = vmatpush1.bf16.msra.mxu0 0
    %926 = vmatprep.subr.bf16.mxu0 0
    %927 = vmatpush1.bf16.msra.mxu0 0
    %928 = vmatprep.subr.bf16.mxu0 0
    %929 = vmatpush1.bf16.msra.mxu0 0
    %930 = vmatprep.subr.bf16.mxu0 0
    %931 = vmatpush1.bf16.msra.mxu0 0
    %932 = vmatprep.subr.bf16.mxu0 0
    %933 = vmatpush1.bf16.msra.mxu0 0
    %934 = vmatprep.subr.bf16.mxu0 0
    %935 = vmatpush1.bf16.msra.mxu0 0
    %936 = vmatprep.mubr.bf16.mxu0 0
    %937 = vmatmul.mubr.bf16.gmra.mrb[0].mxu0 %v902
    %v938 = vpop.f32.mrb[0].mxu0
    %v939 = vadd.f32 0.0, %v938
    %v940 = vpop.f32.mrb[0].mxu0
    %v941 = vpop.f32.mrb[0].mxu0
    %v942 = vadd.f32 0.0, %v941
    %v943 = vpop.f32.mrb[0].mxu0
    %944 = vdwg.mxu0
    %v945 = vpack.c.bf16 %v942, %v939
    %v946 = vld [vmem:[#allocation2 + $0x10] sm:$0xf]
    %v947 = vld [vmem:[#allocation2 + $0x14] sm:$0xf]
    %v948 = vld [vmem:[#allocation2 + $0x18] sm:$0xf]
    %v949 = vld [vmem:[#allocation2 + $0x1c] sm:$0xf]
    %v954 = vunpack.c.l.b16 %v946
    %v955 = vunpack.c.l.b16 %v947
    %v956 = vunpack.c.l.b16 %v948
    %v957 = vunpack.c.l.b16 %v949
    %v958 = vpack.c.b16 %v955, %v954
    %v959 = vpack.c.b16 %v957, %v956
    %v963 = vsel %vm700, %v945, 0
    %965 = vmatprep.subr.bf16.mxu0 0
    %966 = vmatpush1.bf16.msra.mxu0 %v958
    %967 = vmatprep.subr.bf16.mxu0 0
    %968 = vmatpush1.bf16.msra.mxu0 %v959
    %969 = vmatprep.subr.bf16.mxu0 0
    %970 = vmatpush1.bf16.msra.mxu0 0
    %971 = vmatprep.subr.bf16.mxu0 0
    %972 = vmatpush1.bf16.msra.mxu0 0
    %973 = vmatprep.subr.bf16.mxu0 0
    %974 = vmatpush1.bf16.msra.mxu0 0
    %975 = vmatprep.subr.bf16.mxu0 0
    %976 = vmatpush1.bf16.msra.mxu0 0
    %977 = vmatprep.subr.bf16.mxu0 0
    %978 = vmatpush1.bf16.msra.mxu0 0
    %979 = vmatprep.subr.bf16.mxu0 0
    %980 = vmatpush1.bf16.msra.mxu0 0
    %981 = vmatprep.subr.bf16.mxu0 0
    %982 = vmatpush1.bf16.msra.mxu0 0
    %983 = vmatprep.subr.bf16.mxu0 0
    %984 = vmatpush1.bf16.msra.mxu0 0
    %985 = vmatprep.subr.bf16.mxu0 0
    %986 = vmatpush1.bf16.msra.mxu0 0
    %987 = vmatprep.subr.bf16.mxu0 0
    %988 = vmatpush1.bf16.msra.mxu0 0
    %989 = vmatprep.subr.bf16.mxu0 0
    %990 = vmatpush1.bf16.msra.mxu0 0
    %991 = vmatprep.subr.bf16.mxu0 0
    %992 = vmatpush1.bf16.msra.mxu0 0
    %993 = vmatprep.subr.bf16.mxu0 0
    %994 = vmatpush1.bf16.msra.mxu0 0
    %995 = vmatprep.subr.bf16.mxu0 0
    %996 = vmatpush1.bf16.msra.mxu0 0
    %997 = vmatprep.mubr.bf16.mxu0 0
    %998 = vmatmul.mubr.bf16.gmra.mrb[0].mxu0 %v963
    %v999 = vpop.f32.mrb[0].mxu0
    %v1000 = vadd.f32 0.0, %v999
    %v1001 = vpop.f32.mrb[0].mxu0
    %v1002 = vpop.f32.mrb[0].mxu0
    %v1003 = vadd.f32 0.0, %v1002
    %v1004 = vpop.f32.mrb[0].mxu0
    %1005 = vdwg.mxu0
    %v1010 = vunpack.c.l.b16 %v817
    %v1011 = vunpack.c.l.b16 %v818
    %v1012 = vunpack.c.l.b16 %v819
    %v1013 = vunpack.c.l.b16 %v820
    %v1014 = vpack.c.b16 %v1011, %v1010
    %v1015 = vpack.c.b16 %v1013, %v1012
    %v1019 = vsel %vm700, %v816, 0
    %1021 = vmatprep.subr.bf16.mxu0 0
    %1022 = vmatpush1.bf16.msra.mxu0 %v1014
    %1023 = vmatprep.subr.bf16.mxu0 0
    %1024 = vmatpush1.bf16.msra.mxu0 %v1015
    %1025 = vmatprep.subr.bf16.mxu0 0
    %1026 = vmatpush1.bf16.msra.mxu0 0
    %1027 = vmatprep.subr.bf16.mxu0 0
    %1028 = vmatpush1.bf16.msra.mxu0 0
    %1029 = vmatprep.subr.bf16.mxu0 0
    %1030 = vmatpush1.bf16.msra.mxu0 0
    %1031 = vmatprep.subr.bf16.mxu0 0
    %1032 = vmatpush1.bf16.msra.mxu0 0
    %1033 = vmatprep.subr.bf16.mxu0 0
    %1034 = vmatpush1.bf16.msra.mxu0 0
    %1035 = vmatprep.subr.bf16.mxu0 0
    %1036 = vmatpush1.bf16.msra.mxu0 0
    %1037 = vmatprep.subr.bf16.mxu0 0
    %1038 = vmatpush1.bf16.msra.mxu0 0
    %1039 = vmatprep.subr.bf16.mxu0 0
    %1040 = vmatpush1.bf16.msra.mxu0 0
    %1041 = vmatprep.subr.bf16.mxu0 0
    %1042 = vmatpush1.bf16.msra.mxu0 0
    %1043 = vmatprep.subr.bf16.mxu0 0
    %1044 = vmatpush1.bf16.msra.mxu0 0
    %1045 = vmatprep.subr.bf16.mxu0 0
    %1046 = vmatpush1.bf16.msra.mxu0 0
    %1047 = vmatprep.subr.bf16.mxu0 0
    %1048 = vmatpush1.bf16.msra.mxu0 0
    %1049 = vmatprep.subr.bf16.mxu0 0
    %1050 = vmatpush1.bf16.msra.mxu0 0
    %1051 = vmatprep.subr.bf16.mxu0 0
    %1052 = vmatpush1.bf16.msra.mxu0 0
    %1053 = vmatprep.mubr.bf16.mxu0 0
    %1054 = vmatmul.mubr.bf16.gmra.mrb[0].mxu0 %v1019
    %v1055 = vpop.f32.mrb[0].mxu0
    %v1056 = vadd.f32 %v1000, %v1055
    %v1057 = vpop.f32.mrb[0].mxu0
    %v1058 = vpop.f32.mrb[0].mxu0
    %v1059 = vadd.f32 %v1003, %v1058
    %v1060 = vpop.f32.mrb[0].mxu0
    %1061 = vdwg.mxu0
    %1062 = vrot.lane.b32.xlu0 %v697, 64
    %v1063 = vpop.permute.xlu0 %1062
    %1064 = vrot.lane.b32.xlu0 %v698, 64
    %v1065 = vpop.permute.xlu0 %1064
    %v1067 = vsel %vm700, %v1063, 0
    %v1070 = vsel %vm700, %v1065, 0
    %1072 = vmatprep.subr.bf16.mxu0 0
    %1073 = vmatpush1.bf16.xpose.msra.mxu0 %v1070
    %1074 = vmatprep.subr.bf16.mxu0 0
    %1075 = vmatpush1.bf16.xpose.msra.mxu0 0
    %1076 = vmatprep.subr.bf16.mxu0 0
    %1077 = vmatpush1.bf16.xpose.msra.mxu0 0
    %1078 = vmatprep.subr.bf16.mxu0 0
    %1079 = vmatpush1.bf16.xpose.msra.mxu0 0
    %1080 = vmatprep.subr.bf16.mxu0 0
    %1081 = vmatpush1.bf16.xpose.msra.mxu0 0
    %1082 = vmatprep.subr.bf16.mxu0 0
    %1083 = vmatpush1.bf16.xpose.msra.mxu0 0
    %1084 = vmatprep.subr.bf16.mxu0 0
    %1085 = vmatpush1.bf16.xpose.msra.mxu0 0
    %1086 = vmatprep.subr.bf16.mxu0 0
    %1087 = vmatpush1.bf16.xpose.msra.mxu0 0
    %1088 = vmatprep.subr.bf16.mxu0 0
    %1089 = vmatpush1.bf16.xpose.msra.mxu0 0
    %1090 = vmatprep.subr.bf16.mxu0 0
    %1091 = vmatpush1.bf16.xpose.msra.mxu0 0
    %1092 = vmatprep.subr.bf16.mxu0 0
    %1093 = vmatpush1.bf16.xpose.msra.mxu0 0
    %1094 = vmatprep.subr.bf16.mxu0 0
    %1095 = vmatpush1.bf16.xpose.msra.mxu0 0
    %1096 = vmatprep.subr.bf16.mxu0 0
    %1097 = vmatpush1.bf16.xpose.msra.mxu0 0
    %1098 = vmatprep.subr.bf16.mxu0 0
    %1099 = vmatpush1.bf16.xpose.msra.mxu0 0
    %1100 = vmatprep.subr.bf16.mxu0 0
    %1101 = vmatpush1.bf16.xpose.msra.mxu0 0
    %1102 = vmatprep.subr.bf16.mxu0 0
    %1103 = vmatpush1.bf16.xpose.msra.mxu0 0
    %1104 = vmatprep.mubr.bf16.mxu0 0
    %1105 = vmatmul.mubr.bf16.gmra.mrb[0].mxu0 %v1067
    %v1106 = vpop.f32.mrb[0].mxu0
    %v1107 = vadd.f32 %v433, %v1106
    %v1108 = vpop.f32.mrb[0].mxu0
    %v1109 = vpop.f32.mrb[0].mxu0
    %v1110 = vadd.f32 %v434, %v1109
    %v1111 = vpop.f32.mrb[0].mxu0
    %1112 = vdwg.mxu0
    %v1113 = vsel %vm748, %v1107, -inf
    %1114 = vmax.xlane.f32.xlu0 %v1113
    %v1115 = vpop.xlane.xlu0 %1114
    %v1116 = vsel %vm748, %v1110, -inf
    %1117 = vmax.xlane.f32.xlu0 %v1116
    %v1118 = vpop.xlane.xlu0 %1117
    %v1119 = vsub.f32 %v1107, %v1115
    %v1120 = vsub.f32 %v1110, %v1118
    %v1121 = vmul.f32 %v1119, 1.442695
    %v1122 = vpow.pop %v1121
    %v1123 = vmul.f32 %v1120, 1.442695
    %v1124 = vpow.pop %v1123
    %v1125 = vsel %vm748, %v1122, 0.0
    %1126 = vadd.xlane.f32.xlu0 %v1125
    %v1127 = vpop.xlane.xlu0 %1126
    %v1128 = vsel %vm748, %v1124, 0.0
    %1129 = vadd.xlane.f32.xlu0 %v1128
    %v1130 = vpop.xlane.xlu0 %1129
    %v1131 = vrcp.pop %v1127
    %v1132 = vrcp.pop %v1130
    %v1133 = vmul.f32 %v1122, %v1131
    %v1134 = vmul.f32 %v1124, %v1132
    %v1135 = vpack.c.bf16 %v1134, %v1133
    %1136 = vrot.lane.b32.xlu0 %v699, 64
    %v1137 = vpop.permute.xlu0 %1136
    %v1140 = vsel %vm748, %v1135, 0
    %1142 = vmatprep.subr.bf16.mxu0 0
    %1143 = vmatpush1.bf16.msra.mxu0 %v1137
    %1144 = vmatprep.subr.bf16.mxu0 0
    %1145 = vmatpush1.bf16.msra.mxu0 0
    %1146 = vmatprep.subr.bf16.mxu0 0
    %1147 = vmatpush1.bf16.msra.mxu0 0
    %1148 = vmatprep.subr.bf16.mxu0 0
    %1149 = vmatpush1.bf16.msra.mxu0 0
    %1150 = vmatprep.subr.bf16.mxu0 0
    %1151 = vmatpush1.bf16.msra.mxu0 0
    %1152 = vmatprep.subr.bf16.mxu0 0
    %1153 = vmatpush1.bf16.msra.mxu0 0
    %1154 = vmatprep.subr.bf16.mxu0 0
    %1155 = vmatpush1.bf16.msra.mxu0 0
    %1156 = vmatprep.subr.bf16.mxu0 0
    %1157 = vmatpush1.bf16.msra.mxu0 0
    %1158 = vmatprep.subr.bf16.mxu0 0
    %1159 = vmatpush1.bf16.msra.mxu0 0
    %1160 = vmatprep.subr.bf16.mxu0 0
    %1161 = vmatpush1.bf16.msra.mxu0 0
    %1162 = vmatprep.subr.bf16.mxu0 0
    %1163 = vmatpush1.bf16.msra.mxu0 0
    %1164 = vmatprep.subr.bf16.mxu0 0
    %1165 = vmatpush1.bf16.msra.mxu0 0
    %1166 = vmatprep.subr.bf16.mxu0 0
    %1167 = vmatpush1.bf16.msra.mxu0 0
    %1168 = vmatprep.subr.bf16.mxu0 0
    %1169 = vmatpush1.bf16.msra.mxu0 0
    %1170 = vmatprep.subr.bf16.mxu0 0
    %1171 = vmatpush1.bf16.msra.mxu0 0
    %1172 = vmatprep.subr.bf16.mxu0 0
    %1173 = vmatpush1.bf16.msra.mxu0 0
    %1174 = vmatprep.mubr.bf16.mxu0 0
    %1175 = vmatmul.mubr.bf16.gmra.mrb[0].mxu0 %v1140
    %v1176 = vpop.f32.mrb[0].mxu0
    %v1177 = vadd.f32 0.0, %v1176
    %v1178 = vpop.f32.mrb[0].mxu0
    %v1179 = vpop.f32.mrb[0].mxu0
    %v1180 = vadd.f32 0.0, %v1179
    %v1181 = vpop.f32.mrb[0].mxu0
    %1182 = vdwg.mxu0
    %v1183 = vpack.c.bf16 %v1180, %v1177
    %v1184 = vld [vmem:[#allocation2 + $0x20] sm:$0xf]
    %v1185 = vld [vmem:[#allocation2 + $0x24] sm:$0xf]
    %v1186 = vld [vmem:[#allocation2 + $0x28] sm:$0xf]
    %v1187 = vld [vmem:[#allocation2 + $0x2c] sm:$0xf]
    %v1192 = vunpack.c.l.b16 %v1184
    %v1193 = vunpack.c.l.b16 %v1185
    %v1194 = vunpack.c.l.b16 %v1186
    %v1195 = vunpack.c.l.b16 %v1187
    %v1196 = vpack.c.b16 %v1193, %v1192
    %v1197 = vpack.c.b16 %v1195, %v1194
    %v1201 = vsel %vm700, %v1183, 0
    %1203 = vmatprep.subr.bf16.mxu0 0
    %1204 = vmatpush1.bf16.msra.mxu0 %v1196
    %1205 = vmatprep.subr.bf16.mxu0 0
    %1206 = vmatpush1.bf16.msra.mxu0 %v1197
    %1207 = vmatprep.subr.bf16.mxu0 0
    %1208 = vmatpush1.bf16.msra.mxu0 0
    %1209 = vmatprep.subr.bf16.mxu0 0
    %1210 = vmatpush1.bf16.msra.mxu0 0
    %1211 = vmatprep.subr.bf16.mxu0 0
    %1212 = vmatpush1.bf16.msra.mxu0 0
    %1213 = vmatprep.subr.bf16.mxu0 0
    %1214 = vmatpush1.bf16.msra.mxu0 0
    %1215 = vmatprep.subr.bf16.mxu0 0
    %1216 = vmatpush1.bf16.msra.mxu0 0
    %1217 = vmatprep.subr.bf16.mxu0 0
    %1218 = vmatpush1.bf16.msra.mxu0 0
    %1219 = vmatprep.subr.bf16.mxu0 0
    %1220 = vmatpush1.bf16.msra.mxu0 0
    %1221 = vmatprep.subr.bf16.mxu0 0
    %1222 = vmatpush1.bf16.msra.mxu0 0
    %1223 = vmatprep.subr.bf16.mxu0 0
    %1224 = vmatpush1.bf16.msra.mxu0 0
    %1225 = vmatprep.subr.bf16.mxu0 0
    %1226 = vmatpush1.bf16.msra.mxu0 0
    %1227 = vmatprep.subr.bf16.mxu0 0
    %1228 = vmatpush1.bf16.msra.mxu0 0
    %1229 = vmatprep.subr.bf16.mxu0 0
    %1230 = vmatpush1.bf16.msra.mxu0 0
    %1231 = vmatprep.subr.bf16.mxu0 0
    %1232 = vmatpush1.bf16.msra.mxu0 0
    %1233 = vmatprep.subr.bf16.mxu0 0
    %1234 = vmatpush1.bf16.msra.mxu0 0
    %1235 = vmatprep.mubr.bf16.mxu0 0
    %1236 = vmatmul.mubr.bf16.gmra.mrb[0].mxu0 %v1201
    %v1237 = vpop.f32.mrb[0].mxu0
    %v1238 = vadd.f32 0.0, %v1237
    %v1239 = vpop.f32.mrb[0].mxu0
    %v1240 = vpop.f32.mrb[0].mxu0
    %v1241 = vadd.f32 0.0, %v1240
    %v1242 = vpop.f32.mrb[0].mxu0
    %1243 = vdwg.mxu0
    %v1244 = vadd.f32 %v1056, %v1238
    %v1245 = vadd.f32 %v1059, %v1241
    %1246 = vrot.lane.b32.xlu0 %v697, 32
    %v1247 = vpop.permute.xlu0 %1246
    %1248 = vrot.lane.b32.xlu0 %v698, 32
    %v1249 = vpop.permute.xlu0 %1248
    %v1251 = vsel %vm700, %v1247, 0
    %v1254 = vsel %vm700, %v1249, 0
    %1256 = vmatprep.subr.bf16.mxu0 0
    %1257 = vmatpush1.bf16.xpose.msra.mxu0 %v1254
    %1258 = vmatprep.subr.bf16.mxu0 0
    %1259 = vmatpush1.bf16.xpose.msra.mxu0 0
    %1260 = vmatprep.subr.bf16.mxu0 0
    %1261 = vmatpush1.bf16.xpose.msra.mxu0 0
    %1262 = vmatprep.subr.bf16.mxu0 0
    %1263 = vmatpush1.bf16.xpose.msra.mxu0 0
    %1264 = vmatprep.subr.bf16.mxu0 0
    %1265 = vmatpush1.bf16.xpose.msra.mxu0 0
    %1266 = vmatprep.subr.bf16.mxu0 0
    %1267 = vmatpush1.bf16.xpose.msra.mxu0 0
    %1268 = vmatprep.subr.bf16.mxu0 0
    %1269 = vmatpush1.bf16.xpose.msra.mxu0 0
    %1270 = vmatprep.subr.bf16.mxu0 0
    %1271 = vmatpush1.bf16.xpose.msra.mxu0 0
    %1272 = vmatprep.subr.bf16.mxu0 0
    %1273 = vmatpush1.bf16.xpose.msra.mxu0 0
    %1274 = vmatprep.subr.bf16.mxu0 0
    %1275 = vmatpush1.bf16.xpose.msra.mxu0 0
    %1276 = vmatprep.subr.bf16.mxu0 0
    %1277 = vmatpush1.bf16.xpose.msra.mxu0 0
    %1278 = vmatprep.subr.bf16.mxu0 0
    %1279 = vmatpush1.bf16.xpose.msra.mxu0 0
    %1280 = vmatprep.subr.bf16.mxu0 0
    %1281 = vmatpush1.bf16.xpose.msra.mxu0 0
    %1282 = vmatprep.subr.bf16.mxu0 0
    %1283 = vmatpush1.bf16.xpose.msra.mxu0 0
    %1284 = vmatprep.subr.bf16.mxu0 0
    %1285 = vmatpush1.bf16.xpose.msra.mxu0 0
    %1286 = vmatprep.subr.bf16.mxu0 0
    %1287 = vmatpush1.bf16.xpose.msra.mxu0 0
    %1288 = vmatprep.mubr.bf16.mxu0 0
    %1289 = vmatmul.mubr.bf16.gmra.mrb[0].mxu0 %v1251
    %v1290 = vpop.f32.mrb[0].mxu0
    %v1291 = vadd.f32 %v433, %v1290
    %v1292 = vpop.f32.mrb[0].mxu0
    %v1293 = vpop.f32.mrb[0].mxu0
    %v1294 = vadd.f32 %v434, %v1293
    %v1295 = vpop.f32.mrb[0].mxu0
    %1296 = vdwg.mxu0
    %v1297 = vsel %vm748, %v1291, -inf
    %1298 = vmax.xlane.f32.xlu0 %v1297
    %v1299 = vpop.xlane.xlu0 %1298
    %v1300 = vsel %vm748, %v1294, -inf
    %1301 = vmax.xlane.f32.xlu0 %v1300
    %v1302 = vpop.xlane.xlu0 %1301
    %v1303 = vsub.f32 %v1291, %v1299
    %v1304 = vsub.f32 %v1294, %v1302
    %v1305 = vmul.f32 %v1303, 1.442695
    %v1306 = vpow.pop %v1305
    %v1307 = vmul.f32 %v1304, 1.442695
    %v1308 = vpow.pop %v1307
    %v1309 = vsel %vm748, %v1306, 0.0
    %1310 = vadd.xlane.f32.xlu0 %v1309
    %v1311 = vpop.xlane.xlu0 %1310
    %v1312 = vsel %vm748, %v1308, 0.0
    %1313 = vadd.xlane.f32.xlu0 %v1312
    %v1314 = vpop.xlane.xlu0 %1313
    %v1315 = vrcp.pop %v1311
    %v1316 = vrcp.pop %v1314
    %v1317 = vmul.f32 %v1306, %v1315
    %v1318 = vmul.f32 %v1308, %v1316
    %v1319 = vpack.c.bf16 %v1318, %v1317
    %1320 = vrot.lane.b32.xlu0 %v699, 32
    %v1321 = vpop.permute.xlu0 %1320
    %v1324 = vsel %vm748, %v1319, 0
    %1326 = vmatprep.subr.bf16.mxu0 0
    %1327 = vmatpush1.bf16.msra.mxu0 %v1321
    %1328 = vmatprep.subr.bf16.mxu0 0
    %1329 = vmatpush1.bf16.msra.mxu0 0
    %1330 = vmatprep.subr.bf16.mxu0 0
    %1331 = vmatpush1.bf16.msra.mxu0 0
    %1332 = vmatprep.subr.bf16.mxu0 0
    %1333 = vmatpush1.bf16.msra.mxu0 0
    %1334 = vmatprep.subr.bf16.mxu0 0
    %1335 = vmatpush1.bf16.msra.mxu0 0
    %1336 = vmatprep.subr.bf16.mxu0 0
    %1337 = vmatpush1.bf16.msra.mxu0 0
    %1338 = vmatprep.subr.bf16.mxu0 0
    %1339 = vmatpush1.bf16.msra.mxu0 0
    %1340 = vmatprep.subr.bf16.mxu0 0
    %1341 = vmatpush1.bf16.msra.mxu0 0
    %1342 = vmatprep.subr.bf16.mxu0 0
    %1343 = vmatpush1.bf16.msra.mxu0 0
    %1344 = vmatprep.subr.bf16.mxu0 0
    %1345 = vmatpush1.bf16.msra.mxu0 0
    %1346 = vmatprep.subr.bf16.mxu0 0
    %1347 = vmatpush1.bf16.msra.mxu0 0
    %1348 = vmatprep.subr.bf16.mxu0 0
    %1349 = vmatpush1.bf16.msra.mxu0 0
    %1350 = vmatprep.subr.bf16.mxu0 0
    %1351 = vmatpush1.bf16.msra.mxu0 0
    %1352 = vmatprep.subr.bf16.mxu0 0
    %1353 = vmatpush1.bf16.msra.mxu0 0
    %1354 = vmatprep.subr.bf16.mxu0 0
    %1355 = vmatpush1.bf16.msra.mxu0 0
    %1356 = vmatprep.subr.bf16.mxu0 0
    %1357 = vmatpush1.bf16.msra.mxu0 0
    %1358 = vmatprep.mubr.bf16.mxu0 0
    %1359 = vmatmul.mubr.bf16.gmra.mrb[0].mxu0 %v1324
    %v1360 = vpop.f32.mrb[0].mxu0
    %v1361 = vadd.f32 0.0, %v1360
    %v1362 = vpop.f32.mrb[0].mxu0
    %v1363 = vpop.f32.mrb[0].mxu0
    %v1364 = vadd.f32 0.0, %v1363
    %v1365 = vpop.f32.mrb[0].mxu0
    %1366 = vdwg.mxu0
    %v1367 = vpack.c.bf16 %v1364, %v1361
    %v1368 = vld [vmem:[#allocation2 + $0x30] sm:$0xf]
    %v1369 = vld [vmem:[#allocation2 + $0x34] sm:$0xf]
    %v1370 = vld [vmem:[#allocation2 + $0x38] sm:$0xf]
    %v1371 = vld [vmem:[#allocation2 + $0x3c] sm:$0xf]
    %v1376 = vunpack.c.l.b16 %v1368
    %v1377 = vunpack.c.l.b16 %v1369
    %v1378 = vunpack.c.l.b16 %v1370
    %v1379 = vunpack.c.l.b16 %v1371
    %v1380 = vpack.c.b16 %v1377, %v1376
    %v1381 = vpack.c.b16 %v1379, %v1378
    %v1385 = vsel %vm700, %v1367, 0
    %1387 = vmatprep.subr.bf16.mxu0 0
    %1388 = vmatpush1.bf16.msra.mxu0 %v1380
    %1389 = vmatprep.subr.bf16.mxu0 0
    %1390 = vmatpush1.bf16.msra.mxu0 %v1381
    %1391 = vmatprep.subr.bf16.mxu0 0
    %1392 = vmatpush1.bf16.msra.mxu0 0
    %1393 = vmatprep.subr.bf16.mxu0 0
    %1394 = vmatpush1.bf16.msra.mxu0 0
    %1395 = vmatprep.subr.bf16.mxu0 0
    %1396 = vmatpush1.bf16.msra.mxu0 0
    %1397 = vmatprep.subr.bf16.mxu0 0
    %1398 = vmatpush1.bf16.msra.mxu0 0
    %1399 = vmatprep.subr.bf16.mxu0 0
    %1400 = vmatpush1.bf16.msra.mxu0 0
    %1401 = vmatprep.subr.bf16.mxu0 0
    %1402 = vmatpush1.bf16.msra.mxu0 0
    %1403 = vmatprep.subr.bf16.mxu0 0
    %1404 = vmatpush1.bf16.msra.mxu0 0
    %1405 = vmatprep.subr.bf16.mxu0 0
    %1406 = vmatpush1.bf16.msra.mxu0 0
    %1407 = vmatprep.subr.bf16.mxu0 0
    %1408 = vmatpush1.bf16.msra.mxu0 0
    %1409 = vmatprep.subr.bf16.mxu0 0
    %1410 = vmatpush1.bf16.msra.mxu0 0
    %1411 = vmatprep.subr.bf16.mxu0 0
    %1412 = vmatpush1.bf16.msra.mxu0 0
    %1413 = vmatprep.subr.bf16.mxu0 0
    %1414 = vmatpush1.bf16.msra.mxu0 0
    %1415 = vmatprep.subr.bf16.mxu0 0
    %1416 = vmatpush1.bf16.msra.mxu0 0
    %1417 = vmatprep.subr.bf16.mxu0 0
    %1418 = vmatpush1.bf16.msra.mxu0 0
    %1419 = vmatprep.mubr.bf16.mxu0 0
    %1420 = vmatmul.mubr.bf16.gmra.mrb[0].mxu0 %v1385
    %v1421 = vpop.f32.mrb[0].mxu0
    %v1422 = vadd.f32 0.0, %v1421
    %v1423 = vpop.f32.mrb[0].mxu0
    %v1424 = vpop.f32.mrb[0].mxu0
    %v1425 = vadd.f32 0.0, %v1424
    %v1426 = vpop.f32.mrb[0].mxu0
    %1427 = vdwg.mxu0
    %v1428 = vadd.f32 %v1244, %v1422
    %v1429 = vadd.f32 %v1245, %v1425
    %v1430 = vld [vmem:[#allocation5] sm:$0x1]
    %v1432 = vlaneseq
    %v1433 = vshrl.u32 %v1432, 7
    %v1434 = vsub.s32 0, %v1433
    %v1435 = vrot.slane %v1430, %v1434
    %v1437 = vadd.f32 %v1428, %v1435
    %v1438 = vadd.f32 %v1429, %v1435
    %v1439 = vadd.f32 %v431, %v1437
    %v1440 = vadd.f32 %v432, %v1438
    %v1441 = vld [vmem:[#allocation7] sm:$0x1]
    %v1442 = vld [vmem:[#allocation8] sm:$0x1]
    %v1443 = vlaneseq
    %v1444 = vand.u32 %v1443, 127
    %vm1445 = vcmp.lt.s32.totalorder %v1444, 96
    %v1446 = vsel %vm1445, 1, 0
    %v1447 = vcvt.s32.f32 %v1446
    %1448 = vadd.xlane.f32.xlu0 %v1439
    %v1449 = vpop.xlane.xlu0 %1448
    %1450 = vadd.xlane.f32.xlu0 %v1440
    %v1451 = vpop.xlane.xlu0 %1450
    %v1452 = vmul.f32 %v1449, 0.010416667
    %v1453 = vmul.f32 %v1451, 0.010416667
    %v1454 = vsub.f32 %v1439, %v1452
    %v1455 = vsub.f32 %v1440, %v1453
    %v1456 = vmul.f32 %v1454, %v1447
    %v1457 = vmul.f32 %v1455, %v1447
    %v1458 = vmul.f32 %v1456, %v1456
    %v1459 = vmul.f32 %v1457, %v1457
    %1460 = vadd.xlane.f32.xlu0 %v1458
    %v1461 = vpop.xlane.xlu0 %1460
    %1462 = vadd.xlane.f32.xlu0 %v1459
    %v1463 = vpop.xlane.xlu0 %1462
    %v1464 = vmul.f32 %v1461, 0.010416667
    %v1465 = vmul.f32 %v1463, 0.010416667
    %v1466 = vadd.f32 %v1464, 1e-05
    %v1467 = vadd.f32 %v1465, 1e-05
    %v1468 = vrsqrt.pop %v1466
    %v1469 = vrsqrt.pop %v1467
    %v1470 = vmul.f32 %v1454, %v1468
    %v1471 = vmul.f32 %v1455, %v1469
    %v1473 = vlaneseq
    %v1474 = vshrl.u32 %v1473, 7
    %v1475 = vsub.s32 0, %v1474
    %v1476 = vrot.slane %v1441, %v1475
    %v1478 = vmul.f32 %v1470, %v1476
    %v1479 = vmul.f32 %v1471, %v1476
    %v1481 = vlaneseq
    %v1482 = vshrl.u32 %v1481, 7
    %v1483 = vsub.s32 0, %v1482
    %v1484 = vrot.slane %v1442, %v1483
    %v1486 = vadd.f32 %v1478, %v1484
    %v1487 = vadd.f32 %v1479, %v1484
    %v1488 = vpack.c.bf16 %v1487, %v1486
    %v1489 = vld [vmem:[#allocation10] sm:$0xff]
    %v1490 = vld [vmem:[#allocation10 + $0x8] sm:$0xff]
    %v1491 = vld [vmem:[#allocation10 + $0x10] sm:$0xff]
    %v1492 = vld [vmem:[#allocation10 + $0x18] sm:$0xff]
    %v1493 = vld [vmem:[#allocation10 + $0x20] sm:$0xff]
    %v1494 = vld [vmem:[#allocation10 + $0x28] sm:$0xff]
    %v1495 = vld [vmem:[#allocation10 + $0x30] sm:$0xff]
    %v1496 = vld [vmem:[#allocation10 + $0x38] sm:$0xff]
    %v1497 = vld [vmem:[#allocation10 + $0x40] sm:$0xff]
    %v1498 = vld [vmem:[#allocation10 + $0x48] sm:$0xff]
    %v1499 = vld [vmem:[#allocation10 + $0x50] sm:$0xff]
    %v1500 = vld [vmem:[#allocation10 + $0x58] sm:$0xff]
    %v1501 = vld [vmem:[#allocation10 + $0x60] sm:$0xff]
    %v1502 = vld [vmem:[#allocation10 + $0x68] sm:$0xff]
    %v1503 = vld [vmem:[#allocation10 + $0x70] sm:$0xff]
    %v1504 = vld [vmem:[#allocation10 + $0x78] sm:$0xff]
    %v1505 = vld [vmem:[#allocation10 + $0x80] sm:$0xff]
    %v1506 = vld [vmem:[#allocation10 + $0x88] sm:$0xff]
    %v1507 = vld [vmem:[#allocation10 + $0x90] sm:$0xff]
    %v1508 = vld [vmem:[#allocation10 + $0x98] sm:$0xff]
    %v1509 = vld [vmem:[#allocation10 + $0xa0] sm:$0xff]
    %v1510 = vld [vmem:[#allocation10 + $0xa8] sm:$0xff]
    %v1511 = vld [vmem:[#allocation10 + $0xb0] sm:$0xff]
    %v1512 = vld [vmem:[#allocation10 + $0xb8] sm:$0xff]
    %v1513 = vld [vmem:[#allocation10 + $0xc0] sm:$0xff]
    %v1514 = vld [vmem:[#allocation10 + $0xc8] sm:$0xff]
    %v1515 = vld [vmem:[#allocation10 + $0xd0] sm:$0xff]
    %v1516 = vld [vmem:[#allocation10 + $0xd8] sm:$0xff]
    %v1517 = vld [vmem:[#allocation10 + $0xe0] sm:$0xff]
    %v1518 = vld [vmem:[#allocation10 + $0xe8] sm:$0xff]
    %v1519 = vld [vmem:[#allocation10 + $0xf0] sm:$0xff]
    %v1520 = vld [vmem:[#allocation10 + $0xf8] sm:$0xff]
    %v1521 = vld [vmem:[#allocation10 + $0x100] sm:$0xff]
    %v1522 = vld [vmem:[#allocation10 + $0x108] sm:$0xff]
    %v1523 = vld [vmem:[#allocation10 + $0x110] sm:$0xff]
    %v1524 = vld [vmem:[#allocation10 + $0x118] sm:$0xff]
    %v1525 = vld [vmem:[#allocation10 + $0x120] sm:$0xff]
    %v1526 = vld [vmem:[#allocation10 + $0x128] sm:$0xff]
    %v1527 = vld [vmem:[#allocation10 + $0x130] sm:$0xff]
    %v1528 = vld [vmem:[#allocation10 + $0x138] sm:$0xff]
    %v1529 = vld [vmem:[#allocation10 + $0x140] sm:$0xff]
    %v1530 = vld [vmem:[#allocation10 + $0x148] sm:$0xff]
    %v1531 = vld [vmem:[#allocation10 + $0x150] sm:$0xff]
    %v1532 = vld [vmem:[#allocation10 + $0x158] sm:$0xff]
    %v1533 = vld [vmem:[#allocation10 + $0x160] sm:$0xff]
    %v1534 = vld [vmem:[#allocation10 + $0x168] sm:$0xff]
    %v1535 = vld [vmem:[#allocation10 + $0x170] sm:$0xff]
    %v1536 = vld [vmem:[#allocation10 + $0x178] sm:$0xff]
    %v1537 = vld [vmem:[#allocation10 + $0x180] sm:$0xff]
    %v1538 = vld [vmem:[#allocation10 + $0x188] sm:$0xff]
    %v1539 = vld [vmem:[#allocation10 + $0x190] sm:$0xff]
    %v1540 = vld [vmem:[#allocation10 + $0x198] sm:$0xff]
    %v1541 = vld [vmem:[#allocation10 + $0x1a0] sm:$0xff]
    %v1542 = vld [vmem:[#allocation10 + $0x1a8] sm:$0xff]
    %v1543 = vld [vmem:[#allocation10 + $0x1b0] sm:$0xff]
    %v1544 = vld [vmem:[#allocation10 + $0x1b8] sm:$0xff]
    %v1545 = vld [vmem:[#allocation10 + $0x1c0] sm:$0xff]
    %v1546 = vld [vmem:[#allocation10 + $0x1c8] sm:$0xff]
    %v1547 = vld [vmem:[#allocation10 + $0x1d0] sm:$0xff]
    %v1548 = vld [vmem:[#allocation10 + $0x1d8] sm:$0xff]
    %v1549 = vld [vmem:[#allocation10 + $0x1e0] sm:$0xff]
    %v1550 = vld [vmem:[#allocation10 + $0x1e8] sm:$0xff]
    %v1551 = vld [vmem:[#allocation10 + $0x1f0] sm:$0xff]
    %v1552 = vld [vmem:[#allocation10 + $0x1f8] sm:$0xff]
    %v1553 = vld [vmem:[#allocation10 + $0x200] sm:$0xff]
    %v1554 = vld [vmem:[#allocation10 + $0x208] sm:$0xff]
    %v1555 = vld [vmem:[#allocation10 + $0x210] sm:$0xff]
    %v1556 = vld [vmem:[#allocation10 + $0x218] sm:$0xff]
    %v1557 = vld [vmem:[#allocation10 + $0x220] sm:$0xff]
    %v1558 = vld [vmem:[#allocation10 + $0x228] sm:$0xff]
    %v1559 = vld [vmem:[#allocation10 + $0x230] sm:$0xff]
    %v1560 = vld [vmem:[#allocation10 + $0x238] sm:$0xff]
    %v1561 = vld [vmem:[#allocation10 + $0x240] sm:$0xff]
    %v1562 = vld [vmem:[#allocation10 + $0x248] sm:$0xff]
    %v1563 = vld [vmem:[#allocation10 + $0x250] sm:$0xff]
    %v1564 = vld [vmem:[#allocation10 + $0x258] sm:$0xff]
    %v1565 = vld [vmem:[#allocation10 + $0x260] sm:$0xff]
    %v1566 = vld [vmem:[#allocation10 + $0x268] sm:$0xff]
    %v1567 = vld [vmem:[#allocation10 + $0x270] sm:$0xff]
    %v1568 = vld [vmem:[#allocation10 + $0x278] sm:$0xff]
    %v1569 = vld [vmem:[#allocation10 + $0x280] sm:$0xff]
    %v1570 = vld [vmem:[#allocation10 + $0x288] sm:$0xff]
    %v1571 = vld [vmem:[#allocation10 + $0x290] sm:$0xff]
    %v1572 = vld [vmem:[#allocation10 + $0x298] sm:$0xff]
    %v1573 = vld [vmem:[#allocation10 + $0x2a0] sm:$0xff]
    %v1574 = vld [vmem:[#allocation10 + $0x2a8] sm:$0xff]
    %v1575 = vld [vmem:[#allocation10 + $0x2b0] sm:$0xff]
    %v1576 = vld [vmem:[#allocation10 + $0x2b8] sm:$0xff]
    %v1577 = vld [vmem:[#allocation10 + $0x2c0] sm:$0xff]
    %v1578 = vld [vmem:[#allocation10 + $0x2c8] sm:$0xff]
    %v1579 = vld [vmem:[#allocation10 + $0x2d0] sm:$0xff]
    %v1580 = vld [vmem:[#allocation10 + $0x2d8] sm:$0xff]
    %v1581 = vld [vmem:[#allocation10 + $0x2e0] sm:$0xff]
    %v1582 = vld [vmem:[#allocation10 + $0x2e8] sm:$0xff]
    %v1583 = vld [vmem:[#allocation10 + $0x2f0] sm:$0xff]
    %v1584 = vld [vmem:[#allocation10 + $0x2f8] sm:$0xff]
    %v1585 = vld [vmem:[#allocation10 + $0x300] sm:$0xff]
    %v1586 = vld [vmem:[#allocation10 + $0x308] sm:$0xff]
    %v1587 = vld [vmem:[#allocation10 + $0x310] sm:$0xff]
    %v1588 = vld [vmem:[#allocation10 + $0x318] sm:$0xff]
    %v1589 = vld [vmem:[#allocation10 + $0x320] sm:$0xff]
    %v1590 = vld [vmem:[#allocation10 + $0x328] sm:$0xff]
    %v1591 = vld [vmem:[#allocation10 + $0x330] sm:$0xff]
    %v1592 = vld [vmem:[#allocation10 + $0x338] sm:$0xff]
    %v1593 = vld [vmem:[#allocation10 + $0x340] sm:$0xff]
    %v1594 = vld [vmem:[#allocation10 + $0x348] sm:$0xff]
    %v1595 = vld [vmem:[#allocation10 + $0x350] sm:$0xff]
    %v1596 = vld [vmem:[#allocation10 + $0x358] sm:$0xff]
    %v1597 = vld [vmem:[#allocation10 + $0x360] sm:$0xff]
    %v1598 = vld [vmem:[#allocation10 + $0x368] sm:$0xff]
    %v1599 = vld [vmem:[#allocation10 + $0x370] sm:$0xff]
    %v1600 = vld [vmem:[#allocation10 + $0x378] sm:$0xff]
    %v1601 = vld [vmem:[#allocation10 + $0x380] sm:$0xff]
    %v1602 = vld [vmem:[#allocation10 + $0x388] sm:$0xff]
    %v1603 = vld [vmem:[#allocation10 + $0x390] sm:$0xff]
    %v1604 = vld [vmem:[#allocation10 + $0x398] sm:$0xff]
    %v1605 = vld [vmem:[#allocation10 + $0x3a0] sm:$0xff]
    %v1606 = vld [vmem:[#allocation10 + $0x3a8] sm:$0xff]
    %v1607 = vld [vmem:[#allocation10 + $0x3b0] sm:$0xff]
    %v1608 = vld [vmem:[#allocation10 + $0x3b8] sm:$0xff]
    %v1609 = vld [vmem:[#allocation10 + $0x3c0] sm:$0xff]
    %v1610 = vld [vmem:[#allocation10 + $0x3c8] sm:$0xff]
    %v1611 = vld [vmem:[#allocation10 + $0x3d0] sm:$0xff]
    %v1612 = vld [vmem:[#allocation10 + $0x3d8] sm:$0xff]
    %v1613 = vld [vmem:[#allocation10 + $0x3e0] sm:$0xff]
    %v1614 = vld [vmem:[#allocation10 + $0x3e8] sm:$0xff]
    %v1615 = vld [vmem:[#allocation10 + $0x3f0] sm:$0xff]
    %v1616 = vld [vmem:[#allocation10 + $0x3f8] sm:$0xff]
    %v1617 = vld [vmem:[#allocation11] sm:$0xff]
    %v1618 = vld [vmem:[#allocation11 + $0x8] sm:$0xff]
    %v1621 = vlaneseq
    %v1622 = vshrl.u32 %v1621, 7
    %v1623 = vsub.s32 0, %v1622
    %v1624 = vrot.slane %v1617, %v1623
    %v1625 = vlaneseq
    %v1626 = vshrl.u32 %v1625, 7
    %v1627 = vsub.s32 1, %v1626
    %v1628 = vrot.slane %v1617, %v1627
    %v1629 = vlaneseq
    %v1630 = vshrl.u32 %v1629, 7
    %v1631 = vsub.s32 2, %v1630
    %v1632 = vrot.slane %v1617, %v1631
    %v1633 = vlaneseq
    %v1634 = vshrl.u32 %v1633, 7
    %v1635 = vsub.s32 3, %v1634
    %v1636 = vrot.slane %v1617, %v1635
    %v1637 = vlaneseq
    %v1638 = vshrl.u32 %v1637, 7
    %v1639 = vsub.s32 4, %v1638
    %v1640 = vrot.slane %v1617, %v1639
    %v1641 = vlaneseq
    %v1642 = vshrl.u32 %v1641, 7
    %v1643 = vsub.s32 5, %v1642
    %v1644 = vrot.slane %v1617, %v1643
    %v1645 = vlaneseq
    %v1646 = vshrl.u32 %v1645, 7
    %v1647 = vsub.s32 6, %v1646
    %v1648 = vrot.slane %v1617, %v1647
    %v1649 = vlaneseq
    %v1650 = vshrl.u32 %v1649, 7
    %v1651 = vsub.s32 7, %v1650
    %v1652 = vrot.slane %v1617, %v1651
    %v1653 = vlaneseq
    %v1654 = vshrl.u32 %v1653, 7
    %v1655 = vsub.s32 0, %v1654
    %v1656 = vrot.slane %v1618, %v1655
    %v1657 = vlaneseq
    %v1658 = vshrl.u32 %v1657, 7
    %v1659 = vsub.s32 1, %v1658
    %v1660 = vrot.slane %v1618, %v1659
    %v1661 = vlaneseq
    %v1662 = vshrl.u32 %v1661, 7
    %v1663 = vsub.s32 2, %v1662
    %v1664 = vrot.slane %v1618, %v1663
    %v1665 = vlaneseq
    %v1666 = vshrl.u32 %v1665, 7
    %v1667 = vsub.s32 3, %v1666
    %v1668 = vrot.slane %v1618, %v1667
    %v1669 = vlaneseq
    %v1670 = vshrl.u32 %v1669, 7
    %v1671 = vsub.s32 4, %v1670
    %v1672 = vrot.slane %v1618, %v1671
    %v1673 = vlaneseq
    %v1674 = vshrl.u32 %v1673, 7
    %v1675 = vsub.s32 5, %v1674
    %v1676 = vrot.slane %v1618, %v1675
    %v1677 = vlaneseq
    %v1678 = vshrl.u32 %v1677, 7
    %v1679 = vsub.s32 6, %v1678
    %v1680 = vrot.slane %v1618, %v1679
    %v1681 = vlaneseq
    %v1682 = vshrl.u32 %v1681, 7
    %v1683 = vsub.s32 7, %v1682
    %v1684 = vrot.slane %v1618, %v1683
    %v1829 = vunpack.c.l.b16 %v1489
    %v1830 = vunpack.c.h.b16 %v1489
    %v1831 = vunpack.c.l.b16 %v1490
    %v1832 = vunpack.c.h.b16 %v1490
    %v1833 = vunpack.c.l.b16 %v1491
    %v1834 = vunpack.c.h.b16 %v1491
    %v1835 = vunpack.c.l.b16 %v1492
    %v1836 = vunpack.c.h.b16 %v1492
    %v1837 = vunpack.c.l.b16 %v1493
    %v1838 = vunpack.c.h.b16 %v1493
    %v1839 = vunpack.c.l.b16 %v1494
    %v1840 = vunpack.c.h.b16 %v1494
    %v1841 = vunpack.c.l.b16 %v1495
    %v1842 = vunpack.c.h.b16 %v1495
    %v1843 = vunpack.c.l.b16 %v1496
    %v1844 = vunpack.c.h.b16 %v1496
    %v1845 = vunpack.c.l.b16 %v1497
    %v1846 = vunpack.c.h.b16 %v1497
    %v1847 = vunpack.c.l.b16 %v1498
    %v1848 = vunpack.c.h.b16 %v1498
    %v1849 = vunpack.c.l.b16 %v1499
    %v1850 = vunpack.c.h.b16 %v1499
    %v1851 = vunpack.c.l.b16 %v1500
    %v1852 = vunpack.c.h.b16 %v1500
    %v1853 = vunpack.c.l.b16 %v1501
    %v1854 = vunpack.c.h.b16 %v1501
    %v1855 = vunpack.c.l.b16 %v1502
    %v1856 = vunpack.c.h.b16 %v1502
    %v1857 = vunpack.c.l.b16 %v1503
    %v1858 = vunpack.c.h.b16 %v1503
    %v1859 = vunpack.c.l.b16 %v1504
    %v1860 = vunpack.c.h.b16 %v1504
    %v1861 = vunpack.c.l.b16 %v1505
    %v1862 = vunpack.c.h.b16 %v1505
    %v1863 = vunpack.c.l.b16 %v1506
    %v1864 = vunpack.c.h.b16 %v1506
    %v1865 = vunpack.c.l.b16 %v1507
    %v1866 = vunpack.c.h.b16 %v1507
    %v1867 = vunpack.c.l.b16 %v1508
    %v1868 = vunpack.c.h.b16 %v1508
    %v1869 = vunpack.c.l.b16 %v1509
    %v1870 = vunpack.c.h.b16 %v1509
    %v1871 = vunpack.c.l.b16 %v1510
    %v1872 = vunpack.c.h.b16 %v1510
    %v1873 = vunpack.c.l.b16 %v1511
    %v1874 = vunpack.c.h.b16 %v1511
    %v1875 = vunpack.c.l.b16 %v1512
    %v1876 = vunpack.c.h.b16 %v1512
    %v1877 = vunpack.c.l.b16 %v1513
    %v1878 = vunpack.c.h.b16 %v1513
    %v1879 = vunpack.c.l.b16 %v1514
    %v1880 = vunpack.c.h.b16 %v1514
    %v1881 = vunpack.c.l.b16 %v1515
    %v1882 = vunpack.c.h.b16 %v1515
    %v1883 = vunpack.c.l.b16 %v1516
    %v1884 = vunpack.c.h.b16 %v1516
    %v1885 = vunpack.c.l.b16 %v1517
    %v1886 = vunpack.c.h.b16 %v1517
    %v1887 = vunpack.c.l.b16 %v1518
    %v1888 = vunpack.c.h.b16 %v1518
    %v1889 = vunpack.c.l.b16 %v1519
    %v1890 = vunpack.c.h.b16 %v1519
    %v1891 = vunpack.c.l.b16 %v1520
    %v1892 = vunpack.c.h.b16 %v1520
    %v1893 = vunpack.c.l.b16 %v1521
    %v1894 = vunpack.c.h.b16 %v1521
    %v1895 = vunpack.c.l.b16 %v1522
    %v1896 = vunpack.c.h.b16 %v1522
    %v1897 = vunpack.c.l.b16 %v1523
    %v1898 = vunpack.c.h.b16 %v1523
    %v1899 = vunpack.c.l.b16 %v1524
    %v1900 = vunpack.c.h.b16 %v1524
    %v1901 = vunpack.c.l.b16 %v1525
    %v1902 = vunpack.c.h.b16 %v1525
    %v1903 = vunpack.c.l.b16 %v1526
    %v1904 = vunpack.c.h.b16 %v1526
    %v1905 = vunpack.c.l.b16 %v1527
    %v1906 = vunpack.c.h.b16 %v1527
    %v1907 = vunpack.c.l.b16 %v1528
    %v1908 = vunpack.c.h.b16 %v1528
    %v1909 = vunpack.c.l.b16 %v1529
    %v1910 = vunpack.c.h.b16 %v1529
    %v1911 = vunpack.c.l.b16 %v1530
    %v1912 = vunpack.c.h.b16 %v1530
    %v1913 = vunpack.c.l.b16 %v1531
    %v1914 = vunpack.c.h.b16 %v1531
    %v1915 = vunpack.c.l.b16 %v1532
    %v1916 = vunpack.c.h.b16 %v1532
    %v1917 = vunpack.c.l.b16 %v1533
    %v1918 = vunpack.c.h.b16 %v1533
    %v1919 = vunpack.c.l.b16 %v1534
    %v1920 = vunpack.c.h.b16 %v1534
    %v1921 = vunpack.c.l.b16 %v1535
    %v1922 = vunpack.c.h.b16 %v1535
    %v1923 = vunpack.c.l.b16 %v1536
    %v1924 = vunpack.c.h.b16 %v1536
    %v1925 = vunpack.c.l.b16 %v1537
    %v1926 = vunpack.c.h.b16 %v1537
    %v1927 = vunpack.c.l.b16 %v1538
    %v1928 = vunpack.c.h.b16 %v1538
    %v1929 = vunpack.c.l.b16 %v1539
    %v1930 = vunpack.c.h.b16 %v1539
    %v1931 = vunpack.c.l.b16 %v1540
    %v1932 = vunpack.c.h.b16 %v1540
    %v1933 = vunpack.c.l.b16 %v1541
    %v1934 = vunpack.c.h.b16 %v1541
    %v1935 = vunpack.c.l.b16 %v1542
    %v1936 = vunpack.c.h.b16 %v1542
    %v1937 = vunpack.c.l.b16 %v1543
    %v1938 = vunpack.c.h.b16 %v1543
    %v1939 = vunpack.c.l.b16 %v1544
    %v1940 = vunpack.c.h.b16 %v1544
    %v1941 = vunpack.c.l.b16 %v1545
    %v1942 = vunpack.c.h.b16 %v1545
    %v1943 = vunpack.c.l.b16 %v1546
    %v1944 = vunpack.c.h.b16 %v1546
    %v1945 = vunpack.c.l.b16 %v1547
    %v1946 = vunpack.c.h.b16 %v1547
    %v1947 = vunpack.c.l.b16 %v1548
    %v1948 = vunpack.c.h.b16 %v1548
    %v1949 = vunpack.c.l.b16 %v1549
    %v1950 = vunpack.c.h.b16 %v1549
    %v1951 = vunpack.c.l.b16 %v1550
    %v1952 = vunpack.c.h.b16 %v1550
    %v1953 = vunpack.c.l.b16 %v1551
    %v1954 = vunpack.c.h.b16 %v1551
    %v1955 = vunpack.c.l.b16 %v1552
    %v1956 = vunpack.c.h.b16 %v1552
    %v1957 = vunpack.c.l.b16 %v1553
    %v1958 = vunpack.c.h.b16 %v1553
    %v1959 = vunpack.c.l.b16 %v1554
    %v1960 = vunpack.c.h.b16 %v1554
    %v1961 = vunpack.c.l.b16 %v1555
    %v1962 = vunpack.c.h.b16 %v1555
    %v1963 = vunpack.c.l.b16 %v1556
    %v1964 = vunpack.c.h.b16 %v1556
    %v1965 = vunpack.c.l.b16 %v1557
    %v1966 = vunpack.c.h.b16 %v1557
    %v1967 = vunpack.c.l.b16 %v1558
    %v1968 = vunpack.c.h.b16 %v1558
    %v1969 = vunpack.c.l.b16 %v1559
    %v1970 = vunpack.c.h.b16 %v1559
    %v1971 = vunpack.c.l.b16 %v1560
    %v1972 = vunpack.c.h.b16 %v1560
    %v1973 = vunpack.c.l.b16 %v1561
    %v1974 = vunpack.c.h.b16 %v1561
    %v1975 = vunpack.c.l.b16 %v1562
    %v1976 = vunpack.c.h.b16 %v1562
    %v1977 = vunpack.c.l.b16 %v1563
    %v1978 = vunpack.c.h.b16 %v1563
    %v1979 = vunpack.c.l.b16 %v1564
    %v1980 = vunpack.c.h.b16 %v1564
    %v1981 = vunpack.c.l.b16 %v1565
    %v1982 = vunpack.c.h.b16 %v1565
    %v1983 = vunpack.c.l.b16 %v1566
    %v1984 = vunpack.c.h.b16 %v1566
    %v1985 = vunpack.c.l.b16 %v1567
    %v1986 = vunpack.c.h.b16 %v1567
    %v1987 = vunpack.c.l.b16 %v1568
    %v1988 = vunpack.c.h.b16 %v1568
    %v1989 = vunpack.c.l.b16 %v1569
    %v1990 = vunpack.c.h.b16 %v1569
    %v1991 = vunpack.c.l.b16 %v1570
    %v1992 = vunpack.c.h.b16 %v1570
    %v1993 = vunpack.c.l.b16 %v1571
    %v1994 = vunpack.c.h.b16 %v1571
    %v1995 = vunpack.c.l.b16 %v1572
    %v1996 = vunpack.c.h.b16 %v1572
    %v1997 = vunpack.c.l.b16 %v1573
    %v1998 = vunpack.c.h.b16 %v1573
    %v1999 = vunpack.c.l.b16 %v1574
    %v2000 = vunpack.c.h.b16 %v1574
    %v2001 = vunpack.c.l.b16 %v1575
    %v2002 = vunpack.c.h.b16 %v1575
    %v2003 = vunpack.c.l.b16 %v1576
    %v2004 = vunpack.c.h.b16 %v1576
    %v2005 = vunpack.c.l.b16 %v1577
    %v2006 = vunpack.c.h.b16 %v1577
    %v2007 = vunpack.c.l.b16 %v1578
    %v2008 = vunpack.c.h.b16 %v1578
    %v2009 = vunpack.c.l.b16 %v1579
    %v2010 = vunpack.c.h.b16 %v1579
    %v2011 = vunpack.c.l.b16 %v1580
    %v2012 = vunpack.c.h.b16 %v1580
    %v2013 = vunpack.c.l.b16 %v1581
    %v2014 = vunpack.c.h.b16 %v1581
    %v2015 = vunpack.c.l.b16 %v1582
    %v2016 = vunpack.c.h.b16 %v1582
    %v2017 = vunpack.c.l.b16 %v1583
    %v2018 = vunpack.c.h.b16 %v1583
    %v2019 = vunpack.c.l.b16 %v1584
    %v2020 = vunpack.c.h.b16 %v1584
    %v2021 = vunpack.c.l.b16 %v1585
    %v2022 = vunpack.c.h.b16 %v1585
    %v2023 = vunpack.c.l.b16 %v1586
    %v2024 = vunpack.c.h.b16 %v1586
    %v2025 = vunpack.c.l.b16 %v1587
    %v2026 = vunpack.c.h.b16 %v1587
    %v2027 = vunpack.c.l.b16 %v1588
    %v2028 = vunpack.c.h.b16 %v1588
    %v2029 = vunpack.c.l.b16 %v1589
    %v2030 = vunpack.c.h.b16 %v1589
    %v2031 = vunpack.c.l.b16 %v1590
    %v2032 = vunpack.c.h.b16 %v1590
    %v2033 = vunpack.c.l.b16 %v1591
    %v2034 = vunpack.c.h.b16 %v1591
    %v2035 = vunpack.c.l.b16 %v1592
    %v2036 = vunpack.c.h.b16 %v1592
    %v2037 = vunpack.c.l.b16 %v1593
    %v2038 = vunpack.c.h.b16 %v1593
    %v2039 = vunpack.c.l.b16 %v1594
    %v2040 = vunpack.c.h.b16 %v1594
    %v2041 = vunpack.c.l.b16 %v1595
    %v2042 = vunpack.c.h.b16 %v1595
    %v2043 = vunpack.c.l.b16 %v1596
    %v2044 = vunpack.c.h.b16 %v1596
    %v2045 = vunpack.c.l.b16 %v1597
    %v2046 = vunpack.c.h.b16 %v1597
    %v2047 = vunpack.c.l.b16 %v1598
    %v2048 = vunpack.c.h.b16 %v1598
    %v2049 = vunpack.c.l.b16 %v1599
    %v2050 = vunpack.c.h.b16 %v1599
    %v2051 = vunpack.c.l.b16 %v1600
    %v2052 = vunpack.c.h.b16 %v1600
    %v2053 = vunpack.c.l.b16 %v1601
    %v2054 = vunpack.c.h.b16 %v1601
    %v2055 = vunpack.c.l.b16 %v1602
    %v2056 = vunpack.c.h.b16 %v1602
    %v2057 = vunpack.c.l.b16 %v1603
    %v2058 = vunpack.c.h.b16 %v1603
    %v2059 = vunpack.c.l.b16 %v1604
    %v2060 = vunpack.c.h.b16 %v1604
    %v2061 = vunpack.c.l.b16 %v1605
    %v2062 = vunpack.c.h.b16 %v1605
    %v2063 = vunpack.c.l.b16 %v1606
    %v2064 = vunpack.c.h.b16 %v1606
    %v2065 = vunpack.c.l.b16 %v1607
    %v2066 = vunpack.c.h.b16 %v1607
    %v2067 = vunpack.c.l.b16 %v1608
    %v2068 = vunpack.c.h.b16 %v1608
    %v2069 = vunpack.c.l.b16 %v1609
    %v2070 = vunpack.c.h.b16 %v1609
    %v2071 = vunpack.c.l.b16 %v1610
    %v2072 = vunpack.c.h.b16 %v1610
    %v2073 = vunpack.c.l.b16 %v1611
    %v2074 = vunpack.c.h.b16 %v1611
    %v2075 = vunpack.c.l.b16 %v1612
    %v2076 = vunpack.c.h.b16 %v1612
    %v2077 = vunpack.c.l.b16 %v1613
    %v2078 = vunpack.c.h.b16 %v1613
    %v2079 = vunpack.c.l.b16 %v1614
    %v2080 = vunpack.c.h.b16 %v1614
    %v2081 = vunpack.c.l.b16 %v1615
    %v2082 = vunpack.c.h.b16 %v1615
    %v2083 = vunpack.c.l.b16 %v1616
    %v2084 = vunpack.c.h.b16 %v1616
    %v2085 = vpack.c.b16 %v1845, %v1829
    %v2086 = vpack.c.b16 %v1846, %v1830
    %v2087 = vpack.c.b16 %v1847, %v1831
    %v2088 = vpack.c.b16 %v1848, %v1832
    %v2089 = vpack.c.b16 %v1849, %v1833
    %v2090 = vpack.c.b16 %v1850, %v1834
    %v2091 = vpack.c.b16 %v1851, %v1835
    %v2092 = vpack.c.b16 %v1852, %v1836
    %v2093 = vpack.c.b16 %v1853, %v1837
    %v2094 = vpack.c.b16 %v1854, %v1838
    %v2095 = vpack.c.b16 %v1855, %v1839
    %v2096 = vpack.c.b16 %v1856, %v1840
    %v2097 = vpack.c.b16 %v1857, %v1841
    %v2098 = vpack.c.b16 %v1858, %v1842
    %v2099 = vpack.c.b16 %v1859, %v1843
    %v2100 = vpack.c.b16 %v1860, %v1844
    %v2101 = vpack.c.b16 %v1877, %v1861
    %v2102 = vpack.c.b16 %v1878, %v1862
    %v2103 = vpack.c.b16 %v1879, %v1863
    %v2104 = vpack.c.b16 %v1880, %v1864
    %v2105 = vpack.c.b16 %v1881, %v1865
    %v2106 = vpack.c.b16 %v1882, %v1866
    %v2107 = vpack.c.b16 %v1883, %v1867
    %v2108 = vpack.c.b16 %v1884, %v1868
    %v2109 = vpack.c.b16 %v1885, %v1869
    %v2110 = vpack.c.b16 %v1886, %v1870
    %v2111 = vpack.c.b16 %v1887, %v1871
    %v2112 = vpack.c.b16 %v1888, %v1872
    %v2113 = vpack.c.b16 %v1889, %v1873
    %v2114 = vpack.c.b16 %v1890, %v1874
    %v2115 = vpack.c.b16 %v1891, %v1875
    %v2116 = vpack.c.b16 %v1892, %v1876
    %v2117 = vpack.c.b16 %v1909, %v1893
    %v2118 = vpack.c.b16 %v1910, %v1894
    %v2119 = vpack.c.b16 %v1911, %v1895
    %v2120 = vpack.c.b16 %v1912, %v1896
    %v2121 = vpack.c.b16 %v1913, %v1897
    %v2122 = vpack.c.b16 %v1914, %v1898
    %v2123 = vpack.c.b16 %v1915, %v1899
    %v2124 = vpack.c.b16 %v1916, %v1900
    %v2125 = vpack.c.b16 %v1917, %v1901
    %v2126 = vpack.c.b16 %v1918, %v1902
    %v2127 = vpack.c.b16 %v1919, %v1903
    %v2128 = vpack.c.b16 %v1920, %v1904
    %v2129 = vpack.c.b16 %v1921, %v1905
    %v2130 = vpack.c.b16 %v1922, %v1906
    %v2131 = vpack.c.b16 %v1923, %v1907
    %v2132 = vpack.c.b16 %v1924, %v1908
    %v2133 = vpack.c.b16 %v1941, %v1925
    %v2134 = vpack.c.b16 %v1942, %v1926
    %v2135 = vpack.c.b16 %v1943, %v1927
    %v2136 = vpack.c.b16 %v1944, %v1928
    %v2137 = vpack.c.b16 %v1945, %v1929
    %v2138 = vpack.c.b16 %v1946, %v1930
    %v2139 = vpack.c.b16 %v1947, %v1931
    %v2140 = vpack.c.b16 %v1948, %v1932
    %v2141 = vpack.c.b16 %v1949, %v1933
    %v2142 = vpack.c.b16 %v1950, %v1934
    %v2143 = vpack.c.b16 %v1951, %v1935
    %v2144 = vpack.c.b16 %v1952, %v1936
    %v2145 = vpack.c.b16 %v1953, %v1937
    %v2146 = vpack.c.b16 %v1954, %v1938
    %v2147 = vpack.c.b16 %v1955, %v1939
    %v2148 = vpack.c.b16 %v1956, %v1940
    %v2149 = vpack.c.b16 %v1973, %v1957
    %v2150 = vpack.c.b16 %v1974, %v1958
    %v2151 = vpack.c.b16 %v1975, %v1959
    %v2152 = vpack.c.b16 %v1976, %v1960
    %v2153 = vpack.c.b16 %v1977, %v1961
    %v2154 = vpack.c.b16 %v1978, %v1962
    %v2155 = vpack.c.b16 %v1979, %v1963
    %v2156 = vpack.c.b16 %v1980, %v1964
    %v2157 = vpack.c.b16 %v1981, %v1965
    %v2158 = vpack.c.b16 %v1982, %v1966
    %v2159 = vpack.c.b16 %v1983, %v1967
    %v2160 = vpack.c.b16 %v1984, %v1968
    %v2161 = vpack.c.b16 %v1985, %v1969
    %v2162 = vpack.c.b16 %v1986, %v1970
    %v2163 = vpack.c.b16 %v1987, %v1971
    %v2164 = vpack.c.b16 %v1988, %v1972
    %v2165 = vpack.c.b16 %v2005, %v1989
    %v2166 = vpack.c.b16 %v2006, %v1990
    %v2167 = vpack.c.b16 %v2007, %v1991
    %v2168 = vpack.c.b16 %v2008, %v1992
    %v2169 = vpack.c.b16 %v2009, %v1993
    %v2170 = vpack.c.b16 %v2010, %v1994
    %v2171 = vpack.c.b16 %v2011, %v1995
    %v2172 = vpack.c.b16 %v2012, %v1996
    %v2173 = vpack.c.b16 %v2013, %v1997
    %v2174 = vpack.c.b16 %v2014, %v1998
    %v2175 = vpack.c.b16 %v2015, %v1999
    %v2176 = vpack.c.b16 %v2016, %v2000
    %v2177 = vpack.c.b16 %v2017, %v2001
    %v2178 = vpack.c.b16 %v2018, %v2002
    %v2179 = vpack.c.b16 %v2019, %v2003
    %v2180 = vpack.c.b16 %v2020, %v2004
    %v2181 = vpack.c.b16 %v2037, %v2021
    %v2182 = vpack.c.b16 %v2038, %v2022
    %v2183 = vpack.c.b16 %v2039, %v2023
    %v2184 = vpack.c.b16 %v2040, %v2024
    %v2185 = vpack.c.b16 %v2041, %v2025
    %v2186 = vpack.c.b16 %v2042, %v2026
    %v2187 = vpack.c.b16 %v2043, %v2027
    %v2188 = vpack.c.b16 %v2044, %v2028
    %v2189 = vpack.c.b16 %v2045, %v2029
    %v2190 = vpack.c.b16 %v2046, %v2030
    %v2191 = vpack.c.b16 %v2047, %v2031
    %v2192 = vpack.c.b16 %v2048, %v2032
    %v2193 = vpack.c.b16 %v2049, %v2033
    %v2194 = vpack.c.b16 %v2050, %v2034
    %v2195 = vpack.c.b16 %v2051, %v2035
    %v2196 = vpack.c.b16 %v2052, %v2036
    %v2197 = vpack.c.b16 %v2069, %v2053
    %v2198 = vpack.c.b16 %v2070, %v2054
    %v2199 = vpack.c.b16 %v2071, %v2055
    %v2200 = vpack.c.b16 %v2072, %v2056
    %v2201 = vpack.c.b16 %v2073, %v2057
    %v2202 = vpack.c.b16 %v2074, %v2058
    %v2203 = vpack.c.b16 %v2075, %v2059
    %v2204 = vpack.c.b16 %v2076, %v2060
    %v2205 = vpack.c.b16 %v2077, %v2061
    %v2206 = vpack.c.b16 %v2078, %v2062
    %v2207 = vpack.c.b16 %v2079, %v2063
    %v2208 = vpack.c.b16 %v2080, %v2064
    %v2209 = vpack.c.b16 %v2081, %v2065
    %v2210 = vpack.c.b16 %v2082, %v2066
    %v2211 = vpack.c.b16 %v2083, %v2067
    %v2212 = vpack.c.b16 %v2084, %v2068
    %2341 = vmatprep.subr.bf16.mxu0 %v2086
    %2342 = vmatpush1.bf16.msra.mxu0 %v2085
    %2343 = vmatprep.subr.bf16.mxu0 %v2102
    %2344 = vmatpush1.bf16.msra.mxu0 %v2101
    %2345 = vmatprep.subr.bf16.mxu0 %v2118
    %2346 = vmatpush1.bf16.msra.mxu0 %v2117
    %2347 = vmatprep.subr.bf16.mxu0 %v2134
    %2348 = vmatpush1.bf16.msra.mxu0 %v2133
    %2349 = vmatprep.subr.bf16.mxu0 %v2150
    %2350 = vmatpush1.bf16.msra.mxu0 %v2149
    %2351 = vmatprep.subr.bf16.mxu0 %v2166
    %2352 = vmatpush1.bf16.msra.mxu0 %v2165
    %2353 = vmatprep.subr.bf16.mxu0 %v2182
    %2354 = vmatpush1.bf16.msra.mxu0 %v2181
    %2355 = vmatprep.subr.bf16.mxu0 %v2198
    %2356 = vmatpush1.bf16.msra.mxu0 %v2197
    %2357 = vmatprep.subr.bf16.mxu0 0
    %2358 = vmatpush1.bf16.msra.mxu0 0
    %2359 = vmatprep.subr.bf16.mxu0 0
    %2360 = vmatpush1.bf16.msra.mxu0 0
    %2361 = vmatprep.subr.bf16.mxu0 0
    %2362 = vmatpush1.bf16.msra.mxu0 0
    %2363 = vmatprep.subr.bf16.mxu0 0
    %2364 = vmatpush1.bf16.msra.mxu0 0
    %2365 = vmatprep.subr.bf16.mxu0 0
    %2366 = vmatpush1.bf16.msra.mxu0 0
    %2367 = vmatprep.subr.bf16.mxu0 0
    %2368 = vmatpush1.bf16.msra.mxu0 0
    %2369 = vmatprep.subr.bf16.mxu0 0
    %2370 = vmatpush1.bf16.msra.mxu0 0
    %2371 = vmatprep.subr.bf16.mxu0 0
    %2372 = vmatpush1.bf16.msra.mxu0 0
    %2373 = vmatprep.mubr.bf16.mxu0 0
    %2374 = vmatmul.mubr.bf16.gmra.mrb[0].mxu0 %v1488
    %v2375 = vpop.f32.mrb[0].mxu0
    %v2376 = vadd.f32 %v1624, %v2375
    %v2377 = vpop.f32.mrb[0].mxu0
    %v2378 = vadd.f32 %v1628, %v2377
    %v2379 = vpop.f32.mrb[0].mxu0
    %v2380 = vadd.f32 %v1624, %v2379
    %v2381 = vpop.f32.mrb[0].mxu0
    %v2382 = vadd.f32 %v1628, %v2381
    %2383 = vdwg.mxu0
    %2384 = vmatprep.subr.bf16.mxu0 %v2088
    %2385 = vmatpush1.bf16.msra.mxu0 %v2087
    %2386 = vmatprep.subr.bf16.mxu0 %v2104
    %2387 = vmatpush1.bf16.msra.mxu0 %v2103
    %2388 = vmatprep.subr.bf16.mxu0 %v2120
    %2389 = vmatpush1.bf16.msra.mxu0 %v2119
    %2390 = vmatprep.subr.bf16.mxu0 %v2136
    %2391 = vmatpush1.bf16.msra.mxu0 %v2135
    %2392 = vmatprep.subr.bf16.mxu0 %v2152
    %2393 = vmatpush1.bf16.msra.mxu0 %v2151
    %2394 = vmatprep.subr.bf16.mxu0 %v2168
    %2395 = vmatpush1.bf16.msra.mxu0 %v2167
    %2396 = vmatprep.subr.bf16.mxu0 %v2184
    %2397 = vmatpush1.bf16.msra.mxu0 %v2183
    %2398 = vmatprep.subr.bf16.mxu0 %v2200
    %2399 = vmatpush1.bf16.msra.mxu0 %v2199
    %2400 = vmatprep.subr.bf16.mxu0 0
    %2401 = vmatpush1.bf16.msra.mxu0 0
    %2402 = vmatprep.subr.bf16.mxu0 0
    %2403 = vmatpush1.bf16.msra.mxu0 0
    %2404 = vmatprep.subr.bf16.mxu0 0
    %2405 = vmatpush1.bf16.msra.mxu0 0
    %2406 = vmatprep.subr.bf16.mxu0 0
    %2407 = vmatpush1.bf16.msra.mxu0 0
    %2408 = vmatprep.subr.bf16.mxu0 0
    %2409 = vmatpush1.bf16.msra.mxu0 0
    %2410 = vmatprep.subr.bf16.mxu0 0
    %2411 = vmatpush1.bf16.msra.mxu0 0
    %2412 = vmatprep.subr.bf16.mxu0 0
    %2413 = vmatpush1.bf16.msra.mxu0 0
    %2414 = vmatprep.subr.bf16.mxu0 0
    %2415 = vmatpush1.bf16.msra.mxu0 0
    %2416 = vmatprep.mubr.bf16.mxu0 0
    %2417 = vmatmul.mubr.bf16.gmra.mrb[0].mxu0 %v1488
    %v2418 = vpop.f32.mrb[0].mxu0
    %v2419 = vadd.f32 %v1632, %v2418
    %v2420 = vpop.f32.mrb[0].mxu0
    %v2421 = vadd.f32 %v1636, %v2420
    %v2422 = vpop.f32.mrb[0].mxu0
    %v2423 = vadd.f32 %v1632, %v2422
    %v2424 = vpop.f32.mrb[0].mxu0
    %v2425 = vadd.f32 %v1636, %v2424
    %2426 = vdwg.mxu0
    %2427 = vmatprep.subr.bf16.mxu0 %v2090
    %2428 = vmatpush1.bf16.msra.mxu0 %v2089
    %2429 = vmatprep.subr.bf16.mxu0 %v2106
    %2430 = vmatpush1.bf16.msra.mxu0 %v2105
    %2431 = vmatprep.subr.bf16.mxu0 %v2122
    %2432 = vmatpush1.bf16.msra.mxu0 %v2121
    %2433 = vmatprep.subr.bf16.mxu0 %v2138
    %2434 = vmatpush1.bf16.msra.mxu0 %v2137
    %2435 = vmatprep.subr.bf16.mxu0 %v2154
    %2436 = vmatpush1.bf16.msra.mxu0 %v2153
    %2437 = vmatprep.subr.bf16.mxu0 %v2170
    %2438 = vmatpush1.bf16.msra.mxu0 %v2169
    %2439 = vmatprep.subr.bf16.mxu0 %v2186
    %2440 = vmatpush1.bf16.msra.mxu0 %v2185
    %2441 = vmatprep.subr.bf16.mxu0 %v2202
    %2442 = vmatpush1.bf16.msra.mxu0 %v2201
    %2443 = vmatprep.subr.bf16.mxu0 0
    %2444 = vmatpush1.bf16.msra.mxu0 0
    %2445 = vmatprep.subr.bf16.mxu0 0
    %2446 = vmatpush1.bf16.msra.mxu0 0
    %2447 = vmatprep.subr.bf16.mxu0 0
    %2448 = vmatpush1.bf16.msra.mxu0 0
    %2449 = vmatprep.subr.bf16.mxu0 0
    %2450 = vmatpush1.bf16.msra.mxu0 0
    %2451 = vmatprep.subr.bf16.mxu0 0
    %2452 = vmatpush1.bf16.msra.mxu0 0
    %2453 = vmatprep.subr.bf16.mxu0 0
    %2454 = vmatpush1.bf16.msra.mxu0 0
    %2455 = vmatprep.subr.bf16.mxu0 0
    %2456 = vmatpush1.bf16.msra.mxu0 0
    %2457 = vmatprep.subr.bf16.mxu0 0
    %2458 = vmatpush1.bf16.msra.mxu0 0
    %2459 = vmatprep.mubr.bf16.mxu0 0
    %2460 = vmatmul.mubr.bf16.gmra.mrb[0].mxu0 %v1488
    %v2461 = vpop.f32.mrb[0].mxu0
    %v2462 = vadd.f32 %v1640, %v2461
    %v2463 = vpop.f32.mrb[0].mxu0
    %v2464 = vadd.f32 %v1644, %v2463
    %v2465 = vpop.f32.mrb[0].mxu0
    %v2466 = vadd.f32 %v1640, %v2465
    %v2467 = vpop.f32.mrb[0].mxu0
    %v2468 = vadd.f32 %v1644, %v2467
    %2469 = vdwg.mxu0
    %2470 = vmatprep.subr.bf16.mxu0 %v2092
    %2471 = vmatpush1.bf16.msra.mxu0 %v2091
    %2472 = vmatprep.subr.bf16.mxu0 %v2108
    %2473 = vmatpush1.bf16.msra.mxu0 %v2107
    %2474 = vmatprep.subr.bf16.mxu0 %v2124
    %2475 = vmatpush1.bf16.msra.mxu0 %v2123
    %2476 = vmatprep.subr.bf16.mxu0 %v2140
    %2477 = vmatpush1.bf16.msra.mxu0 %v2139
    %2478 = vmatprep.subr.bf16.mxu0 %v2156
    %2479 = vmatpush1.bf16.msra.mxu0 %v2155
    %2480 = vmatprep.subr.bf16.mxu0 %v2172
    %2481 = vmatpush1.bf16.msra.mxu0 %v2171
    %2482 = vmatprep.subr.bf16.mxu0 %v2188
    %2483 = vmatpush1.bf16.msra.mxu0 %v2187
    %2484 = vmatprep.subr.bf16.mxu0 %v2204
    %2485 = vmatpush1.bf16.msra.mxu0 %v2203
    %2486 = vmatprep.subr.bf16.mxu0 0
    %2487 = vmatpush1.bf16.msra.mxu0 0
    %2488 = vmatprep.subr.bf16.mxu0 0
    %2489 = vmatpush1.bf16.msra.mxu0 0
    %2490 = vmatprep.subr.bf16.mxu0 0
    %2491 = vmatpush1.bf16.msra.mxu0 0
    %2492 = vmatprep.subr.bf16.mxu0 0
    %2493 = vmatpush1.bf16.msra.mxu0 0
    %2494 = vmatprep.subr.bf16.mxu0 0
    %2495 = vmatpush1.bf16.msra.mxu0 0
    %2496 = vmatprep.subr.bf16.mxu0 0
    %2497 = vmatpush1.bf16.msra.mxu0 0
    %2498 = vmatprep.subr.bf16.mxu0 0
    %2499 = vmatpush1.bf16.msra.mxu0 0
    %2500 = vmatprep.subr.bf16.mxu0 0
    %2501 = vmatpush1.bf16.msra.mxu0 0
    %2502 = vmatprep.mubr.bf16.mxu0 0
    %2503 = vmatmul.mubr.bf16.gmra.mrb[0].mxu0 %v1488
    %v2504 = vpop.f32.mrb[0].mxu0
    %v2505 = vadd.f32 %v1648, %v2504
    %v2506 = vpop.f32.mrb[0].mxu0
    %v2507 = vadd.f32 %v1652, %v2506
    %v2508 = vpop.f32.mrb[0].mxu0
    %v2509 = vadd.f32 %v1648, %v2508
    %v2510 = vpop.f32.mrb[0].mxu0
    %v2511 = vadd.f32 %v1652, %v2510
    %2512 = vdwg.mxu0
    %2513 = vmatprep.subr.bf16.mxu0 %v2094
    %2514 = vmatpush1.bf16.msra.mxu0 %v2093
    %2515 = vmatprep.subr.bf16.mxu0 %v2110
    %2516 = vmatpush1.bf16.msra.mxu0 %v2109
    %2517 = vmatprep.subr.bf16.mxu0 %v2126
    %2518 = vmatpush1.bf16.msra.mxu0 %v2125
    %2519 = vmatprep.subr.bf16.mxu0 %v2142
    %2520 = vmatpush1.bf16.msra.mxu0 %v2141
    %2521 = vmatprep.subr.bf16.mxu0 %v2158
    %2522 = vmatpush1.bf16.msra.mxu0 %v2157
    %2523 = vmatprep.subr.bf16.mxu0 %v2174
    %2524 = vmatpush1.bf16.msra.mxu0 %v2173
    %2525 = vmatprep.subr.bf16.mxu0 %v2190
    %2526 = vmatpush1.bf16.msra.mxu0 %v2189
    %2527 = vmatprep.subr.bf16.mxu0 %v2206
    %2528 = vmatpush1.bf16.msra.mxu0 %v2205
    %2529 = vmatprep.subr.bf16.mxu0 0
    %2530 = vmatpush1.bf16.msra.mxu0 0
    %2531 = vmatprep.subr.bf16.mxu0 0
    %2532 = vmatpush1.bf16.msra.mxu0 0
    %2533 = vmatprep.subr.bf16.mxu0 0
    %2534 = vmatpush1.bf16.msra.mxu0 0
    %2535 = vmatprep.subr.bf16.mxu0 0
    %2536 = vmatpush1.bf16.msra.mxu0 0
    %2537 = vmatprep.subr.bf16.mxu0 0
    %2538 = vmatpush1.bf16.msra.mxu0 0
    %2539 = vmatprep.subr.bf16.mxu0 0
    %2540 = vmatpush1.bf16.msra.mxu0 0
    %2541 = vmatprep.subr.bf16.mxu0 0
    %2542 = vmatpush1.bf16.msra.mxu0 0
    %2543 = vmatprep.subr.bf16.mxu0 0
    %2544 = vmatpush1.bf16.msra.mxu0 0
    %2545 = vmatprep.mubr.bf16.mxu0 0
    %2546 = vmatmul.mubr.bf16.gmra.mrb[0].mxu0 %v1488
    %v2547 = vpop.f32.mrb[0].mxu0
    %v2548 = vadd.f32 %v1656, %v2547
    %v2549 = vpop.f32.mrb[0].mxu0
    %v2550 = vadd.f32 %v1660, %v2549
    %v2551 = vpop.f32.mrb[0].mxu0
    %v2552 = vadd.f32 %v1656, %v2551
    %v2553 = vpop.f32.mrb[0].mxu0
    %v2554 = vadd.f32 %v1660, %v2553
    %2555 = vdwg.mxu0
    %2556 = vmatprep.subr.bf16.mxu0 %v2096
    %2557 = vmatpush1.bf16.msra.mxu0 %v2095
    %2558 = vmatprep.subr.bf16.mxu0 %v2112
    %2559 = vmatpush1.bf16.msra.mxu0 %v2111
    %2560 = vmatprep.subr.bf16.mxu0 %v2128
    %2561 = vmatpush1.bf16.msra.mxu0 %v2127
    %2562 = vmatprep.subr.bf16.mxu0 %v2144
    %2563 = vmatpush1.bf16.msra.mxu0 %v2143
    %2564 = vmatprep.subr.bf16.mxu0 %v2160
    %2565 = vmatpush1.bf16.msra.mxu0 %v2159
    %2566 = vmatprep.subr.bf16.mxu0 %v2176
    %2567 = vmatpush1.bf16.msra.mxu0 %v2175
    %2568 = vmatprep.subr.bf16.mxu0 %v2192
    %2569 = vmatpush1.bf16.msra.mxu0 %v2191
    %2570 = vmatprep.subr.bf16.mxu0 %v2208
    %2571 = vmatpush1.bf16.msra.mxu0 %v2207
    %2572 = vmatprep.subr.bf16.mxu0 0
    %2573 = vmatpush1.bf16.msra.mxu0 0
    %2574 = vmatprep.subr.bf16.mxu0 0
    %2575 = vmatpush1.bf16.msra.mxu0 0
    %2576 = vmatprep.subr.bf16.mxu0 0
    %2577 = vmatpush1.bf16.msra.mxu0 0
    %2578 = vmatprep.subr.bf16.mxu0 0
    %2579 = vmatpush1.bf16.msra.mxu0 0
    %2580 = vmatprep.subr.bf16.mxu0 0
    %2581 = vmatpush1.bf16.msra.mxu0 0
    %2582 = vmatprep.subr.bf16.mxu0 0
    %2583 = vmatpush1.bf16.msra.mxu0 0
    %2584 = vmatprep.subr.bf16.mxu0 0
    %2585 = vmatpush1.bf16.msra.mxu0 0
    %2586 = vmatprep.subr.bf16.mxu0 0
    %2587 = vmatpush1.bf16.msra.mxu0 0
    %2588 = vmatprep.mubr.bf16.mxu0 0
    %2589 = vmatmul.mubr.bf16.gmra.mrb[0].mxu0 %v1488
    %v2590 = vpop.f32.mrb[0].mxu0
    %v2591 = vadd.f32 %v1664, %v2590
    %v2592 = vpop.f32.mrb[0].mxu0
    %v2593 = vadd.f32 %v1668, %v2592
    %v2594 = vpop.f32.mrb[0].mxu0
    %v2595 = vadd.f32 %v1664, %v2594
    %v2596 = vpop.f32.mrb[0].mxu0
    %v2597 = vadd.f32 %v1668, %v2596
    %2598 = vdwg.mxu0
    %2599 = vmatprep.subr.bf16.mxu0 %v2098
    %2600 = vmatpush1.bf16.msra.mxu0 %v2097
    %2601 = vmatprep.subr.bf16.mxu0 %v2114
    %2602 = vmatpush1.bf16.msra.mxu0 %v2113
    %2603 = vmatprep.subr.bf16.mxu0 %v2130
    %2604 = vmatpush1.bf16.msra.mxu0 %v2129
    %2605 = vmatprep.subr.bf16.mxu0 %v2146
    %2606 = vmatpush1.bf16.msra.mxu0 %v2145
    %2607 = vmatprep.subr.bf16.mxu0 %v2162
    %2608 = vmatpush1.bf16.msra.mxu0 %v2161
    %2609 = vmatprep.subr.bf16.mxu0 %v2178
    %2610 = vmatpush1.bf16.msra.mxu0 %v2177
    %2611 = vmatprep.subr.bf16.mxu0 %v2194
    %2612 = vmatpush1.bf16.msra.mxu0 %v2193
    %2613 = vmatprep.subr.bf16.mxu0 %v2210
    %2614 = vmatpush1.bf16.msra.mxu0 %v2209
    %2615 = vmatprep.subr.bf16.mxu0 0
    %2616 = vmatpush1.bf16.msra.mxu0 0
    %2617 = vmatprep.subr.bf16.mxu0 0
    %2618 = vmatpush1.bf16.msra.mxu0 0
    %2619 = vmatprep.subr.bf16.mxu0 0
    %2620 = vmatpush1.bf16.msra.mxu0 0
    %2621 = vmatprep.subr.bf16.mxu0 0
    %2622 = vmatpush1.bf16.msra.mxu0 0
    %2623 = vmatprep.subr.bf16.mxu0 0
    %2624 = vmatpush1.bf16.msra.mxu0 0
    %2625 = vmatprep.subr.bf16.mxu0 0
    %2626 = vmatpush1.bf16.msra.mxu0 0
    %2627 = vmatprep.subr.bf16.mxu0 0
    %2628 = vmatpush1.bf16.msra.mxu0 0
    %2629 = vmatprep.subr.bf16.mxu0 0
    %2630 = vmatpush1.bf16.msra.mxu0 0
    %2631 = vmatprep.mubr.bf16.mxu0 0
    %2632 = vmatmul.mubr.bf16.gmra.mrb[0].mxu0 %v1488
    %v2633 = vpop.f32.mrb[0].mxu0
    %v2634 = vadd.f32 %v1672, %v2633
    %v2635 = vpop.f32.mrb[0].mxu0
    %v2636 = vadd.f32 %v1676, %v2635
    %v2637 = vpop.f32.mrb[0].mxu0
    %v2638 = vadd.f32 %v1672, %v2637
    %v2639 = vpop.f32.mrb[0].mxu0
    %v2640 = vadd.f32 %v1676, %v2639
    %2641 = vdwg.mxu0
    %2642 = vmatprep.subr.bf16.mxu0 %v2100
    %2643 = vmatpush1.bf16.msra.mxu0 %v2099
    %2644 = vmatprep.subr.bf16.mxu0 %v2116
    %2645 = vmatpush1.bf16.msra.mxu0 %v2115
    %2646 = vmatprep.subr.bf16.mxu0 %v2132
    %2647 = vmatpush1.bf16.msra.mxu0 %v2131
    %2648 = vmatprep.subr.bf16.mxu0 %v2148
    %2649 = vmatpush1.bf16.msra.mxu0 %v2147
    %2650 = vmatprep.subr.bf16.mxu0 %v2164
    %2651 = vmatpush1.bf16.msra.mxu0 %v2163
    %2652 = vmatprep.subr.bf16.mxu0 %v2180
    %2653 = vmatpush1.bf16.msra.mxu0 %v2179
    %2654 = vmatprep.subr.bf16.mxu0 %v2196
    %2655 = vmatpush1.bf16.msra.mxu0 %v2195
    %2656 = vmatprep.subr.bf16.mxu0 %v2212
    %2657 = vmatpush1.bf16.msra.mxu0 %v2211
    %2658 = vmatprep.subr.bf16.mxu0 0
    %2659 = vmatpush1.bf16.msra.mxu0 0
    %2660 = vmatprep.subr.bf16.mxu0 0
    %2661 = vmatpush1.bf16.msra.mxu0 0
    %2662 = vmatprep.subr.bf16.mxu0 0
    %2663 = vmatpush1.bf16.msra.mxu0 0
    %2664 = vmatprep.subr.bf16.mxu0 0
    %2665 = vmatpush1.bf16.msra.mxu0 0
    %2666 = vmatprep.subr.bf16.mxu0 0
    %2667 = vmatpush1.bf16.msra.mxu0 0
    %2668 = vmatprep.subr.bf16.mxu0 0
    %2669 = vmatpush1.bf16.msra.mxu0 0
    %2670 = vmatprep.subr.bf16.mxu0 0
    %2671 = vmatpush1.bf16.msra.mxu0 0
    %2672 = vmatprep.subr.bf16.mxu0 0
    %2673 = vmatpush1.bf16.msra.mxu0 0
    %2674 = vmatprep.mubr.bf16.mxu0 0
    %2675 = vmatmul.mubr.bf16.gmra.mrb[0].mxu0 %v1488
    %v2676 = vpop.f32.mrb[0].mxu0
    %v2677 = vadd.f32 %v1680, %v2676
    %v2678 = vpop.f32.mrb[0].mxu0
    %v2679 = vadd.f32 %v1684, %v2678
    %v2680 = vpop.f32.mrb[0].mxu0
    %v2681 = vadd.f32 %v1680, %v2680
    %v2682 = vpop.f32.mrb[0].mxu0
    %v2683 = vadd.f32 %v1684, %v2682
    %2684 = vdwg.mxu0
    %v2685 = vmax.f32 %v2376, 0.0
    %v2686 = vmax.f32 %v2378, 0.0
    %v2687 = vmax.f32 %v2419, 0.0
    %v2688 = vmax.f32 %v2421, 0.0
    %v2689 = vmax.f32 %v2462, 0.0
    %v2690 = vmax.f32 %v2464, 0.0
    %v2691 = vmax.f32 %v2505, 0.0
    %v2692 = vmax.f32 %v2507, 0.0
    %v2693 = vmax.f32 %v2548, 0.0
    %v2694 = vmax.f32 %v2550, 0.0
    %v2695 = vmax.f32 %v2591, 0.0
    %v2696 = vmax.f32 %v2593, 0.0
    %v2697 = vmax.f32 %v2634, 0.0
    %v2698 = vmax.f32 %v2636, 0.0
    %v2699 = vmax.f32 %v2677, 0.0
    %v2700 = vmax.f32 %v2679, 0.0
    %v2701 = vmax.f32 %v2380, 0.0
    %v2702 = vmax.f32 %v2382, 0.0
    %v2703 = vmax.f32 %v2423, 0.0
    %v2704 = vmax.f32 %v2425, 0.0
    %v2705 = vmax.f32 %v2466, 0.0
    %v2706 = vmax.f32 %v2468, 0.0
    %v2707 = vmax.f32 %v2509, 0.0
    %v2708 = vmax.f32 %v2511, 0.0
    %v2709 = vmax.f32 %v2552, 0.0
    %v2710 = vmax.f32 %v2554, 0.0
    %v2711 = vmax.f32 %v2595, 0.0
    %v2712 = vmax.f32 %v2597, 0.0
    %v2713 = vmax.f32 %v2638, 0.0
    %v2714 = vmax.f32 %v2640, 0.0
    %v2715 = vmax.f32 %v2681, 0.0
    %v2716 = vmax.f32 %v2683, 0.0
    %v2717 = vpack.c.bf16 %v2701, %v2685
    %v2718 = vpack.c.bf16 %v2702, %v2686
    %v2719 = vpack.c.bf16 %v2703, %v2687
    %v2720 = vpack.c.bf16 %v2704, %v2688
    %v2721 = vpack.c.bf16 %v2705, %v2689
    %v2722 = vpack.c.bf16 %v2706, %v2690
    %v2723 = vpack.c.bf16 %v2707, %v2691
    %v2724 = vpack.c.bf16 %v2708, %v2692
    %v2725 = vpack.c.bf16 %v2709, %v2693
    %v2726 = vpack.c.bf16 %v2710, %v2694
    %v2727 = vpack.c.bf16 %v2711, %v2695
    %v2728 = vpack.c.bf16 %v2712, %v2696
    %v2729 = vpack.c.bf16 %v2713, %v2697
    %v2730 = vpack.c.bf16 %v2714, %v2698
    %v2731 = vpack.c.bf16 %v2715, %v2699
    %v2732 = vpack.c.bf16 %v2716, %v2700
    %v2733 = vld [vmem:[#allocation13] sm:$0xf]
    %v2734 = vld [vmem:[#allocation13 + $0x4] sm:$0xf]
    %v2735 = vld [vmem:[#allocation13 + $0x8] sm:$0xf]
    %v2736 = vld [vmem:[#allocation13 + $0xc] sm:$0xf]
    %v2737 = vld [vmem:[#allocation13 + $0x10] sm:$0xf]
    %v2738 = vld [vmem:[#allocation13 + $0x14] sm:$0xf]
    %v2739 = vld [vmem:[#allocation13 + $0x18] sm:$0xf]
    %v2740 = vld [vmem:[#allocation13 + $0x1c] sm:$0xf]
    %v2741 = vld [vmem:[#allocation13 + $0x20] sm:$0xf]
    %v2742 = vld [vmem:[#allocation13 + $0x24] sm:$0xf]
    %v2743 = vld [vmem:[#allocation13 + $0x28] sm:$0xf]
    %v2744 = vld [vmem:[#allocation13 + $0x2c] sm:$0xf]
    %v2745 = vld [vmem:[#allocation13 + $0x30] sm:$0xf]
    %v2746 = vld [vmem:[#allocation13 + $0x34] sm:$0xf]
    %v2747 = vld [vmem:[#allocation13 + $0x38] sm:$0xf]
    %v2748 = vld [vmem:[#allocation13 + $0x3c] sm:$0xf]
    %v2749 = vld [vmem:[#allocation13 + $0x40] sm:$0xf]
    %v2750 = vld [vmem:[#allocation13 + $0x44] sm:$0xf]
    %v2751 = vld [vmem:[#allocation13 + $0x48] sm:$0xf]
    %v2752 = vld [vmem:[#allocation13 + $0x4c] sm:$0xf]
    %v2753 = vld [vmem:[#allocation13 + $0x50] sm:$0xf]
    %v2754 = vld [vmem:[#allocation13 + $0x54] sm:$0xf]
    %v2755 = vld [vmem:[#allocation13 + $0x58] sm:$0xf]
    %v2756 = vld [vmem:[#allocation13 + $0x5c] sm:$0xf]
    %v2757 = vld [vmem:[#allocation13 + $0x60] sm:$0xf]
    %v2758 = vld [vmem:[#allocation13 + $0x64] sm:$0xf]
    %v2759 = vld [vmem:[#allocation13 + $0x68] sm:$0xf]
    %v2760 = vld [vmem:[#allocation13 + $0x6c] sm:$0xf]
    %v2761 = vld [vmem:[#allocation13 + $0x70] sm:$0xf]
    %v2762 = vld [vmem:[#allocation13 + $0x74] sm:$0xf]
    %v2763 = vld [vmem:[#allocation13 + $0x78] sm:$0xf]
    %v2764 = vld [vmem:[#allocation13 + $0x7c] sm:$0xf]
    %v2765 = vld [vmem:[#allocation13 + $0x80] sm:$0xf]
    %v2766 = vld [vmem:[#allocation13 + $0x84] sm:$0xf]
    %v2767 = vld [vmem:[#allocation13 + $0x88] sm:$0xf]
    %v2768 = vld [vmem:[#allocation13 + $0x8c] sm:$0xf]
    %v2769 = vld [vmem:[#allocation13 + $0x90] sm:$0xf]
    %v2770 = vld [vmem:[#allocation13 + $0x94] sm:$0xf]
    %v2771 = vld [vmem:[#allocation13 + $0x98] sm:$0xf]
    %v2772 = vld [vmem:[#allocation13 + $0x9c] sm:$0xf]
    %v2773 = vld [vmem:[#allocation13 + $0xa0] sm:$0xf]
    %v2774 = vld [vmem:[#allocation13 + $0xa4] sm:$0xf]
    %v2775 = vld [vmem:[#allocation13 + $0xa8] sm:$0xf]
    %v2776 = vld [vmem:[#allocation13 + $0xac] sm:$0xf]
    %v2777 = vld [vmem:[#allocation13 + $0xb0] sm:$0xf]
    %v2778 = vld [vmem:[#allocation13 + $0xb4] sm:$0xf]
    %v2779 = vld [vmem:[#allocation13 + $0xb8] sm:$0xf]
    %v2780 = vld [vmem:[#allocation13 + $0xbc] sm:$0xf]
    %v2781 = vld [vmem:[#allocation13 + $0xc0] sm:$0xf]
    %v2782 = vld [vmem:[#allocation13 + $0xc4] sm:$0xf]
    %v2783 = vld [vmem:[#allocation13 + $0xc8] sm:$0xf]
    %v2784 = vld [vmem:[#allocation13 + $0xcc] sm:$0xf]
    %v2785 = vld [vmem:[#allocation13 + $0xd0] sm:$0xf]
    %v2786 = vld [vmem:[#allocation13 + $0xd4] sm:$0xf]
    %v2787 = vld [vmem:[#allocation13 + $0xd8] sm:$0xf]
    %v2788 = vld [vmem:[#allocation13 + $0xdc] sm:$0xf]
    %v2789 = vld [vmem:[#allocation13 + $0xe0] sm:$0xf]
    %v2790 = vld [vmem:[#allocation13 + $0xe4] sm:$0xf]
    %v2791 = vld [vmem:[#allocation13 + $0xe8] sm:$0xf]
    %v2792 = vld [vmem:[#allocation13 + $0xec] sm:$0xf]
    %v2793 = vld [vmem:[#allocation13 + $0xf0] sm:$0xf]
    %v2794 = vld [vmem:[#allocation13 + $0xf4] sm:$0xf]
    %v2795 = vld [vmem:[#allocation13 + $0xf8] sm:$0xf]
    %v2796 = vld [vmem:[#allocation13 + $0xfc] sm:$0xf]
    %v2797 = vld [vmem:[#allocation13 + $0x100] sm:$0xf]
    %v2798 = vld [vmem:[#allocation13 + $0x104] sm:$0xf]
    %v2799 = vld [vmem:[#allocation13 + $0x108] sm:$0xf]
    %v2800 = vld [vmem:[#allocation13 + $0x10c] sm:$0xf]
    %v2801 = vld [vmem:[#allocation13 + $0x110] sm:$0xf]
    %v2802 = vld [vmem:[#allocation13 + $0x114] sm:$0xf]
    %v2803 = vld [vmem:[#allocation13 + $0x118] sm:$0xf]
    %v2804 = vld [vmem:[#allocation13 + $0x11c] sm:$0xf]
    %v2805 = vld [vmem:[#allocation13 + $0x120] sm:$0xf]
    %v2806 = vld [vmem:[#allocation13 + $0x124] sm:$0xf]
    %v2807 = vld [vmem:[#allocation13 + $0x128] sm:$0xf]
    %v2808 = vld [vmem:[#allocation13 + $0x12c] sm:$0xf]
    %v2809 = vld [vmem:[#allocation13 + $0x130] sm:$0xf]
    %v2810 = vld [vmem:[#allocation13 + $0x134] sm:$0xf]
    %v2811 = vld [vmem:[#allocation13 + $0x138] sm:$0xf]
    %v2812 = vld [vmem:[#allocation13 + $0x13c] sm:$0xf]
    %v2813 = vld [vmem:[#allocation13 + $0x140] sm:$0xf]
    %v2814 = vld [vmem:[#allocation13 + $0x144] sm:$0xf]
    %v2815 = vld [vmem:[#allocation13 + $0x148] sm:$0xf]
    %v2816 = vld [vmem:[#allocation13 + $0x14c] sm:$0xf]
    %v2817 = vld [vmem:[#allocation13 + $0x150] sm:$0xf]
    %v2818 = vld [vmem:[#allocation13 + $0x154] sm:$0xf]
    %v2819 = vld [vmem:[#allocation13 + $0x158] sm:$0xf]
    %v2820 = vld [vmem:[#allocation13 + $0x15c] sm:$0xf]
    %v2821 = vld [vmem:[#allocation13 + $0x160] sm:$0xf]
    %v2822 = vld [vmem:[#allocation13 + $0x164] sm:$0xf]
    %v2823 = vld [vmem:[#allocation13 + $0x168] sm:$0xf]
    %v2824 = vld [vmem:[#allocation13 + $0x16c] sm:$0xf]
    %v2825 = vld [vmem:[#allocation13 + $0x170] sm:$0xf]
    %v2826 = vld [vmem:[#allocation13 + $0x174] sm:$0xf]
    %v2827 = vld [vmem:[#allocation13 + $0x178] sm:$0xf]
    %v2828 = vld [vmem:[#allocation13 + $0x17c] sm:$0xf]
    %v2829 = vld [vmem:[#allocation13 + $0x180] sm:$0xf]
    %v2830 = vld [vmem:[#allocation13 + $0x184] sm:$0xf]
    %v2831 = vld [vmem:[#allocation13 + $0x188] sm:$0xf]
    %v2832 = vld [vmem:[#allocation13 + $0x18c] sm:$0xf]
    %v2833 = vld [vmem:[#allocation13 + $0x190] sm:$0xf]
    %v2834 = vld [vmem:[#allocation13 + $0x194] sm:$0xf]
    %v2835 = vld [vmem:[#allocation13 + $0x198] sm:$0xf]
    %v2836 = vld [vmem:[#allocation13 + $0x19c] sm:$0xf]
    %v2837 = vld [vmem:[#allocation13 + $0x1a0] sm:$0xf]
    %v2838 = vld [vmem:[#allocation13 + $0x1a4] sm:$0xf]
    %v2839 = vld [vmem:[#allocation13 + $0x1a8] sm:$0xf]
    %v2840 = vld [vmem:[#allocation13 + $0x1ac] sm:$0xf]
    %v2841 = vld [vmem:[#allocation13 + $0x1b0] sm:$0xf]
    %v2842 = vld [vmem:[#allocation13 + $0x1b4] sm:$0xf]
    %v2843 = vld [vmem:[#allocation13 + $0x1b8] sm:$0xf]
    %v2844 = vld [vmem:[#allocation13 + $0x1bc] sm:$0xf]
    %v2845 = vld [vmem:[#allocation13 + $0x1c0] sm:$0xf]
    %v2846 = vld [vmem:[#allocation13 + $0x1c4] sm:$0xf]
    %v2847 = vld [vmem:[#allocation13 + $0x1c8] sm:$0xf]
    %v2848 = vld [vmem:[#allocation13 + $0x1cc] sm:$0xf]
    %v2849 = vld [vmem:[#allocation13 + $0x1d0] sm:$0xf]
    %v2850 = vld [vmem:[#allocation13 + $0x1d4] sm:$0xf]
    %v2851 = vld [vmem:[#allocation13 + $0x1d8] sm:$0xf]
    %v2852 = vld [vmem:[#allocation13 + $0x1dc] sm:$0xf]
    %v2853 = vld [vmem:[#allocation13 + $0x1e0] sm:$0xf]
    %v2854 = vld [vmem:[#allocation13 + $0x1e4] sm:$0xf]
    %v2855 = vld [vmem:[#allocation13 + $0x1e8] sm:$0xf]
    %v2856 = vld [vmem:[#allocation13 + $0x1ec] sm:$0xf]
    %v2857 = vld [vmem:[#allocation13 + $0x1f0] sm:$0xf]
    %v2858 = vld [vmem:[#allocation13 + $0x1f4] sm:$0xf]
    %v2859 = vld [vmem:[#allocation13 + $0x1f8] sm:$0xf]
    %v2860 = vld [vmem:[#allocation13 + $0x1fc] sm:$0xf]
    %v2861 = vld [vmem:[#allocation13 + $0x200] sm:$0xf]
    %v2862 = vld [vmem:[#allocation13 + $0x204] sm:$0xf]
    %v2863 = vld [vmem:[#allocation13 + $0x208] sm:$0xf]
    %v2864 = vld [vmem:[#allocation13 + $0x20c] sm:$0xf]
    %v2865 = vld [vmem:[#allocation13 + $0x210] sm:$0xf]
    %v2866 = vld [vmem:[#allocation13 + $0x214] sm:$0xf]
    %v2867 = vld [vmem:[#allocation13 + $0x218] sm:$0xf]
    %v2868 = vld [vmem:[#allocation13 + $0x21c] sm:$0xf]
    %v2869 = vld [vmem:[#allocation13 + $0x220] sm:$0xf]
    %v2870 = vld [vmem:[#allocation13 + $0x224] sm:$0xf]
    %v2871 = vld [vmem:[#allocation13 + $0x228] sm:$0xf]
    %v2872 = vld [vmem:[#allocation13 + $0x22c] sm:$0xf]
    %v2873 = vld [vmem:[#allocation13 + $0x230] sm:$0xf]
    %v2874 = vld [vmem:[#allocation13 + $0x234] sm:$0xf]
    %v2875 = vld [vmem:[#allocation13 + $0x238] sm:$0xf]
    %v2876 = vld [vmem:[#allocation13 + $0x23c] sm:$0xf]
    %v2877 = vld [vmem:[#allocation13 + $0x240] sm:$0xf]
    %v2878 = vld [vmem:[#allocation13 + $0x244] sm:$0xf]
    %v2879 = vld [vmem:[#allocation13 + $0x248] sm:$0xf]
    %v2880 = vld [vmem:[#allocation13 + $0x24c] sm:$0xf]
    %v2881 = vld [vmem:[#allocation13 + $0x250] sm:$0xf]
    %v2882 = vld [vmem:[#allocation13 + $0x254] sm:$0xf]
    %v2883 = vld [vmem:[#allocation13 + $0x258] sm:$0xf]
    %v2884 = vld [vmem:[#allocation13 + $0x25c] sm:$0xf]
    %v2885 = vld [vmem:[#allocation13 + $0x260] sm:$0xf]
    %v2886 = vld [vmem:[#allocation13 + $0x264] sm:$0xf]
    %v2887 = vld [vmem:[#allocation13 + $0x268] sm:$0xf]
    %v2888 = vld [vmem:[#allocation13 + $0x26c] sm:$0xf]
    %v2889 = vld [vmem:[#allocation13 + $0x270] sm:$0xf]
    %v2890 = vld [vmem:[#allocation13 + $0x274] sm:$0xf]
    %v2891 = vld [vmem:[#allocation13 + $0x278] sm:$0xf]
    %v2892 = vld [vmem:[#allocation13 + $0x27c] sm:$0xf]
    %v2893 = vld [vmem:[#allocation13 + $0x280] sm:$0xf]
    %v2894 = vld [vmem:[#allocation13 + $0x284] sm:$0xf]
    %v2895 = vld [vmem:[#allocation13 + $0x288] sm:$0xf]
    %v2896 = vld [vmem:[#allocation13 + $0x28c] sm:$0xf]
    %v2897 = vld [vmem:[#allocation13 + $0x290] sm:$0xf]
    %v2898 = vld [vmem:[#allocation13 + $0x294] sm:$0xf]
    %v2899 = vld [vmem:[#allocation13 + $0x298] sm:$0xf]
    %v2900 = vld [vmem:[#allocation13 + $0x29c] sm:$0xf]
    %v2901 = vld [vmem:[#allocation13 + $0x2a0] sm:$0xf]
    %v2902 = vld [vmem:[#allocation13 + $0x2a4] sm:$0xf]
    %v2903 = vld [vmem:[#allocation13 + $0x2a8] sm:$0xf]
    %v2904 = vld [vmem:[#allocation13 + $0x2ac] sm:$0xf]
    %v2905 = vld [vmem:[#allocation13 + $0x2b0] sm:$0xf]
    %v2906 = vld [vmem:[#allocation13 + $0x2b4] sm:$0xf]
    %v2907 = vld [vmem:[#allocation13 + $0x2b8] sm:$0xf]
    %v2908 = vld [vmem:[#allocation13 + $0x2bc] sm:$0xf]
    %v2909 = vld [vmem:[#allocation13 + $0x2c0] sm:$0xf]
    %v2910 = vld [vmem:[#allocation13 + $0x2c4] sm:$0xf]
    %v2911 = vld [vmem:[#allocation13 + $0x2c8] sm:$0xf]
    %v2912 = vld [vmem:[#allocation13 + $0x2cc] sm:$0xf]
    %v2913 = vld [vmem:[#allocation13 + $0x2d0] sm:$0xf]
    %v2914 = vld [vmem:[#allocation13 + $0x2d4] sm:$0xf]
    %v2915 = vld [vmem:[#allocation13 + $0x2d8] sm:$0xf]
    %v2916 = vld [vmem:[#allocation13 + $0x2dc] sm:$0xf]
    %v2917 = vld [vmem:[#allocation13 + $0x2e0] sm:$0xf]
    %v2918 = vld [vmem:[#allocation13 + $0x2e4] sm:$0xf]
    %v2919 = vld [vmem:[#allocation13 + $0x2e8] sm:$0xf]
    %v2920 = vld [vmem:[#allocation13 + $0x2ec] sm:$0xf]
    %v2921 = vld [vmem:[#allocation13 + $0x2f0] sm:$0xf]
    %v2922 = vld [vmem:[#allocation13 + $0x2f4] sm:$0xf]
    %v2923 = vld [vmem:[#allocation13 + $0x2f8] sm:$0xf]
    %v2924 = vld [vmem:[#allocation13 + $0x2fc] sm:$0xf]
    %v2925 = vld [vmem:[#allocation13 + $0x300] sm:$0xf]
    %v2926 = vld [vmem:[#allocation13 + $0x304] sm:$0xf]
    %v2927 = vld [vmem:[#allocation13 + $0x308] sm:$0xf]
    %v2928 = vld [vmem:[#allocation13 + $0x30c] sm:$0xf]
    %v2929 = vld [vmem:[#allocation13 + $0x310] sm:$0xf]
    %v2930 = vld [vmem:[#allocation13 + $0x314] sm:$0xf]
    %v2931 = vld [vmem:[#allocation13 + $0x318] sm:$0xf]
    %v2932 = vld [vmem:[#allocation13 + $0x31c] sm:$0xf]
    %v2933 = vld [vmem:[#allocation13 + $0x320] sm:$0xf]
    %v2934 = vld [vmem:[#allocation13 + $0x324] sm:$0xf]
    %v2935 = vld [vmem:[#allocation13 + $0x328] sm:$0xf]
    %v2936 = vld [vmem:[#allocation13 + $0x32c] sm:$0xf]
    %v2937 = vld [vmem:[#allocation13 + $0x330] sm:$0xf]
    %v2938 = vld [vmem:[#allocation13 + $0x334] sm:$0xf]
    %v2939 = vld [vmem:[#allocation13 + $0x338] sm:$0xf]
    %v2940 = vld [vmem:[#allocation13 + $0x33c] sm:$0xf]
    %v2941 = vld [vmem:[#allocation13 + $0x340] sm:$0xf]
    %v2942 = vld [vmem:[#allocation13 + $0x344] sm:$0xf]
    %v2943 = vld [vmem:[#allocation13 + $0x348] sm:$0xf]
    %v2944 = vld [vmem:[#allocation13 + $0x34c] sm:$0xf]
    %v2945 = vld [vmem:[#allocation13 + $0x350] sm:$0xf]
    %v2946 = vld [vmem:[#allocation13 + $0x354] sm:$0xf]
    %v2947 = vld [vmem:[#allocation13 + $0x358] sm:$0xf]
    %v2948 = vld [vmem:[#allocation13 + $0x35c] sm:$0xf]
    %v2949 = vld [vmem:[#allocation13 + $0x360] sm:$0xf]
    %v2950 = vld [vmem:[#allocation13 + $0x364] sm:$0xf]
    %v2951 = vld [vmem:[#allocation13 + $0x368] sm:$0xf]
    %v2952 = vld [vmem:[#allocation13 + $0x36c] sm:$0xf]
    %v2953 = vld [vmem:[#allocation13 + $0x370] sm:$0xf]
    %v2954 = vld [vmem:[#allocation13 + $0x374] sm:$0xf]
    %v2955 = vld [vmem:[#allocation13 + $0x378] sm:$0xf]
    %v2956 = vld [vmem:[#allocation13 + $0x37c] sm:$0xf]
    %v2957 = vld [vmem:[#allocation13 + $0x380] sm:$0xf]
    %v2958 = vld [vmem:[#allocation13 + $0x384] sm:$0xf]
    %v2959 = vld [vmem:[#allocation13 + $0x388] sm:$0xf]
    %v2960 = vld [vmem:[#allocation13 + $0x38c] sm:$0xf]
    %v2961 = vld [vmem:[#allocation13 + $0x390] sm:$0xf]
    %v2962 = vld [vmem:[#allocation13 + $0x394] sm:$0xf]
    %v2963 = vld [vmem:[#allocation13 + $0x398] sm:$0xf]
    %v2964 = vld [vmem:[#allocation13 + $0x39c] sm:$0xf]
    %v2965 = vld [vmem:[#allocation13 + $0x3a0] sm:$0xf]
    %v2966 = vld [vmem:[#allocation13 + $0x3a4] sm:$0xf]
    %v2967 = vld [vmem:[#allocation13 + $0x3a8] sm:$0xf]
    %v2968 = vld [vmem:[#allocation13 + $0x3ac] sm:$0xf]
    %v2969 = vld [vmem:[#allocation13 + $0x3b0] sm:$0xf]
    %v2970 = vld [vmem:[#allocation13 + $0x3b4] sm:$0xf]
    %v2971 = vld [vmem:[#allocation13 + $0x3b8] sm:$0xf]
    %v2972 = vld [vmem:[#allocation13 + $0x3bc] sm:$0xf]
    %v2973 = vld [vmem:[#allocation13 + $0x3c0] sm:$0xf]
    %v2974 = vld [vmem:[#allocation13 + $0x3c4] sm:$0xf]
    %v2975 = vld [vmem:[#allocation13 + $0x3c8] sm:$0xf]
    %v2976 = vld [vmem:[#allocation13 + $0x3cc] sm:$0xf]
    %v2977 = vld [vmem:[#allocation13 + $0x3d0] sm:$0xf]
    %v2978 = vld [vmem:[#allocation13 + $0x3d4] sm:$0xf]
    %v2979 = vld [vmem:[#allocation13 + $0x3d8] sm:$0xf]
    %v2980 = vld [vmem:[#allocation13 + $0x3dc] sm:$0xf]
    %v2981 = vld [vmem:[#allocation13 + $0x3e0] sm:$0xf]
    %v2982 = vld [vmem:[#allocation13 + $0x3e4] sm:$0xf]
    %v2983 = vld [vmem:[#allocation13 + $0x3e8] sm:$0xf]
    %v2984 = vld [vmem:[#allocation13 + $0x3ec] sm:$0xf]
    %v2985 = vld [vmem:[#allocation13 + $0x3f0] sm:$0xf]
    %v2986 = vld [vmem:[#allocation13 + $0x3f4] sm:$0xf]
    %v2987 = vld [vmem:[#allocation13 + $0x3f8] sm:$0xf]
    %v2988 = vld [vmem:[#allocation13 + $0x3fc] sm:$0xf]
    %v2989 = vld [vmem:[#allocation14] sm:$0x1]
    %v2991 = vlaneseq
    %v2992 = vshrl.u32 %v2991, 7
    %v2993 = vsub.s32 0, %v2992
    %v2994 = vrot.slane %v2989, %v2993
    %v3252 = vunpack.c.l.b16 %v2733
    %v3253 = vunpack.c.l.b16 %v2734
    %v3254 = vunpack.c.l.b16 %v2735
    %v3255 = vunpack.c.l.b16 %v2736
    %v3256 = vunpack.c.l.b16 %v2737
    %v3257 = vunpack.c.l.b16 %v2738
    %v3258 = vunpack.c.l.b16 %v2739
    %v3259 = vunpack.c.l.b16 %v2740
    %v3260 = vunpack.c.l.b16 %v2741
    %v3261 = vunpack.c.l.b16 %v2742
    %v3262 = vunpack.c.l.b16 %v2743
    %v3263 = vunpack.c.l.b16 %v2744
    %v3264 = vunpack.c.l.b16 %v2745
    %v3265 = vunpack.c.l.b16 %v2746
    %v3266 = vunpack.c.l.b16 %v2747
    %v3267 = vunpack.c.l.b16 %v2748
    %v3268 = vunpack.c.l.b16 %v2749
    %v3269 = vunpack.c.l.b16 %v2750
    %v3270 = vunpack.c.l.b16 %v2751
    %v3271 = vunpack.c.l.b16 %v2752
    %v3272 = vunpack.c.l.b16 %v2753
    %v3273 = vunpack.c.l.b16 %v2754
    %v3274 = vunpack.c.l.b16 %v2755
    %v3275 = vunpack.c.l.b16 %v2756
    %v3276 = vunpack.c.l.b16 %v2757
    %v3277 = vunpack.c.l.b16 %v2758
    %v3278 = vunpack.c.l.b16 %v2759
    %v3279 = vunpack.c.l.b16 %v2760
    %v3280 = vunpack.c.l.b16 %v2761
    %v3281 = vunpack.c.l.b16 %v2762
    %v3282 = vunpack.c.l.b16 %v2763
    %v3283 = vunpack.c.l.b16 %v2764
    %v3284 = vunpack.c.l.b16 %v2765
    %v3285 = vunpack.c.l.b16 %v2766
    %v3286 = vunpack.c.l.b16 %v2767
    %v3287 = vunpack.c.l.b16 %v2768
    %v3288 = vunpack.c.l.b16 %v2769
    %v3289 = vunpack.c.l.b16 %v2770
    %v3290 = vunpack.c.l.b16 %v2771
    %v3291 = vunpack.c.l.b16 %v2772
    %v3292 = vunpack.c.l.b16 %v2773
    %v3293 = vunpack.c.l.b16 %v2774
    %v3294 = vunpack.c.l.b16 %v2775
    %v3295 = vunpack.c.l.b16 %v2776
    %v3296 = vunpack.c.l.b16 %v2777
    %v3297 = vunpack.c.l.b16 %v2778
    %v3298 = vunpack.c.l.b16 %v2779
    %v3299 = vunpack.c.l.b16 %v2780
    %v3300 = vunpack.c.l.b16 %v2781
    %v3301 = vunpack.c.l.b16 %v2782
    %v3302 = vunpack.c.l.b16 %v2783
    %v3303 = vunpack.c.l.b16 %v2784
    %v3304 = vunpack.c.l.b16 %v2785
    %v3305 = vunpack.c.l.b16 %v2786
    %v3306 = vunpack.c.l.b16 %v2787
    %v3307 = vunpack.c.l.b16 %v2788
    %v3308 = vunpack.c.l.b16 %v2789
    %v3309 = vunpack.c.l.b16 %v2790
    %v3310 = vunpack.c.l.b16 %v2791
    %v3311 = vunpack.c.l.b16 %v2792
    %v3312 = vunpack.c.l.b16 %v2793
    %v3313 = vunpack.c.l.b16 %v2794
    %v3314 = vunpack.c.l.b16 %v2795
    %v3315 = vunpack.c.l.b16 %v2796
    %v3316 = vunpack.c.l.b16 %v2797
    %v3317 = vunpack.c.l.b16 %v2798
    %v3318 = vunpack.c.l.b16 %v2799
    %v3319 = vunpack.c.l.b16 %v2800
    %v3320 = vunpack.c.l.b16 %v2801
    %v3321 = vunpack.c.l.b16 %v2802
    %v3322 = vunpack.c.l.b16 %v2803
    %v3323 = vunpack.c.l.b16 %v2804
    %v3324 = vunpack.c.l.b16 %v2805
    %v3325 = vunpack.c.l.b16 %v2806
    %v3326 = vunpack.c.l.b16 %v2807
    %v3327 = vunpack.c.l.b16 %v2808
    %v3328 = vunpack.c.l.b16 %v2809
    %v3329 = vunpack.c.l.b16 %v2810
    %v3330 = vunpack.c.l.b16 %v2811
    %v3331 = vunpack.c.l.b16 %v2812
    %v3332 = vunpack.c.l.b16 %v2813
    %v3333 = vunpack.c.l.b16 %v2814
    %v3334 = vunpack.c.l.b16 %v2815
    %v3335 = vunpack.c.l.b16 %v2816
    %v3336 = vunpack.c.l.b16 %v2817
    %v3337 = vunpack.c.l.b16 %v2818
    %v3338 = vunpack.c.l.b16 %v2819
    %v3339 = vunpack.c.l.b16 %v2820
    %v3340 = vunpack.c.l.b16 %v2821
    %v3341 = vunpack.c.l.b16 %v2822
    %v3342 = vunpack.c.l.b16 %v2823
    %v3343 = vunpack.c.l.b16 %v2824
    %v3344 = vunpack.c.l.b16 %v2825
    %v3345 = vunpack.c.l.b16 %v2826
    %v3346 = vunpack.c.l.b16 %v2827
    %v3347 = vunpack.c.l.b16 %v2828
    %v3348 = vunpack.c.l.b16 %v2829
    %v3349 = vunpack.c.l.b16 %v2830
    %v3350 = vunpack.c.l.b16 %v2831
    %v3351 = vunpack.c.l.b16 %v2832
    %v3352 = vunpack.c.l.b16 %v2833
    %v3353 = vunpack.c.l.b16 %v2834
    %v3354 = vunpack.c.l.b16 %v2835
    %v3355 = vunpack.c.l.b16 %v2836
    %v3356 = vunpack.c.l.b16 %v2837
    %v3357 = vunpack.c.l.b16 %v2838
    %v3358 = vunpack.c.l.b16 %v2839
    %v3359 = vunpack.c.l.b16 %v2840
    %v3360 = vunpack.c.l.b16 %v2841
    %v3361 = vunpack.c.l.b16 %v2842
    %v3362 = vunpack.c.l.b16 %v2843
    %v3363 = vunpack.c.l.b16 %v2844
    %v3364 = vunpack.c.l.b16 %v2845
    %v3365 = vunpack.c.l.b16 %v2846
    %v3366 = vunpack.c.l.b16 %v2847
    %v3367 = vunpack.c.l.b16 %v2848
    %v3368 = vunpack.c.l.b16 %v2849
    %v3369 = vunpack.c.l.b16 %v2850
    %v3370 = vunpack.c.l.b16 %v2851
    %v3371 = vunpack.c.l.b16 %v2852
    %v3372 = vunpack.c.l.b16 %v2853
    %v3373 = vunpack.c.l.b16 %v2854
    %v3374 = vunpack.c.l.b16 %v2855
    %v3375 = vunpack.c.l.b16 %v2856
    %v3376 = vunpack.c.l.b16 %v2857
    %v3377 = vunpack.c.l.b16 %v2858
    %v3378 = vunpack.c.l.b16 %v2859
    %v3379 = vunpack.c.l.b16 %v2860
    %v3380 = vunpack.c.l.b16 %v2861
    %v3381 = vunpack.c.l.b16 %v2862
    %v3382 = vunpack.c.l.b16 %v2863
    %v3383 = vunpack.c.l.b16 %v2864
    %v3384 = vunpack.c.l.b16 %v2865
    %v3385 = vunpack.c.l.b16 %v2866
    %v3386 = vunpack.c.l.b16 %v2867
    %v3387 = vunpack.c.l.b16 %v2868
    %v3388 = vunpack.c.l.b16 %v2869
    %v3389 = vunpack.c.l.b16 %v2870
    %v3390 = vunpack.c.l.b16 %v2871
    %v3391 = vunpack.c.l.b16 %v2872
    %v3392 = vunpack.c.l.b16 %v2873
    %v3393 = vunpack.c.l.b16 %v2874
    %v3394 = vunpack.c.l.b16 %v2875
    %v3395 = vunpack.c.l.b16 %v2876
    %v3396 = vunpack.c.l.b16 %v2877
    %v3397 = vunpack.c.l.b16 %v2878
    %v3398 = vunpack.c.l.b16 %v2879
    %v3399 = vunpack.c.l.b16 %v2880
    %v3400 = vunpack.c.l.b16 %v2881
    %v3401 = vunpack.c.l.b16 %v2882
    %v3402 = vunpack.c.l.b16 %v2883
    %v3403 = vunpack.c.l.b16 %v2884
    %v3404 = vunpack.c.l.b16 %v2885
    %v3405 = vunpack.c.l.b16 %v2886
    %v3406 = vunpack.c.l.b16 %v2887
    %v3407 = vunpack.c.l.b16 %v2888
    %v3408 = vunpack.c.l.b16 %v2889
    %v3409 = vunpack.c.l.b16 %v2890
    %v3410 = vunpack.c.l.b16 %v2891
    %v3411 = vunpack.c.l.b16 %v2892
    %v3412 = vunpack.c.l.b16 %v2893
    %v3413 = vunpack.c.l.b16 %v2894
    %v3414 = vunpack.c.l.b16 %v2895
    %v3415 = vunpack.c.l.b16 %v2896
    %v3416 = vunpack.c.l.b16 %v2897
    %v3417 = vunpack.c.l.b16 %v2898
    %v3418 = vunpack.c.l.b16 %v2899
    %v3419 = vunpack.c.l.b16 %v2900
    %v3420 = vunpack.c.l.b16 %v2901
    %v3421 = vunpack.c.l.b16 %v2902
    %v3422 = vunpack.c.l.b16 %v2903
    %v3423 = vunpack.c.l.b16 %v2904
    %v3424 = vunpack.c.l.b16 %v2905
    %v3425 = vunpack.c.l.b16 %v2906
    %v3426 = vunpack.c.l.b16 %v2907
    %v3427 = vunpack.c.l.b16 %v2908
    %v3428 = vunpack.c.l.b16 %v2909
    %v3429 = vunpack.c.l.b16 %v2910
    %v3430 = vunpack.c.l.b16 %v2911
    %v3431 = vunpack.c.l.b16 %v2912
    %v3432 = vunpack.c.l.b16 %v2913
    %v3433 = vunpack.c.l.b16 %v2914
    %v3434 = vunpack.c.l.b16 %v2915
    %v3435 = vunpack.c.l.b16 %v2916
    %v3436 = vunpack.c.l.b16 %v2917
    %v3437 = vunpack.c.l.b16 %v2918
    %v3438 = vunpack.c.l.b16 %v2919
    %v3439 = vunpack.c.l.b16 %v2920
    %v3440 = vunpack.c.l.b16 %v2921
    %v3441 = vunpack.c.l.b16 %v2922
    %v3442 = vunpack.c.l.b16 %v2923
    %v3443 = vunpack.c.l.b16 %v2924
    %v3444 = vunpack.c.l.b16 %v2925
    %v3445 = vunpack.c.l.b16 %v2926
    %v3446 = vunpack.c.l.b16 %v2927
    %v3447 = vunpack.c.l.b16 %v2928
    %v3448 = vunpack.c.l.b16 %v2929
    %v3449 = vunpack.c.l.b16 %v2930
    %v3450 = vunpack.c.l.b16 %v2931
    %v3451 = vunpack.c.l.b16 %v2932
    %v3452 = vunpack.c.l.b16 %v2933
    %v3453 = vunpack.c.l.b16 %v2934
    %v3454 = vunpack.c.l.b16 %v2935
    %v3455 = vunpack.c.l.b16 %v2936
    %v3456 = vunpack.c.l.b16 %v2937
    %v3457 = vunpack.c.l.b16 %v2938
    %v3458 = vunpack.c.l.b16 %v2939
    %v3459 = vunpack.c.l.b16 %v2940
    %v3460 = vunpack.c.l.b16 %v2941
    %v3461 = vunpack.c.l.b16 %v2942
    %v3462 = vunpack.c.l.b16 %v2943
    %v3463 = vunpack.c.l.b16 %v2944
    %v3464 = vunpack.c.l.b16 %v2945
    %v3465 = vunpack.c.l.b16 %v2946
    %v3466 = vunpack.c.l.b16 %v2947
    %v3467 = vunpack.c.l.b16 %v2948
    %v3468 = vunpack.c.l.b16 %v2949
    %v3469 = vunpack.c.l.b16 %v2950
    %v3470 = vunpack.c.l.b16 %v2951
    %v3471 = vunpack.c.l.b16 %v2952
    %v3472 = vunpack.c.l.b16 %v2953
    %v3473 = vunpack.c.l.b16 %v2954
    %v3474 = vunpack.c.l.b16 %v2955
    %v3475 = vunpack.c.l.b16 %v2956
    %v3476 = vunpack.c.l.b16 %v2957
    %v3477 = vunpack.c.l.b16 %v2958
    %v3478 = vunpack.c.l.b16 %v2959
    %v3479 = vunpack.c.l.b16 %v2960
    %v3480 = vunpack.c.l.b16 %v2961
    %v3481 = vunpack.c.l.b16 %v2962
    %v3482 = vunpack.c.l.b16 %v2963
    %v3483 = vunpack.c.l.b16 %v2964
    %v3484 = vunpack.c.l.b16 %v2965
    %v3485 = vunpack.c.l.b16 %v2966
    %v3486 = vunpack.c.l.b16 %v2967
    %v3487 = vunpack.c.l.b16 %v2968
    %v3488 = vunpack.c.l.b16 %v2969
    %v3489 = vunpack.c.l.b16 %v2970
    %v3490 = vunpack.c.l.b16 %v2971
    %v3491 = vunpack.c.l.b16 %v2972
    %v3492 = vunpack.c.l.b16 %v2973
    %v3493 = vunpack.c.l.b16 %v2974
    %v3494 = vunpack.c.l.b16 %v2975
    %v3495 = vunpack.c.l.b16 %v2976
    %v3496 = vunpack.c.l.b16 %v2977
    %v3497 = vunpack.c.l.b16 %v2978
    %v3498 = vunpack.c.l.b16 %v2979
    %v3499 = vunpack.c.l.b16 %v2980
    %v3500 = vunpack.c.l.b16 %v2981
    %v3501 = vunpack.c.l.b16 %v2982
    %v3502 = vunpack.c.l.b16 %v2983
    %v3503 = vunpack.c.l.b16 %v2984
    %v3504 = vunpack.c.l.b16 %v2985
    %v3505 = vunpack.c.l.b16 %v2986
    %v3506 = vunpack.c.l.b16 %v2987
    %v3507 = vunpack.c.l.b16 %v2988
    %v3508 = vpack.c.b16 %v3253, %v3252
    %v3509 = vpack.c.b16 %v3255, %v3254
    %v3510 = vpack.c.b16 %v3257, %v3256
    %v3511 = vpack.c.b16 %v3259, %v3258
    %v3512 = vpack.c.b16 %v3261, %v3260
    %v3513 = vpack.c.b16 %v3263, %v3262
    %v3514 = vpack.c.b16 %v3265, %v3264
    %v3515 = vpack.c.b16 %v3267, %v3266
    %v3516 = vpack.c.b16 %v3269, %v3268
    %v3517 = vpack.c.b16 %v3271, %v3270
    %v3518 = vpack.c.b16 %v3273, %v3272
    %v3519 = vpack.c.b16 %v3275, %v3274
    %v3520 = vpack.c.b16 %v3277, %v3276
    %v3521 = vpack.c.b16 %v3279, %v3278
    %v3522 = vpack.c.b16 %v3281, %v3280
    %v3523 = vpack.c.b16 %v3283, %v3282
    %v3524 = vpack.c.b16 %v3285, %v3284
    %v3525 = vpack.c.b16 %v3287, %v3286
    %v3526 = vpack.c.b16 %v3289, %v3288
    %v3527 = vpack.c.b16 %v3291, %v3290
    %v3528 = vpack.c.b16 %v3293, %v3292
    %v3529 = vpack.c.b16 %v3295, %v3294
    %v3530 = vpack.c.b16 %v3297, %v3296
    %v3531 = vpack.c.b16 %v3299, %v3298
    %v3532 = vpack.c.b16 %v3301, %v3300
    %v3533 = vpack.c.b16 %v3303, %v3302
    %v3534 = vpack.c.b16 %v3305, %v3304
    %v3535 = vpack.c.b16 %v3307, %v3306
    %v3536 = vpack.c.b16 %v3309, %v3308
    %v3537 = vpack.c.b16 %v3311, %v3310
    %v3538 = vpack.c.b16 %v3313, %v3312
    %v3539 = vpack.c.b16 %v3315, %v3314
    %v3540 = vpack.c.b16 %v3317, %v3316
    %v3541 = vpack.c.b16 %v3319, %v3318
    %v3542 = vpack.c.b16 %v3321, %v3320
    %v3543 = vpack.c.b16 %v3323, %v3322
    %v3544 = vpack.c.b16 %v3325, %v3324
    %v3545 = vpack.c.b16 %v3327, %v3326
    %v3546 = vpack.c.b16 %v3329, %v3328
    %v3547 = vpack.c.b16 %v3331, %v3330
    %v3548 = vpack.c.b16 %v3333, %v3332
    %v3549 = vpack.c.b16 %v3335, %v3334
    %v3550 = vpack.c.b16 %v3337, %v3336
    %v3551 = vpack.c.b16 %v3339, %v3338
    %v3552 = vpack.c.b16 %v3341, %v3340
    %v3553 = vpack.c.b16 %v3343, %v3342
    %v3554 = vpack.c.b16 %v3345, %v3344
    %v3555 = vpack.c.b16 %v3347, %v3346
    %v3556 = vpack.c.b16 %v3349, %v3348
    %v3557 = vpack.c.b16 %v3351, %v3350
    %v3558 = vpack.c.b16 %v3353, %v3352
    %v3559 = vpack.c.b16 %v3355, %v3354
    %v3560 = vpack.c.b16 %v3357, %v3356
    %v3561 = vpack.c.b16 %v3359, %v3358
    %v3562 = vpack.c.b16 %v3361, %v3360
    %v3563 = vpack.c.b16 %v3363, %v3362
    %v3564 = vpack.c.b16 %v3365, %v3364
    %v3565 = vpack.c.b16 %v3367, %v3366
    %v3566 = vpack.c.b16 %v3369, %v3368
    %v3567 = vpack.c.b16 %v3371, %v3370
    %v3568 = vpack.c.b16 %v3373, %v3372
    %v3569 = vpack.c.b16 %v3375, %v3374
    %v3570 = vpack.c.b16 %v3377, %v3376
    %v3571 = vpack.c.b16 %v3379, %v3378
    %v3572 = vpack.c.b16 %v3381, %v3380
    %v3573 = vpack.c.b16 %v3383, %v3382
    %v3574 = vpack.c.b16 %v3385, %v3384
    %v3575 = vpack.c.b16 %v3387, %v3386
    %v3576 = vpack.c.b16 %v3389, %v3388
    %v3577 = vpack.c.b16 %v3391, %v3390
    %v3578 = vpack.c.b16 %v3393, %v3392
    %v3579 = vpack.c.b16 %v3395, %v3394
    %v3580 = vpack.c.b16 %v3397, %v3396
    %v3581 = vpack.c.b16 %v3399, %v3398
    %v3582 = vpack.c.b16 %v3401, %v3400
    %v3583 = vpack.c.b16 %v3403, %v3402
    %v3584 = vpack.c.b16 %v3405, %v3404
    %v3585 = vpack.c.b16 %v3407, %v3406
    %v3586 = vpack.c.b16 %v3409, %v3408
    %v3587 = vpack.c.b16 %v3411, %v3410
    %v3588 = vpack.c.b16 %v3413, %v3412
    %v3589 = vpack.c.b16 %v3415, %v3414
    %v3590 = vpack.c.b16 %v3417, %v3416
    %v3591 = vpack.c.b16 %v3419, %v3418
    %v3592 = vpack.c.b16 %v3421, %v3420
    %v3593 = vpack.c.b16 %v3423, %v3422
    %v3594 = vpack.c.b16 %v3425, %v3424
    %v3595 = vpack.c.b16 %v3427, %v3426
    %v3596 = vpack.c.b16 %v3429, %v3428
    %v3597 = vpack.c.b16 %v3431, %v3430
    %v3598 = vpack.c.b16 %v3433, %v3432
    %v3599 = vpack.c.b16 %v3435, %v3434
    %v3600 = vpack.c.b16 %v3437, %v3436
    %v3601 = vpack.c.b16 %v3439, %v3438
    %v3602 = vpack.c.b16 %v3441, %v3440
    %v3603 = vpack.c.b16 %v3443, %v3442
    %v3604 = vpack.c.b16 %v3445, %v3444
    %v3605 = vpack.c.b16 %v3447, %v3446
    %v3606 = vpack.c.b16 %v3449, %v3448
    %v3607 = vpack.c.b16 %v3451, %v3450
    %v3608 = vpack.c.b16 %v3453, %v3452
    %v3609 = vpack.c.b16 %v3455, %v3454
    %v3610 = vpack.c.b16 %v3457, %v3456
    %v3611 = vpack.c.b16 %v3459, %v3458
    %v3612 = vpack.c.b16 %v3461, %v3460
    %v3613 = vpack.c.b16 %v3463, %v3462
    %v3614 = vpack.c.b16 %v3465, %v3464
    %v3615 = vpack.c.b16 %v3467, %v3466
    %v3616 = vpack.c.b16 %v3469, %v3468
    %v3617 = vpack.c.b16 %v3471, %v3470
    %v3618 = vpack.c.b16 %v3473, %v3472
    %v3619 = vpack.c.b16 %v3475, %v3474
    %v3620 = vpack.c.b16 %v3477, %v3476
    %v3621 = vpack.c.b16 %v3479, %v3478
    %v3622 = vpack.c.b16 %v3481, %v3480
    %v3623 = vpack.c.b16 %v3483, %v3482
    %v3624 = vpack.c.b16 %v3485, %v3484
    %v3625 = vpack.c.b16 %v3487, %v3486
    %v3626 = vpack.c.b16 %v3489, %v3488
    %v3627 = vpack.c.b16 %v3491, %v3490
    %v3628 = vpack.c.b16 %v3493, %v3492
    %v3629 = vpack.c.b16 %v3495, %v3494
    %v3630 = vpack.c.b16 %v3497, %v3496
    %v3631 = vpack.c.b16 %v3499, %v3498
    %v3632 = vpack.c.b16 %v3501, %v3500
    %v3633 = vpack.c.b16 %v3503, %v3502
    %v3634 = vpack.c.b16 %v3505, %v3504
    %v3635 = vpack.c.b16 %v3507, %v3506
    %3764 = vmatprep.subr.bf16.mxu0 0
    %3765 = vmatpush1.bf16.msra.mxu0 %v3508
    %3766 = vmatprep.subr.bf16.mxu0 0
    %3767 = vmatpush1.bf16.msra.mxu0 %v3509
    %3768 = vmatprep.subr.bf16.mxu0 0
    %3769 = vmatpush1.bf16.msra.mxu0 %v3510
    %3770 = vmatprep.subr.bf16.mxu0 0
    %3771 = vmatpush1.bf16.msra.mxu0 %v3511
    %3772 = vmatprep.subr.bf16.mxu0 0
    %3773 = vmatpush1.bf16.msra.mxu0 %v3512
    %3774 = vmatprep.subr.bf16.mxu0 0
    %3775 = vmatpush1.bf16.msra.mxu0 %v3513
    %3776 = vmatprep.subr.bf16.mxu0 0
    %3777 = vmatpush1.bf16.msra.mxu0 %v3514
    %3778 = vmatprep.subr.bf16.mxu0 0
    %3779 = vmatpush1.bf16.msra.mxu0 %v3515
    %3780 = vmatprep.subr.bf16.mxu0 0
    %3781 = vmatpush1.bf16.msra.mxu0 %v3516
    %3782 = vmatprep.subr.bf16.mxu0 0
    %3783 = vmatpush1.bf16.msra.mxu0 %v3517
    %3784 = vmatprep.subr.bf16.mxu0 0
    %3785 = vmatpush1.bf16.msra.mxu0 %v3518
    %3786 = vmatprep.subr.bf16.mxu0 0
    %3787 = vmatpush1.bf16.msra.mxu0 %v3519
    %3788 = vmatprep.subr.bf16.mxu0 0
    %3789 = vmatpush1.bf16.msra.mxu0 %v3520
    %3790 = vmatprep.subr.bf16.mxu0 0
    %3791 = vmatpush1.bf16.msra.mxu0 %v3521
    %3792 = vmatprep.subr.bf16.mxu0 0
    %3793 = vmatpush1.bf16.msra.mxu0 %v3522
    %3794 = vmatprep.subr.bf16.mxu0 0
    %3795 = vmatpush1.bf16.msra.mxu0 %v3523
    %3796 = vmatprep.mubr.bf16.mxu0 %v2718
    %3797 = vmatmul.mubr.bf16.gmra.mrb[0].mxu0 %v2717
    %v3798 = vpop.f32.mrb[0].mxu0
    %v3799 = vadd.f32 %v2994, %v3798
    %v3800 = vpop.f32.mrb[0].mxu0
    %v3801 = vpop.f32.mrb[0].mxu0
    %v3802 = vadd.f32 %v2994, %v3801
    %v3803 = vpop.f32.mrb[0].mxu0
    %3804 = vdwg.mxu0
    %3805 = vmatprep.subr.bf16.mxu0 0
    %3806 = vmatpush1.bf16.msra.mxu0 %v3524
    %3807 = vmatprep.subr.bf16.mxu0 0
    %3808 = vmatpush1.bf16.msra.mxu0 %v3525
    %3809 = vmatprep.subr.bf16.mxu0 0
    %3810 = vmatpush1.bf16.msra.mxu0 %v3526
    %3811 = vmatprep.subr.bf16.mxu0 0
    %3812 = vmatpush1.bf16.msra.mxu0 %v3527
    %3813 = vmatprep.subr.bf16.mxu0 0
    %3814 = vmatpush1.bf16.msra.mxu0 %v3528
    %3815 = vmatprep.subr.bf16.mxu0 0
    %3816 = vmatpush1.bf16.msra.mxu0 %v3529
    %3817 = vmatprep.subr.bf16.mxu0 0
    %3818 = vmatpush1.bf16.msra.mxu0 %v3530
    %3819 = vmatprep.subr.bf16.mxu0 0
    %3820 = vmatpush1.bf16.msra.mxu0 %v3531
    %3821 = vmatprep.subr.bf16.mxu0 0
    %3822 = vmatpush1.bf16.msra.mxu0 %v3532
    %3823 = vmatprep.subr.bf16.mxu0 0
    %3824 = vmatpush1.bf16.msra.mxu0 %v3533
    %3825 = vmatprep.subr.bf16.mxu0 0
    %3826 = vmatpush1.bf16.msra.mxu0 %v3534
    %3827 = vmatprep.subr.bf16.mxu0 0
    %3828 = vmatpush1.bf16.msra.mxu0 %v3535
    %3829 = vmatprep.subr.bf16.mxu0 0
    %3830 = vmatpush1.bf16.msra.mxu0 %v3536
    %3831 = vmatprep.subr.bf16.mxu0 0
    %3832 = vmatpush1.bf16.msra.mxu0 %v3537
    %3833 = vmatprep.subr.bf16.mxu0 0
    %3834 = vmatpush1.bf16.msra.mxu0 %v3538
    %3835 = vmatprep.subr.bf16.mxu0 0
    %3836 = vmatpush1.bf16.msra.mxu0 %v3539
    %3837 = vmatprep.mubr.bf16.mxu0 %v2720
    %3838 = vmatmul.mubr.bf16.gmra.mrb[0].mxu0 %v2719
    %v3839 = vpop.f32.mrb[0].mxu0
    %v3840 = vadd.f32 %v3799, %v3839
    %v3841 = vpop.f32.mrb[0].mxu0
    %v3842 = vpop.f32.mrb[0].mxu0
    %v3843 = vadd.f32 %v3802, %v3842
    %v3844 = vpop.f32.mrb[0].mxu0
    %3845 = vdwg.mxu0
    %3846 = vmatprep.subr.bf16.mxu0 0
    %3847 = vmatpush1.bf16.msra.mxu0 %v3540
    %3848 = vmatprep.subr.bf16.mxu0 0
    %3849 = vmatpush1.bf16.msra.mxu0 %v3541
    %3850 = vmatprep.subr.bf16.mxu0 0
    %3851 = vmatpush1.bf16.msra.mxu0 %v3542
    %3852 = vmatprep.subr.bf16.mxu0 0
    %3853 = vmatpush1.bf16.msra.mxu0 %v3543
    %3854 = vmatprep.subr.bf16.mxu0 0
    %3855 = vmatpush1.bf16.msra.mxu0 %v3544
    %3856 = vmatprep.subr.bf16.mxu0 0
    %3857 = vmatpush1.bf16.msra.mxu0 %v3545
    %3858 = vmatprep.subr.bf16.mxu0 0
    %3859 = vmatpush1.bf16.msra.mxu0 %v3546
    %3860 = vmatprep.subr.bf16.mxu0 0
    %3861 = vmatpush1.bf16.msra.mxu0 %v3547
    %3862 = vmatprep.subr.bf16.mxu0 0
    %3863 = vmatpush1.bf16.msra.mxu0 %v3548
    %3864 = vmatprep.subr.bf16.mxu0 0
    %3865 = vmatpush1.bf16.msra.mxu0 %v3549
    %3866 = vmatprep.subr.bf16.mxu0 0
    %3867 = vmatpush1.bf16.msra.mxu0 %v3550
    %3868 = vmatprep.subr.bf16.mxu0 0
    %3869 = vmatpush1.bf16.msra.mxu0 %v3551
    %3870 = vmatprep.subr.bf16.mxu0 0
    %3871 = vmatpush1.bf16.msra.mxu0 %v3552
    %3872 = vmatprep.subr.bf16.mxu0 0
    %3873 = vmatpush1.bf16.msra.mxu0 %v3553
    %3874 = vmatprep.subr.bf16.mxu0 0
    %3875 = vmatpush1.bf16.msra.mxu0 %v3554
    %3876 = vmatprep.subr.bf16.mxu0 0
    %3877 = vmatpush1.bf16.msra.mxu0 %v3555
    %3878 = vmatprep.mubr.bf16.mxu0 %v2722
    %3879 = vmatmul.mubr.bf16.gmra.mrb[0].mxu0 %v2721
    %v3880 = vpop.f32.mrb[0].mxu0
    %v3881 = vadd.f32 %v3840, %v3880
    %v3882 = vpop.f32.mrb[0].mxu0
    %v3883 = vpop.f32.mrb[0].mxu0
    %v3884 = vadd.f32 %v3843, %v3883
    %v3885 = vpop.f32.mrb[0].mxu0
    %3886 = vdwg.mxu0
    %3887 = vmatprep.subr.bf16.mxu0 0
    %3888 = vmatpush1.bf16.msra.mxu0 %v3556
    %3889 = vmatprep.subr.bf16.mxu0 0
    %3890 = vmatpush1.bf16.msra.mxu0 %v3557
    %3891 = vmatprep.subr.bf16.mxu0 0
    %3892 = vmatpush1.bf16.msra.mxu0 %v3558
    %3893 = vmatprep.subr.bf16.mxu0 0
    %3894 = vmatpush1.bf16.msra.mxu0 %v3559
    %3895 = vmatprep.subr.bf16.mxu0 0
    %3896 = vmatpush1.bf16.msra.mxu0 %v3560
    %3897 = vmatprep.subr.bf16.mxu0 0
    %3898 = vmatpush1.bf16.msra.mxu0 %v3561
    %3899 = vmatprep.subr.bf16.mxu0 0
    %3900 = vmatpush1.bf16.msra.mxu0 %v3562
    %3901 = vmatprep.subr.bf16.mxu0 0
    %3902 = vmatpush1.bf16.msra.mxu0 %v3563
    %3903 = vmatprep.subr.bf16.mxu0 0
    %3904 = vmatpush1.bf16.msra.mxu0 %v3564
    %3905 = vmatprep.subr.bf16.mxu0 0
    %3906 = vmatpush1.bf16.msra.mxu0 %v3565
    %3907 = vmatprep.subr.bf16.mxu0 0
    %3908 = vmatpush1.bf16.msra.mxu0 %v3566
    %3909 = vmatprep.subr.bf16.mxu0 0
    %3910 = vmatpush1.bf16.msra.mxu0 %v3567
    %3911 = vmatprep.subr.bf16.mxu0 0
    %3912 = vmatpush1.bf16.msra.mxu0 %v3568
    %3913 = vmatprep.subr.bf16.mxu0 0
    %3914 = vmatpush1.bf16.msra.mxu0 %v3569
    %3915 = vmatprep.subr.bf16.mxu0 0
    %3916 = vmatpush1.bf16.msra.mxu0 %v3570
    %3917 = vmatprep.subr.bf16.mxu0 0
    %3918 = vmatpush1.bf16.msra.mxu0 %v3571
    %3919 = vmatprep.mubr.bf16.mxu0 %v2724
    %3920 = vmatmul.mubr.bf16.gmra.mrb[0].mxu0 %v2723
    %v3921 = vpop.f32.mrb[0].mxu0
    %v3922 = vadd.f32 %v3881, %v3921
    %v3923 = vpop.f32.mrb[0].mxu0
    %v3924 = vpop.f32.mrb[0].mxu0
    %v3925 = vadd.f32 %v3884, %v3924
    %v3926 = vpop.f32.mrb[0].mxu0
    %3927 = vdwg.mxu0
    %3928 = vmatprep.subr.bf16.mxu0 0
    %3929 = vmatpush1.bf16.msra.mxu0 %v3572
    %3930 = vmatprep.subr.bf16.mxu0 0
    %3931 = vmatpush1.bf16.msra.mxu0 %v3573
    %3932 = vmatprep.subr.bf16.mxu0 0
    %3933 = vmatpush1.bf16.msra.mxu0 %v3574
    %3934 = vmatprep.subr.bf16.mxu0 0
    %3935 = vmatpush1.bf16.msra.mxu0 %v3575
    %3936 = vmatprep.subr.bf16.mxu0 0
    %3937 = vmatpush1.bf16.msra.mxu0 %v3576
    %3938 = vmatprep.subr.bf16.mxu0 0
    %3939 = vmatpush1.bf16.msra.mxu0 %v3577
    %3940 = vmatprep.subr.bf16.mxu0 0
    %3941 = vmatpush1.bf16.msra.mxu0 %v3578
    %3942 = vmatprep.subr.bf16.mxu0 0
    %3943 = vmatpush1.bf16.msra.mxu0 %v3579
    %3944 = vmatprep.subr.bf16.mxu0 0
    %3945 = vmatpush1.bf16.msra.mxu0 %v3580
    %3946 = vmatprep.subr.bf16.mxu0 0
    %3947 = vmatpush1.bf16.msra.mxu0 %v3581
    %3948 = vmatprep.subr.bf16.mxu0 0
    %3949 = vmatpush1.bf16.msra.mxu0 %v3582
    %3950 = vmatprep.subr.bf16.mxu0 0
    %3951 = vmatpush1.bf16.msra.mxu0 %v3583
    %3952 = vmatprep.subr.bf16.mxu0 0
    %3953 = vmatpush1.bf16.msra.mxu0 %v3584
    %3954 = vmatprep.subr.bf16.mxu0 0
    %3955 = vmatpush1.bf16.msra.mxu0 %v3585
    %3956 = vmatprep.subr.bf16.mxu0 0
    %3957 = vmatpush1.bf16.msra.mxu0 %v3586
    %3958 = vmatprep.subr.bf16.mxu0 0
    %3959 = vmatpush1.bf16.msra.mxu0 %v3587
    %3960 = vmatprep.mubr.bf16.mxu0 %v2726
    %3961 = vmatmul.mubr.bf16.gmra.mrb[0].mxu0 %v2725
    %v3962 = vpop.f32.mrb[0].mxu0
    %v3963 = vadd.f32 %v3922, %v3962
    %v3964 = vpop.f32.mrb[0].mxu0
    %v3965 = vpop.f32.mrb[0].mxu0
    %v3966 = vadd.f32 %v3925, %v3965
    %v3967 = vpop.f32.mrb[0].mxu0
    %3968 = vdwg.mxu0
    %3969 = vmatprep.subr.bf16.mxu0 0
    %3970 = vmatpush1.bf16.msra.mxu0 %v3588
    %3971 = vmatprep.subr.bf16.mxu0 0
    %3972 = vmatpush1.bf16.msra.mxu0 %v3589
    %3973 = vmatprep.subr.bf16.mxu0 0
    %3974 = vmatpush1.bf16.msra.mxu0 %v3590
    %3975 = vmatprep.subr.bf16.mxu0 0
    %3976 = vmatpush1.bf16.msra.mxu0 %v3591
    %3977 = vmatprep.subr.bf16.mxu0 0
    %3978 = vmatpush1.bf16.msra.mxu0 %v3592
    %3979 = vmatprep.subr.bf16.mxu0 0
    %3980 = vmatpush1.bf16.msra.mxu0 %v3593
    %3981 = vmatprep.subr.bf16.mxu0 0
    %3982 = vmatpush1.bf16.msra.mxu0 %v3594
    %3983 = vmatprep.subr.bf16.mxu0 0
    %3984 = vmatpush1.bf16.msra.mxu0 %v3595
    %3985 = vmatprep.subr.bf16.mxu0 0
    %3986 = vmatpush1.bf16.msra.mxu0 %v3596
    %3987 = vmatprep.subr.bf16.mxu0 0
    %3988 = vmatpush1.bf16.msra.mxu0 %v3597
    %3989 = vmatprep.subr.bf16.mxu0 0
    %3990 = vmatpush1.bf16.msra.mxu0 %v3598
    %3991 = vmatprep.subr.bf16.mxu0 0
    %3992 = vmatpush1.bf16.msra.mxu0 %v3599
    %3993 = vmatprep.subr.bf16.mxu0 0
    %3994 = vmatpush1.bf16.msra.mxu0 %v3600
    %3995 = vmatprep.subr.bf16.mxu0 0
    %3996 = vmatpush1.bf16.msra.mxu0 %v3601
    %3997 = vmatprep.subr.bf16.mxu0 0
    %3998 = vmatpush1.bf16.msra.mxu0 %v3602
    %3999 = vmatprep.subr.bf16.mxu0 0
    %4000 = vmatpush1.bf16.msra.mxu0 %v3603
    %4001 = vmatprep.mubr.bf16.mxu0 %v2728
    %4002 = vmatmul.mubr.bf16.gmra.mrb[0].mxu0 %v2727
    %v4003 = vpop.f32.mrb[0].mxu0
    %v4004 = vadd.f32 %v3963, %v4003
    %v4005 = vpop.f32.mrb[0].mxu0
    %v4006 = vpop.f32.mrb[0].mxu0
    %v4007 = vadd.f32 %v3966, %v4006
    %v4008 = vpop.f32.mrb[0].mxu0
    %4009 = vdwg.mxu0
    %4010 = vmatprep.subr.bf16.mxu0 0
    %4011 = vmatpush1.bf16.msra.mxu0 %v3604
    %4012 = vmatprep.subr.bf16.mxu0 0
    %4013 = vmatpush1.bf16.msra.mxu0 %v3605
    %4014 = vmatprep.subr.bf16.mxu0 0
    %4015 = vmatpush1.bf16.msra.mxu0 %v3606
    %4016 = vmatprep.subr.bf16.mxu0 0
    %4017 = vmatpush1.bf16.msra.mxu0 %v3607
    %4018 = vmatprep.subr.bf16.mxu0 0
    %4019 = vmatpush1.bf16.msra.mxu0 %v3608
    %4020 = vmatprep.subr.bf16.mxu0 0
    %4021 = vmatpush1.bf16.msra.mxu0 %v3609
    %4022 = vmatprep.subr.bf16.mxu0 0
    %4023 = vmatpush1.bf16.msra.mxu0 %v3610
    %4024 = vmatprep.subr.bf16.mxu0 0
    %4025 = vmatpush1.bf16.msra.mxu0 %v3611
    %4026 = vmatprep.subr.bf16.mxu0 0
    %4027 = vmatpush1.bf16.msra.mxu0 %v3612
    %4028 = vmatprep.subr.bf16.mxu0 0
    %4029 = vmatpush1.bf16.msra.mxu0 %v3613
    %4030 = vmatprep.subr.bf16.mxu0 0
    %4031 = vmatpush1.bf16.msra.mxu0 %v3614
    %4032 = vmatprep.subr.bf16.mxu0 0
    %4033 = vmatpush1.bf16.msra.mxu0 %v3615
    %4034 = vmatprep.subr.bf16.mxu0 0
    %4035 = vmatpush1.bf16.msra.mxu0 %v3616
    %4036 = vmatprep.subr.bf16.mxu0 0
    %4037 = vmatpush1.bf16.msra.mxu0 %v3617
    %4038 = vmatprep.subr.bf16.mxu0 0
    %4039 = vmatpush1.bf16.msra.mxu0 %v3618
    %4040 = vmatprep.subr.bf16.mxu0 0
    %4041 = vmatpush1.bf16.msra.mxu0 %v3619
    %4042 = vmatprep.mubr.bf16.mxu0 %v2730
    %4043 = vmatmul.mubr.bf16.gmra.mrb[0].mxu0 %v2729
    %v4044 = vpop.f32.mrb[0].mxu0
    %v4045 = vadd.f32 %v4004, %v4044
    %v4046 = vpop.f32.mrb[0].mxu0
    %v4047 = vpop.f32.mrb[0].mxu0
    %v4048 = vadd.f32 %v4007, %v4047
    %v4049 = vpop.f32.mrb[0].mxu0
    %4050 = vdwg.mxu0
    %4051 = vmatprep.subr.bf16.mxu0 0
    %4052 = vmatpush1.bf16.msra.mxu0 %v3620
    %4053 = vmatprep.subr.bf16.mxu0 0
    %4054 = vmatpush1.bf16.msra.mxu0 %v3621
    %4055 = vmatprep.subr.bf16.mxu0 0
    %4056 = vmatpush1.bf16.msra.mxu0 %v3622
    %4057 = vmatprep.subr.bf16.mxu0 0
    %4058 = vmatpush1.bf16.msra.mxu0 %v3623
    %4059 = vmatprep.subr.bf16.mxu0 0
    %4060 = vmatpush1.bf16.msra.mxu0 %v3624
    %4061 = vmatprep.subr.bf16.mxu0 0
    %4062 = vmatpush1.bf16.msra.mxu0 %v3625
    %4063 = vmatprep.subr.bf16.mxu0 0
    %4064 = vmatpush1.bf16.msra.mxu0 %v3626
    %4065 = vmatprep.subr.bf16.mxu0 0
    %4066 = vmatpush1.bf16.msra.mxu0 %v3627
    %4067 = vmatprep.subr.bf16.mxu0 0
    %4068 = vmatpush1.bf16.msra.mxu0 %v3628
    %4069 = vmatprep.subr.bf16.mxu0 0
    %4070 = vmatpush1.bf16.msra.mxu0 %v3629
    %4071 = vmatprep.subr.bf16.mxu0 0
    %4072 = vmatpush1.bf16.msra.mxu0 %v3630
    %4073 = vmatprep.subr.bf16.mxu0 0
    %4074 = vmatpush1.bf16.msra.mxu0 %v3631
    %4075 = vmatprep.subr.bf16.mxu0 0
    %4076 = vmatpush1.bf16.msra.mxu0 %v3632
    %4077 = vmatprep.subr.bf16.mxu0 0
    %4078 = vmatpush1.bf16.msra.mxu0 %v3633
    %4079 = vmatprep.subr.bf16.mxu0 0
    %4080 = vmatpush1.bf16.msra.mxu0 %v3634
    %4081 = vmatprep.subr.bf16.mxu0 0
    %4082 = vmatpush1.bf16.msra.mxu0 %v3635
    %4083 = vmatprep.mubr.bf16.mxu0 %v2732
    %4084 = vmatmul.mubr.bf16.gmra.mrb[0].mxu0 %v2731
    %v4085 = vpop.f32.mrb[0].mxu0
    %v4086 = vadd.f32 %v4045, %v4085
    %v4087 = vpop.f32.mrb[0].mxu0
    %v4088 = vpop.f32.mrb[0].mxu0
    %v4089 = vadd.f32 %v4048, %v4088
    %v4090 = vpop.f32.mrb[0].mxu0
    %4091 = vdwg.mxu0
    %v4092 = vadd.f32 %v1486, %v4086
    %v4093 = vadd.f32 %v1487, %v4089
    %v4094 = vld [vmem:[#allocation16] sm:$0x1]
    %v4095 = vld [vmem:[#allocation17] sm:$0x1]
    %4096 = vadd.xlane.f32.xlu0 %v4092
    %v4097 = vpop.xlane.xlu0 %4096
    %4098 = vadd.xlane.f32.xlu0 %v4093
    %v4099 = vpop.xlane.xlu0 %4098
    %v4100 = vmul.f32 %v4097, 0.010416667
    %v4101 = vmul.f32 %v4099, 0.010416667
    %v4102 = vsub.f32 %v4092, %v4100
    %v4103 = vsub.f32 %v4093, %v4101
    %v4104 = vmul.f32 %v4102, %v1447
    %v4105 = vmul.f32 %v4103, %v1447
    %v4106 = vmul.f32 %v4104, %v4104
    %v4107 = vmul.f32 %v4105, %v4105
    %4108 = vadd.xlane.f32.xlu0 %v4106
    %v4109 = vpop.xlane.xlu0 %4108
    %4110 = vadd.xlane.f32.xlu0 %v4107
    %v4111 = vpop.xlane.xlu0 %4110
    %v4112 = vmul.f32 %v4109, 0.010416667
    %v4113 = vmul.f32 %v4111, 0.010416667
    %v4114 = vadd.f32 %v4112, 1e-05
    %v4115 = vadd.f32 %v4113, 1e-05
    %v4116 = vrsqrt.pop %v4114
    %v4117 = vrsqrt.pop %v4115
    %v4118 = vmul.f32 %v4102, %v4116
    %v4119 = vmul.f32 %v4103, %v4117
    %v4121 = vlaneseq
    %v4122 = vshrl.u32 %v4121, 7
    %v4123 = vsub.s32 0, %v4122
    %v4124 = vrot.slane %v4094, %v4123
    %v4126 = vmul.f32 %v4118, %v4124
    %v4127 = vmul.f32 %v4119, %v4124
    %v4129 = vlaneseq
    %v4130 = vshrl.u32 %v4129, 7
    %v4131 = vsub.s32 0, %v4130
    %v4132 = vrot.slane %v4095, %v4131
    %v4134 = vadd.f32 %v4126, %v4132
    %v4135 = vadd.f32 %v4127, %v4132
    %v4136 = vld [vmem:[%s5] sm:$0xff]
    %v4137 = vld [vmem:[%s5 + $0x8] sm:$0xff]
    %v4138 = vld [vmem:[%s5 + $0x10] sm:$0x3]
    %v4139 = vld [vmem:[%s7] sm:$0xff]
    %v4140 = vld [vmem:[%s7 + $0x8] sm:$0xff]
    %v4141 = vld [vmem:[%s7 + $0x10] sm:$0x3]
    %v4142 = vpack.c.bf16 %v4137, %v4136
    %v4143 = vpack.c.bf16 %v4138, %v4138
    %v4144 = vld [vmem:[%s37] sm:$0xff]
    %v4145 = vld [vmem:[%s37 + $0x8] sm:$0xf]
    %v4146 = vld [vmem:[%s37 + $0xc] sm:$0xff]
    %v4147 = vld [vmem:[%s37 + $0x14] sm:$0xf]
    %v4148 = vld [vmem:[%s37 + $0x18] sm:$0xff]
    %v4149 = vld [vmem:[%s37 + $0x20] sm:$0xf]
    %v4150 = vld [vmem:[%s37 + $0x24] sm:$0xff]
    %v4151 = vld [vmem:[%s37 + $0x2c] sm:$0xf]
    %v4152 = vld [vmem:[%s37 + $0x30] sm:$0xff]
    %v4153 = vld [vmem:[%s37 + $0x38] sm:$0xf]
    %v4154 = vld [vmem:[%s37 + $0x3c] sm:$0xff]
    %v4155 = vld [vmem:[%s37 + $0x44] sm:$0xf]
    %v4156 = vld [vmem:[%s37 + $0x48] sm:$0xff]
    %v4157 = vld [vmem:[%s37 + $0x50] sm:$0xf]
    %v4158 = vld [vmem:[%s37 + $0x54] sm:$0xff]
    %v4159 = vld [vmem:[%s37 + $0x5c] sm:$0xf]
    %v4160 = vld [vmem:[%s37 + $0x60] sm:$0xff]
    %v4161 = vld [vmem:[%s37 + $0x68] sm:$0xf]
    %v4162 = vld [vmem:[%s37 + $0x6c] sm:$0xff]
    %v4163 = vld [vmem:[%s37 + $0x74] sm:$0xf]
    %v4164 = vld [vmem:[%s37 + $0x78] sm:$0xff]
    %v4165 = vld [vmem:[%s37 + $0x80] sm:$0xf]
    %v4166 = vld [vmem:[%s37 + $0x84] sm:$0xff]
    %v4167 = vld [vmem:[%s37 + $0x8c] sm:$0xf]
    %v4168 = vld [vmem:[%s37 + $0x90] sm:$0xff]
    %v4169 = vld [vmem:[%s37 + $0x98] sm:$0xf]
    %v4170 = vld [vmem:[%s37 + $0x9c] sm:$0xff]
    %v4171 = vld [vmem:[%s37 + $0xa4] sm:$0xf]
    %v4172 = vld [vmem:[%s37 + $0xa8] sm:$0xff]
    %v4173 = vld [vmem:[%s37 + $0xb0] sm:$0xf]
    %v4174 = vld [vmem:[%s37 + $0xb4] sm:$0xff]
    %v4175 = vld [vmem:[%s37 + $0xbc] sm:$0xf]
    %v4176 = vld [vmem:[#allocation19] sm:$0x7]
    %v4178 = vlaneseq
    %v4179 = vshrl.u32 %v4178, 7
    %v4180 = vsub.s32 0, %v4179
    %v4181 = vrot.slane %v4176, %v4180
    %v4182 = vlaneseq
    %v4183 = vshrl.u32 %v4182, 7
    %v4184 = vsub.s32 1, %v4183
    %v4185 = vrot.slane %v4176, %v4184
    %v4186 = vlaneseq
    %v4187 = vshrl.u32 %v4186, 7
    %v4188 = vsub.s32 2, %v4187
    %v4189 = vrot.slane %v4176, %v4188
    %v4225 = vunpack.c.l.b16 %v4144
    %v4226 = vunpack.c.h.b16 %v4144
    %v4227 = vunpack.c.l.b16 %v4145
    %v4228 = vunpack.c.l.b16 %v4146
    %v4229 = vunpack.c.h.b16 %v4146
    %v4230 = vunpack.c.l.b16 %v4147
    %v4231 = vunpack.c.l.b16 %v4148
    %v4232 = vunpack.c.h.b16 %v4148
    %v4233 = vunpack.c.l.b16 %v4149
    %v4234 = vunpack.c.l.b16 %v4150
    %v4235 = vunpack.c.h.b16 %v4150
    %v4236 = vunpack.c.l.b16 %v4151
    %v4237 = vunpack.c.l.b16 %v4152
    %v4238 = vunpack.c.h.b16 %v4152
    %v4239 = vunpack.c.l.b16 %v4153
    %v4240 = vunpack.c.l.b16 %v4154
    %v4241 = vunpack.c.h.b16 %v4154
    %v4242 = vunpack.c.l.b16 %v4155
    %v4243 = vunpack.c.l.b16 %v4156
    %v4244 = vunpack.c.h.b16 %v4156
    %v4245 = vunpack.c.l.b16 %v4157
    %v4246 = vunpack.c.l.b16 %v4158
    %v4247 = vunpack.c.h.b16 %v4158
    %v4248 = vunpack.c.l.b16 %v4159
    %v4249 = vunpack.c.l.b16 %v4160
    %v4250 = vunpack.c.h.b16 %v4160
    %v4251 = vunpack.c.l.b16 %v4161
    %v4252 = vunpack.c.l.b16 %v4162
    %v4253 = vunpack.c.h.b16 %v4162
    %v4254 = vunpack.c.l.b16 %v4163
    %v4255 = vunpack.c.l.b16 %v4164
    %v4256 = vunpack.c.h.b16 %v4164
    %v4257 = vunpack.c.l.b16 %v4165
    %v4258 = vunpack.c.l.b16 %v4166
    %v4259 = vunpack.c.h.b16 %v4166
    %v4260 = vunpack.c.l.b16 %v4167
    %v4261 = vunpack.c.l.b16 %v4168
    %v4262 = vunpack.c.h.b16 %v4168
    %v4263 = vunpack.c.l.b16 %v4169
    %v4264 = vunpack.c.l.b16 %v4170
    %v4265 = vunpack.c.h.b16 %v4170
    %v4266 = vunpack.c.l.b16 %v4171
    %v4267 = vunpack.c.l.b16 %v4172
    %v4268 = vunpack.c.h.b16 %v4172
    %v4269 = vunpack.c.l.b16 %v4173
    %v4270 = vunpack.c.l.b16 %v4174
    %v4271 = vunpack.c.h.b16 %v4174
    %v4272 = vunpack.c.l.b16 %v4175
    %v4273 = vpack.c.b16 %v4228, %v4225
    %v4274 = vpack.c.b16 %v4229, %v4226
    %v4275 = vpack.c.b16 %v4230, %v4227
    %v4276 = vpack.c.b16 %v4234, %v4231
    %v4277 = vpack.c.b16 %v4235, %v4232
    %v4278 = vpack.c.b16 %v4236, %v4233
    %v4279 = vpack.c.b16 %v4240, %v4237
    %v4280 = vpack.c.b16 %v4241, %v4238
    %v4281 = vpack.c.b16 %v4242, %v4239
    %v4282 = vpack.c.b16 %v4246, %v4243
    %v4283 = vpack.c.b16 %v4247, %v4244
    %v4284 = vpack.c.b16 %v4248, %v4245
    %v4285 = vpack.c.b16 %v4252, %v4249
    %v4286 = vpack.c.b16 %v4253, %v4250
    %v4287 = vpack.c.b16 %v4254, %v4251
    %v4288 = vpack.c.b16 %v4258, %v4255
    %v4289 = vpack.c.b16 %v4259, %v4256
    %v4290 = vpack.c.b16 %v4260, %v4257
    %v4291 = vpack.c.b16 %v4264, %v4261
    %v4292 = vpack.c.b16 %v4265, %v4262
    %v4293 = vpack.c.b16 %v4266, %v4263
    %v4294 = vpack.c.b16 %v4270, %v4267
    %v4295 = vpack.c.b16 %v4271, %v4268
    %v4296 = vpack.c.b16 %v4272, %v4269
    %4321 = vmatprep.subr.bf16.mxu0 %v4274
    %4322 = vmatpush1.bf16.msra.mxu0 %v4273
    %4323 = vmatprep.subr.bf16.mxu0 %v4277
    %4324 = vmatpush1.bf16.msra.mxu0 %v4276
    %4325 = vmatprep.subr.bf16.mxu0 %v4280
    %4326 = vmatpush1.bf16.msra.mxu0 %v4279
    %4327 = vmatprep.subr.bf16.mxu0 %v4283
    %4328 = vmatpush1.bf16.msra.mxu0 %v4282
    %4329 = vmatprep.subr.bf16.mxu0 %v4286
    %4330 = vmatpush1.bf16.msra.mxu0 %v4285
    %4331 = vmatprep.subr.bf16.mxu0 %v4289
    %4332 = vmatpush1.bf16.msra.mxu0 %v4288
    %4333 = vmatprep.subr.bf16.mxu0 %v4292
    %4334 = vmatpush1.bf16.msra.mxu0 %v4291
    %4335 = vmatprep.subr.bf16.mxu0 %v4295
    %4336 = vmatpush1.bf16.msra.mxu0 %v4294
    %4337 = vmatprep.subr.bf16.mxu0 0
    %4338 = vmatpush1.bf16.msra.mxu0 0
    %4339 = vmatprep.subr.bf16.mxu0 0
    %4340 = vmatpush1.bf16.msra.mxu0 0
    %4341 = vmatprep.subr.bf16.mxu0 0
    %4342 = vmatpush1.bf16.msra.mxu0 0
    %4343 = vmatprep.subr.bf16.mxu0 0
    %4344 = vmatpush1.bf16.msra.mxu0 0
    %4345 = vmatprep.subr.bf16.mxu0 0
    %4346 = vmatpush1.bf16.msra.mxu0 0
    %4347 = vmatprep.subr.bf16.mxu0 0
    %4348 = vmatpush1.bf16.msra.mxu0 0
    %4349 = vmatprep.subr.bf16.mxu0 0
    %4350 = vmatpush1.bf16.msra.mxu0 0
    %4351 = vmatprep.subr.bf16.mxu0 0
    %4352 = vmatpush1.bf16.msra.mxu0 0
    %4353 = vmatprep.mubr.bf16.mxu0 0
    %4354 = vmatmul.mubr.bf16.gmra.mrb[0].mxu0 %v4142
    %v4355 = vpop.f32.mrb[0].mxu0
    %v4356 = vadd.f32 %v4181, %v4355
    %v4357 = vpop.f32.mrb[0].mxu0
    %v4358 = vadd.f32 %v4185, %v4357
    %v4359 = vpop.f32.mrb[0].mxu0
    %v4360 = vadd.f32 %v4181, %v4359
    %v4361 = vpop.f32.mrb[0].mxu0
    %v4362 = vadd.f32 %v4185, %v4361
    %4363 = vmatprep.mubr.bf16.mxu0 0
    %4364 = vmatmul.mubr.bf16.gmra.mrb[0].mxu0 %v4143
    %v4365 = vpop.f32.mrb[0].mxu0
    %v4366 = vadd.f32 %v4181, %v4365
    %v4367 = vpop.f32.mrb[0].mxu0
    %v4368 = vadd.f32 %v4185, %v4367
    %v4369 = vpop.f32.mrb[0].mxu0
    %v4370 = vpop.f32.mrb[0].mxu0
    %4371 = vdwg.mxu0
    %4372 = vmatprep.subr.bf16.mxu0 0
    %4373 = vmatpush1.bf16.msra.mxu0 %v4275
    %4374 = vmatprep.subr.bf16.mxu0 0
    %4375 = vmatpush1.bf16.msra.mxu0 %v4278
    %4376 = vmatprep.subr.bf16.mxu0 0
    %4377 = vmatpush1.bf16.msra.mxu0 %v4281
    %4378 = vmatprep.subr.bf16.mxu0 0
    %4379 = vmatpush1.bf16.msra.mxu0 %v4284
    %4380 = vmatprep.subr.bf16.mxu0 0
    %4381 = vmatpush1.bf16.msra.mxu0 %v4287
    %4382 = vmatprep.subr.bf16.mxu0 0
    %4383 = vmatpush1.bf16.msra.mxu0 %v4290
    %4384 = vmatprep.subr.bf16.mxu0 0
    %4385 = vmatpush1.bf16.msra.mxu0 %v4293
    %4386 = vmatprep.subr.bf16.mxu0 0
    %4387 = vmatpush1.bf16.msra.mxu0 %v4296
    %4388 = vmatprep.subr.bf16.mxu0 0
    %4389 = vmatpush1.bf16.msra.mxu0 0
    %4390 = vmatprep.subr.bf16.mxu0 0
    %4391 = vmatpush1.bf16.msra.mxu0 0
    %4392 = vmatprep.subr.bf16.mxu0 0
    %4393 = vmatpush1.bf16.msra.mxu0 0
    %4394 = vmatprep.subr.bf16.mxu0 0
    %4395 = vmatpush1.bf16.msra.mxu0 0
    %4396 = vmatprep.subr.bf16.mxu0 0
    %4397 = vmatpush1.bf16.msra.mxu0 0
    %4398 = vmatprep.subr.bf16.mxu0 0
    %4399 = vmatpush1.bf16.msra.mxu0 0
    %4400 = vmatprep.subr.bf16.mxu0 0
    %4401 = vmatpush1.bf16.msra.mxu0 0
    %4402 = vmatprep.subr.bf16.mxu0 0
    %4403 = vmatpush1.bf16.msra.mxu0 0
    %4404 = vmatprep.mubr.bf16.mxu0 0
    %4405 = vmatmul.mubr.bf16.gmra.mrb[0].mxu0 %v4142
    %v4406 = vpop.f32.mrb[0].mxu0
    %v4407 = vadd.f32 %v4189, %v4406
    %v4408 = vpop.f32.mrb[0].mxu0
    %v4409 = vpop.f32.mrb[0].mxu0
    %v4410 = vadd.f32 %v4189, %v4409
    %v4411 = vpop.f32.mrb[0].mxu0
    %4412 = vmatprep.mubr.bf16.mxu0 0
    %4413 = vmatmul.mubr.bf16.gmra.mrb[0].mxu0 %v4143
    %v4414 = vpop.f32.mrb[0].mxu0
    %v4415 = vadd.f32 %v4189, %v4414
    %v4416 = vpop.f32.mrb[0].mxu0
    %v4417 = vpop.f32.mrb[0].mxu0
    %v4418 = vpop.f32.mrb[0].mxu0
    %4419 = vdwg.mxu0
    %v4420 = vpack.c.bf16 %v4360, %v4356
    %v4421 = vpack.c.bf16 %v4366, %v4366
    %v4422 = vpack.c.bf16 %v4362, %v4358
    %v4423 = vpack.c.bf16 %v4368, %v4368
    %v4424 = vpack.c.bf16 %v4410, %v4407
    %v4425 = vpack.c.bf16 %v4415, %v4415
    %v4427 = vsel %vm700, %v4420, 0
    %v4430 = vsel %vm700, %v4421, 0
    %v4433 = vsel %vm700, %v4422, 0
    %v4436 = vsel %vm700, %v4423, 0
    %4438 = vmatprep.subr.bf16.mxu0 0
    %4439 = vmatpush1.bf16.xpose.msra.mxu0 %v4433
    %4440 = vmatprep.subr.bf16.mxu0 0
    %4441 = vmatpush1.bf16.xpose.msra.mxu0 %v4436
    %4442 = vmatprep.subr.bf16.mxu0 0
    %4443 = vmatpush1.bf16.xpose.msra.mxu0 0
    %4444 = vmatprep.subr.bf16.mxu0 0
    %4445 = vmatpush1.bf16.xpose.msra.mxu0 0
    %4446 = vmatprep.subr.bf16.mxu0 0
    %4447 = vmatpush1.bf16.xpose.msra.mxu0 0
    %4448 = vmatprep.subr.bf16.mxu0 0
    %4449 = vmatpush1.bf16.xpose.msra.mxu0 0
    %4450 = vmatprep.subr.bf16.mxu0 0
    %4451 = vmatpush1.bf16.xpose.msra.mxu0 0
    %4452 = vmatprep.subr.bf16.mxu0 0
    %4453 = vmatpush1.bf16.xpose.msra.mxu0 0
    %4454 = vmatprep.subr.bf16.mxu0 0
    %4455 = vmatpush1.bf16.xpose.msra.mxu0 0
    %4456 = vmatprep.subr.bf16.mxu0 0
    %4457 = vmatpush1.bf16.xpose.msra.mxu0 0
    %4458 = vmatprep.subr.bf16.mxu0 0
    %4459 = vmatpush1.bf16.xpose.msra.mxu0 0
    %4460 = vmatprep.subr.bf16.mxu0 0
    %4461 = vmatpush1.bf16.xpose.msra.mxu0 0
    %4462 = vmatprep.subr.bf16.mxu0 0
    %4463 = vmatpush1.bf16.xpose.msra.mxu0 0
    %4464 = vmatprep.subr.bf16.mxu0 0
    %4465 = vmatpush1.bf16.xpose.msra.mxu0 0
    %4466 = vmatprep.subr.bf16.mxu0 0
    %4467 = vmatpush1.bf16.xpose.msra.mxu0 0
    %4468 = vmatprep.subr.bf16.mxu0 0
    %4469 = vmatpush1.bf16.xpose.msra.mxu0 0
    %4470 = vmatprep.mubr.bf16.mxu0 0
    %4471 = vmatmul.mubr.bf16.gmra.mrb[0].mxu0 %v4427
    %v4472 = vpop.f32.mrb[0].mxu0
    %v4473 = vadd.f32 %v4139, %v4472
    %v4474 = vpop.f32.mrb[0].mxu0
    %v4475 = vpop.f32.mrb[0].mxu0
    %v4476 = vadd.f32 %v4140, %v4475
    %v4477 = vpop.f32.mrb[0].mxu0
    %4478 = vmatprep.mubr.bf16.mxu0 0
    %4479 = vmatmul.mubr.bf16.gmra.mrb[0].mxu0 %v4430
    %v4480 = vpop.f32.mrb[0].mxu0
    %v4481 = vadd.f32 %v4141, %v4480
    %v4482 = vpop.f32.mrb[0].mxu0
    %v4483 = vpop.f32.mrb[0].mxu0
    %v4484 = vpop.f32.mrb[0].mxu0
    %4485 = vdwg.mxu0
    %vm4486 = vcmask 146432
    %v4487 = vsel %vm4486, %v4473, -inf
    %4488 = vmax.xlane.f32.xlu0 %v4487
    %v4489 = vpop.xlane.xlu0 %4488
    %v4490 = vsel %vm4486, %v4476, -inf
    %4491 = vmax.xlane.f32.xlu0 %v4490
    %v4492 = vpop.xlane.xlu0 %4491
    %vm4493 = vcmask 140288
    %v4494 = vsel %vm4493, %v4481, -inf
    %4495 = vmax.xlane.f32.xlu0 %v4494
    %v4496 = vpop.xlane.xlu0 %4495
    %v4497 = vsub.f32 %v4473, %v4489
    %v4498 = vsub.f32 %v4476, %v4492
    %v4499 = vsub.f32 %v4481, %v4496
    %v4500 = vmul.f32 %v4497, 1.442695
    %v4501 = vpow.pop %v4500
    %v4502 = vmul.f32 %v4498, 1.442695
    %v4503 = vpow.pop %v4502
    %v4504 = vmul.f32 %v4499, 1.442695
    %v4505 = vpow.pop %v4504
    %v4506 = vsel %vm4486, %v4501, 0.0
    %4507 = vadd.xlane.f32.xlu0 %v4506
    %v4508 = vpop.xlane.xlu0 %4507
    %v4509 = vsel %vm4486, %v4503, 0.0
    %4510 = vadd.xlane.f32.xlu0 %v4509
    %v4511 = vpop.xlane.xlu0 %4510
    %v4512 = vsel %vm4493, %v4505, 0.0
    %4513 = vadd.xlane.f32.xlu0 %v4512
    %v4514 = vpop.xlane.xlu0 %4513
    %v4515 = vrcp.pop %v4508
    %v4516 = vrcp.pop %v4511
    %v4517 = vrcp.pop %v4514
    %v4518 = vmul.f32 %v4501, %v4515
    %v4519 = vmul.f32 %v4503, %v4516
    %v4520 = vmul.f32 %v4505, %v4517
    %v4521 = vpack.c.bf16 %v4519, %v4518
    %v4522 = vpack.c.bf16 %v4520, %v4520
    %v4524 = vsel %vm4486, %v4521, 0
    %v4527 = vsel %vm4486, %v4522, 0
    %vm4529 = vcmask 1040384
    %v4531 = vsel %vm4529, %v4425, 0
    %4533 = vmatprep.subr.bf16.mxu0 0
    %4534 = vmatpush1.bf16.msra.mxu0 %v4424
    %4535 = vmatprep.subr.bf16.mxu0 0
    %4536 = vmatpush1.bf16.msra.mxu0 %v4531
    %4537 = vmatprep.subr.bf16.mxu0 0
    %4538 = vmatpush1.bf16.msra.mxu0 0
    %4539 = vmatprep.subr.bf16.mxu0 0
    %4540 = vmatpush1.bf16.msra.mxu0 0
    %4541 = vmatprep.subr.bf16.mxu0 0
    %4542 = vmatpush1.bf16.msra.mxu0 0
    %4543 = vmatprep.subr.bf16.mxu0 0
    %4544 = vmatpush1.bf16.msra.mxu0 0
    %4545 = vmatprep.subr.bf16.mxu0 0
    %4546 = vmatpush1.bf16.msra.mxu0 0
    %4547 = vmatprep.subr.bf16.mxu0 0
    %4548 = vmatpush1.bf16.msra.mxu0 0
    %4549 = vmatprep.subr.bf16.mxu0 0
    %4550 = vmatpush1.bf16.msra.mxu0 0
    %4551 = vmatprep.subr.bf16.mxu0 0
    %4552 = vmatpush1.bf16.msra.mxu0 0
    %4553 = vmatprep.subr.bf16.mxu0 0
    %4554 = vmatpush1.bf16.msra.mxu0 0
    %4555 = vmatprep.subr.bf16.mxu0 0
    %4556 = vmatpush1.bf16.msra.mxu0 0
    %4557 = vmatprep.subr.bf16.mxu0 0
    %4558 = vmatpush1.bf16.msra.mxu0 0
    %4559 = vmatprep.subr.bf16.mxu0 0
    %4560 = vmatpush1.bf16.msra.mxu0 0
    %4561 = vmatprep.subr.bf16.mxu0 0
    %4562 = vmatpush1.bf16.msra.mxu0 0
    %4563 = vmatprep.subr.bf16.mxu0 0
    %4564 = vmatpush1.bf16.msra.mxu0 0
    %4565 = vmatprep.mubr.bf16.mxu0 0
    %4566 = vmatmul.mubr.bf16.gmra.mrb[0].mxu0 %v4524
    %v4567 = vpop.f32.mrb[0].mxu0
    %v4568 = vadd.f32 0.0, %v4567
    %v4569 = vpop.f32.mrb[0].mxu0
    %v4570 = vpop.f32.mrb[0].mxu0
    %v4571 = vadd.f32 0.0, %v4570
    %v4572 = vpop.f32.mrb[0].mxu0
    %4573 = vmatprep.mubr.bf16.mxu0 0
    %4574 = vmatmul.mubr.bf16.gmra.mrb[0].mxu0 %v4527
    %v4575 = vpop.f32.mrb[0].mxu0
    %v4576 = vadd.f32 0.0, %v4575
    %v4577 = vpop.f32.mrb[0].mxu0
    %v4578 = vpop.f32.mrb[0].mxu0
    %v4579 = vpop.f32.mrb[0].mxu0
    %4580 = vdwg.mxu0
    %v4581 = vpack.c.bf16 %v4571, %v4568
    %v4582 = vpack.c.bf16 %v4576, %v4576
    %v4583 = vld [vmem:[%s41] sm:$0xf]
    %v4584 = vld [vmem:[%s41 + $0x4] sm:$0xf]
    %v4585 = vld [vmem:[%s41 + $0x8] sm:$0xf]
    %v4586 = vld [vmem:[%s41 + $0xc] sm:$0xf]
    %4589 = vrot.lane.b32.xlu0 %v4420, 96
    %v4590 = vpop.permute.xlu0 %4589
    %4591 = vrot.lane.b32.xlu0 %v4421, 96
    %v4592 = vpop.permute.xlu0 %4591
    %4595 = vrot.lane.b32.xlu0 %v4422, 96
    %v4596 = vpop.permute.xlu0 %4595
    %4597 = vrot.lane.b32.xlu0 %v4423, 96
    %v4598 = vpop.permute.xlu0 %4597
    %v4600 = vsel %vm700, %v4590, 0
    %v4603 = vsel %vm700, %v4592, 0
    %v4606 = vsel %vm700, %v4596, 0
    %v4609 = vsel %vm700, %v4598, 0
    %4611 = vmatprep.subr.bf16.mxu0 0
    %4612 = vmatpush1.bf16.xpose.msra.mxu0 %v4606
    %4613 = vmatprep.subr.bf16.mxu0 0
    %4614 = vmatpush1.bf16.xpose.msra.mxu0 %v4609
    %4615 = vmatprep.subr.bf16.mxu0 0
    %4616 = vmatpush1.bf16.xpose.msra.mxu0 0
    %4617 = vmatprep.subr.bf16.mxu0 0
    %4618 = vmatpush1.bf16.xpose.msra.mxu0 0
    %4619 = vmatprep.subr.bf16.mxu0 0
    %4620 = vmatpush1.bf16.xpose.msra.mxu0 0
    %4621 = vmatprep.subr.bf16.mxu0 0
    %4622 = vmatpush1.bf16.xpose.msra.mxu0 0
    %4623 = vmatprep.subr.bf16.mxu0 0
    %4624 = vmatpush1.bf16.xpose.msra.mxu0 0
    %4625 = vmatprep.subr.bf16.mxu0 0
    %4626 = vmatpush1.bf16.xpose.msra.mxu0 0
    %4627 = vmatprep.subr.bf16.mxu0 0
    %4628 = vmatpush1.bf16.xpose.msra.mxu0 0
    %4629 = vmatprep.subr.bf16.mxu0 0
    %4630 = vmatpush1.bf16.xpose.msra.mxu0 0
    %4631 = vmatprep.subr.bf16.mxu0 0
    %4632 = vmatpush1.bf16.xpose.msra.mxu0 0
    %4633 = vmatprep.subr.bf16.mxu0 0
    %4634 = vmatpush1.bf16.xpose.msra.mxu0 0
    %4635 = vmatprep.subr.bf16.mxu0 0
    %4636 = vmatpush1.bf16.xpose.msra.mxu0 0
    %4637 = vmatprep.subr.bf16.mxu0 0
    %4638 = vmatpush1.bf16.xpose.msra.mxu0 0
    %4639 = vmatprep.subr.bf16.mxu0 0
    %4640 = vmatpush1.bf16.xpose.msra.mxu0 0
    %4641 = vmatprep.subr.bf16.mxu0 0
    %4642 = vmatpush1.bf16.xpose.msra.mxu0 0
    %4643 = vmatprep.mubr.bf16.mxu0 0
    %4644 = vmatmul.mubr.bf16.gmra.mrb[0].mxu0 %v4600
    %v4645 = vpop.f32.mrb[0].mxu0
    %v4646 = vadd.f32 %v4139, %v4645
    %v4647 = vpop.f32.mrb[0].mxu0
    %v4648 = vpop.f32.mrb[0].mxu0
    %v4649 = vadd.f32 %v4140, %v4648
    %v4650 = vpop.f32.mrb[0].mxu0
    %4651 = vmatprep.mubr.bf16.mxu0 0
    %4652 = vmatmul.mubr.bf16.gmra.mrb[0].mxu0 %v4603
    %v4653 = vpop.f32.mrb[0].mxu0
    %v4654 = vadd.f32 %v4141, %v4653
    %v4655 = vpop.f32.mrb[0].mxu0
    %v4656 = vpop.f32.mrb[0].mxu0
    %v4657 = vpop.f32.mrb[0].mxu0
    %4658 = vdwg.mxu0
    %v4659 = vsel %vm4486, %v4646, -inf
    %4660 = vmax.xlane.f32.xlu0 %v4659
    %v4661 = vpop.xlane.xlu0 %4660
    %v4662 = vsel %vm4486, %v4649, -inf
    %4663 = vmax.xlane.f32.xlu0 %v4662
    %v4664 = vpop.xlane.xlu0 %4663
    %v4665 = vsel %vm4493, %v4654, -inf
    %4666 = vmax.xlane.f32.xlu0 %v4665
    %v4667 = vpop.xlane.xlu0 %4666
    %v4668 = vsub.f32 %v4646, %v4661
    %v4669 = vsub.f32 %v4649, %v4664
    %v4670 = vsub.f32 %v4654, %v4667
    %v4671 = vmul.f32 %v4668, 1.442695
    %v4672 = vpow.pop %v4671
    %v4673 = vmul.f32 %v4669, 1.442695
    %v4674 = vpow.pop %v4673
    %v4675 = vmul.f32 %v4670, 1.442695
    %v4676 = vpow.pop %v4675
    %v4677 = vsel %vm4486, %v4672, 0.0
    %4678 = vadd.xlane.f32.xlu0 %v4677
    %v4679 = vpop.xlane.xlu0 %4678
    %v4680 = vsel %vm4486, %v4674, 0.0
    %4681 = vadd.xlane.f32.xlu0 %v4680
    %v4682 = vpop.xlane.xlu0 %4681
    %v4683 = vsel %vm4493, %v4676, 0.0
    %4684 = vadd.xlane.f32.xlu0 %v4683
    %v4685 = vpop.xlane.xlu0 %4684
    %v4686 = vrcp.pop %v4679
    %v4687 = vrcp.pop %v4682
    %v4688 = vrcp.pop %v4685
    %v4689 = vmul.f32 %v4672, %v4686
    %v4690 = vmul.f32 %v4674, %v4687
    %v4691 = vmul.f32 %v4676, %v4688
    %v4692 = vpack.c.bf16 %v4690, %v4689
    %v4693 = vpack.c.bf16 %v4691, %v4691
    %4696 = vrot.lane.b32.xlu0 %v4424, 96
    %v4697 = vpop.permute.xlu0 %4696
    %4698 = vrot.lane.b32.xlu0 %v4425, 96
    %v4699 = vpop.permute.xlu0 %4698
    %v4702 = vsel %vm4486, %v4692, 0
    %v4705 = vsel %vm4486, %v4693, 0
    %v4708 = vsel %vm4529, %v4699, 0
    %4710 = vmatprep.subr.bf16.mxu0 0
    %4711 = vmatpush1.bf16.msra.mxu0 %v4697
    %4712 = vmatprep.subr.bf16.mxu0 0
    %4713 = vmatpush1.bf16.msra.mxu0 %v4708
    %4714 = vmatprep.subr.bf16.mxu0 0
    %4715 = vmatpush1.bf16.msra.mxu0 0
    %4716 = vmatprep.subr.bf16.mxu0 0
    %4717 = vmatpush1.bf16.msra.mxu0 0
    %4718 = vmatprep.subr.bf16.mxu0 0
    %4719 = vmatpush1.bf16.msra.mxu0 0
    %4720 = vmatprep.subr.bf16.mxu0 0
    %4721 = vmatpush1.bf16.msra.mxu0 0
    %4722 = vmatprep.subr.bf16.mxu0 0
    %4723 = vmatpush1.bf16.msra.mxu0 0
    %4724 = vmatprep.subr.bf16.mxu0 0
    %4725 = vmatpush1.bf16.msra.mxu0 0
    %4726 = vmatprep.subr.bf16.mxu0 0
    %4727 = vmatpush1.bf16.msra.mxu0 0
    %4728 = vmatprep.subr.bf16.mxu0 0
    %4729 = vmatpush1.bf16.msra.mxu0 0
    %4730 = vmatprep.subr.bf16.mxu0 0
    %4731 = vmatpush1.bf16.msra.mxu0 0
    %4732 = vmatprep.subr.bf16.mxu0 0
    %4733 = vmatpush1.bf16.msra.mxu0 0
    %4734 = vmatprep.subr.bf16.mxu0 0
    %4735 = vmatpush1.bf16.msra.mxu0 0
    %4736 = vmatprep.subr.bf16.mxu0 0
    %4737 = vmatpush1.bf16.msra.mxu0 0
    %4738 = vmatprep.subr.bf16.mxu0 0
    %4739 = vmatpush1.bf16.msra.mxu0 0
    %4740 = vmatprep.subr.bf16.mxu0 0
    %4741 = vmatpush1.bf16.msra.mxu0 0
    %4742 = vmatprep.mubr.bf16.mxu0 0
    %4743 = vmatmul.mubr.bf16.gmra.mrb[0].mxu0 %v4702
    %v4744 = vpop.f32.mrb[0].mxu0
    %v4745 = vadd.f32 0.0, %v4744
    %v4746 = vpop.f32.mrb[0].mxu0
    %v4747 = vpop.f32.mrb[0].mxu0
    %v4748 = vadd.f32 0.0, %v4747
    %v4749 = vpop.f32.mrb[0].mxu0
    %4750 = vmatprep.mubr.bf16.mxu0 0
    %4751 = vmatmul.mubr.bf16.gmra.mrb[0].mxu0 %v4705
    %v4752 = vpop.f32.mrb[0].mxu0
    %v4753 = vadd.f32 0.0, %v4752
    %v4754 = vpop.f32.mrb[0].mxu0
    %v4755 = vpop.f32.mrb[0].mxu0
    %v4756 = vpop.f32.mrb[0].mxu0
    %4757 = vdwg.mxu0
    %v4758 = vpack.c.bf16 %v4748, %v4745
    %v4759 = vpack.c.bf16 %v4753, %v4753
    %v4760 = vld [vmem:[%s41 + $0x10] sm:$0xf]
    %v4761 = vld [vmem:[%s41 + $0x14] sm:$0xf]
    %v4762 = vld [vmem:[%s41 + $0x18] sm:$0xf]
    %v4763 = vld [vmem:[%s41 + $0x1c] sm:$0xf]
    %v4768 = vunpack.c.l.b16 %v4760
    %v4769 = vunpack.c.l.b16 %v4761
    %v4770 = vunpack.c.l.b16 %v4762
    %v4771 = vunpack.c.l.b16 %v4763
    %v4772 = vpack.c.b16 %v4769, %v4768
    %v4773 = vpack.c.b16 %v4771, %v4770
    %v4777 = vsel %vm700, %v4758, 0
    %v4780 = vsel %vm700, %v4759, 0
    %4782 = vmatprep.subr.bf16.mxu0 0
    %4783 = vmatpush1.bf16.msra.mxu0 %v4772
    %4784 = vmatprep.subr.bf16.mxu0 0
    %4785 = vmatpush1.bf16.msra.mxu0 %v4773
    %4786 = vmatprep.subr.bf16.mxu0 0
    %4787 = vmatpush1.bf16.msra.mxu0 0
    %4788 = vmatprep.subr.bf16.mxu0 0
    %4789 = vmatpush1.bf16.msra.mxu0 0
    %4790 = vmatprep.subr.bf16.mxu0 0
    %4791 = vmatpush1.bf16.msra.mxu0 0
    %4792 = vmatprep.subr.bf16.mxu0 0
    %4793 = vmatpush1.bf16.msra.mxu0 0
    %4794 = vmatprep.subr.bf16.mxu0 0
    %4795 = vmatpush1.bf16.msra.mxu0 0
    %4796 = vmatprep.subr.bf16.mxu0 0
    %4797 = vmatpush1.bf16.msra.mxu0 0
    %4798 = vmatprep.subr.bf16.mxu0 0
    %4799 = vmatpush1.bf16.msra.mxu0 0
    %4800 = vmatprep.subr.bf16.mxu0 0
    %4801 = vmatpush1.bf16.msra.mxu0 0
    %4802 = vmatprep.subr.bf16.mxu0 0
    %4803 = vmatpush1.bf16.msra.mxu0 0
    %4804 = vmatprep.subr.bf16.mxu0 0
    %4805 = vmatpush1.bf16.msra.mxu0 0
    %4806 = vmatprep.subr.bf16.mxu0 0
    %4807 = vmatpush1.bf16.msra.mxu0 0
    %4808 = vmatprep.subr.bf16.mxu0 0
    %4809 = vmatpush1.bf16.msra.mxu0 0
    %4810 = vmatprep.subr.bf16.mxu0 0
    %4811 = vmatpush1.bf16.msra.mxu0 0
    %4812 = vmatprep.subr.bf16.mxu0 0
    %4813 = vmatpush1.bf16.msra.mxu0 0
    %4814 = vmatprep.mubr.bf16.mxu0 0
    %4815 = vmatmul.mubr.bf16.gmra.mrb[0].mxu0 %v4777
    %v4816 = vpop.f32.mrb[0].mxu0
    %v4817 = vadd.f32 0.0, %v4816
    %v4818 = vpop.f32.mrb[0].mxu0
    %v4819 = vpop.f32.mrb[0].mxu0
    %v4820 = vadd.f32 0.0, %v4819
    %v4821 = vpop.f32.mrb[0].mxu0
    %4822 = vmatprep.mubr.bf16.mxu0 0
    %4823 = vmatmul.mubr.bf16.gmra.mrb[0].mxu0 %v4780
    %v4824 = vpop.f32.mrb[0].mxu0
    %v4825 = vadd.f32 0.0, %v4824
    %v4826 = vpop.f32.mrb[0].mxu0
    %v4827 = vpop.f32.mrb[0].mxu0
    %v4828 = vpop.f32.mrb[0].mxu0
    %4829 = vdwg.mxu0
    %v4834 = vunpack.c.l.b16 %v4583
    %v4835 = vunpack.c.l.b16 %v4584
    %v4836 = vunpack.c.l.b16 %v4585
    %v4837 = vunpack.c.l.b16 %v4586
    %v4838 = vpack.c.b16 %v4835, %v4834
    %v4839 = vpack.c.b16 %v4837, %v4836
    %v4843 = vsel %vm700, %v4581, 0
    %v4846 = vsel %vm700, %v4582, 0
    %4848 = vmatprep.subr.bf16.mxu0 0
    %4849 = vmatpush1.bf16.msra.mxu0 %v4838
    %4850 = vmatprep.subr.bf16.mxu0 0
    %4851 = vmatpush1.bf16.msra.mxu0 %v4839
    %4852 = vmatprep.subr.bf16.mxu0 0
    %4853 = vmatpush1.bf16.msra.mxu0 0
    %4854 = vmatprep.subr.bf16.mxu0 0
    %4855 = vmatpush1.bf16.msra.mxu0 0
    %4856 = vmatprep.subr.bf16.mxu0 0
    %4857 = vmatpush1.bf16.msra.mxu0 0
    %4858 = vmatprep.subr.bf16.mxu0 0
    %4859 = vmatpush1.bf16.msra.mxu0 0
    %4860 = vmatprep.subr.bf16.mxu0 0
    %4861 = vmatpush1.bf16.msra.mxu0 0
    %4862 = vmatprep.subr.bf16.mxu0 0
    %4863 = vmatpush1.bf16.msra.mxu0 0
    %4864 = vmatprep.subr.bf16.mxu0 0
    %4865 = vmatpush1.bf16.msra.mxu0 0
    %4866 = vmatprep.subr.bf16.mxu0 0
    %4867 = vmatpush1.bf16.msra.mxu0 0
    %4868 = vmatprep.subr.bf16.mxu0 0
    %4869 = vmatpush1.bf16.msra.mxu0 0
    %4870 = vmatprep.subr.bf16.mxu0 0
    %4871 = vmatpush1.bf16.msra.mxu0 0
    %4872 = vmatprep.subr.bf16.mxu0 0
    %4873 = vmatpush1.bf16.msra.mxu0 0
    %4874 = vmatprep.subr.bf16.mxu0 0
    %4875 = vmatpush1.bf16.msra.mxu0 0
    %4876 = vmatprep.subr.bf16.mxu0 0
    %4877 = vmatpush1.bf16.msra.mxu0 0
    %4878 = vmatprep.subr.bf16.mxu0 0
    %4879 = vmatpush1.bf16.msra.mxu0 0
    %4880 = vmatprep.mubr.bf16.mxu0 0
    %4881 = vmatmul.mubr.bf16.gmra.mrb[0].mxu0 %v4843
    %v4882 = vpop.f32.mrb[0].mxu0
    %v4883 = vadd.f32 %v4817, %v4882
    %v4884 = vpop.f32.mrb[0].mxu0
    %v4885 = vpop.f32.mrb[0].mxu0
    %v4886 = vadd.f32 %v4820, %v4885
    %v4887 = vpop.f32.mrb[0].mxu0
    %4888 = vmatprep.mubr.bf16.mxu0 0
    %4889 = vmatmul.mubr.bf16.gmra.mrb[0].mxu0 %v4846
    %v4890 = vpop.f32.mrb[0].mxu0
    %v4891 = vadd.f32 %v4825, %v4890
    %v4892 = vpop.f32.mrb[0].mxu0
    %v4893 = vpop.f32.mrb[0].mxu0
    %v4894 = vpop.f32.mrb[0].mxu0
    %4895 = vdwg.mxu0
    %4896 = vrot.lane.b32.xlu0 %v4420, 64
    %v4897 = vpop.permute.xlu0 %4896
    %4898 = vrot.lane.b32.xlu0 %v4421, 64
    %v4899 = vpop.permute.xlu0 %4898
    %4900 = vrot.lane.b32.xlu0 %v4422, 64
    %v4901 = vpop.permute.xlu0 %4900
    %4902 = vrot.lane.b32.xlu0 %v4423, 64
    %v4903 = vpop.permute.xlu0 %4902
    %v4905 = vsel %vm700, %v4897, 0
    %v4908 = vsel %vm700, %v4899, 0
    %v4911 = vsel %vm700, %v4901, 0
    %v4914 = vsel %vm700, %v4903, 0
    %4916 = vmatprep.subr.bf16.mxu0 0
    %4917 = vmatpush1.bf16.xpose.msra.mxu0 %v4911
    %4918 = vmatprep.subr.bf16.mxu0 0
    %4919 = vmatpush1.bf16.xpose.msra.mxu0 %v4914
    %4920 = vmatprep.subr.bf16.mxu0 0
    %4921 = vmatpush1.bf16.xpose.msra.mxu0 0
    %4922 = vmatprep.subr.bf16.mxu0 0
    %4923 = vmatpush1.bf16.xpose.msra.mxu0 0
    %4924 = vmatprep.subr.bf16.mxu0 0
    %4925 = vmatpush1.bf16.xpose.msra.mxu0 0
    %4926 = vmatprep.subr.bf16.mxu0 0
    %4927 = vmatpush1.bf16.xpose.msra.mxu0 0
    %4928 = vmatprep.subr.bf16.mxu0 0
    %4929 = vmatpush1.bf16.xpose.msra.mxu0 0
    %4930 = vmatprep.subr.bf16.mxu0 0
    %4931 = vmatpush1.bf16.xpose.msra.mxu0 0
    %4932 = vmatprep.subr.bf16.mxu0 0
    %4933 = vmatpush1.bf16.xpose.msra.mxu0 0
    %4934 = vmatprep.subr.bf16.mxu0 0
    %4935 = vmatpush1.bf16.xpose.msra.mxu0 0
    %4936 = vmatprep.subr.bf16.mxu0 0
    %4937 = vmatpush1.bf16.xpose.msra.mxu0 0
    %4938 = vmatprep.subr.bf16.mxu0 0
    %4939 = vmatpush1.bf16.xpose.msra.mxu0 0
    %4940 = vmatprep.subr.bf16.mxu0 0
    %4941 = vmatpush1.bf16.xpose.msra.mxu0 0
    %4942 = vmatprep.subr.bf16.mxu0 0
    %4943 = vmatpush1.bf16.xpose.msra.mxu0 0
    %4944 = vmatprep.subr.bf16.mxu0 0
    %4945 = vmatpush1.bf16.xpose.msra.mxu0 0
    %4946 = vmatprep.subr.bf16.mxu0 0
    %4947 = vmatpush1.bf16.xpose.msra.mxu0 0
    %4948 = vmatprep.mubr.bf16.mxu0 0
    %4949 = vmatmul.mubr.bf16.gmra.mrb[0].mxu0 %v4905
    %v4950 = vpop.f32.mrb[0].mxu0
    %v4951 = vadd.f32 %v4139, %v4950
    %v4952 = vpop.f32.mrb[0].mxu0
    %v4953 = vpop.f32.mrb[0].mxu0
    %v4954 = vadd.f32 %v4140, %v4953
    %v4955 = vpop.f32.mrb[0].mxu0
    %4956 = vmatprep.mubr.bf16.mxu0 0
    %4957 = vmatmul.mubr.bf16.gmra.mrb[0].mxu0 %v4908
    %v4958 = vpop.f32.mrb[0].mxu0
    %v4959 = vadd.f32 %v4141, %v4958
    %v4960 = vpop.f32.mrb[0].mxu0
    %v4961 = vpop.f32.mrb[0].mxu0
    %v4962 = vpop.f32.mrb[0].mxu0
    %4963 = vdwg.mxu0
    %v4964 = vsel %vm4486, %v4951, -inf
    %4965 = vmax.xlane.f32.xlu0 %v4964
    %v4966 = vpop.xlane.xlu0 %4965
    %v4967 = vsel %vm4486, %v4954, -inf
    %4968 = vmax.xlane.f32.xlu0 %v4967
    %v4969 = vpop.xlane.xlu0 %4968
    %v4970 = vsel %vm4493, %v4959, -inf
    %4971 = vmax.xlane.f32.xlu0 %v4970
    %v4972 = vpop.xlane.xlu0 %4971
    %v4973 = vsub.f32 %v4951, %v4966
    %v4974 = vsub.f32 %v4954, %v4969
    %v4975 = vsub.f32 %v4959, %v4972
    %v4976 = vmul.f32 %v4973, 1.442695
    %v4977 = vpow.pop %v4976
    %v4978 = vmul.f32 %v4974, 1.442695
    %v4979 = vpow.pop %v4978
    %v4980 = vmul.f32 %v4975, 1.442695
    %v4981 = vpow.pop %v4980
    %v4982 = vsel %vm4486, %v4977, 0.0
    %4983 = vadd.xlane.f32.xlu0 %v4982
    %v4984 = vpop.xlane.xlu0 %4983
    %v4985 = vsel %vm4486, %v4979, 0.0
    %4986 = vadd.xlane.f32.xlu0 %v4985
    %v4987 = vpop.xlane.xlu0 %4986
    %v4988 = vsel %vm4493, %v4981, 0.0
    %4989 = vadd.xlane.f32.xlu0 %v4988
    %v4990 = vpop.xlane.xlu0 %4989
    %v4991 = vrcp.pop %v4984
    %v4992 = vrcp.pop %v4987
    %v4993 = vrcp.pop %v4990
    %v4994 = vmul.f32 %v4977, %v4991
    %v4995 = vmul.f32 %v4979, %v4992
    %v4996 = vmul.f32 %v4981, %v4993
    %v4997 = vpack.c.bf16 %v4995, %v4994
    %v4998 = vpack.c.bf16 %v4996, %v4996
    %4999 = vrot.lane.b32.xlu0 %v4424, 64
    %v5000 = vpop.permute.xlu0 %4999
    %5001 = vrot.lane.b32.xlu0 %v4425, 64
    %v5002 = vpop.permute.xlu0 %5001
    %v5005 = vsel %vm4486, %v4997, 0
    %v5008 = vsel %vm4486, %v4998, 0
    %v5011 = vsel %vm4529, %v5002, 0
    %5013 = vmatprep.subr.bf16.mxu0 0
    %5014 = vmatpush1.bf16.msra.mxu0 %v5000
    %5015 = vmatprep.subr.bf16.mxu0 0
    %5016 = vmatpush1.bf16.msra.mxu0 %v5011
    %5017 = vmatprep.subr.bf16.mxu0 0
    %5018 = vmatpush1.bf16.msra.mxu0 0
    %5019 = vmatprep.subr.bf16.mxu0 0
    %5020 = vmatpush1.bf16.msra.mxu0 0
    %5021 = vmatprep.subr.bf16.mxu0 0
    %5022 = vmatpush1.bf16.msra.mxu0 0
    %5023 = vmatprep.subr.bf16.mxu0 0
    %5024 = vmatpush1.bf16.msra.mxu0 0
    %5025 = vmatprep.subr.bf16.mxu0 0
    %5026 = vmatpush1.bf16.msra.mxu0 0
    %5027 = vmatprep.subr.bf16.mxu0 0
    %5028 = vmatpush1.bf16.msra.mxu0 0
    %5029 = vmatprep.subr.bf16.mxu0 0
    %5030 = vmatpush1.bf16.msra.mxu0 0
    %5031 = vmatprep.subr.bf16.mxu0 0
    %5032 = vmatpush1.bf16.msra.mxu0 0
    %5033 = vmatprep.subr.bf16.mxu0 0
    %5034 = vmatpush1.bf16.msra.mxu0 0
    %5035 = vmatprep.subr.bf16.mxu0 0
    %5036 = vmatpush1.bf16.msra.mxu0 0
    %5037 = vmatprep.subr.bf16.mxu0 0
    %5038 = vmatpush1.bf16.msra.mxu0 0
    %5039 = vmatprep.subr.bf16.mxu0 0
    %5040 = vmatpush1.bf16.msra.mxu0 0
    %5041 = vmatprep.subr.bf16.mxu0 0
    %5042 = vmatpush1.bf16.msra.mxu0 0
    %5043 = vmatprep.subr.bf16.mxu0 0
    %5044 = vmatpush1.bf16.msra.mxu0 0
    %5045 = vmatprep.mubr.bf16.mxu0 0
    %5046 = vmatmul.mubr.bf16.gmra.mrb[0].mxu0 %v5005
    %v5047 = vpop.f32.mrb[0].mxu0
    %v5048 = vadd.f32 0.0, %v5047
    %v5049 = vpop.f32.mrb[0].mxu0
    %v5050 = vpop.f32.mrb[0].mxu0
    %v5051 = vadd.f32 0.0, %v5050
    %v5052 = vpop.f32.mrb[0].mxu0
    %5053 = vmatprep.mubr.bf16.mxu0 0
    %5054 = vmatmul.mubr.bf16.gmra.mrb[0].mxu0 %v5008
    %v5055 = vpop.f32.mrb[0].mxu0
    %v5056 = vadd.f32 0.0, %v5055
    %v5057 = vpop.f32.mrb[0].mxu0
    %v5058 = vpop.f32.mrb[0].mxu0
    %v5059 = vpop.f32.mrb[0].mxu0
    %5060 = vdwg.mxu0
    %v5061 = vpack.c.bf16 %v5051, %v5048
    %v5062 = vpack.c.bf16 %v5056, %v5056
    %v5063 = vld [vmem:[%s41 + $0x20] sm:$0xf]
    %v5064 = vld [vmem:[%s41 + $0x24] sm:$0xf]
    %v5065 = vld [vmem:[%s41 + $0x28] sm:$0xf]
    %v5066 = vld [vmem:[%s41 + $0x2c] sm:$0xf]
    %v5071 = vunpack.c.l.b16 %v5063
    %v5072 = vunpack.c.l.b16 %v5064
    %v5073 = vunpack.c.l.b16 %v5065
    %v5074 = vunpack.c.l.b16 %v5066
    %v5075 = vpack.c.b16 %v5072, %v5071
    %v5076 = vpack.c.b16 %v5074, %v5073
    %v5080 = vsel %vm700, %v5061, 0
    %v5083 = vsel %vm700, %v5062, 0
    %5085 = vmatprep.subr.bf16.mxu0 0
    %5086 = vmatpush1.bf16.msra.mxu0 %v5075
    %5087 = vmatprep.subr.bf16.mxu0 0
    %5088 = vmatpush1.bf16.msra.mxu0 %v5076
    %5089 = vmatprep.subr.bf16.mxu0 0
    %5090 = vmatpush1.bf16.msra.mxu0 0
    %5091 = vmatprep.subr.bf16.mxu0 0
    %5092 = vmatpush1.bf16.msra.mxu0 0
    %5093 = vmatprep.subr.bf16.mxu0 0
    %5094 = vmatpush1.bf16.msra.mxu0 0
    %5095 = vmatprep.subr.bf16.mxu0 0
    %5096 = vmatpush1.bf16.msra.mxu0 0
    %5097 = vmatprep.subr.bf16.mxu0 0
    %5098 = vmatpush1.bf16.msra.mxu0 0
    %5099 = vmatprep.subr.bf16.mxu0 0
    %5100 = vmatpush1.bf16.msra.mxu0 0
    %5101 = vmatprep.subr.bf16.mxu0 0
    %5102 = vmatpush1.bf16.msra.mxu0 0
    %5103 = vmatprep.subr.bf16.mxu0 0
    %5104 = vmatpush1.bf16.msra.mxu0 0
    %5105 = vmatprep.subr.bf16.mxu0 0
    %5106 = vmatpush1.bf16.msra.mxu0 0
    %5107 = vmatprep.subr.bf16.mxu0 0
    %5108 = vmatpush1.bf16.msra.mxu0 0
    %5109 = vmatprep.subr.bf16.mxu0 0
    %5110 = vmatpush1.bf16.msra.mxu0 0
    %5111 = vmatprep.subr.bf16.mxu0 0
    %5112 = vmatpush1.bf16.msra.mxu0 0
    %5113 = vmatprep.subr.bf16.mxu0 0
    %5114 = vmatpush1.bf16.msra.mxu0 0
    %5115 = vmatprep.subr.bf16.mxu0 0
    %5116 = vmatpush1.bf16.msra.mxu0 0
    %5117 = vmatprep.mubr.bf16.mxu0 0
    %5118 = vmatmul.mubr.bf16.gmra.mrb[0].mxu0 %v5080
    %v5119 = vpop.f32.mrb[0].mxu0
    %v5120 = vadd.f32 0.0, %v5119
    %v5121 = vpop.f32.mrb[0].mxu0
    %v5122 = vpop.f32.mrb[0].mxu0
    %v5123 = vadd.f32 0.0, %v5122
    %v5124 = vpop.f32.mrb[0].mxu0
    %5125 = vmatprep.mubr.bf16.mxu0 0
    %5126 = vmatmul.mubr.bf16.gmra.mrb[0].mxu0 %v5083
    %v5127 = vpop.f32.mrb[0].mxu0
    %v5128 = vadd.f32 0.0, %v5127
    %v5129 = vpop.f32.mrb[0].mxu0
    %v5130 = vpop.f32.mrb[0].mxu0
    %v5131 = vpop.f32.mrb[0].mxu0
    %5132 = vdwg.mxu0
    %v5133 = vadd.f32 %v4883, %v5120
    %v5134 = vadd.f32 %v4886, %v5123
    %v5135 = vadd.f32 %v4891, %v5128
    %5136 = vrot.lane.b32.xlu0 %v4420, 32
    %v5137 = vpop.permute.xlu0 %5136
    %5138 = vrot.lane.b32.xlu0 %v4421, 32
    %v5139 = vpop.permute.xlu0 %5138
    %5140 = vrot.lane.b32.xlu0 %v4422, 32
    %v5141 = vpop.permute.xlu0 %5140
    %5142 = vrot.lane.b32.xlu0 %v4423, 32
    %v5143 = vpop.permute.xlu0 %5142
    %v5145 = vsel %vm700, %v5137, 0
    %v5148 = vsel %vm700, %v5139, 0
    %v5151 = vsel %vm700, %v5141, 0
    %v5154 = vsel %vm700, %v5143, 0
    %5156 = vmatprep.subr.bf16.mxu0 0
    %5157 = vmatpush1.bf16.xpose.msra.mxu0 %v5151
    %5158 = vmatprep.subr.bf16.mxu0 0
    %5159 = vmatpush1.bf16.xpose.msra.mxu0 %v5154
    %5160 = vmatprep.subr.bf16.mxu0 0
    %5161 = vmatpush1.bf16.xpose.msra.mxu0 0
    %5162 = vmatprep.subr.bf16.mxu0 0
    %5163 = vmatpush1.bf16.xpose.msra.mxu0 0
    %5164 = vmatprep.subr.bf16.mxu0 0
    %5165 = vmatpush1.bf16.xpose.msra.mxu0 0
    %5166 = vmatprep.subr.bf16.mxu0 0
    %5167 = vmatpush1.bf16.xpose.msra.mxu0 0
    %5168 = vmatprep.subr.bf16.mxu0 0
    %5169 = vmatpush1.bf16.xpose.msra.mxu0 0
    %5170 = vmatprep.subr.bf16.mxu0 0
    %5171 = vmatpush1.bf16.xpose.msra.mxu0 0
    %5172 = vmatprep.subr.bf16.mxu0 0
    %5173 = vmatpush1.bf16.xpose.msra.mxu0 0
    %5174 = vmatprep.subr.bf16.mxu0 0
    %5175 = vmatpush1.bf16.xpose.msra.mxu0 0
    %5176 = vmatprep.subr.bf16.mxu0 0
    %5177 = vmatpush1.bf16.xpose.msra.mxu0 0
    %5178 = vmatprep.subr.bf16.mxu0 0
    %5179 = vmatpush1.bf16.xpose.msra.mxu0 0
    %5180 = vmatprep.subr.bf16.mxu0 0
    %5181 = vmatpush1.bf16.xpose.msra.mxu0 0
    %5182 = vmatprep.subr.bf16.mxu0 0
    %5183 = vmatpush1.bf16.xpose.msra.mxu0 0
    %5184 = vmatprep.subr.bf16.mxu0 0
    %5185 = vmatpush1.bf16.xpose.msra.mxu0 0
    %5186 = vmatprep.subr.bf16.mxu0 0
    %5187 = vmatpush1.bf16.xpose.msra.mxu0 0
    %5188 = vmatprep.mubr.bf16.mxu0 0
    %5189 = vmatmul.mubr.bf16.gmra.mrb[0].mxu0 %v5145
    %v5190 = vpop.f32.mrb[0].mxu0
    %v5191 = vadd.f32 %v4139, %v5190
    %v5192 = vpop.f32.mrb[0].mxu0
    %v5193 = vpop.f32.mrb[0].mxu0
    %v5194 = vadd.f32 %v4140, %v5193
    %v5195 = vpop.f32.mrb[0].mxu0
    %5196 = vmatprep.mubr.bf16.mxu0 0
    %5197 = vmatmul.mubr.bf16.gmra.mrb[0].mxu0 %v5148
    %v5198 = vpop.f32.mrb[0].mxu0
    %v5199 = vadd.f32 %v4141, %v5198
    %v5200 = vpop.f32.mrb[0].mxu0
    %v5201 = vpop.f32.mrb[0].mxu0
    %v5202 = vpop.f32.mrb[0].mxu0
    %5203 = vdwg.mxu0
    %v5204 = vsel %vm4486, %v5191, -inf
    %5205 = vmax.xlane.f32.xlu0 %v5204
    %v5206 = vpop.xlane.xlu0 %5205
    %v5207 = vsel %vm4486, %v5194, -inf
    %5208 = vmax.xlane.f32.xlu0 %v5207
    %v5209 = vpop.xlane.xlu0 %5208
    %v5210 = vsel %vm4493, %v5199, -inf
    %5211 = vmax.xlane.f32.xlu0 %v5210
    %v5212 = vpop.xlane.xlu0 %5211
    %v5213 = vsub.f32 %v5191, %v5206
    %v5214 = vsub.f32 %v5194, %v5209
    %v5215 = vsub.f32 %v5199, %v5212
    %v5216 = vmul.f32 %v5213, 1.442695
    %v5217 = vpow.pop %v5216
    %v5218 = vmul.f32 %v5214, 1.442695
    %v5219 = vpow.pop %v5218
    %v5220 = vmul.f32 %v5215, 1.442695
    %v5221 = vpow.pop %v5220
    %v5222 = vsel %vm4486, %v5217, 0.0
    %5223 = vadd.xlane.f32.xlu0 %v5222
    %v5224 = vpop.xlane.xlu0 %5223
    %v5225 = vsel %vm4486, %v5219, 0.0
    %5226 = vadd.xlane.f32.xlu0 %v5225
    %v5227 = vpop.xlane.xlu0 %5226
    %v5228 = vsel %vm4493, %v5221, 0.0
    %5229 = vadd.xlane.f32.xlu0 %v5228
    %v5230 = vpop.xlane.xlu0 %5229
    %v5231 = vrcp.pop %v5224
    %v5232 = vrcp.pop %v5227
    %v5233 = vrcp.pop %v5230
    %v5234 = vmul.f32 %v5217, %v5231
    %v5235 = vmul.f32 %v5219, %v5232
    %v5236 = vmul.f32 %v5221, %v5233
    %v5237 = vpack.c.bf16 %v5235, %v5234
    %v5238 = vpack.c.bf16 %v5236, %v5236
    %5239 = vrot.lane.b32.xlu0 %v4424, 32
    %v5240 = vpop.permute.xlu0 %5239
    %5241 = vrot.lane.b32.xlu0 %v4425, 32
    %v5242 = vpop.permute.xlu0 %5241
    %v5245 = vsel %vm4486, %v5237, 0
    %v5248 = vsel %vm4486, %v5238, 0
    %v5251 = vsel %vm4529, %v5242, 0
    %5253 = vmatprep.subr.bf16.mxu0 0
    %5254 = vmatpush1.bf16.msra.mxu0 %v5240
    %5255 = vmatprep.subr.bf16.mxu0 0
    %5256 = vmatpush1.bf16.msra.mxu0 %v5251
    %5257 = vmatprep.subr.bf16.mxu0 0
    %5258 = vmatpush1.bf16.msra.mxu0 0
    %5259 = vmatprep.subr.bf16.mxu0 0
    %5260 = vmatpush1.bf16.msra.mxu0 0
    %5261 = vmatprep.subr.bf16.mxu0 0
    %5262 = vmatpush1.bf16.msra.mxu0 0
    %5263 = vmatprep.subr.bf16.mxu0 0
    %5264 = vmatpush1.bf16.msra.mxu0 0
    %5265 = vmatprep.subr.bf16.mxu0 0
    %5266 = vmatpush1.bf16.msra.mxu0 0
    %5267 = vmatprep.subr.bf16.mxu0 0
    %5268 = vmatpush1.bf16.msra.mxu0 0
    %5269 = vmatprep.subr.bf16.mxu0 0
    %5270 = vmatpush1.bf16.msra.mxu0 0
    %5271 = vmatprep.subr.bf16.mxu0 0
    %5272 = vmatpush1.bf16.msra.mxu0 0
    %5273 = vmatprep.subr.bf16.mxu0 0
    %5274 = vmatpush1.bf16.msra.mxu0 0
    %5275 = vmatprep.subr.bf16.mxu0 0
    %5276 = vmatpush1.bf16.msra.mxu0 0
    %5277 = vmatprep.subr.bf16.mxu0 0
    %5278 = vmatpush1.bf16.msra.mxu0 0
    %5279 = vmatprep.subr.bf16.mxu0 0
    %5280 = vmatpush1.bf16.msra.mxu0 0
    %5281 = vmatprep.subr.bf16.mxu0 0
    %5282 = vmatpush1.bf16.msra.mxu0 0
    %5283 = vmatprep.subr.bf16.mxu0 0
    %5284 = vmatpush1.bf16.msra.mxu0 0
    %5285 = vmatprep.mubr.bf16.mxu0 0
    %5286 = vmatmul.mubr.bf16.gmra.mrb[0].mxu0 %v5245
    %v5287 = vpop.f32.mrb[0].mxu0
    %v5288 = vadd.f32 0.0, %v5287
    %v5289 = vpop.f32.mrb[0].mxu0
    %v5290 = vpop.f32.mrb[0].mxu0
    %v5291 = vadd.f32 0.0, %v5290
    %v5292 = vpop.f32.mrb[0].mxu0
    %5293 = vmatprep.mubr.bf16.mxu0 0
    %5294 = vmatmul.mubr.bf16.gmra.mrb[0].mxu0 %v5248
    %v5295 = vpop.f32.mrb[0].mxu0
    %v5296 = vadd.f32 0.0, %v5295
    %v5297 = vpop.f32.mrb[0].mxu0
    %v5298 = vpop.f32.mrb[0].mxu0
    %v5299 = vpop.f32.mrb[0].mxu0
    %5300 = vdwg.mxu0
    %v5301 = vpack.c.bf16 %v5291, %v5288
    %v5302 = vpack.c.bf16 %v5296, %v5296
    %v5303 = vld [vmem:[%s41 + $0x30] sm:$0xf]
    %v5304 = vld [vmem:[%s41 + $0x34] sm:$0xf]
    %v5305 = vld [vmem:[%s41 + $0x38] sm:$0xf]
    %v5306 = vld [vmem:[%s41 + $0x3c] sm:$0xf]
    %v5311 = vunpack.c.l.b16 %v5303
    %v5312 = vunpack.c.l.b16 %v5304
    %v5313 = vunpack.c.l.b16 %v5305
    %v5314 = vunpack.c.l.b16 %v5306
    %v5315 = vpack.c.b16 %v5312, %v5311
    %v5316 = vpack.c.b16 %v5314, %v5313
    %v5320 = vsel %vm700, %v5301, 0
    %v5323 = vsel %vm700, %v5302, 0
    %5325 = vmatprep.subr.bf16.mxu0 0
    %5326 = vmatpush1.bf16.msra.mxu0 %v5315
    %5327 = vmatprep.subr.bf16.mxu0 0
    %5328 = vmatpush1.bf16.msra.mxu0 %v5316
    %5329 = vmatprep.subr.bf16.mxu0 0
    %5330 = vmatpush1.bf16.msra.mxu0 0
    %5331 = vmatprep.subr.bf16.mxu0 0
    %5332 = vmatpush1.bf16.msra.mxu0 0
    %5333 = vmatprep.subr.bf16.mxu0 0
    %5334 = vmatpush1.bf16.msra.mxu0 0
    %5335 = vmatprep.subr.bf16.mxu0 0
    %5336 = vmatpush1.bf16.msra.mxu0 0
    %5337 = vmatprep.subr.bf16.mxu0 0
    %5338 = vmatpush1.bf16.msra.mxu0 0
    %5339 = vmatprep.subr.bf16.mxu0 0
    %5340 = vmatpush1.bf16.msra.mxu0 0
    %5341 = vmatprep.subr.bf16.mxu0 0
    %5342 = vmatpush1.bf16.msra.mxu0 0
    %5343 = vmatprep.subr.bf16.mxu0 0
    %5344 = vmatpush1.bf16.msra.mxu0 0
    %5345 = vmatprep.subr.bf16.mxu0 0
    %5346 = vmatpush1.bf16.msra.mxu0 0
    %5347 = vmatprep.subr.bf16.mxu0 0
    %5348 = vmatpush1.bf16.msra.mxu0 0
    %5349 = vmatprep.subr.bf16.mxu0 0
    %5350 = vmatpush1.bf16.msra.mxu0 0
    %5351 = vmatprep.subr.bf16.mxu0 0
    %5352 = vmatpush1.bf16.msra.mxu0 0
    %5353 = vmatprep.subr.bf16.mxu0 0
    %5354 = vmatpush1.bf16.msra.mxu0 0
    %5355 = vmatprep.subr.bf16.mxu0 0
    %5356 = vmatpush1.bf16.msra.mxu0 0
    %5357 = vmatprep.mubr.bf16.mxu0 0
    %5358 = vmatmul.mubr.bf16.gmra.mrb[0].mxu0 %v5320
    %v5359 = vpop.f32.mrb[0].mxu0
    %v5360 = vadd.f32 0.0, %v5359
    %v5361 = vpop.f32.mrb[0].mxu0
    %v5362 = vpop.f32.mrb[0].mxu0
    %v5363 = vadd.f32 0.0, %v5362
    %v5364 = vpop.f32.mrb[0].mxu0
    %5365 = vmatprep.mubr.bf16.mxu0 0
    %5366 = vmatmul.mubr.bf16.gmra.mrb[0].mxu0 %v5323
    %v5367 = vpop.f32.mrb[0].mxu0
    %v5368 = vadd.f32 0.0, %v5367
    %v5369 = vpop.f32.mrb[0].mxu0
    %v5370 = vpop.f32.mrb[0].mxu0
    %v5371 = vpop.f32.mrb[0].mxu0
    %5372 = vdwg.mxu0
    %v5373 = vadd.f32 %v5133, %v5360
    %v5374 = vadd.f32 %v5134, %v5363
    %v5375 = vadd.f32 %v5135, %v5368
    %v5376 = vld [vmem:[#allocation20] sm:$0x1]
    %v5378 = vlaneseq
    %v5379 = vshrl.u32 %v5378, 7
    %v5380 = vsub.s32 0, %v5379
    %v5381 = vrot.slane %v5376, %v5380
    %v5383 = vadd.f32 %v5373, %v5381
    %v5384 = vadd.f32 %v5374, %v5381
    %v5385 = vadd.f32 %v5375, %v5381
    %v5386 = vadd.f32 %v4136, %v5383
    %v5387 = vadd.f32 %v4137, %v5384
    %v5388 = vadd.f32 %v4138, %v5385
    %v5389 = vld [vmem:[#allocation22] sm:$0x1]
    %v5390 = vld [vmem:[#allocation23] sm:$0x1]
    %5391 = vadd.xlane.f32.xlu0 %v5386
    %v5392 = vpop.xlane.xlu0 %5391
    %5393 = vadd.xlane.f32.xlu0 %v5387
    %v5394 = vpop.xlane.xlu0 %5393
    %vm5395 = vcmask 1041408
    %v5396 = vsel %vm5395, %v5388, 0.0
    %5397 = vadd.xlane.f32.xlu0 %v5396
    %v5398 = vpop.xlane.xlu0 %5397
    %v5399 = vmul.f32 %v5392, 0.010416667
    %v5400 = vmul.f32 %v5394, 0.010416667
    %v5401 = vmul.f32 %v5398, 0.010416667
    %v5402 = vsub.f32 %v5386, %v5399
    %v5403 = vsub.f32 %v5387, %v5400
    %v5404 = vsub.f32 %v5388, %v5401
    %v5405 = vmul.f32 %v5402, %v1447
    %v5406 = vmul.f32 %v5403, %v1447
    %v5407 = vmul.f32 %v5404, %v1447
    %v5408 = vmul.f32 %v5405, %v5405
    %v5409 = vmul.f32 %v5406, %v5406
    %v5410 = vmul.f32 %v5407, %v5407
    %5411 = vadd.xlane.f32.xlu0 %v5408
    %v5412 = vpop.xlane.xlu0 %5411
    %5413 = vadd.xlane.f32.xlu0 %v5409
    %v5414 = vpop.xlane.xlu0 %5413
    %v5415 = vsel %vm5395, %v5410, 0.0
    %5416 = vadd.xlane.f32.xlu0 %v5415
    %v5417 = vpop.xlane.xlu0 %5416
    %v5418 = vmul.f32 %v5412, 0.010416667
    %v5419 = vmul.f32 %v5414, 0.010416667
    %v5420 = vmul.f32 %v5417, 0.010416667
    %v5421 = vadd.f32 %v5418, 1e-05
    %v5422 = vadd.f32 %v5419, 1e-05
    %v5423 = vadd.f32 %v5420, 1e-05
    %v5424 = vrsqrt.pop %v5421
    %v5425 = vrsqrt.pop %v5422
    %v5426 = vrsqrt.pop %v5423
    %v5427 = vmul.f32 %v5402, %v5424
    %v5428 = vmul.f32 %v5403, %v5425
    %v5429 = vmul.f32 %v5404, %v5426
    %v5431 = vlaneseq
    %v5432 = vshrl.u32 %v5431, 7
    %v5433 = vsub.s32 0, %v5432
    %v5434 = vrot.slane %v5389, %v5433
    %v5436 = vmul.f32 %v5427, %v5434
    %v5437 = vmul.f32 %v5428, %v5434
    %v5438 = vmul.f32 %v5429, %v5434
    %v5440 = vlaneseq
    %v5441 = vshrl.u32 %v5440, 7
    %v5442 = vsub.s32 0, %v5441
    %v5443 = vrot.slane %v5390, %v5442
    %v5445 = vadd.f32 %v5436, %v5443
    %v5446 = vadd.f32 %v5437, %v5443
    %v5447 = vadd.f32 %v5438, %v5443
    %v5448 = vpack.c.bf16 %v5446, %v5445
    %v5449 = vpack.c.bf16 %v5447, %v5447
    %v5450 = vld [vmem:[#allocation25] sm:$0xff]
    %v5451 = vld [vmem:[#allocation25 + $0x8] sm:$0xff]
    %v5452 = vld [vmem:[#allocation25 + $0x10] sm:$0xff]
    %v5453 = vld [vmem:[#allocation25 + $0x18] sm:$0xff]
    %v5454 = vld [vmem:[#allocation25 + $0x20] sm:$0xff]
    %v5455 = vld [vmem:[#allocation25 + $0x28] sm:$0xff]
    %v5456 = vld [vmem:[#allocation25 + $0x30] sm:$0xff]
    %v5457 = vld [vmem:[#allocation25 + $0x38] sm:$0xff]
    %v5458 = vld [vmem:[#allocation25 + $0x40] sm:$0xff]
    %v5459 = vld [vmem:[#allocation25 + $0x48] sm:$0xff]
    %v5460 = vld [vmem:[#allocation25 + $0x50] sm:$0xff]
    %v5461 = vld [vmem:[#allocation25 + $0x58] sm:$0xff]
    %v5462 = vld [vmem:[#allocation25 + $0x60] sm:$0xff]
    %v5463 = vld [vmem:[#allocation25 + $0x68] sm:$0xff]
    %v5464 = vld [vmem:[#allocation25 + $0x70] sm:$0xff]
    %v5465 = vld [vmem:[#allocation25 + $0x78] sm:$0xff]
    %v5466 = vld [vmem:[#allocation25 + $0x80] sm:$0xff]
    %v5467 = vld [vmem:[#allocation25 + $0x88] sm:$0xff]
    %v5468 = vld [vmem:[#allocation25 + $0x90] sm:$0xff]
    %v5469 = vld [vmem:[#allocation25 + $0x98] sm:$0xff]
    %v5470 = vld [vmem:[#allocation25 + $0xa0] sm:$0xff]
    %v5471 = vld [vmem:[#allocation25 + $0xa8] sm:$0xff]
    %v5472 = vld [vmem:[#allocation25 + $0xb0] sm:$0xff]
    %v5473 = vld [vmem:[#allocation25 + $0xb8] sm:$0xff]
    %v5474 = vld [vmem:[#allocation25 + $0xc0] sm:$0xff]
    %v5475 = vld [vmem:[#allocation25 + $0xc8] sm:$0xff]
    %v5476 = vld [vmem:[#allocation25 + $0xd0] sm:$0xff]
    %v5477 = vld [vmem:[#allocation25 + $0xd8] sm:$0xff]
    %v5478 = vld [vmem:[#allocation25 + $0xe0] sm:$0xff]
    %v5479 = vld [vmem:[#allocation25 + $0xe8] sm:$0xff]
    %v5480 = vld [vmem:[#allocation25 + $0xf0] sm:$0xff]
    %v5481 = vld [vmem:[#allocation25 + $0xf8] sm:$0xff]
    %v5482 = vld [vmem:[#allocation25 + $0x100] sm:$0xff]
    %v5483 = vld [vmem:[#allocation25 + $0x108] sm:$0xff]
    %v5484 = vld [vmem:[#allocation25 + $0x110] sm:$0xff]
    %v5485 = vld [vmem:[#allocation25 + $0x118] sm:$0xff]
    %v5486 = vld [vmem:[#allocation25 + $0x120] sm:$0xff]
    %v5487 = vld [vmem:[#allocation25 + $0x128] sm:$0xff]
    %v5488 = vld [vmem:[#allocation25 + $0x130] sm:$0xff]
    %v5489 = vld [vmem:[#allocation25 + $0x138] sm:$0xff]
    %v5490 = vld [vmem:[#allocation25 + $0x140] sm:$0xff]
    %v5491 = vld [vmem:[#allocation25 + $0x148] sm:$0xff]
    %v5492 = vld [vmem:[#allocation25 + $0x150] sm:$0xff]
    %v5493 = vld [vmem:[#allocation25 + $0x158] sm:$0xff]
    %v5494 = vld [vmem:[#allocation25 + $0x160] sm:$0xff]
    %v5495 = vld [vmem:[#allocation25 + $0x168] sm:$0xff]
    %v5496 = vld [vmem:[#allocation25 + $0x170] sm:$0xff]
    %v5497 = vld [vmem:[#allocation25 + $0x178] sm:$0xff]
    %v5498 = vld [vmem:[#allocation25 + $0x180] sm:$0xff]
    %v5499 = vld [vmem:[#allocation25 + $0x188] sm:$0xff]
    %v5500 = vld [vmem:[#allocation25 + $0x190] sm:$0xff]
    %v5501 = vld [vmem:[#allocation25 + $0x198] sm:$0xff]
    %v5502 = vld [vmem:[#allocation25 + $0x1a0] sm:$0xff]
    %v5503 = vld [vmem:[#allocation25 + $0x1a8] sm:$0xff]
    %v5504 = vld [vmem:[#allocation25 + $0x1b0] sm:$0xff]
    %v5505 = vld [vmem:[#allocation25 + $0x1b8] sm:$0xff]
    %v5506 = vld [vmem:[#allocation25 + $0x1c0] sm:$0xff]
    %v5507 = vld [vmem:[#allocation25 + $0x1c8] sm:$0xff]
    %v5508 = vld [vmem:[#allocation25 + $0x1d0] sm:$0xff]
    %v5509 = vld [vmem:[#allocation25 + $0x1d8] sm:$0xff]
    %v5510 = vld [vmem:[#allocation25 + $0x1e0] sm:$0xff]
    %v5511 = vld [vmem:[#allocation25 + $0x1e8] sm:$0xff]
    %v5512 = vld [vmem:[#allocation25 + $0x1f0] sm:$0xff]
    %v5513 = vld [vmem:[#allocation25 + $0x1f8] sm:$0xff]
    %v5514 = vld [vmem:[#allocation25 + $0x200] sm:$0xff]
    %v5515 = vld [vmem:[#allocation25 + $0x208] sm:$0xff]
    %v5516 = vld [vmem:[#allocation25 + $0x210] sm:$0xff]
    %v5517 = vld [vmem:[#allocation25 + $0x218] sm:$0xff]
    %v5518 = vld [vmem:[#allocation25 + $0x220] sm:$0xff]
    %v5519 = vld [vmem:[#allocation25 + $0x228] sm:$0xff]
    %v5520 = vld [vmem:[#allocation25 + $0x230] sm:$0xff]
    %v5521 = vld [vmem:[#allocation25 + $0x238] sm:$0xff]
    %v5522 = vld [vmem:[#allocation25 + $0x240] sm:$0xff]
    %v5523 = vld [vmem:[#allocation25 + $0x248] sm:$0xff]
    %v5524 = vld [vmem:[#allocation25 + $0x250] sm:$0xff]
    %v5525 = vld [vmem:[#allocation25 + $0x258] sm:$0xff]
    %v5526 = vld [vmem:[#allocation25 + $0x260] sm:$0xff]
    %v5527 = vld [vmem:[#allocation25 + $0x268] sm:$0xff]
    %v5528 = vld [vmem:[#allocation25 + $0x270] sm:$0xff]
    %v5529 = vld [vmem:[#allocation25 + $0x278] sm:$0xff]
    %v5530 = vld [vmem:[#allocation25 + $0x280] sm:$0xff]
    %v5531 = vld [vmem:[#allocation25 + $0x288] sm:$0xff]
    %v5532 = vld [vmem:[#allocation25 + $0x290] sm:$0xff]
    %v5533 = vld [vmem:[#allocation25 + $0x298] sm:$0xff]
    %v5534 = vld [vmem:[#allocation25 + $0x2a0] sm:$0xff]
    %v5535 = vld [vmem:[#allocation25 + $0x2a8] sm:$0xff]
    %v5536 = vld [vmem:[#allocation25 + $0x2b0] sm:$0xff]
    %v5537 = vld [vmem:[#allocation25 + $0x2b8] sm:$0xff]
    %v5538 = vld [vmem:[#allocation25 + $0x2c0] sm:$0xff]
    %v5539 = vld [vmem:[#allocation25 + $0x2c8] sm:$0xff]
    %v5540 = vld [vmem:[#allocation25 + $0x2d0] sm:$0xff]
    %v5541 = vld [vmem:[#allocation25 + $0x2d8] sm:$0xff]
    %v5542 = vld [vmem:[#allocation25 + $0x2e0] sm:$0xff]
    %v5543 = vld [vmem:[#allocation25 + $0x2e8] sm:$0xff]
    %v5544 = vld [vmem:[#allocation25 + $0x2f0] sm:$0xff]
    %v5545 = vld [vmem:[#allocation25 + $0x2f8] sm:$0xff]
    %v5546 = vld [vmem:[#allocation25 + $0x300] sm:$0xff]
    %v5547 = vld [vmem:[#allocation25 + $0x308] sm:$0xff]
    %v5548 = vld [vmem:[#allocation25 + $0x310] sm:$0xff]
    %v5549 = vld [vmem:[#allocation25 + $0x318] sm:$0xff]
    %v5550 = vld [vmem:[#allocation25 + $0x320] sm:$0xff]
    %v5551 = vld [vmem:[#allocation25 + $0x328] sm:$0xff]
    %v5552 = vld [vmem:[#allocation25 + $0x330] sm:$0xff]
    %v5553 = vld [vmem:[#allocation25 + $0x338] sm:$0xff]
    %v5554 = vld [vmem:[#allocation25 + $0x340] sm:$0xff]
    %v5555 = vld [vmem:[#allocation25 + $0x348] sm:$0xff]
    %v5556 = vld [vmem:[#allocation25 + $0x350] sm:$0xff]
    %v5557 = vld [vmem:[#allocation25 + $0x358] sm:$0xff]
    %v5558 = vld [vmem:[#allocation25 + $0x360] sm:$0xff]
    %v5559 = vld [vmem:[#allocation25 + $0x368] sm:$0xff]
    %v5560 = vld [vmem:[#allocation25 + $0x370] sm:$0xff]
    %v5561 = vld [vmem:[#allocation25 + $0x378] sm:$0xff]
    %v5562 = vld [vmem:[#allocation25 + $0x380] sm:$0xff]
    %v5563 = vld [vmem:[#allocation25 + $0x388] sm:$0xff]
    %v5564 = vld [vmem:[#allocation25 + $0x390] sm:$0xff]
    %v5565 = vld [vmem:[#allocation25 + $0x398] sm:$0xff]
    %v5566 = vld [vmem:[#allocation25 + $0x3a0] sm:$0xff]
    %v5567 = vld [vmem:[#allocation25 + $0x3a8] sm:$0xff]
    %v5568 = vld [vmem:[#allocation25 + $0x3b0] sm:$0xff]
    %v5569 = vld [vmem:[#allocation25 + $0x3b8] sm:$0xff]
    %v5570 = vld [vmem:[#allocation25 + $0x3c0] sm:$0xff]
    %v5571 = vld [vmem:[#allocation25 + $0x3c8] sm:$0xff]
    %v5572 = vld [vmem:[#allocation25 + $0x3d0] sm:$0xff]
    %v5573 = vld [vmem:[#allocation25 + $0x3d8] sm:$0xff]
    %v5574 = vld [vmem:[#allocation25 + $0x3e0] sm:$0xff]
    %v5575 = vld [vmem:[#allocation25 + $0x3e8] sm:$0xff]
    %v5576 = vld [vmem:[#allocation25 + $0x3f0] sm:$0xff]
    %v5577 = vld [vmem:[#allocation25 + $0x3f8] sm:$0xff]
    %v5578 = vld [vmem:[#allocation26] sm:$0xff]
    %v5579 = vld [vmem:[#allocation26 + $0x8] sm:$0xff]
    %v5582 = vlaneseq
    %v5583 = vshrl.u32 %v5582, 7
    %v5584 = vsub.s32 0, %v5583
    %v5585 = vrot.slane %v5578, %v5584
    %v5586 = vlaneseq
    %v5587 = vshrl.u32 %v5586, 7
    %v5588 = vsub.s32 1, %v5587
    %v5589 = vrot.slane %v5578, %v5588
    %v5590 = vlaneseq
    %v5591 = vshrl.u32 %v5590, 7
    %v5592 = vsub.s32 2, %v5591
    %v5593 = vrot.slane %v5578, %v5592
    %v5594 = vlaneseq
    %v5595 = vshrl.u32 %v5594, 7
    %v5596 = vsub.s32 3, %v5595
    %v5597 = vrot.slane %v5578, %v5596
    %v5598 = vlaneseq
    %v5599 = vshrl.u32 %v5598, 7
    %v5600 = vsub.s32 4, %v5599
    %v5601 = vrot.slane %v5578, %v5600
    %v5602 = vlaneseq
    %v5603 = vshrl.u32 %v5602, 7
    %v5604 = vsub.s32 5, %v5603
    %v5605 = vrot.slane %v5578, %v5604
    %v5606 = vlaneseq
    %v5607 = vshrl.u32 %v5606, 7
    %v5608 = vsub.s32 6, %v5607
    %v5609 = vrot.slane %v5578, %v5608
    %v5610 = vlaneseq
    %v5611 = vshrl.u32 %v5610, 7
    %v5612 = vsub.s32 7, %v5611
    %v5613 = vrot.slane %v5578, %v5612
    %v5614 = vlaneseq
    %v5615 = vshrl.u32 %v5614, 7
    %v5616 = vsub.s32 0, %v5615
    %v5617 = vrot.slane %v5579, %v5616
    %v5618 = vlaneseq
    %v5619 = vshrl.u32 %v5618, 7
    %v5620 = vsub.s32 1, %v5619
    %v5621 = vrot.slane %v5579, %v5620
    %v5622 = vlaneseq
    %v5623 = vshrl.u32 %v5622, 7
    %v5624 = vsub.s32 2, %v5623
    %v5625 = vrot.slane %v5579, %v5624
    %v5626 = vlaneseq
    %v5627 = vshrl.u32 %v5626, 7
    %v5628 = vsub.s32 3, %v5627
    %v5629 = vrot.slane %v5579, %v5628
    %v5630 = vlaneseq
    %v5631 = vshrl.u32 %v5630, 7
    %v5632 = vsub.s32 4, %v5631
    %v5633 = vrot.slane %v5579, %v5632
    %v5634 = vlaneseq
    %v5635 = vshrl.u32 %v5634, 7
    %v5636 = vsub.s32 5, %v5635
    %v5637 = vrot.slane %v5579, %v5636
    %v5638 = vlaneseq
    %v5639 = vshrl.u32 %v5638, 7
    %v5640 = vsub.s32 6, %v5639
    %v5641 = vrot.slane %v5579, %v5640
    %v5642 = vlaneseq
    %v5643 = vshrl.u32 %v5642, 7
    %v5644 = vsub.s32 7, %v5643
    %v5645 = vrot.slane %v5579, %v5644
    %v5790 = vunpack.c.l.b16 %v5450
    %v5791 = vunpack.c.h.b16 %v5450
    %v5792 = vunpack.c.l.b16 %v5451
    %v5793 = vunpack.c.h.b16 %v5451
    %v5794 = vunpack.c.l.b16 %v5452
    %v5795 = vunpack.c.h.b16 %v5452
    %v5796 = vunpack.c.l.b16 %v5453
    %v5797 = vunpack.c.h.b16 %v5453
    %v5798 = vunpack.c.l.b16 %v5454
    %v5799 = vunpack.c.h.b16 %v5454
    %v5800 = vunpack.c.l.b16 %v5455
    %v5801 = vunpack.c.h.b16 %v5455
    %v5802 = vunpack.c.l.b16 %v5456
    %v5803 = vunpack.c.h.b16 %v5456
    %v5804 = vunpack.c.l.b16 %v5457
    %v5805 = vunpack.c.h.b16 %v5457
    %v5806 = vunpack.c.l.b16 %v5458
    %v5807 = vunpack.c.h.b16 %v5458
    %v5808 = vunpack.c.l.b16 %v5459
    %v5809 = vunpack.c.h.b16 %v5459
    %v5810 = vunpack.c.l.b16 %v5460
    %v5811 = vunpack.c.h.b16 %v5460
    %v5812 = vunpack.c.l.b16 %v5461
    %v5813 = vunpack.c.h.b16 %v5461
    %v5814 = vunpack.c.l.b16 %v5462
    %v5815 = vunpack.c.h.b16 %v5462
    %v5816 = vunpack.c.l.b16 %v5463
    %v5817 = vunpack.c.h.b16 %v5463
    %v5818 = vunpack.c.l.b16 %v5464
    %v5819 = vunpack.c.h.b16 %v5464
    %v5820 = vunpack.c.l.b16 %v5465
    %v5821 = vunpack.c.h.b16 %v5465
    %v5822 = vunpack.c.l.b16 %v5466
    %v5823 = vunpack.c.h.b16 %v5466
    %v5824 = vunpack.c.l.b16 %v5467
    %v5825 = vunpack.c.h.b16 %v5467
    %v5826 = vunpack.c.l.b16 %v5468
    %v5827 = vunpack.c.h.b16 %v5468
    %v5828 = vunpack.c.l.b16 %v5469
    %v5829 = vunpack.c.h.b16 %v5469
    %v5830 = vunpack.c.l.b16 %v5470
    %v5831 = vunpack.c.h.b16 %v5470
    %v5832 = vunpack.c.l.b16 %v5471
    %v5833 = vunpack.c.h.b16 %v5471
    %v5834 = vunpack.c.l.b16 %v5472
    %v5835 = vunpack.c.h.b16 %v5472
    %v5836 = vunpack.c.l.b16 %v5473
    %v5837 = vunpack.c.h.b16 %v5473
    %v5838 = vunpack.c.l.b16 %v5474
    %v5839 = vunpack.c.h.b16 %v5474
    %v5840 = vunpack.c.l.b16 %v5475
    %v5841 = vunpack.c.h.b16 %v5475
    %v5842 = vunpack.c.l.b16 %v5476
    %v5843 = vunpack.c.h.b16 %v5476
    %v5844 = vunpack.c.l.b16 %v5477
    %v5845 = vunpack.c.h.b16 %v5477
    %v5846 = vunpack.c.l.b16 %v5478
    %v5847 = vunpack.c.h.b16 %v5478
    %v5848 = vunpack.c.l.b16 %v5479
    %v5849 = vunpack.c.h.b16 %v5479
    %v5850 = vunpack.c.l.b16 %v5480
    %v5851 = vunpack.c.h.b16 %v5480
    %v5852 = vunpack.c.l.b16 %v5481
    %v5853 = vunpack.c.h.b16 %v5481
    %v5854 = vunpack.c.l.b16 %v5482
    %v5855 = vunpack.c.h.b16 %v5482
    %v5856 = vunpack.c.l.b16 %v5483
    %v5857 = vunpack.c.h.b16 %v5483
    %v5858 = vunpack.c.l.b16 %v5484
    %v5859 = vunpack.c.h.b16 %v5484
    %v5860 = vunpack.c.l.b16 %v5485
    %v5861 = vunpack.c.h.b16 %v5485
    %v5862 = vunpack.c.l.b16 %v5486
    %v5863 = vunpack.c.h.b16 %v5486
    %v5864 = vunpack.c.l.b16 %v5487
    %v5865 = vunpack.c.h.b16 %v5487
    %v5866 = vunpack.c.l.b16 %v5488
    %v5867 = vunpack.c.h.b16 %v5488
    %v5868 = vunpack.c.l.b16 %v5489
    %v5869 = vunpack.c.h.b16 %v5489
    %v5870 = vunpack.c.l.b16 %v5490
    %v5871 = vunpack.c.h.b16 %v5490
    %v5872 = vunpack.c.l.b16 %v5491
    %v5873 = vunpack.c.h.b16 %v5491
    %v5874 = vunpack.c.l.b16 %v5492
    %v5875 = vunpack.c.h.b16 %v5492
    %v5876 = vunpack.c.l.b16 %v5493
    %v5877 = vunpack.c.h.b16 %v5493
    %v5878 = vunpack.c.l.b16 %v5494
    %v5879 = vunpack.c.h.b16 %v5494
    %v5880 = vunpack.c.l.b16 %v5495
    %v5881 = vunpack.c.h.b16 %v5495
    %v5882 = vunpack.c.l.b16 %v5496
    %v5883 = vunpack.c.h.b16 %v5496
    %v5884 = vunpack.c.l.b16 %v5497
    %v5885 = vunpack.c.h.b16 %v5497
    %v5886 = vunpack.c.l.b16 %v5498
    %v5887 = vunpack.c.h.b16 %v5498
    %v5888 = vunpack.c.l.b16 %v5499
    %v5889 = vunpack.c.h.b16 %v5499
    %v5890 = vunpack.c.l.b16 %v5500
    %v5891 = vunpack.c.h.b16 %v5500
    %v5892 = vunpack.c.l.b16 %v5501
    %v5893 = vunpack.c.h.b16 %v5501
    %v5894 = vunpack.c.l.b16 %v5502
    %v5895 = vunpack.c.h.b16 %v5502
    %v5896 = vunpack.c.l.b16 %v5503
    %v5897 = vunpack.c.h.b16 %v5503
    %v5898 = vunpack.c.l.b16 %v5504
    %v5899 = vunpack.c.h.b16 %v5504
    %v5900 = vunpack.c.l.b16 %v5505
    %v5901 = vunpack.c.h.b16 %v5505
    %v5902 = vunpack.c.l.b16 %v5506
    %v5903 = vunpack.c.h.b16 %v5506
    %v5904 = vunpack.c.l.b16 %v5507
    %v5905 = vunpack.c.h.b16 %v5507
    %v5906 = vunpack.c.l.b16 %v5508
    %v5907 = vunpack.c.h.b16 %v5508
    %v5908 = vunpack.c.l.b16 %v5509
    %v5909 = vunpack.c.h.b16 %v5509
    %v5910 = vunpack.c.l.b16 %v5510
    %v5911 = vunpack.c.h.b16 %v5510
    %v5912 = vunpack.c.l.b16 %v5511
    %v5913 = vunpack.c.h.b16 %v5511
    %v5914 = vunpack.c.l.b16 %v5512
    %v5915 = vunpack.c.h.b16 %v5512
    %v5916 = vunpack.c.l.b16 %v5513
    %v5917 = vunpack.c.h.b16 %v5513
    %v5918 = vunpack.c.l.b16 %v5514
    %v5919 = vunpack.c.h.b16 %v5514
    %v5920 = vunpack.c.l.b16 %v5515
    %v5921 = vunpack.c.h.b16 %v5515
    %v5922 = vunpack.c.l.b16 %v5516
    %v5923 = vunpack.c.h.b16 %v5516
    %v5924 = vunpack.c.l.b16 %v5517
    %v5925 = vunpack.c.h.b16 %v5517
    %v5926 = vunpack.c.l.b16 %v5518
    %v5927 = vunpack.c.h.b16 %v5518
    %v5928 = vunpack.c.l.b16 %v5519
    %v5929 = vunpack.c.h.b16 %v5519
    %v5930 = vunpack.c.l.b16 %v5520
    %v5931 = vunpack.c.h.b16 %v5520
    %v5932 = vunpack.c.l.b16 %v5521
    %v5933 = vunpack.c.h.b16 %v5521
    %v5934 = vunpack.c.l.b16 %v5522
    %v5935 = vunpack.c.h.b16 %v5522
    %v5936 = vunpack.c.l.b16 %v5523
    %v5937 = vunpack.c.h.b16 %v5523
    %v5938 = vunpack.c.l.b16 %v5524
    %v5939 = vunpack.c.h.b16 %v5524
    %v5940 = vunpack.c.l.b16 %v5525
    %v5941 = vunpack.c.h.b16 %v5525
    %v5942 = vunpack.c.l.b16 %v5526
    %v5943 = vunpack.c.h.b16 %v5526
    %v5944 = vunpack.c.l.b16 %v5527
    %v5945 = vunpack.c.h.b16 %v5527
    %v5946 = vunpack.c.l.b16 %v5528
    %v5947 = vunpack.c.h.b16 %v5528
    %v5948 = vunpack.c.l.b16 %v5529
    %v5949 = vunpack.c.h.b16 %v5529
    %v5950 = vunpack.c.l.b16 %v5530
    %v5951 = vunpack.c.h.b16 %v5530
    %v5952 = vunpack.c.l.b16 %v5531
    %v5953 = vunpack.c.h.b16 %v5531
    %v5954 = vunpack.c.l.b16 %v5532
    %v5955 = vunpack.c.h.b16 %v5532
    %v5956 = vunpack.c.l.b16 %v5533
    %v5957 = vunpack.c.h.b16 %v5533
    %v5958 = vunpack.c.l.b16 %v5534
    %v5959 = vunpack.c.h.b16 %v5534
    %v5960 = vunpack.c.l.b16 %v5535
    %v5961 = vunpack.c.h.b16 %v5535
    %v5962 = vunpack.c.l.b16 %v5536
    %v5963 = vunpack.c.h.b16 %v5536
    %v5964 = vunpack.c.l.b16 %v5537
    %v5965 = vunpack.c.h.b16 %v5537
    %v5966 = vunpack.c.l.b16 %v5538
    %v5967 = vunpack.c.h.b16 %v5538
    %v5968 = vunpack.c.l.b16 %v5539
    %v5969 = vunpack.c.h.b16 %v5539
    %v5970 = vunpack.c.l.b16 %v5540
    %v5971 = vunpack.c.h.b16 %v5540
    %v5972 = vunpack.c.l.b16 %v5541
    %v5973 = vunpack.c.h.b16 %v5541
    %v5974 = vunpack.c.l.b16 %v5542
    %v5975 = vunpack.c.h.b16 %v5542
    %v5976 = vunpack.c.l.b16 %v5543
    %v5977 = vunpack.c.h.b16 %v5543
    %v5978 = vunpack.c.l.b16 %v5544
    %v5979 = vunpack.c.h.b16 %v5544
    %v5980 = vunpack.c.l.b16 %v5545
    %v5981 = vunpack.c.h.b16 %v5545
    %v5982 = vunpack.c.l.b16 %v5546
    %v5983 = vunpack.c.h.b16 %v5546
    %v5984 = vunpack.c.l.b16 %v5547
    %v5985 = vunpack.c.h.b16 %v5547
    %v5986 = vunpack.c.l.b16 %v5548
    %v5987 = vunpack.c.h.b16 %v5548
    %v5988 = vunpack.c.l.b16 %v5549
    %v5989 = vunpack.c.h.b16 %v5549
    %v5990 = vunpack.c.l.b16 %v5550
    %v5991 = vunpack.c.h.b16 %v5550
    %v5992 = vunpack.c.l.b16 %v5551
    %v5993 = vunpack.c.h.b16 %v5551
    %v5994 = vunpack.c.l.b16 %v5552
    %v5995 = vunpack.c.h.b16 %v5552
    %v5996 = vunpack.c.l.b16 %v5553
    %v5997 = vunpack.c.h.b16 %v5553
    %v5998 = vunpack.c.l.b16 %v5554
    %v5999 = vunpack.c.h.b16 %v5554
    %v6000 = vunpack.c.l.b16 %v5555
    %v6001 = vunpack.c.h.b16 %v5555
    %v6002 = vunpack.c.l.b16 %v5556
    %v6003 = vunpack.c.h.b16 %v5556
    %v6004 = vunpack.c.l.b16 %v5557
    %v6005 = vunpack.c.h.b16 %v5557
    %v6006 = vunpack.c.l.b16 %v5558
    %v6007 = vunpack.c.h.b16 %v5558
    %v6008 = vunpack.c.l.b16 %v5559
    %v6009 = vunpack.c.h.b16 %v5559
    %v6010 = vunpack.c.l.b16 %v5560
    %v6011 = vunpack.c.h.b16 %v5560
    %v6012 = vunpack.c.l.b16 %v5561
    %v6013 = vunpack.c.h.b16 %v5561
    %v6014 = vunpack.c.l.b16 %v5562
    %v6015 = vunpack.c.h.b16 %v5562
    %v6016 = vunpack.c.l.b16 %v5563
    %v6017 = vunpack.c.h.b16 %v5563
    %v6018 = vunpack.c.l.b16 %v5564
    %v6019 = vunpack.c.h.b16 %v5564
    %v6020 = vunpack.c.l.b16 %v5565
    %v6021 = vunpack.c.h.b16 %v5565
    %v6022 = vunpack.c.l.b16 %v5566
    %v6023 = vunpack.c.h.b16 %v5566
    %v6024 = vunpack.c.l.b16 %v5567
    %v6025 = vunpack.c.h.b16 %v5567
    %v6026 = vunpack.c.l.b16 %v5568
    %v6027 = vunpack.c.h.b16 %v5568
    %v6028 = vunpack.c.l.b16 %v5569
    %v6029 = vunpack.c.h.b16 %v5569
    %v6030 = vunpack.c.l.b16 %v5570
    %v6031 = vunpack.c.h.b16 %v5570
    %v6032 = vunpack.c.l.b16 %v5571
    %v6033 = vunpack.c.h.b16 %v5571
    %v6034 = vunpack.c.l.b16 %v5572
    %v6035 = vunpack.c.h.b16 %v5572
    %v6036 = vunpack.c.l.b16 %v5573
    %v6037 = vunpack.c.h.b16 %v5573
    %v6038 = vunpack.c.l.b16 %v5574
    %v6039 = vunpack.c.h.b16 %v5574
    %v6040 = vunpack.c.l.b16 %v5575
    %v6041 = vunpack.c.h.b16 %v5575
    %v6042 = vunpack.c.l.b16 %v5576
    %v6043 = vunpack.c.h.b16 %v5576
    %v6044 = vunpack.c.l.b16 %v5577
    %v6045 = vunpack.c.h.b16 %v5577
    %v6046 = vpack.c.b16 %v5806, %v5790
    %v6047 = vpack.c.b16 %v5807, %v5791
    %v6048 = vpack.c.b16 %v5808, %v5792
    %v6049 = vpack.c.b16 %v5809, %v5793
    %v6050 = vpack.c.b16 %v5810, %v5794
    %v6051 = vpack.c.b16 %v5811, %v5795
    %v6052 = vpack.c.b16 %v5812, %v5796
    %v6053 = vpack.c.b16 %v5813, %v5797
    %v6054 = vpack.c.b16 %v5814, %v5798
    %v6055 = vpack.c.b16 %v5815, %v5799
    %v6056 = vpack.c.b16 %v5816, %v5800
    %v6057 = vpack.c.b16 %v5817, %v5801
    %v6058 = vpack.c.b16 %v5818, %v5802
    %v6059 = vpack.c.b16 %v5819, %v5803
    %v6060 = vpack.c.b16 %v5820, %v5804
    %v6061 = vpack.c.b16 %v5821, %v5805
    %v6062 = vpack.c.b16 %v5838, %v5822
    %v6063 = vpack.c.b16 %v5839, %v5823
    %v6064 = vpack.c.b16 %v5840, %v5824
    %v6065 = vpack.c.b16 %v5841, %v5825
    %v6066 = vpack.c.b16 %v5842, %v5826
    %v6067 = vpack.c.b16 %v5843, %v5827
    %v6068 = vpack.c.b16 %v5844, %v5828
    %v6069 = vpack.c.b16 %v5845, %v5829
    %v6070 = vpack.c.b16 %v5846, %v5830
    %v6071 = vpack.c.b16 %v5847, %v5831
    %v6072 = vpack.c.b16 %v5848, %v5832
    %v6073 = vpack.c.b16 %v5849, %v5833
    %v6074 = vpack.c.b16 %v5850, %v5834
    %v6075 = vpack.c.b16 %v5851, %v5835
    %v6076 = vpack.c.b16 %v5852, %v5836
    %v6077 = vpack.c.b16 %v5853, %v5837
    %v6078 = vpack.c.b16 %v5870, %v5854
    %v6079 = vpack.c.b16 %v5871, %v5855
    %v6080 = vpack.c.b16 %v5872, %v5856
    %v6081 = vpack.c.b16 %v5873, %v5857
    %v6082 = vpack.c.b16 %v5874, %v5858
    %v6083 = vpack.c.b16 %v5875, %v5859
    %v6084 = vpack.c.b16 %v5876, %v5860
    %v6085 = vpack.c.b16 %v5877, %v5861
    %v6086 = vpack.c.b16 %v5878, %v5862
    %v6087 = vpack.c.b16 %v5879, %v5863
    %v6088 = vpack.c.b16 %v5880, %v5864
    %v6089 = vpack.c.b16 %v5881, %v5865
    %v6090 = vpack.c.b16 %v5882, %v5866
    %v6091 = vpack.c.b16 %v5883, %v5867
    %v6092 = vpack.c.b16 %v5884, %v5868
    %v6093 = vpack.c.b16 %v5885, %v5869
    %v6094 = vpack.c.b16 %v5902, %v5886
    %v6095 = vpack.c.b16 %v5903, %v5887
    %v6096 = vpack.c.b16 %v5904, %v5888
    %v6097 = vpack.c.b16 %v5905, %v5889
    %v6098 = vpack.c.b16 %v5906, %v5890
    %v6099 = vpack.c.b16 %v5907, %v5891
    %v6100 = vpack.c.b16 %v5908, %v5892
    %v6101 = vpack.c.b16 %v5909, %v5893
    %v6102 = vpack.c.b16 %v5910, %v5894
    %v6103 = vpack.c.b16 %v5911, %v5895
    %v6104 = vpack.c.b16 %v5912, %v5896
    %v6105 = vpack.c.b16 %v5913, %v5897
    %v6106 = vpack.c.b16 %v5914, %v5898
    %v6107 = vpack.c.b16 %v5915, %v5899
    %v6108 = vpack.c.b16 %v5916, %v5900
    %v6109 = vpack.c.b16 %v5917, %v5901
    %v6110 = vpack.c.b16 %v5934, %v5918
    %v6111 = vpack.c.b16 %v5935, %v5919
    %v6112 = vpack.c.b16 %v5936, %v5920
    %v6113 = vpack.c.b16 %v5937, %v5921
    %v6114 = vpack.c.b16 %v5938, %v5922
    %v6115 = vpack.c.b16 %v5939, %v5923
    %v6116 = vpack.c.b16 %v5940, %v5924
    %v6117 = vpack.c.b16 %v5941, %v5925
    %v6118 = vpack.c.b16 %v5942, %v5926
    %v6119 = vpack.c.b16 %v5943, %v5927
    %v6120 = vpack.c.b16 %v5944, %v5928
    %v6121 = vpack.c.b16 %v5945, %v5929
    %v6122 = vpack.c.b16 %v5946, %v5930
    %v6123 = vpack.c.b16 %v5947, %v5931
    %v6124 = vpack.c.b16 %v5948, %v5932
    %v6125 = vpack.c.b16 %v5949, %v5933
    %v6126 = vpack.c.b16 %v5966, %v5950
    %v6127 = vpack.c.b16 %v5967, %v5951
    %v6128 = vpack.c.b16 %v5968, %v5952
    %v6129 = vpack.c.b16 %v5969, %v5953
    %v6130 = vpack.c.b16 %v5970, %v5954
    %v6131 = vpack.c.b16 %v5971, %v5955
    %v6132 = vpack.c.b16 %v5972, %v5956
    %v6133 = vpack.c.b16 %v5973, %v5957
    %v6134 = vpack.c.b16 %v5974, %v5958
    %v6135 = vpack.c.b16 %v5975, %v5959
    %v6136 = vpack.c.b16 %v5976, %v5960
    %v6137 = vpack.c.b16 %v5977, %v5961
    %v6138 = vpack.c.b16 %v5978, %v5962
    %v6139 = vpack.c.b16 %v5979, %v5963
    %v6140 = vpack.c.b16 %v5980, %v5964
    %v6141 = vpack.c.b16 %v5981, %v5965
    %v6142 = vpack.c.b16 %v5998, %v5982
    %v6143 = vpack.c.b16 %v5999, %v5983
    %v6144 = vpack.c.b16 %v6000, %v5984
    %v6145 = vpack.c.b16 %v6001, %v5985
    %v6146 = vpack.c.b16 %v6002, %v5986
    %v6147 = vpack.c.b16 %v6003, %v5987
    %v6148 = vpack.c.b16 %v6004, %v5988
    %v6149 = vpack.c.b16 %v6005, %v5989
    %v6150 = vpack.c.b16 %v6006, %v5990
    %v6151 = vpack.c.b16 %v6007, %v5991
    %v6152 = vpack.c.b16 %v6008, %v5992
    %v6153 = vpack.c.b16 %v6009, %v5993
    %v6154 = vpack.c.b16 %v6010, %v5994
    %v6155 = vpack.c.b16 %v6011, %v5995
    %v6156 = vpack.c.b16 %v6012, %v5996
    %v6157 = vpack.c.b16 %v6013, %v5997
    %v6158 = vpack.c.b16 %v6030, %v6014
    %v6159 = vpack.c.b16 %v6031, %v6015
    %v6160 = vpack.c.b16 %v6032, %v6016
    %v6161 = vpack.c.b16 %v6033, %v6017
    %v6162 = vpack.c.b16 %v6034, %v6018
    %v6163 = vpack.c.b16 %v6035, %v6019
    %v6164 = vpack.c.b16 %v6036, %v6020
    %v6165 = vpack.c.b16 %v6037, %v6021
    %v6166 = vpack.c.b16 %v6038, %v6022
    %v6167 = vpack.c.b16 %v6039, %v6023
    %v6168 = vpack.c.b16 %v6040, %v6024
    %v6169 = vpack.c.b16 %v6041, %v6025
    %v6170 = vpack.c.b16 %v6042, %v6026
    %v6171 = vpack.c.b16 %v6043, %v6027
    %v6172 = vpack.c.b16 %v6044, %v6028
    %v6173 = vpack.c.b16 %v6045, %v6029
    %6302 = vmatprep.subr.bf16.mxu0 %v6047
    %6303 = vmatpush1.bf16.msra.mxu0 %v6046
    %6304 = vmatprep.subr.bf16.mxu0 %v6063
    %6305 = vmatpush1.bf16.msra.mxu0 %v6062
    %6306 = vmatprep.subr.bf16.mxu0 %v6079
    %6307 = vmatpush1.bf16.msra.mxu0 %v6078
    %6308 = vmatprep.subr.bf16.mxu0 %v6095
    %6309 = vmatpush1.bf16.msra.mxu0 %v6094
    %6310 = vmatprep.subr.bf16.mxu0 %v6111
    %6311 = vmatpush1.bf16.msra.mxu0 %v6110
    %6312 = vmatprep.subr.bf16.mxu0 %v6127
    %6313 = vmatpush1.bf16.msra.mxu0 %v6126
    %6314 = vmatprep.subr.bf16.mxu0 %v6143
    %6315 = vmatpush1.bf16.msra.mxu0 %v6142
    %6316 = vmatprep.subr.bf16.mxu0 %v6159
    %6317 = vmatpush1.bf16.msra.mxu0 %v6158
    %6318 = vmatprep.subr.bf16.mxu0 0
    %6319 = vmatpush1.bf16.msra.mxu0 0
    %6320 = vmatprep.subr.bf16.mxu0 0
    %6321 = vmatpush1.bf16.msra.mxu0 0
    %6322 = vmatprep.subr.bf16.mxu0 0
    %6323 = vmatpush1.bf16.msra.mxu0 0
    %6324 = vmatprep.subr.bf16.mxu0 0
    %6325 = vmatpush1.bf16.msra.mxu0 0
    %6326 = vmatprep.subr.bf16.mxu0 0
    %6327 = vmatpush1.bf16.msra.mxu0 0
    %6328 = vmatprep.subr.bf16.mxu0 0
    %6329 = vmatpush1.bf16.msra.mxu0 0
    %6330 = vmatprep.subr.bf16.mxu0 0
    %6331 = vmatpush1.bf16.msra.mxu0 0
    %6332 = vmatprep.subr.bf16.mxu0 0
    %6333 = vmatpush1.bf16.msra.mxu0 0
    %6334 = vmatprep.mubr.bf16.mxu0 0
    %6335 = vmatmul.mubr.bf16.gmra.mrb[0].mxu0 %v5448
    %v6336 = vpop.f32.mrb[0].mxu0
    %v6337 = vadd.f32 %v5585, %v6336
    %v6338 = vpop.f32.mrb[0].mxu0
    %v6339 = vadd.f32 %v5589, %v6338
    %v6340 = vpop.f32.mrb[0].mxu0
    %v6341 = vadd.f32 %v5585, %v6340
    %v6342 = vpop.f32.mrb[0].mxu0
    %v6343 = vadd.f32 %v5589, %v6342
    %6344 = vmatprep.mubr.bf16.mxu0 0
    %6345 = vmatmul.mubr.bf16.gmra.mrb[0].mxu0 %v5449
    %v6346 = vpop.f32.mrb[0].mxu0
    %v6347 = vadd.f32 %v5585, %v6346
    %v6348 = vpop.f32.mrb[0].mxu0
    %v6349 = vadd.f32 %v5589, %v6348
    %v6350 = vpop.f32.mrb[0].mxu0
    %v6351 = vpop.f32.mrb[0].mxu0
    %6352 = vdwg.mxu0
    %6353 = vmatprep.subr.bf16.mxu0 %v6049
    %6354 = vmatpush1.bf16.msra.mxu0 %v6048
    %6355 = vmatprep.subr.bf16.mxu0 %v6065
    %6356 = vmatpush1.bf16.msra.mxu0 %v6064
    %6357 = vmatprep.subr.bf16.mxu0 %v6081
    %6358 = vmatpush1.bf16.msra.mxu0 %v6080
    %6359 = vmatprep.subr.bf16.mxu0 %v6097
    %6360 = vmatpush1.bf16.msra.mxu0 %v6096
    %6361 = vmatprep.subr.bf16.mxu0 %v6113
    %6362 = vmatpush1.bf16.msra.mxu0 %v6112
    %6363 = vmatprep.subr.bf16.mxu0 %v6129
    %6364 = vmatpush1.bf16.msra.mxu0 %v6128
    %6365 = vmatprep.subr.bf16.mxu0 %v6145
    %6366 = vmatpush1.bf16.msra.mxu0 %v6144
    %6367 = vmatprep.subr.bf16.mxu0 %v6161
    %6368 = vmatpush1.bf16.msra.mxu0 %v6160
    %6369 = vmatprep.subr.bf16.mxu0 0
    %6370 = vmatpush1.bf16.msra.mxu0 0
    %6371 = vmatprep.subr.bf16.mxu0 0
    %6372 = vmatpush1.bf16.msra.mxu0 0
    %6373 = vmatprep.subr.bf16.mxu0 0
    %6374 = vmatpush1.bf16.msra.mxu0 0
    %6375 = vmatprep.subr.bf16.mxu0 0
    %6376 = vmatpush1.bf16.msra.mxu0 0
    %6377 = vmatprep.subr.bf16.mxu0 0
    %6378 = vmatpush1.bf16.msra.mxu0 0
    %6379 = vmatprep.subr.bf16.mxu0 0
    %6380 = vmatpush1.bf16.msra.mxu0 0
    %6381 = vmatprep.subr.bf16.mxu0 0
    %6382 = vmatpush1.bf16.msra.mxu0 0
    %6383 = vmatprep.subr.bf16.mxu0 0
    %6384 = vmatpush1.bf16.msra.mxu0 0
    %6385 = vmatprep.mubr.bf16.mxu0 0
    %6386 = vmatmul.mubr.bf16.gmra.mrb[0].mxu0 %v5448
    %v6387 = vpop.f32.mrb[0].mxu0
    %v6388 = vadd.f32 %v5593, %v6387
    %v6389 = vpop.f32.mrb[0].mxu0
    %v6390 = vadd.f32 %v5597, %v6389
    %v6391 = vpop.f32.mrb[0].mxu0
    %v6392 = vadd.f32 %v5593, %v6391
    %v6393 = vpop.f32.mrb[0].mxu0
    %v6394 = vadd.f32 %v5597, %v6393
    %6395 = vmatprep.mubr.bf16.mxu0 0
    %6396 = vmatmul.mubr.bf16.gmra.mrb[0].mxu0 %v5449
    %v6397 = vpop.f32.mrb[0].mxu0
    %v6398 = vadd.f32 %v5593, %v6397
    %v6399 = vpop.f32.mrb[0].mxu0
    %v6400 = vadd.f32 %v5597, %v6399
    %v6401 = vpop.f32.mrb[0].mxu0
    %v6402 = vpop.f32.mrb[0].mxu0
    %6403 = vdwg.mxu0
    %6404 = vmatprep.subr.bf16.mxu0 %v6051
    %6405 = vmatpush1.bf16.msra.mxu0 %v6050
    %6406 = vmatprep.subr.bf16.mxu0 %v6067
    %6407 = vmatpush1.bf16.msra.mxu0 %v6066
    %6408 = vmatprep.subr.bf16.mxu0 %v6083
    %6409 = vmatpush1.bf16.msra.mxu0 %v6082
    %6410 = vmatprep.subr.bf16.mxu0 %v6099
    %6411 = vmatpush1.bf16.msra.mxu0 %v6098
    %6412 = vmatprep.subr.bf16.mxu0 %v6115
    %6413 = vmatpush1.bf16.msra.mxu0 %v6114
    %6414 = vmatprep.subr.bf16.mxu0 %v6131
    %6415 = vmatpush1.bf16.msra.mxu0 %v6130
    %6416 = vmatprep.subr.bf16.mxu0 %v6147
    %6417 = vmatpush1.bf16.msra.mxu0 %v6146
    %6418 = vmatprep.subr.bf16.mxu0 %v6163
    %6419 = vmatpush1.bf16.msra.mxu0 %v6162
    %6420 = vmatprep.subr.bf16.mxu0 0
    %6421 = vmatpush1.bf16.msra.mxu0 0
    %6422 = vmatprep.subr.bf16.mxu0 0
    %6423 = vmatpush1.bf16.msra.mxu0 0
    %6424 = vmatprep.subr.bf16.mxu0 0
    %6425 = vmatpush1.bf16.msra.mxu0 0
    %6426 = vmatprep.subr.bf16.mxu0 0
    %6427 = vmatpush1.bf16.msra.mxu0 0
    %6428 = vmatprep.subr.bf16.mxu0 0
    %6429 = vmatpush1.bf16.msra.mxu0 0
    %6430 = vmatprep.subr.bf16.mxu0 0
    %6431 = vmatpush1.bf16.msra.mxu0 0
    %6432 = vmatprep.subr.bf16.mxu0 0
    %6433 = vmatpush1.bf16.msra.mxu0 0
    %6434 = vmatprep.subr.bf16.mxu0 0
    %6435 = vmatpush1.bf16.msra.mxu0 0
    %6436 = vmatprep.mubr.bf16.mxu0 0
    %6437 = vmatmul.mubr.bf16.gmra.mrb[0].mxu0 %v5448
    %v6438 = vpop.f32.mrb[0].mxu0
    %v6439 = vadd.f32 %v5601, %v6438
    %v6440 = vpop.f32.mrb[0].mxu0
    %v6441 = vadd.f32 %v5605, %v6440
    %v6442 = vpop.f32.mrb[0].mxu0
    %v6443 = vadd.f32 %v5601, %v6442
    %v6444 = vpop.f32.mrb[0].mxu0
    %v6445 = vadd.f32 %v5605, %v6444
    %6446 = vmatprep.mubr.bf16.mxu0 0
    %6447 = vmatmul.mubr.bf16.gmra.mrb[0].mxu0 %v5449
    %v6448 = vpop.f32.mrb[0].mxu0
    %v6449 = vadd.f32 %v5601, %v6448
    %v6450 = vpop.f32.mrb[0].mxu0
    %v6451 = vadd.f32 %v5605, %v6450
    %v6452 = vpop.f32.mrb[0].mxu0
    %v6453 = vpop.f32.mrb[0].mxu0
    %6454 = vdwg.mxu0
    %6455 = vmatprep.subr.bf16.mxu0 %v6053
    %6456 = vmatpush1.bf16.msra.mxu0 %v6052
    %6457 = vmatprep.subr.bf16.mxu0 %v6069
    %6458 = vmatpush1.bf16.msra.mxu0 %v6068
    %6459 = vmatprep.subr.bf16.mxu0 %v6085
    %6460 = vmatpush1.bf16.msra.mxu0 %v6084
    %6461 = vmatprep.subr.bf16.mxu0 %v6101
    %6462 = vmatpush1.bf16.msra.mxu0 %v6100
    %6463 = vmatprep.subr.bf16.mxu0 %v6117
    %6464 = vmatpush1.bf16.msra.mxu0 %v6116
    %6465 = vmatprep.subr.bf16.mxu0 %v6133
    %6466 = vmatpush1.bf16.msra.mxu0 %v6132
    %6467 = vmatprep.subr.bf16.mxu0 %v6149
    %6468 = vmatpush1.bf16.msra.mxu0 %v6148
    %6469 = vmatprep.subr.bf16.mxu0 %v6165
    %6470 = vmatpush1.bf16.msra.mxu0 %v6164
    %6471 = vmatprep.subr.bf16.mxu0 0
    %6472 = vmatpush1.bf16.msra.mxu0 0
    %6473 = vmatprep.subr.bf16.mxu0 0
    %6474 = vmatpush1.bf16.msra.mxu0 0
    %6475 = vmatprep.subr.bf16.mxu0 0
    %6476 = vmatpush1.bf16.msra.mxu0 0
    %6477 = vmatprep.subr.bf16.mxu0 0
    %6478 = vmatpush1.bf16.msra.mxu0 0
    %6479 = vmatprep.subr.bf16.mxu0 0
    %6480 = vmatpush1.bf16.msra.mxu0 0
    %6481 = vmatprep.subr.bf16.mxu0 0
    %6482 = vmatpush1.bf16.msra.mxu0 0
    %6483 = vmatprep.subr.bf16.mxu0 0
    %6484 = vmatpush1.bf16.msra.mxu0 0
    %6485 = vmatprep.subr.bf16.mxu0 0
    %6486 = vmatpush1.bf16.msra.mxu0 0
    %6487 = vmatprep.mubr.bf16.mxu0 0
    %6488 = vmatmul.mubr.bf16.gmra.mrb[0].mxu0 %v5448
    %v6489 = vpop.f32.mrb[0].mxu0
    %v6490 = vadd.f32 %v5609, %v6489
    %v6491 = vpop.f32.mrb[0].mxu0
    %v6492 = vadd.f32 %v5613, %v6491
    %v6493 = vpop.f32.mrb[0].mxu0
    %v6494 = vadd.f32 %v5609, %v6493
    %v6495 = vpop.f32.mrb[0].mxu0
    %v6496 = vadd.f32 %v5613, %v6495
    %6497 = vmatprep.mubr.bf16.mxu0 0
    %6498 = vmatmul.mubr.bf16.gmra.mrb[0].mxu0 %v5449
    %v6499 = vpop.f32.mrb[0].mxu0
    %v6500 = vadd.f32 %v5609, %v6499
    %v6501 = vpop.f32.mrb[0].mxu0
    %v6502 = vadd.f32 %v5613, %v6501
    %v6503 = vpop.f32.mrb[0].mxu0
    %v6504 = vpop.f32.mrb[0].mxu0
    %6505 = vdwg.mxu0
    %6506 = vmatprep.subr.bf16.mxu0 %v6055
    %6507 = vmatpush1.bf16.msra.mxu0 %v6054
    %6508 = vmatprep.subr.bf16.mxu0 %v6071
    %6509 = vmatpush1.bf16.msra.mxu0 %v6070
    %6510 = vmatprep.subr.bf16.mxu0 %v6087
    %6511 = vmatpush1.bf16.msra.mxu0 %v6086
    %6512 = vmatprep.subr.bf16.mxu0 %v6103
    %6513 = vmatpush1.bf16.msra.mxu0 %v6102
    %6514 = vmatprep.subr.bf16.mxu0 %v6119
    %6515 = vmatpush1.bf16.msra.mxu0 %v6118
    %6516 = vmatprep.subr.bf16.mxu0 %v6135
    %6517 = vmatpush1.bf16.msra.mxu0 %v6134
    %6518 = vmatprep.subr.bf16.mxu0 %v6151
    %6519 = vmatpush1.bf16.msra.mxu0 %v6150
    %6520 = vmatprep.subr.bf16.mxu0 %v6167
    %6521 = vmatpush1.bf16.msra.mxu0 %v6166
    %6522 = vmatprep.subr.bf16.mxu0 0
    %6523 = vmatpush1.bf16.msra.mxu0 0
    %6524 = vmatprep.subr.bf16.mxu0 0
    %6525 = vmatpush1.bf16.msra.mxu0 0
    %6526 = vmatprep.subr.bf16.mxu0 0
    %6527 = vmatpush1.bf16.msra.mxu0 0
    %6528 = vmatprep.subr.bf16.mxu0 0
    %6529 = vmatpush1.bf16.msra.mxu0 0
    %6530 = vmatprep.subr.bf16.mxu0 0
    %6531 = vmatpush1.bf16.msra.mxu0 0
    %6532 = vmatprep.subr.bf16.mxu0 0
    %6533 = vmatpush1.bf16.msra.mxu0 0
    %6534 = vmatprep.subr.bf16.mxu0 0
    %6535 = vmatpush1.bf16.msra.mxu0 0
    %6536 = vmatprep.subr.bf16.mxu0 0
    %6537 = vmatpush1.bf16.msra.mxu0 0
    %6538 = vmatprep.mubr.bf16.mxu0 0
    %6539 = vmatmul.mubr.bf16.gmra.mrb[0].mxu0 %v5448
    %v6540 = vpop.f32.mrb[0].mxu0
    %v6541 = vadd.f32 %v5617, %v6540
    %v6542 = vpop.f32.mrb[0].mxu0
    %v6543 = vadd.f32 %v5621, %v6542
    %v6544 = vpop.f32.mrb[0].mxu0
    %v6545 = vadd.f32 %v5617, %v6544
    %v6546 = vpop.f32.mrb[0].mxu0
    %v6547 = vadd.f32 %v5621, %v6546
    %6548 = vmatprep.mubr.bf16.mxu0 0
    %6549 = vmatmul.mubr.bf16.gmra.mrb[0].mxu0 %v5449
    %v6550 = vpop.f32.mrb[0].mxu0
    %v6551 = vadd.f32 %v5617, %v6550
    %v6552 = vpop.f32.mrb[0].mxu0
    %v6553 = vadd.f32 %v5621, %v6552
    %v6554 = vpop.f32.mrb[0].mxu0
    %v6555 = vpop.f32.mrb[0].mxu0
    %6556 = vdwg.mxu0
    %6557 = vmatprep.subr.bf16.mxu0 %v6057
    %6558 = vmatpush1.bf16.msra.mxu0 %v6056
    %6559 = vmatprep.subr.bf16.mxu0 %v6073
    %6560 = vmatpush1.bf16.msra.mxu0 %v6072
    %6561 = vmatprep.subr.bf16.mxu0 %v6089
    %6562 = vmatpush1.bf16.msra.mxu0 %v6088
    %6563 = vmatprep.subr.bf16.mxu0 %v6105
    %6564 = vmatpush1.bf16.msra.mxu0 %v6104
    %6565 = vmatprep.subr.bf16.mxu0 %v6121
    %6566 = vmatpush1.bf16.msra.mxu0 %v6120
    %6567 = vmatprep.subr.bf16.mxu0 %v6137
    %6568 = vmatpush1.bf16.msra.mxu0 %v6136
    %6569 = vmatprep.subr.bf16.mxu0 %v6153
    %6570 = vmatpush1.bf16.msra.mxu0 %v6152
    %6571 = vmatprep.subr.bf16.mxu0 %v6169
    %6572 = vmatpush1.bf16.msra.mxu0 %v6168
    %6573 = vmatprep.subr.bf16.mxu0 0
    %6574 = vmatpush1.bf16.msra.mxu0 0
    %6575 = vmatprep.subr.bf16.mxu0 0
    %6576 = vmatpush1.bf16.msra.mxu0 0
    %6577 = vmatprep.subr.bf16.mxu0 0
    %6578 = vmatpush1.bf16.msra.mxu0 0
    %6579 = vmatprep.subr.bf16.mxu0 0
    %6580 = vmatpush1.bf16.msra.mxu0 0
    %6581 = vmatprep.subr.bf16.mxu0 0
    %6582 = vmatpush1.bf16.msra.mxu0 0
    %6583 = vmatprep.subr.bf16.mxu0 0
    %6584 = vmatpush1.bf16.msra.mxu0 0
    %6585 = vmatprep.subr.bf16.mxu0 0
    %6586 = vmatpush1.bf16.msra.mxu0 0
    %6587 = vmatprep.subr.bf16.mxu0 0
    %6588 = vmatpush1.bf16.msra.mxu0 0
    %6589 = vmatprep.mubr.bf16.mxu0 0
    %6590 = vmatmul.mubr.bf16.gmra.mrb[0].mxu0 %v5448
    %v6591 = vpop.f32.mrb[0].mxu0
    %v6592 = vadd.f32 %v5625, %v6591
    %v6593 = vpop.f32.mrb[0].mxu0
    %v6594 = vadd.f32 %v5629, %v6593
    %v6595 = vpop.f32.mrb[0].mxu0
    %v6596 = vadd.f32 %v5625, %v6595
    %v6597 = vpop.f32.mrb[0].mxu0
    %v6598 = vadd.f32 %v5629, %v6597
    %6599 = vmatprep.mubr.bf16.mxu0 0
    %6600 = vmatmul.mubr.bf16.gmra.mrb[0].mxu0 %v5449
    %v6601 = vpop.f32.mrb[0].mxu0
    %v6602 = vadd.f32 %v5625, %v6601
    %v6603 = vpop.f32.mrb[0].mxu0
    %v6604 = vadd.f32 %v5629, %v6603
    %v6605 = vpop.f32.mrb[0].mxu0
    %v6606 = vpop.f32.mrb[0].mxu0
    %6607 = vdwg.mxu0
    %6608 = vmatprep.subr.bf16.mxu0 %v6059
    %6609 = vmatpush1.bf16.msra.mxu0 %v6058
    %6610 = vmatprep.subr.bf16.mxu0 %v6075
    %6611 = vmatpush1.bf16.msra.mxu0 %v6074
    %6612 = vmatprep.subr.bf16.mxu0 %v6091
    %6613 = vmatpush1.bf16.msra.mxu0 %v6090
    %6614 = vmatprep.subr.bf16.mxu0 %v6107
    %6615 = vmatpush1.bf16.msra.mxu0 %v6106
    %6616 = vmatprep.subr.bf16.mxu0 %v6123
    %6617 = vmatpush1.bf16.msra.mxu0 %v6122
    %6618 = vmatprep.subr.bf16.mxu0 %v6139
    %6619 = vmatpush1.bf16.msra.mxu0 %v6138
    %6620 = vmatprep.subr.bf16.mxu0 %v6155
    %6621 = vmatpush1.bf16.msra.mxu0 %v6154
    %6622 = vmatprep.subr.bf16.mxu0 %v6171
    %6623 = vmatpush1.bf16.msra.mxu0 %v6170
    %6624 = vmatprep.subr.bf16.mxu0 0
    %6625 = vmatpush1.bf16.msra.mxu0 0
    %6626 = vmatprep.subr.bf16.mxu0 0
    %6627 = vmatpush1.bf16.msra.mxu0 0
    %6628 = vmatprep.subr.bf16.mxu0 0
    %6629 = vmatpush1.bf16.msra.mxu0 0
    %6630 = vmatprep.subr.bf16.mxu0 0
    %6631 = vmatpush1.bf16.msra.mxu0 0
    %6632 = vmatprep.subr.bf16.mxu0 0
    %6633 = vmatpush1.bf16.msra.mxu0 0
    %6634 = vmatprep.subr.bf16.mxu0 0
    %6635 = vmatpush1.bf16.msra.mxu0 0
    %6636 = vmatprep.subr.bf16.mxu0 0
    %6637 = vmatpush1.bf16.msra.mxu0 0
    %6638 = vmatprep.subr.bf16.mxu0 0
    %6639 = vmatpush1.bf16.msra.mxu0 0
    %6640 = vmatprep.mubr.bf16.mxu0 0
    %6641 = vmatmul.mubr.bf16.gmra.mrb[0].mxu0 %v5448
    %v6642 = vpop.f32.mrb[0].mxu0
    %v6643 = vadd.f32 %v5633, %v6642
    %v6644 = vpop.f32.mrb[0].mxu0
    %v6645 = vadd.f32 %v5637, %v6644
    %v6646 = vpop.f32.mrb[0].mxu0
    %v6647 = vadd.f32 %v5633, %v6646
    %v6648 = vpop.f32.mrb[0].mxu0
    %v6649 = vadd.f32 %v5637, %v6648
    %6650 = vmatprep.mubr.bf16.mxu0 0
    %6651 = vmatmul.mubr.bf16.gmra.mrb[0].mxu0 %v5449
    %v6652 = vpop.f32.mrb[0].mxu0
    %v6653 = vadd.f32 %v5633, %v6652
    %v6654 = vpop.f32.mrb[0].mxu0
    %v6655 = vadd.f32 %v5637, %v6654
    %v6656 = vpop.f32.mrb[0].mxu0
    %v6657 = vpop.f32.mrb[0].mxu0
    %6658 = vdwg.mxu0
    %6659 = vmatprep.subr.bf16.mxu0 %v6061
    %6660 = vmatpush1.bf16.msra.mxu0 %v6060
    %6661 = vmatprep.subr.bf16.mxu0 %v6077
    %6662 = vmatpush1.bf16.msra.mxu0 %v6076
    %6663 = vmatprep.subr.bf16.mxu0 %v6093
    %6664 = vmatpush1.bf16.msra.mxu0 %v6092
    %6665 = vmatprep.subr.bf16.mxu0 %v6109
    %6666 = vmatpush1.bf16.msra.mxu0 %v6108
    %6667 = vmatprep.subr.bf16.mxu0 %v6125
    %6668 = vmatpush1.bf16.msra.mxu0 %v6124
    %6669 = vmatprep.subr.bf16.mxu0 %v6141
    %6670 = vmatpush1.bf16.msra.mxu0 %v6140
    %6671 = vmatprep.subr.bf16.mxu0 %v6157
    %6672 = vmatpush1.bf16.msra.mxu0 %v6156
    %6673 = vmatprep.subr.bf16.mxu0 %v6173
    %6674 = vmatpush1.bf16.msra.mxu0 %v6172
    %6675 = vmatprep.subr.bf16.mxu0 0
    %6676 = vmatpush1.bf16.msra.mxu0 0
    %6677 = vmatprep.subr.bf16.mxu0 0
    %6678 = vmatpush1.bf16.msra.mxu0 0
    %6679 = vmatprep.subr.bf16.mxu0 0
    %6680 = vmatpush1.bf16.msra.mxu0 0
    %6681 = vmatprep.subr.bf16.mxu0 0
    %6682 = vmatpush1.bf16.msra.mxu0 0
    %6683 = vmatprep.subr.bf16.mxu0 0
    %6684 = vmatpush1.bf16.msra.mxu0 0
    %6685 = vmatprep.subr.bf16.mxu0 0
    %6686 = vmatpush1.bf16.msra.mxu0 0
    %6687 = vmatprep.subr.bf16.mxu0 0
    %6688 = vmatpush1.bf16.msra.mxu0 0
    %6689 = vmatprep.subr.bf16.mxu0 0
    %6690 = vmatpush1.bf16.msra.mxu0 0
    %6691 = vmatprep.mubr.bf16.mxu0 0
    %6692 = vmatmul.mubr.bf16.gmra.mrb[0].mxu0 %v5448
    %v6693 = vpop.f32.mrb[0].mxu0
    %v6694 = vadd.f32 %v5641, %v6693
    %v6695 = vpop.f32.mrb[0].mxu0
    %v6696 = vadd.f32 %v5645, %v6695
    %v6697 = vpop.f32.mrb[0].mxu0
    %v6698 = vadd.f32 %v5641, %v6697
    %v6699 = vpop.f32.mrb[0].mxu0
    %v6700 = vadd.f32 %v5645, %v6699
    %6701 = vmatprep.mubr.bf16.mxu0 0
    %6702 = vmatmul.mubr.bf16.gmra.mrb[0].mxu0 %v5449
    %v6703 = vpop.f32.mrb[0].mxu0
    %v6704 = vadd.f32 %v5641, %v6703
    %v6705 = vpop.f32.mrb[0].mxu0
    %v6706 = vadd.f32 %v5645, %v6705
    %v6707 = vpop.f32.mrb[0].mxu0
    %v6708 = vpop.f32.mrb[0].mxu0
    %6709 = vdwg.mxu0
    %v6710 = vmax.f32 %v6337, 0.0
    %v6711 = vmax.f32 %v6339, 0.0
    %v6712 = vmax.f32 %v6388, 0.0
    %v6713 = vmax.f32 %v6390, 0.0
    %v6714 = vmax.f32 %v6439, 0.0
    %v6715 = vmax.f32 %v6441, 0.0
    %v6716 = vmax.f32 %v6490, 0.0
    %v6717 = vmax.f32 %v6492, 0.0
    %v6718 = vmax.f32 %v6541, 0.0
    %v6719 = vmax.f32 %v6543, 0.0
    %v6720 = vmax.f32 %v6592, 0.0
    %v6721 = vmax.f32 %v6594, 0.0
    %v6722 = vmax.f32 %v6643, 0.0
    %v6723 = vmax.f32 %v6645, 0.0
    %v6724 = vmax.f32 %v6694, 0.0
    %v6725 = vmax.f32 %v6696, 0.0
    %v6726 = vmax.f32 %v6341, 0.0
    %v6727 = vmax.f32 %v6343, 0.0
    %v6728 = vmax.f32 %v6392, 0.0
    %v6729 = vmax.f32 %v6394, 0.0
    %v6730 = vmax.f32 %v6443, 0.0
    %v6731 = vmax.f32 %v6445, 0.0
    %v6732 = vmax.f32 %v6494, 0.0
    %v6733 = vmax.f32 %v6496, 0.0
    %v6734 = vmax.f32 %v6545, 0.0
    %v6735 = vmax.f32 %v6547, 0.0
    %v6736 = vmax.f32 %v6596, 0.0
    %v6737 = vmax.f32 %v6598, 0.0
    %v6738 = vmax.f32 %v6647, 0.0
    %v6739 = vmax.f32 %v6649, 0.0
    %v6740 = vmax.f32 %v6698, 0.0
    %v6741 = vmax.f32 %v6700, 0.0
    %v6742 = vmax.f32 %v6347, 0.0
    %v6743 = vmax.f32 %v6349, 0.0
    %v6744 = vmax.f32 %v6398, 0.0
    %v6745 = vmax.f32 %v6400, 0.0
    %v6746 = vmax.f32 %v6449, 0.0
    %v6747 = vmax.f32 %v6451, 0.0
    %v6748 = vmax.f32 %v6500, 0.0
    %v6749 = vmax.f32 %v6502, 0.0
    %v6750 = vmax.f32 %v6551, 0.0
    %v6751 = vmax.f32 %v6553, 0.0
    %v6752 = vmax.f32 %v6602, 0.0
    %v6753 = vmax.f32 %v6604, 0.0
    %v6754 = vmax.f32 %v6653, 0.0
    %v6755 = vmax.f32 %v6655, 0.0
    %v6756 = vmax.f32 %v6704, 0.0
    %v6757 = vmax.f32 %v6706, 0.0
    %v6758 = vpack.c.bf16 %v6726, %v6710
    %v6759 = vpack.c.bf16 %v6727, %v6711
    %v6760 = vpack.c.bf16 %v6728, %v6712
    %v6761 = vpack.c.bf16 %v6729, %v6713
    %v6762 = vpack.c.bf16 %v6730, %v6714
    %v6763 = vpack.c.bf16 %v6731, %v6715
    %v6764 = vpack.c.bf16 %v6732, %v6716
    %v6765 = vpack.c.bf16 %v6733, %v6717
    %v6766 = vpack.c.bf16 %v6734, %v6718
    %v6767 = vpack.c.bf16 %v6735, %v6719
    %v6768 = vpack.c.bf16 %v6736, %v6720
    %v6769 = vpack.c.bf16 %v6737, %v6721
    %v6770 = vpack.c.bf16 %v6738, %v6722
    %v6771 = vpack.c.bf16 %v6739, %v6723
    %v6772 = vpack.c.bf16 %v6740, %v6724
    %v6773 = vpack.c.bf16 %v6741, %v6725
    %v6774 = vpack.c.bf16 %v6742, %v6742
    %v6775 = vpack.c.bf16 %v6743, %v6743
    %v6776 = vpack.c.bf16 %v6744, %v6744
    %v6777 = vpack.c.bf16 %v6745, %v6745
    %v6778 = vpack.c.bf16 %v6746, %v6746
    %v6779 = vpack.c.bf16 %v6747, %v6747
    %v6780 = vpack.c.bf16 %v6748, %v6748
    %v6781 = vpack.c.bf16 %v6749, %v6749
    %v6782 = vpack.c.bf16 %v6750, %v6750
    %v6783 = vpack.c.bf16 %v6751, %v6751
    %v6784 = vpack.c.bf16 %v6752, %v6752
    %v6785 = vpack.c.bf16 %v6753, %v6753
    %v6786 = vpack.c.bf16 %v6754, %v6754
    %v6787 = vpack.c.bf16 %v6755, %v6755
    %v6788 = vpack.c.bf16 %v6756, %v6756
    %v6789 = vpack.c.bf16 %v6757, %v6757
    %v6790 = vld [vmem:[#allocation28] sm:$0xf]
    %v6791 = vld [vmem:[#allocation28 + $0x4] sm:$0xf]
    %v6792 = vld [vmem:[#allocation28 + $0x8] sm:$0xf]
    %v6793 = vld [vmem:[#allocation28 + $0xc] sm:$0xf]
    %v6794 = vld [vmem:[#allocation28 + $0x10] sm:$0xf]
    %v6795 = vld [vmem:[#allocation28 + $0x14] sm:$0xf]
    %v6796 = vld [vmem:[#allocation28 + $0x18] sm:$0xf]
    %v6797 = vld [vmem:[#allocation28 + $0x1c] sm:$0xf]
    %v6798 = vld [vmem:[#allocation28 + $0x20] sm:$0xf]
    %v6799 = vld [vmem:[#allocation28 + $0x24] sm:$0xf]
    %v6800 = vld [vmem:[#allocation28 + $0x28] sm:$0xf]
    %v6801 = vld [vmem:[#allocation28 + $0x2c] sm:$0xf]
    %v6802 = vld [vmem:[#allocation28 + $0x30] sm:$0xf]
    %v6803 = vld [vmem:[#allocation28 + $0x34] sm:$0xf]
    %v6804 = vld [vmem:[#allocation28 + $0x38] sm:$0xf]
    %v6805 = vld [vmem:[#allocation28 + $0x3c] sm:$0xf]
    %v6806 = vld [vmem:[#allocation28 + $0x40] sm:$0xf]
    %v6807 = vld [vmem:[#allocation28 + $0x44] sm:$0xf]
    %v6808 = vld [vmem:[#allocation28 + $0x48] sm:$0xf]
    %v6809 = vld [vmem:[#allocation28 + $0x4c] sm:$0xf]
    %v6810 = vld [vmem:[#allocation28 + $0x50] sm:$0xf]
    %v6811 = vld [vmem:[#allocation28 + $0x54] sm:$0xf]
    %v6812 = vld [vmem:[#allocation28 + $0x58] sm:$0xf]
    %v6813 = vld [vmem:[#allocation28 + $0x5c] sm:$0xf]
    %v6814 = vld [vmem:[#allocation28 + $0x60] sm:$0xf]
    %v6815 = vld [vmem:[#allocation28 + $0x64] sm:$0xf]
    %v6816 = vld [vmem:[#allocation28 + $0x68] sm:$0xf]
    %v6817 = vld [vmem:[#allocation28 + $0x6c] sm:$0xf]
    %v6818 = vld [vmem:[#allocation28 + $0x70] sm:$0xf]
    %v6819 = vld [vmem:[#allocation28 + $0x74] sm:$0xf]
    %v6820 = vld [vmem:[#allocation28 + $0x78] sm:$0xf]
    %v6821 = vld [vmem:[#allocation28 + $0x7c] sm:$0xf]
    %v6822 = vld [vmem:[#allocation28 + $0x80] sm:$0xf]
    %v6823 = vld [vmem:[#allocation28 + $0x84] sm:$0xf]
    %v6824 = vld [vmem:[#allocation28 + $0x88] sm:$0xf]
    %v6825 = vld [vmem:[#allocation28 + $0x8c] sm:$0xf]
    %v6826 = vld [vmem:[#allocation28 + $0x90] sm:$0xf]
    %v6827 = vld [vmem:[#allocation28 + $0x94] sm:$0xf]
    %v6828 = vld [vmem:[#allocation28 + $0x98] sm:$0xf]
    %v6829 = vld [vmem:[#allocation28 + $0x9c] sm:$0xf]
    %v6830 = vld [vmem:[#allocation28 + $0xa0] sm:$0xf]
    %v6831 = vld [vmem:[#allocation28 + $0xa4] sm:$0xf]
    %v6832 = vld [vmem:[#allocation28 + $0xa8] sm:$0xf]
    %v6833 = vld [vmem:[#allocation28 + $0xac] sm:$0xf]
    %v6834 = vld [vmem:[#allocation28 + $0xb0] sm:$0xf]
    %v6835 = vld [vmem:[#allocation28 + $0xb4] sm:$0xf]
    %v6836 = vld [vmem:[#allocation28 + $0xb8] sm:$0xf]
    %v6837 = vld [vmem:[#allocation28 + $0xbc] sm:$0xf]
    %v6838 = vld [vmem:[#allocation28 + $0xc0] sm:$0xf]
    %v6839 = vld [vmem:[#allocation28 + $0xc4] sm:$0xf]
    %v6840 = vld [vmem:[#allocation28 + $0xc8] sm:$0xf]
    %v6841 = vld [vmem:[#allocation28 + $0xcc] sm:$0xf]
    %v6842 = vld [vmem:[#allocation28 + $0xd0] sm:$0xf]
    %v6843 = vld [vmem:[#allocation28 + $0xd4] sm:$0xf]
    %v6844 = vld [vmem:[#allocation28 + $0xd8] sm:$0xf]
    %v6845 = vld [vmem:[#allocation28 + $0xdc] sm:$0xf]
    %v6846 = vld [vmem:[#allocation28 + $0xe0] sm:$0xf]
    %v6847 = vld [vmem:[#allocation28 + $0xe4] sm:$0xf]
    %v6848 = vld [vmem:[#allocation28 + $0xe8] sm:$0xf]
    %v6849 = vld [vmem:[#allocation28 + $0xec] sm:$0xf]
    %v6850 = vld [vmem:[#allocation28 + $0xf0] sm:$0xf]
    %v6851 = vld [vmem:[#allocation28 + $0xf4] sm:$0xf]
    %v6852 = vld [vmem:[#allocation28 + $0xf8] sm:$0xf]
    %v6853 = vld [vmem:[#allocation28 + $0xfc] sm:$0xf]
    %v6854 = vld [vmem:[#allocation28 + $0x100] sm:$0xf]
    %v6855 = vld [vmem:[#allocation28 + $0x104] sm:$0xf]
    %v6856 = vld [vmem:[#allocation28 + $0x108] sm:$0xf]
    %v6857 = vld [vmem:[#allocation28 + $0x10c] sm:$0xf]
    %v6858 = vld [vmem:[#allocation28 + $0x110] sm:$0xf]
    %v6859 = vld [vmem:[#allocation28 + $0x114] sm:$0xf]
    %v6860 = vld [vmem:[#allocation28 + $0x118] sm:$0xf]
    %v6861 = vld [vmem:[#allocation28 + $0x11c] sm:$0xf]
    %v6862 = vld [vmem:[#allocation28 + $0x120] sm:$0xf]
    %v6863 = vld [vmem:[#allocation28 + $0x124] sm:$0xf]
    %v6864 = vld [vmem:[#allocation28 + $0x128] sm:$0xf]
    %v6865 = vld [vmem:[#allocation28 + $0x12c] sm:$0xf]
    %v6866 = vld [vmem:[#allocation28 + $0x130] sm:$0xf]
    %v6867 = vld [vmem:[#allocation28 + $0x134] sm:$0xf]
    %v6868 = vld [vmem:[#allocation28 + $0x138] sm:$0xf]
    %v6869 = vld [vmem:[#allocation28 + $0x13c] sm:$0xf]
    %v6870 = vld [vmem:[#allocation28 + $0x140] sm:$0xf]
    %v6871 = vld [vmem:[#allocation28 + $0x144] sm:$0xf]
    %v6872 = vld [vmem:[#allocation28 + $0x148] sm:$0xf]
    %v6873 = vld [vmem:[#allocation28 + $0x14c] sm:$0xf]
    %v6874 = vld [vmem:[#allocation28 + $0x150] sm:$0xf]
    %v6875 = vld [vmem:[#allocation28 + $0x154] sm:$0xf]
    %v6876 = vld [vmem:[#allocation28 + $0x158] sm:$0xf]
    %v6877 = vld [vmem:[#allocation28 + $0x15c] sm:$0xf]
    %v6878 = vld [vmem:[#allocation28 + $0x160] sm:$0xf]
    %v6879 = vld [vmem:[#allocation28 + $0x164] sm:$0xf]
    %v6880 = vld [vmem:[#allocation28 + $0x168] sm:$0xf]
    %v6881 = vld [vmem:[#allocation28 + $0x16c] sm:$0xf]
    %v6882 = vld [vmem:[#allocation28 + $0x170] sm:$0xf]
    %v6883 = vld [vmem:[#allocation28 + $0x174] sm:$0xf]
    %v6884 = vld [vmem:[#allocation28 + $0x178] sm:$0xf]
    %v6885 = vld [vmem:[#allocation28 + $0x17c] sm:$0xf]
    %v6886 = vld [vmem:[#allocation28 + $0x180] sm:$0xf]
    %v6887 = vld [vmem:[#allocation28 + $0x184] sm:$0xf]
    %v6888 = vld [vmem:[#allocation28 + $0x188] sm:$0xf]
    %v6889 = vld [vmem:[#allocation28 + $0x18c] sm:$0xf]
    %v6890 = vld [vmem:[#allocation28 + $0x190] sm:$0xf]
    %v6891 = vld [vmem:[#allocation28 + $0x194] sm:$0xf]
    %v6892 = vld [vmem:[#allocation28 + $0x198] sm:$0xf]
    %v6893 = vld [vmem:[#allocation28 + $0x19c] sm:$0xf]
    %v6894 = vld [vmem:[#allocation28 + $0x1a0] sm:$0xf]
    %v6895 = vld [vmem:[#allocation28 + $0x1a4] sm:$0xf]
    %v6896 = vld [vmem:[#allocation28 + $0x1a8] sm:$0xf]
    %v6897 = vld [vmem:[#allocation28 + $0x1ac] sm:$0xf]
    %v6898 = vld [vmem:[#allocation28 + $0x1b0] sm:$0xf]
    %v6899 = vld [vmem:[#allocation28 + $0x1b4] sm:$0xf]
    %v6900 = vld [vmem:[#allocation28 + $0x1b8] sm:$0xf]
    %v6901 = vld [vmem:[#allocation28 + $0x1bc] sm:$0xf]
    %v6902 = vld [vmem:[#allocation28 + $0x1c0] sm:$0xf]
    %v6903 = vld [vmem:[#allocation28 + $0x1c4] sm:$0xf]
    %v6904 = vld [vmem:[#allocation28 + $0x1c8] sm:$0xf]
    %v6905 = vld [vmem:[#allocation28 + $0x1cc] sm:$0xf]
    %v6906 = vld [vmem:[#allocation28 + $0x1d0] sm:$0xf]
    %v6907 = vld [vmem:[#allocation28 + $0x1d4] sm:$0xf]
    %v6908 = vld [vmem:[#allocation28 + $0x1d8] sm:$0xf]
    %v6909 = vld [vmem:[#allocation28 + $0x1dc] sm:$0xf]
    %v6910 = vld [vmem:[#allocation28 + $0x1e0] sm:$0xf]
    %v6911 = vld [vmem:[#allocation28 + $0x1e4] sm:$0xf]
    %v6912 = vld [vmem:[#allocation28 + $0x1e8] sm:$0xf]
    %v6913 = vld [vmem:[#allocation28 + $0x1ec] sm:$0xf]
    %v6914 = vld [vmem:[#allocation28 + $0x1f0] sm:$0xf]
    %v6915 = vld [vmem:[#allocation28 + $0x1f4] sm:$0xf]
    %v6916 = vld [vmem:[#allocation28 + $0x1f8] sm:$0xf]
    %v6917 = vld [vmem:[#allocation28 + $0x1fc] sm:$0xf]
    %v6918 = vld [vmem:[#allocation28 + $0x200] sm:$0xf]
    %v6919 = vld [vmem:[#allocation28 + $0x204] sm:$0xf]
    %v6920 = vld [vmem:[#allocation28 + $0x208] sm:$0xf]
    %v6921 = vld [vmem:[#allocation28 + $0x20c] sm:$0xf]
    %v6922 = vld [vmem:[#allocation28 + $0x210] sm:$0xf]
    %v6923 = vld [vmem:[#allocation28 + $0x214] sm:$0xf]
    %v6924 = vld [vmem:[#allocation28 + $0x218] sm:$0xf]
    %v6925 = vld [vmem:[#allocation28 + $0x21c] sm:$0xf]
    %v6926 = vld [vmem:[#allocation28 + $0x220] sm:$0xf]
    %v6927 = vld [vmem:[#allocation28 + $0x224] sm:$0xf]
    %v6928 = vld [vmem:[#allocation28 + $0x228] sm:$0xf]
    %v6929 = vld [vmem:[#allocation28 + $0x22c] sm:$0xf]
    %v6930 = vld [vmem:[#allocation28 + $0x230] sm:$0xf]
    %v6931 = vld [vmem:[#allocation28 + $0x234] sm:$0xf]
    %v6932 = vld [vmem:[#allocation28 + $0x238] sm:$0xf]
    %v6933 = vld [vmem:[#allocation28 + $0x23c] sm:$0xf]
    %v6934 = vld [vmem:[#allocation28 + $0x240] sm:$0xf]
    %v6935 = vld [vmem:[#allocation28 + $0x244] sm:$0xf]
    %v6936 = vld [vmem:[#allocation28 + $0x248] sm:$0xf]
    %v6937 = vld [vmem:[#allocation28 + $0x24c] sm:$0xf]
    %v6938 = vld [vmem:[#allocation28 + $0x250] sm:$0xf]
    %v6939 = vld [vmem:[#allocation28 + $0x254] sm:$0xf]
    %v6940 = vld [vmem:[#allocation28 + $0x258] sm:$0xf]
    %v6941 = vld [vmem:[#allocation28 + $0x25c] sm:$0xf]
    %v6942 = vld [vmem:[#allocation28 + $0x260] sm:$0xf]
    %v6943 = vld [vmem:[#allocation28 + $0x264] sm:$0xf]
    %v6944 = vld [vmem:[#allocation28 + $0x268] sm:$0xf]
    %v6945 = vld [vmem:[#allocation28 + $0x26c] sm:$0xf]
    %v6946 = vld [vmem:[#allocation28 + $0x270] sm:$0xf]
    %v6947 = vld [vmem:[#allocation28 + $0x274] sm:$0xf]
    %v6948 = vld [vmem:[#allocation28 + $0x278] sm:$0xf]
    %v6949 = vld [vmem:[#allocation28 + $0x27c] sm:$0xf]
    %v6950 = vld [vmem:[#allocation28 + $0x280] sm:$0xf]
    %v6951 = vld [vmem:[#allocation28 + $0x284] sm:$0xf]
    %v6952 = vld [vmem:[#allocation28 + $0x288] sm:$0xf]
    %v6953 = vld [vmem:[#allocation28 + $0x28c] sm:$0xf]
    %v6954 = vld [vmem:[#allocation28 + $0x290] sm:$0xf]
    %v6955 = vld [vmem:[#allocation28 + $0x294] sm:$0xf]
    %v6956 = vld [vmem:[#allocation28 + $0x298] sm:$0xf]
    %v6957 = vld [vmem:[#allocation28 + $0x29c] sm:$0xf]
    %v6958 = vld [vmem:[#allocation28 + $0x2a0] sm:$0xf]
    %v6959 = vld [vmem:[#allocation28 + $0x2a4] sm:$0xf]
    %v6960 = vld [vmem:[#allocation28 + $0x2a8] sm:$0xf]
    %v6961 = vld [vmem:[#allocation28 + $0x2ac] sm:$0xf]
    %v6962 = vld [vmem:[#allocation28 + $0x2b0] sm:$0xf]
    %v6963 = vld [vmem:[#allocation28 + $0x2b4] sm:$0xf]
    %v6964 = vld [vmem:[#allocation28 + $0x2b8] sm:$0xf]
    %v6965 = vld [vmem:[#allocation28 + $0x2bc] sm:$0xf]
    %v6966 = vld [vmem:[#allocation28 + $0x2c0] sm:$0xf]
    %v6967 = vld [vmem:[#allocation28 + $0x2c4] sm:$0xf]
    %v6968 = vld [vmem:[#allocation28 + $0x2c8] sm:$0xf]
    %v6969 = vld [vmem:[#allocation28 + $0x2cc] sm:$0xf]
    %v6970 = vld [vmem:[#allocation28 + $0x2d0] sm:$0xf]
    %v6971 = vld [vmem:[#allocation28 + $0x2d4] sm:$0xf]
    %v6972 = vld [vmem:[#allocation28 + $0x2d8] sm:$0xf]
    %v6973 = vld [vmem:[#allocation28 + $0x2dc] sm:$0xf]
    %v6974 = vld [vmem:[#allocation28 + $0x2e0] sm:$0xf]
    %v6975 = vld [vmem:[#allocation28 + $0x2e4] sm:$0xf]
    %v6976 = vld [vmem:[#allocation28 + $0x2e8] sm:$0xf]
    %v6977 = vld [vmem:[#allocation28 + $0x2ec] sm:$0xf]
    %v6978 = vld [vmem:[#allocation28 + $0x2f0] sm:$0xf]
    %v6979 = vld [vmem:[#allocation28 + $0x2f4] sm:$0xf]
    %v6980 = vld [vmem:[#allocation28 + $0x2f8] sm:$0xf]
    %v6981 = vld [vmem:[#allocation28 + $0x2fc] sm:$0xf]
    %v6982 = vld [vmem:[#allocation28 + $0x300] sm:$0xf]
    %v6983 = vld [vmem:[#allocation28 + $0x304] sm:$0xf]
    %v6984 = vld [vmem:[#allocation28 + $0x308] sm:$0xf]
    %v6985 = vld [vmem:[#allocation28 + $0x30c] sm:$0xf]
    %v6986 = vld [vmem:[#allocation28 + $0x310] sm:$0xf]
    %v6987 = vld [vmem:[#allocation28 + $0x314] sm:$0xf]
    %v6988 = vld [vmem:[#allocation28 + $0x318] sm:$0xf]
    %v6989 = vld [vmem:[#allocation28 + $0x31c] sm:$0xf]
    %v6990 = vld [vmem:[#allocation28 + $0x320] sm:$0xf]
    %v6991 = vld [vmem:[#allocation28 + $0x324] sm:$0xf]
    %v6992 = vld [vmem:[#allocation28 + $0x328] sm:$0xf]
    %v6993 = vld [vmem:[#allocation28 + $0x32c] sm:$0xf]
    %v6994 = vld [vmem:[#allocation28 + $0x330] sm:$0xf]
    %v6995 = vld [vmem:[#allocation28 + $0x334] sm:$0xf]
    %v6996 = vld [vmem:[#allocation28 + $0x338] sm:$0xf]
    %v6997 = vld [vmem:[#allocation28 + $0x33c] sm:$0xf]
    %v6998 = vld [vmem:[#allocation28 + $0x340] sm:$0xf]
    %v6999 = vld [vmem:[#allocation28 + $0x344] sm:$0xf]
    %v7000 = vld [vmem:[#allocation28 + $0x348] sm:$0xf]
    %v7001 = vld [vmem:[#allocation28 + $0x34c] sm:$0xf]
    %v7002 = vld [vmem:[#allocation28 + $0x350] sm:$0xf]
    %v7003 = vld [vmem:[#allocation28 + $0x354] sm:$0xf]
    %v7004 = vld [vmem:[#allocation28 + $0x358] sm:$0xf]
    %v7005 = vld [vmem:[#allocation28 + $0x35c] sm:$0xf]
    %v7006 = vld [vmem:[#allocation28 + $0x360] sm:$0xf]
    %v7007 = vld [vmem:[#allocation28 + $0x364] sm:$0xf]
    %v7008 = vld [vmem:[#allocation28 + $0x368] sm:$0xf]
    %v7009 = vld [vmem:[#allocation28 + $0x36c] sm:$0xf]
    %v7010 = vld [vmem:[#allocation28 + $0x370] sm:$0xf]
    %v7011 = vld [vmem:[#allocation28 + $0x374] sm:$0xf]
    %v7012 = vld [vmem:[#allocation28 + $0x378] sm:$0xf]
    %v7013 = vld [vmem:[#allocation28 + $0x37c] sm:$0xf]
    %v7014 = vld [vmem:[#allocation28 + $0x380] sm:$0xf]
    %v7015 = vld [vmem:[#allocation28 + $0x384] sm:$0xf]
    %v7016 = vld [vmem:[#allocation28 + $0x388] sm:$0xf]
    %v7017 = vld [vmem:[#allocation28 + $0x38c] sm:$0xf]
    %v7018 = vld [vmem:[#allocation28 + $0x390] sm:$0xf]
    %v7019 = vld [vmem:[#allocation28 + $0x394] sm:$0xf]
    %v7020 = vld [vmem:[#allocation28 + $0x398] sm:$0xf]
    %v7021 = vld [vmem:[#allocation28 + $0x39c] sm:$0xf]
    %v7022 = vld [vmem:[#allocation28 + $0x3a0] sm:$0xf]
    %v7023 = vld [vmem:[#allocation28 + $0x3a4] sm:$0xf]
    %v7024 = vld [vmem:[#allocation28 + $0x3a8] sm:$0xf]
    %v7025 = vld [vmem:[#allocation28 + $0x3ac] sm:$0xf]
    %v7026 = vld [vmem:[#allocation28 + $0x3b0] sm:$0xf]
    %v7027 = vld [vmem:[#allocation28 + $0x3b4] sm:$0xf]
    %v7028 = vld [vmem:[#allocation28 + $0x3b8] sm:$0xf]
    %v7029 = vld [vmem:[#allocation28 + $0x3bc] sm:$0xf]
    %v7030 = vld [vmem:[#allocation28 + $0x3c0] sm:$0xf]
    %v7031 = vld [vmem:[#allocation28 + $0x3c4] sm:$0xf]
    %v7032 = vld [vmem:[#allocation28 + $0x3c8] sm:$0xf]
    %v7033 = vld [vmem:[#allocation28 + $0x3cc] sm:$0xf]
    %v7034 = vld [vmem:[#allocation28 + $0x3d0] sm:$0xf]
    %v7035 = vld [vmem:[#allocation28 + $0x3d4] sm:$0xf]
    %v7036 = vld [vmem:[#allocation28 + $0x3d8] sm:$0xf]
    %v7037 = vld [vmem:[#allocation28 + $0x3dc] sm:$0xf]
    %v7038 = vld [vmem:[#allocation28 + $0x3e0] sm:$0xf]
    %v7039 = vld [vmem:[#allocation28 + $0x3e4] sm:$0xf]
    %v7040 = vld [vmem:[#allocation28 + $0x3e8] sm:$0xf]
    %v7041 = vld [vmem:[#allocation28 + $0x3ec] sm:$0xf]
    %v7042 = vld [vmem:[#allocation28 + $0x3f0] sm:$0xf]
    %v7043 = vld [vmem:[#allocation28 + $0x3f4] sm:$0xf]
    %v7044 = vld [vmem:[#allocation28 + $0x3f8] sm:$0xf]
    %v7045 = vld [vmem:[#allocation28 + $0x3fc] sm:$0xf]
    %v7046 = vld [vmem:[#allocation29] sm:$0x1]
    %v7048 = vlaneseq
    %v7049 = vshrl.u32 %v7048, 7
    %v7050 = vsub.s32 0, %v7049
    %v7051 = vrot.slane %v7046, %v7050
    %v7309 = vunpack.c.l.b16 %v6790
    %v7310 = vunpack.c.l.b16 %v6791
    %v7311 = vunpack.c.l.b16 %v6792
    %v7312 = vunpack.c.l.b16 %v6793
    %v7313 = vunpack.c.l.b16 %v6794
    %v7314 = vunpack.c.l.b16 %v6795
    %v7315 = vunpack.c.l.b16 %v6796
    %v7316 = vunpack.c.l.b16 %v6797
    %v7317 = vunpack.c.l.b16 %v6798
    %v7318 = vunpack.c.l.b16 %v6799
    %v7319 = vunpack.c.l.b16 %v6800
    %v7320 = vunpack.c.l.b16 %v6801
    %v7321 = vunpack.c.l.b16 %v6802
    %v7322 = vunpack.c.l.b16 %v6803
    %v7323 = vunpack.c.l.b16 %v6804
    %v7324 = vunpack.c.l.b16 %v6805
    %v7325 = vunpack.c.l.b16 %v6806
    %v7326 = vunpack.c.l.b16 %v6807
    %v7327 = vunpack.c.l.b16 %v6808
    %v7328 = vunpack.c.l.b16 %v6809
    %v7329 = vunpack.c.l.b16 %v6810
    %v7330 = vunpack.c.l.b16 %v6811
    %v7331 = vunpack.c.l.b16 %v6812
    %v7332 = vunpack.c.l.b16 %v6813
    %v7333 = vunpack.c.l.b16 %v6814
    %v7334 = vunpack.c.l.b16 %v6815
    %v7335 = vunpack.c.l.b16 %v6816
    %v7336 = vunpack.c.l.b16 %v6817
    %v7337 = vunpack.c.l.b16 %v6818
    %v7338 = vunpack.c.l.b16 %v6819
    %v7339 = vunpack.c.l.b16 %v6820
    %v7340 = vunpack.c.l.b16 %v6821
    %v7341 = vunpack.c.l.b16 %v6822
    %v7342 = vunpack.c.l.b16 %v6823
    %v7343 = vunpack.c.l.b16 %v6824
    %v7344 = vunpack.c.l.b16 %v6825
    %v7345 = vunpack.c.l.b16 %v6826
    %v7346 = vunpack.c.l.b16 %v6827
    %v7347 = vunpack.c.l.b16 %v6828
    %v7348 = vunpack.c.l.b16 %v6829
    %v7349 = vunpack.c.l.b16 %v6830
    %v7350 = vunpack.c.l.b16 %v6831
    %v7351 = vunpack.c.l.b16 %v6832
    %v7352 = vunpack.c.l.b16 %v6833
    %v7353 = vunpack.c.l.b16 %v6834
    %v7354 = vunpack.c.l.b16 %v6835
    %v7355 = vunpack.c.l.b16 %v6836
    %v7356 = vunpack.c.l.b16 %v6837
    %v7357 = vunpack.c.l.b16 %v6838
    %v7358 = vunpack.c.l.b16 %v6839
    %v7359 = vunpack.c.l.b16 %v6840
    %v7360 = vunpack.c.l.b16 %v6841
    %v7361 = vunpack.c.l.b16 %v6842
    %v7362 = vunpack.c.l.b16 %v6843
    %v7363 = vunpack.c.l.b16 %v6844
    %v7364 = vunpack.c.l.b16 %v6845
    %v7365 = vunpack.c.l.b16 %v6846
    %v7366 = vunpack.c.l.b16 %v6847
    %v7367 = vunpack.c.l.b16 %v6848
    %v7368 = vunpack.c.l.b16 %v6849
    %v7369 = vunpack.c.l.b16 %v6850
    %v7370 = vunpack.c.l.b16 %v6851
    %v7371 = vunpack.c.l.b16 %v6852
    %v7372 = vunpack.c.l.b16 %v6853
    %v7373 = vunpack.c.l.b16 %v6854
    %v7374 = vunpack.c.l.b16 %v6855
    %v7375 = vunpack.c.l.b16 %v6856
    %v7376 = vunpack.c.l.b16 %v6857
    %v7377 = vunpack.c.l.b16 %v6858
    %v7378 = vunpack.c.l.b16 %v6859
    %v7379 = vunpack.c.l.b16 %v6860
    %v7380 = vunpack.c.l.b16 %v6861
    %v7381 = vunpack.c.l.b16 %v6862
    %v7382 = vunpack.c.l.b16 %v6863
    %v7383 = vunpack.c.l.b16 %v6864
    %v7384 = vunpack.c.l.b16 %v6865
    %v7385 = vunpack.c.l.b16 %v6866
    %v7386 = vunpack.c.l.b16 %v6867
    %v7387 = vunpack.c.l.b16 %v6868
    %v7388 = vunpack.c.l.b16 %v6869
    %v7389 = vunpack.c.l.b16 %v6870
    %v7390 = vunpack.c.l.b16 %v6871
    %v7391 = vunpack.c.l.b16 %v6872
    %v7392 = vunpack.c.l.b16 %v6873
    %v7393 = vunpack.c.l.b16 %v6874
    %v7394 = vunpack.c.l.b16 %v6875
    %v7395 = vunpack.c.l.b16 %v6876
    %v7396 = vunpack.c.l.b16 %v6877
    %v7397 = vunpack.c.l.b16 %v6878
    %v7398 = vunpack.c.l.b16 %v6879
    %v7399 = vunpack.c.l.b16 %v6880
    %v7400 = vunpack.c.l.b16 %v6881
    %v7401 = vunpack.c.l.b16 %v6882
    %v7402 = vunpack.c.l.b16 %v6883
    %v7403 = vunpack.c.l.b16 %v6884
    %v7404 = vunpack.c.l.b16 %v6885
    %v7405 = vunpack.c.l.b16 %v6886
    %v7406 = vunpack.c.l.b16 %v6887
    %v7407 = vunpack.c.l.b16 %v6888
    %v7408 = vunpack.c.l.b16 %v6889
    %v7409 = vunpack.c.l.b16 %v6890
    %v7410 = vunpack.c.l.b16 %v6891
    %v7411 = vunpack.c.l.b16 %v6892
    %v7412 = vunpack.c.l.b16 %v6893
    %v7413 = vunpack.c.l.b16 %v6894
    %v7414 = vunpack.c.l.b16 %v6895
    %v7415 = vunpack.c.l.b16 %v6896
    %v7416 = vunpack.c.l.b16 %v6897
    %v7417 = vunpack.c.l.b16 %v6898
    %v7418 = vunpack.c.l.b16 %v6899
    %v7419 = vunpack.c.l.b16 %v6900
    %v7420 = vunpack.c.l.b16 %v6901
    %v7421 = vunpack.c.l.b16 %v6902
    %v7422 = vunpack.c.l.b16 %v6903
    %v7423 = vunpack.c.l.b16 %v6904
    %v7424 = vunpack.c.l.b16 %v6905
    %v7425 = vunpack.c.l.b16 %v6906
    %v7426 = vunpack.c.l.b16 %v6907
    %v7427 = vunpack.c.l.b16 %v6908
    %v7428 = vunpack.c.l.b16 %v6909
    %v7429 = vunpack.c.l.b16 %v6910
    %v7430 = vunpack.c.l.b16 %v6911
    %v7431 = vunpack.c.l.b16 %v6912
    %v7432 = vunpack.c.l.b16 %v6913
    %v7433 = vunpack.c.l.b16 %v6914
    %v7434 = vunpack.c.l.b16 %v6915
    %v7435 = vunpack.c.l.b16 %v6916
    %v7436 = vunpack.c.l.b16 %v6917
    %v7437 = vunpack.c.l.b16 %v6918
    %v7438 = vunpack.c.l.b16 %v6919
    %v7439 = vunpack.c.l.b16 %v6920
    %v7440 = vunpack.c.l.b16 %v6921
    %v7441 = vunpack.c.l.b16 %v6922
    %v7442 = vunpack.c.l.b16 %v6923
    %v7443 = vunpack.c.l.b16 %v6924
    %v7444 = vunpack.c.l.b16 %v6925
    %v7445 = vunpack.c.l.b16 %v6926
    %v7446 = vunpack.c.l.b16 %v6927
    %v7447 = vunpack.c.l.b16 %v6928
    %v7448 = vunpack.c.l.b16 %v6929
    %v7449 = vunpack.c.l.b16 %v6930
    %v7450 = vunpack.c.l.b16 %v6931
    %v7451 = vunpack.c.l.b16 %v6932
    %v7452 = vunpack.c.l.b16 %v6933
    %v7453 = vunpack.c.l.b16 %v6934
    %v7454 = vunpack.c.l.b16 %v6935
    %v7455 = vunpack.c.l.b16 %v6936
    %v7456 = vunpack.c.l.b16 %v6937
    %v7457 = vunpack.c.l.b16 %v6938
    %v7458 = vunpack.c.l.b16 %v6939
    %v7459 = vunpack.c.l.b16 %v6940
    %v7460 = vunpack.c.l.b16 %v6941
    %v7461 = vunpack.c.l.b16 %v6942
    %v7462 = vunpack.c.l.b16 %v6943
    %v7463 = vunpack.c.l.b16 %v6944
    %v7464 = vunpack.c.l.b16 %v6945
    %v7465 = vunpack.c.l.b16 %v6946
    %v7466 = vunpack.c.l.b16 %v6947
    %v7467 = vunpack.c.l.b16 %v6948
    %v7468 = vunpack.c.l.b16 %v6949
    %v7469 = vunpack.c.l.b16 %v6950
    %v7470 = vunpack.c.l.b16 %v6951
    %v7471 = vunpack.c.l.b16 %v6952
    %v7472 = vunpack.c.l.b16 %v6953
    %v7473 = vunpack.c.l.b16 %v6954
    %v7474 = vunpack.c.l.b16 %v6955
    %v7475 = vunpack.c.l.b16 %v6956
    %v7476 = vunpack.c.l.b16 %v6957
    %v7477 = vunpack.c.l.b16 %v6958
    %v7478 = vunpack.c.l.b16 %v6959
    %v7479 = vunpack.c.l.b16 %v6960
    %v7480 = vunpack.c.l.b16 %v6961
    %v7481 = vunpack.c.l.b16 %v6962
    %v7482 = vunpack.c.l.b16 %v6963
    %v7483 = vunpack.c.l.b16 %v6964
    %v7484 = vunpack.c.l.b16 %v6965
    %v7485 = vunpack.c.l.b16 %v6966
    %v7486 = vunpack.c.l.b16 %v6967
    %v7487 = vunpack.c.l.b16 %v6968
    %v7488 = vunpack.c.l.b16 %v6969
    %v7489 = vunpack.c.l.b16 %v6970
    %v7490 = vunpack.c.l.b16 %v6971
    %v7491 = vunpack.c.l.b16 %v6972
    %v7492 = vunpack.c.l.b16 %v6973
    %v7493 = vunpack.c.l.b16 %v6974
    %v7494 = vunpack.c.l.b16 %v6975
    %v7495 = vunpack.c.l.b16 %v6976
    %v7496 = vunpack.c.l.b16 %v6977
    %v7497 = vunpack.c.l.b16 %v6978
    %v7498 = vunpack.c.l.b16 %v6979
    %v7499 = vunpack.c.l.b16 %v6980
    %v7500 = vunpack.c.l.b16 %v6981
    %v7501 = vunpack.c.l.b16 %v6982
    %v7502 = vunpack.c.l.b16 %v6983
    %v7503 = vunpack.c.l.b16 %v6984
    %v7504 = vunpack.c.l.b16 %v6985
    %v7505 = vunpack.c.l.b16 %v6986
    %v7506 = vunpack.c.l.b16 %v6987
    %v7507 = vunpack.c.l.b16 %v6988
    %v7508 = vunpack.c.l.b16 %v6989
    %v7509 = vunpack.c.l.b16 %v6990
    %v7510 = vunpack.c.l.b16 %v6991
    %v7511 = vunpack.c.l.b16 %v6992
    %v7512 = vunpack.c.l.b16 %v6993
    %v7513 = vunpack.c.l.b16 %v6994
    %v7514 = vunpack.c.l.b16 %v6995
    %v7515 = vunpack.c.l.b16 %v6996
    %v7516 = vunpack.c.l.b16 %v6997
    %v7517 = vunpack.c.l.b16 %v6998
    %v7518 = vunpack.c.l.b16 %v6999
    %v7519 = vunpack.c.l.b16 %v7000
    %v7520 = vunpack.c.l.b16 %v7001
    %v7521 = vunpack.c.l.b16 %v7002
    %v7522 = vunpack.c.l.b16 %v7003
    %v7523 = vunpack.c.l.b16 %v7004
    %v7524 = vunpack.c.l.b16 %v7005
    %v7525 = vunpack.c.l.b16 %v7006
    %v7526 = vunpack.c.l.b16 %v7007
    %v7527 = vunpack.c.l.b16 %v7008
    %v7528 = vunpack.c.l.b16 %v7009
    %v7529 = vunpack.c.l.b16 %v7010
    %v7530 = vunpack.c.l.b16 %v7011
    %v7531 = vunpack.c.l.b16 %v7012
    %v7532 = vunpack.c.l.b16 %v7013
    %v7533 = vunpack.c.l.b16 %v7014
    %v7534 = vunpack.c.l.b16 %v7015
    %v7535 = vunpack.c.l.b16 %v7016
    %v7536 = vunpack.c.l.b16 %v7017
    %v7537 = vunpack.c.l.b16 %v7018
    %v7538 = vunpack.c.l.b16 %v7019
    %v7539 = vunpack.c.l.b16 %v7020
    %v7540 = vunpack.c.l.b16 %v7021
    %v7541 = vunpack.c.l.b16 %v7022
    %v7542 = vunpack.c.l.b16 %v7023
    %v7543 = vunpack.c.l.b16 %v7024
    %v7544 = vunpack.c.l.b16 %v7025
    %v7545 = vunpack.c.l.b16 %v7026
    %v7546 = vunpack.c.l.b16 %v7027
    %v7547 = vunpack.c.l.b16 %v7028
    %v7548 = vunpack.c.l.b16 %v7029
    %v7549 = vunpack.c.l.b16 %v7030
    %v7550 = vunpack.c.l.b16 %v7031
    %v7551 = vunpack.c.l.b16 %v7032
    %v7552 = vunpack.c.l.b16 %v7033
    %v7553 = vunpack.c.l.b16 %v7034
    %v7554 = vunpack.c.l.b16 %v7035
    %v7555 = vunpack.c.l.b16 %v7036
    %v7556 = vunpack.c.l.b16 %v7037
    %v7557 = vunpack.c.l.b16 %v7038
    %v7558 = vunpack.c.l.b16 %v7039
    %v7559 = vunpack.c.l.b16 %v7040
    %v7560 = vunpack.c.l.b16 %v7041
    %v7561 = vunpack.c.l.b16 %v7042
    %v7562 = vunpack.c.l.b16 %v7043
    %v7563 = vunpack.c.l.b16 %v7044
    %v7564 = vunpack.c.l.b16 %v7045
    %v7565 = vpack.c.b16 %v7310, %v7309
    %v7566 = vpack.c.b16 %v7312, %v7311
    %v7567 = vpack.c.b16 %v7314, %v7313
    %v7568 = vpack.c.b16 %v7316, %v7315
    %v7569 = vpack.c.b16 %v7318, %v7317
    %v7570 = vpack.c.b16 %v7320, %v7319
    %v7571 = vpack.c.b16 %v7322, %v7321
    %v7572 = vpack.c.b16 %v7324, %v7323
    %v7573 = vpack.c.b16 %v7326, %v7325
    %v7574 = vpack.c.b16 %v7328, %v7327
    %v7575 = vpack.c.b16 %v7330, %v7329
    %v7576 = vpack.c.b16 %v7332, %v7331
    %v7577 = vpack.c.b16 %v7334, %v7333
    %v7578 = vpack.c.b16 %v7336, %v7335
    %v7579 = vpack.c.b16 %v7338, %v7337
    %v7580 = vpack.c.b16 %v7340, %v7339
    %v7581 = vpack.c.b16 %v7342, %v7341
    %v7582 = vpack.c.b16 %v7344, %v7343
    %v7583 = vpack.c.b16 %v7346, %v7345
    %v7584 = vpack.c.b16 %v7348, %v7347
    %v7585 = vpack.c.b16 %v7350, %v7349
    %v7586 = vpack.c.b16 %v7352, %v7351
    %v7587 = vpack.c.b16 %v7354, %v7353
    %v7588 = vpack.c.b16 %v7356, %v7355
    %v7589 = vpack.c.b16 %v7358, %v7357
    %v7590 = vpack.c.b16 %v7360, %v7359
    %v7591 = vpack.c.b16 %v7362, %v7361
    %v7592 = vpack.c.b16 %v7364, %v7363
    %v7593 = vpack.c.b16 %v7366, %v7365
    %v7594 = vpack.c.b16 %v7368, %v7367
    %v7595 = vpack.c.b16 %v7370, %v7369
    %v7596 = vpack.c.b16 %v7372, %v7371
    %v7597 = vpack.c.b16 %v7374, %v7373
    %v7598 = vpack.c.b16 %v7376, %v7375
    %v7599 = vpack.c.b16 %v7378, %v7377
    %v7600 = vpack.c.b16 %v7380, %v7379
    %v7601 = vpack.c.b16 %v7382, %v7381
    %v7602 = vpack.c.b16 %v7384, %v7383
    %v7603 = vpack.c.b16 %v7386, %v7385
    %v7604 = vpack.c.b16 %v7388, %v7387
    %v7605 = vpack.c.b16 %v7390, %v7389
    %v7606 = vpack.c.b16 %v7392, %v7391
    %v7607 = vpack.c.b16 %v7394, %v7393
    %v7608 = vpack.c.b16 %v7396, %v7395
    %v7609 = vpack.c.b16 %v7398, %v7397
    %v7610 = vpack.c.b16 %v7400, %v7399
    %v7611 = vpack.c.b16 %v7402, %v7401
    %v7612 = vpack.c.b16 %v7404, %v7403
    %v7613 = vpack.c.b16 %v7406, %v7405
    %v7614 = vpack.c.b16 %v7408, %v7407
    %v7615 = vpack.c.b16 %v7410, %v7409
    %v7616 = vpack.c.b16 %v7412, %v7411
    %v7617 = vpack.c.b16 %v7414, %v7413
    %v7618 = vpack.c.b16 %v7416, %v7415
    %v7619 = vpack.c.b16 %v7418, %v7417
    %v7620 = vpack.c.b16 %v7420, %v7419
    %v7621 = vpack.c.b16 %v7422, %v7421
    %v7622 = vpack.c.b16 %v7424, %v7423
    %v7623 = vpack.c.b16 %v7426, %v7425
    %v7624 = vpack.c.b16 %v7428, %v7427
    %v7625 = vpack.c.b16 %v7430, %v7429
    %v7626 = vpack.c.b16 %v7432, %v7431
    %v7627 = vpack.c.b16 %v7434, %v7433
    %v7628 = vpack.c.b16 %v7436, %v7435
    %v7629 = vpack.c.b16 %v7438, %v7437
    %v7630 = vpack.c.b16 %v7440, %v7439
    %v7631 = vpack.c.b16 %v7442, %v7441
    %v7632 = vpack.c.b16 %v7444, %v7443
    %v7633 = vpack.c.b16 %v7446, %v7445
    %v7634 = vpack.c.b16 %v7448, %v7447
    %v7635 = vpack.c.b16 %v7450, %v7449
    %v7636 = vpack.c.b16 %v7452, %v7451
    %v7637 = vpack.c.b16 %v7454, %v7453
    %v7638 = vpack.c.b16 %v7456, %v7455
    %v7639 = vpack.c.b16 %v7458, %v7457
    %v7640 = vpack.c.b16 %v7460, %v7459
    %v7641 = vpack.c.b16 %v7462, %v7461
    %v7642 = vpack.c.b16 %v7464, %v7463
    %v7643 = vpack.c.b16 %v7466, %v7465
    %v7644 = vpack.c.b16 %v7468, %v7467
    %v7645 = vpack.c.b16 %v7470, %v7469
    %v7646 = vpack.c.b16 %v7472, %v7471
    %v7647 = vpack.c.b16 %v7474, %v7473
    %v7648 = vpack.c.b16 %v7476, %v7475
    %v7649 = vpack.c.b16 %v7478, %v7477
    %v7650 = vpack.c.b16 %v7480, %v7479
    %v7651 = vpack.c.b16 %v7482, %v7481
    %v7652 = vpack.c.b16 %v7484, %v7483
    %v7653 = vpack.c.b16 %v7486, %v7485
    %v7654 = vpack.c.b16 %v7488, %v7487
    %v7655 = vpack.c.b16 %v7490, %v7489
    %v7656 = vpack.c.b16 %v7492, %v7491
    %v7657 = vpack.c.b16 %v7494, %v7493
    %v7658 = vpack.c.b16 %v7496, %v7495
    %v7659 = vpack.c.b16 %v7498, %v7497
    %v7660 = vpack.c.b16 %v7500, %v7499
    %v7661 = vpack.c.b16 %v7502, %v7501
    %v7662 = vpack.c.b16 %v7504, %v7503
    %v7663 = vpack.c.b16 %v7506, %v7505
    %v7664 = vpack.c.b16 %v7508, %v7507
    %v7665 = vpack.c.b16 %v7510, %v7509
    %v7666 = vpack.c.b16 %v7512, %v7511
    %v7667 = vpack.c.b16 %v7514, %v7513
    %v7668 = vpack.c.b16 %v7516, %v7515
    %v7669 = vpack.c.b16 %v7518, %v7517
    %v7670 = vpack.c.b16 %v7520, %v7519
    %v7671 = vpack.c.b16 %v7522, %v7521
    %v7672 = vpack.c.b16 %v7524, %v7523
    %v7673 = vpack.c.b16 %v7526, %v7525
    %v7674 = vpack.c.b16 %v7528, %v7527
    %v7675 = vpack.c.b16 %v7530, %v7529
    %v7676 = vpack.c.b16 %v7532, %v7531
    %v7677 = vpack.c.b16 %v7534, %v7533
    %v7678 = vpack.c.b16 %v7536, %v7535
    %v7679 = vpack.c.b16 %v7538, %v7537
    %v7680 = vpack.c.b16 %v7540, %v7539
    %v7681 = vpack.c.b16 %v7542, %v7541
    %v7682 = vpack.c.b16 %v7544, %v7543
    %v7683 = vpack.c.b16 %v7546, %v7545
    %v7684 = vpack.c.b16 %v7548, %v7547
    %v7685 = vpack.c.b16 %v7550, %v7549
    %v7686 = vpack.c.b16 %v7552, %v7551
    %v7687 = vpack.c.b16 %v7554, %v7553
    %v7688 = vpack.c.b16 %v7556, %v7555
    %v7689 = vpack.c.b16 %v7558, %v7557
    %v7690 = vpack.c.b16 %v7560, %v7559
    %v7691 = vpack.c.b16 %v7562, %v7561
    %v7692 = vpack.c.b16 %v7564, %v7563
    %7821 = vmatprep.subr.bf16.mxu0 0
    %7822 = vmatpush1.bf16.msra.mxu0 %v7565
    %7823 = vmatprep.subr.bf16.mxu0 0
    %7824 = vmatpush1.bf16.msra.mxu0 %v7566
    %7825 = vmatprep.subr.bf16.mxu0 0
    %7826 = vmatpush1.bf16.msra.mxu0 %v7567
    %7827 = vmatprep.subr.bf16.mxu0 0
    %7828 = vmatpush1.bf16.msra.mxu0 %v7568
    %7829 = vmatprep.subr.bf16.mxu0 0
    %7830 = vmatpush1.bf16.msra.mxu0 %v7569
    %7831 = vmatprep.subr.bf16.mxu0 0
    %7832 = vmatpush1.bf16.msra.mxu0 %v7570
    %7833 = vmatprep.subr.bf16.mxu0 0
    %7834 = vmatpush1.bf16.msra.mxu0 %v7571
    %7835 = vmatprep.subr.bf16.mxu0 0
    %7836 = vmatpush1.bf16.msra.mxu0 %v7572
    %7837 = vmatprep.subr.bf16.mxu0 0
    %7838 = vmatpush1.bf16.msra.mxu0 %v7573
    %7839 = vmatprep.subr.bf16.mxu0 0
    %7840 = vmatpush1.bf16.msra.mxu0 %v7574
    %7841 = vmatprep.subr.bf16.mxu0 0
    %7842 = vmatpush1.bf16.msra.mxu0 %v7575
    %7843 = vmatprep.subr.bf16.mxu0 0
    %7844 = vmatpush1.bf16.msra.mxu0 %v7576
    %7845 = vmatprep.subr.bf16.mxu0 0
    %7846 = vmatpush1.bf16.msra.mxu0 %v7577
    %7847 = vmatprep.subr.bf16.mxu0 0
    %7848 = vmatpush1.bf16.msra.mxu0 %v7578
    %7849 = vmatprep.subr.bf16.mxu0 0
    %7850 = vmatpush1.bf16.msra.mxu0 %v7579
    %7851 = vmatprep.subr.bf16.mxu0 0
    %7852 = vmatpush1.bf16.msra.mxu0 %v7580
    %7853 = vmatprep.mubr.bf16.mxu0 %v6759
    %7854 = vmatmul.mubr.bf16.gmra.mrb[0].mxu0 %v6758
    %v7855 = vpop.f32.mrb[0].mxu0
    %v7856 = vadd.f32 %v7051, %v7855
    %v7857 = vpop.f32.mrb[0].mxu0
    %v7858 = vpop.f32.mrb[0].mxu0
    %v7859 = vadd.f32 %v7051, %v7858
    %v7860 = vpop.f32.mrb[0].mxu0
    %7861 = vmatprep.mubr.bf16.mxu0 %v6775
    %7862 = vmatmul.mubr.bf16.gmra.mrb[0].mxu0 %v6774
    %v7863 = vpop.f32.mrb[0].mxu0
    %v7864 = vadd.f32 %v7051, %v7863
    %v7865 = vpop.f32.mrb[0].mxu0
    %v7866 = vpop.f32.mrb[0].mxu0
    %v7867 = vpop.f32.mrb[0].mxu0
    %7868 = vdwg.mxu0
    %7869 = vmatprep.subr.bf16.mxu0 0
    %7870 = vmatpush1.bf16.msra.mxu0 %v7581
    %7871 = vmatprep.subr.bf16.mxu0 0
    %7872 = vmatpush1.bf16.msra.mxu0 %v7582
    %7873 = vmatprep.subr.bf16.mxu0 0
    %7874 = vmatpush1.bf16.msra.mxu0 %v7583
    %7875 = vmatprep.subr.bf16.mxu0 0
    %7876 = vmatpush1.bf16.msra.mxu0 %v7584
    %7877 = vmatprep.subr.bf16.mxu0 0
    %7878 = vmatpush1.bf16.msra.mxu0 %v7585
    %7879 = vmatprep.subr.bf16.mxu0 0
    %7880 = vmatpush1.bf16.msra.mxu0 %v7586
    %7881 = vmatprep.subr.bf16.mxu0 0
    %7882 = vmatpush1.bf16.msra.mxu0 %v7587
    %7883 = vmatprep.subr.bf16.mxu0 0
    %7884 = vmatpush1.bf16.msra.mxu0 %v7588
    %7885 = vmatprep.subr.bf16.mxu0 0
    %7886 = vmatpush1.bf16.msra.mxu0 %v7589
    %7887 = vmatprep.subr.bf16.mxu0 0
    %7888 = vmatpush1.bf16.msra.mxu0 %v7590
    %7889 = vmatprep.subr.bf16.mxu0 0
    %7890 = vmatpush1.bf16.msra.mxu0 %v7591
    %7891 = vmatprep.subr.bf16.mxu0 0
    %7892 = vmatpush1.bf16.msra.mxu0 %v7592
    %7893 = vmatprep.subr.bf16.mxu0 0
    %7894 = vmatpush1.bf16.msra.mxu0 %v7593
    %7895 = vmatprep.subr.bf16.mxu0 0
    %7896 = vmatpush1.bf16.msra.mxu0 %v7594
    %7897 = vmatprep.subr.bf16.mxu0 0
    %7898 = vmatpush1.bf16.msra.mxu0 %v7595
    %7899 = vmatprep.subr.bf16.mxu0 0
    %7900 = vmatpush1.bf16.msra.mxu0 %v7596
    %7901 = vmatprep.mubr.bf16.mxu0 %v6761
    %7902 = vmatmul.mubr.bf16.gmra.mrb[0].mxu0 %v6760
    %v7903 = vpop.f32.mrb[0].mxu0
    %v7904 = vadd.f32 %v7856, %v7903
    %v7905 = vpop.f32.mrb[0].mxu0
    %v7906 = vpop.f32.mrb[0].mxu0
    %v7907 = vadd.f32 %v7859, %v7906
    %v7908 = vpop.f32.mrb[0].mxu0
    %7909 = vmatprep.mubr.bf16.mxu0 %v6777
    %7910 = vmatmul.mubr.bf16.gmra.mrb[0].mxu0 %v6776
    %v7911 = vpop.f32.mrb[0].mxu0
    %v7912 = vadd.f32 %v7864, %v7911
    %v7913 = vpop.f32.mrb[0].mxu0
    %v7914 = vpop.f32.mrb[0].mxu0
    %v7915 = vpop.f32.mrb[0].mxu0
    %7916 = vdwg.mxu0
    %7917 = vmatprep.subr.bf16.mxu0 0
    %7918 = vmatpush1.bf16.msra.mxu0 %v7597
    %7919 = vmatprep.subr.bf16.mxu0 0
    %7920 = vmatpush1.bf16.msra.mxu0 %v7598
    %7921 = vmatprep.subr.bf16.mxu0 0
    %7922 = vmatpush1.bf16.msra.mxu0 %v7599
    %7923 = vmatprep.subr.bf16.mxu0 0
    %7924 = vmatpush1.bf16.msra.mxu0 %v7600
    %7925 = vmatprep.subr.bf16.mxu0 0
    %7926 = vmatpush1.bf16.msra.mxu0 %v7601
    %7927 = vmatprep.subr.bf16.mxu0 0
    %7928 = vmatpush1.bf16.msra.mxu0 %v7602
    %7929 = vmatprep.subr.bf16.mxu0 0
    %7930 = vmatpush1.bf16.msra.mxu0 %v7603
    %7931 = vmatprep.subr.bf16.mxu0 0
    %7932 = vmatpush1.bf16.msra.mxu0 %v7604
    %7933 = vmatprep.subr.bf16.mxu0 0
    %7934 = vmatpush1.bf16.msra.mxu0 %v7605
    %7935 = vmatprep.subr.bf16.mxu0 0
    %7936 = vmatpush1.bf16.msra.mxu0 %v7606
    %7937 = vmatprep.subr.bf16.mxu0 0
    %7938 = vmatpush1.bf16.msra.mxu0 %v7607
    %7939 = vmatprep.subr.bf16.mxu0 0
    %7940 = vmatpush1.bf16.msra.mxu0 %v7608
    %7941 = vmatprep.subr.bf16.mxu0 0
    %7942 = vmatpush1.bf16.msra.mxu0 %v7609
    %7943 = vmatprep.subr.bf16.mxu0 0
    %7944 = vmatpush1.bf16.msra.mxu0 %v7610
    %7945 = vmatprep.subr.bf16.mxu0 0
    %7946 = vmatpush1.bf16.msra.mxu0 %v7611
    %7947 = vmatprep.subr.bf16.mxu0 0
    %7948 = vmatpush1.bf16.msra.mxu0 %v7612
    %7949 = vmatprep.mubr.bf16.mxu0 %v6763
    %7950 = vmatmul.mubr.bf16.gmra.mrb[0].mxu0 %v6762
    %v7951 = vpop.f32.mrb[0].mxu0
    %v7952 = vadd.f32 %v7904, %v7951
    %v7953 = vpop.f32.mrb[0].mxu0
    %v7954 = vpop.f32.mrb[0].mxu0
    %v7955 = vadd.f32 %v7907, %v7954
    %v7956 = vpop.f32.mrb[0].mxu0
    %7957 = vmatprep.mubr.bf16.mxu0 %v6779
    %7958 = vmatmul.mubr.bf16.gmra.mrb[0].mxu0 %v6778
    %v7959 = vpop.f32.mrb[0].mxu0
    %v7960 = vadd.f32 %v7912, %v7959
    %v7961 = vpop.f32.mrb[0].mxu0
    %v7962 = vpop.f32.mrb[0].mxu0
    %v7963 = vpop.f32.mrb[0].mxu0
    %7964 = vdwg.mxu0
    %7965 = vmatprep.subr.bf16.mxu0 0
    %7966 = vmatpush1.bf16.msra.mxu0 %v7613
    %7967 = vmatprep.subr.bf16.mxu0 0
    %7968 = vmatpush1.bf16.msra.mxu0 %v7614
    %7969 = vmatprep.subr.bf16.mxu0 0
    %7970 = vmatpush1.bf16.msra.mxu0 %v7615
    %7971 = vmatprep.subr.bf16.mxu0 0
    %7972 = vmatpush1.bf16.msra.mxu0 %v7616
    %7973 = vmatprep.subr.bf16.mxu0 0
    %7974 = vmatpush1.bf16.msra.mxu0 %v7617
    %7975 = vmatprep.subr.bf16.mxu0 0
    %7976 = vmatpush1.bf16.msra.mxu0 %v7618
    %7977 = vmatprep.subr.bf16.mxu0 0
    %7978 = vmatpush1.bf16.msra.mxu0 %v7619
    %7979 = vmatprep.subr.bf16.mxu0 0
    %7980 = vmatpush1.bf16.msra.mxu0 %v7620
    %7981 = vmatprep.subr.bf16.mxu0 0
    %7982 = vmatpush1.bf16.msra.mxu0 %v7621
    %7983 = vmatprep.subr.bf16.mxu0 0
    %7984 = vmatpush1.bf16.msra.mxu0 %v7622
    %7985 = vmatprep.subr.bf16.mxu0 0
    %7986 = vmatpush1.bf16.msra.mxu0 %v7623
    %7987 = vmatprep.subr.bf16.mxu0 0
    %7988 = vmatpush1.bf16.msra.mxu0 %v7624
    %7989 = vmatprep.subr.bf16.mxu0 0
    %7990 = vmatpush1.bf16.msra.mxu0 %v7625
    %7991 = vmatprep.subr.bf16.mxu0 0
    %7992 = vmatpush1.bf16.msra.mxu0 %v7626
    %7993 = vmatprep.subr.bf16.mxu0 0
    %7994 = vmatpush1.bf16.msra.mxu0 %v7627
    %7995 = vmatprep.subr.bf16.mxu0 0
    %7996 = vmatpush1.bf16.msra.mxu0 %v7628
    %7997 = vmatprep.mubr.bf16.mxu0 %v6765
    %7998 = vmatmul.mubr.bf16.gmra.mrb[0].mxu0 %v6764
    %v7999 = vpop.f32.mrb[0].mxu0
    %v8000 = vadd.f32 %v7952, %v7999
    %v8001 = vpop.f32.mrb[0].mxu0
    %v8002 = vpop.f32.mrb[0].mxu0
    %v8003 = vadd.f32 %v7955, %v8002
    %v8004 = vpop.f32.mrb[0].mxu0
    %8005 = vmatprep.mubr.bf16.mxu0 %v6781
    %8006 = vmatmul.mubr.bf16.gmra.mrb[0].mxu0 %v6780
    %v8007 = vpop.f32.mrb[0].mxu0
    %v8008 = vadd.f32 %v7960, %v8007
    %v8009 = vpop.f32.mrb[0].mxu0
    %v8010 = vpop.f32.mrb[0].mxu0
    %v8011 = vpop.f32.mrb[0].mxu0
    %8012 = vdwg.mxu0
    %8013 = vmatprep.subr.bf16.mxu0 0
    %8014 = vmatpush1.bf16.msra.mxu0 %v7629
    %8015 = vmatprep.subr.bf16.mxu0 0
    %8016 = vmatpush1.bf16.msra.mxu0 %v7630
    %8017 = vmatprep.subr.bf16.mxu0 0
    %8018 = vmatpush1.bf16.msra.mxu0 %v7631
    %8019 = vmatprep.subr.bf16.mxu0 0
    %8020 = vmatpush1.bf16.msra.mxu0 %v7632
    %8021 = vmatprep.subr.bf16.mxu0 0
    %8022 = vmatpush1.bf16.msra.mxu0 %v7633
    %8023 = vmatprep.subr.bf16.mxu0 0
    %8024 = vmatpush1.bf16.msra.mxu0 %v7634
    %8025 = vmatprep.subr.bf16.mxu0 0
    %8026 = vmatpush1.bf16.msra.mxu0 %v7635
    %8027 = vmatprep.subr.bf16.mxu0 0
    %8028 = vmatpush1.bf16.msra.mxu0 %v7636
    %8029 = vmatprep.subr.bf16.mxu0 0
    %8030 = vmatpush1.bf16.msra.mxu0 %v7637
    %8031 = vmatprep.subr.bf16.mxu0 0
    %8032 = vmatpush1.bf16.msra.mxu0 %v7638
    %8033 = vmatprep.subr.bf16.mxu0 0
    %8034 = vmatpush1.bf16.msra.mxu0 %v7639
    %8035 = vmatprep.subr.bf16.mxu0 0
    %8036 = vmatpush1.bf16.msra.mxu0 %v7640
    %8037 = vmatprep.subr.bf16.mxu0 0
    %8038 = vmatpush1.bf16.msra.mxu0 %v7641
    %8039 = vmatprep.subr.bf16.mxu0 0
    %8040 = vmatpush1.bf16.msra.mxu0 %v7642
    %8041 = vmatprep.subr.bf16.mxu0 0
    %8042 = vmatpush1.bf16.msra.mxu0 %v7643
    %8043 = vmatprep.subr.bf16.mxu0 0
    %8044 = vmatpush1.bf16.msra.mxu0 %v7644
    %8045 = vmatprep.mubr.bf16.mxu0 %v6767
    %8046 = vmatmul.mubr.bf16.gmra.mrb[0].mxu0 %v6766
    %v8047 = vpop.f32.mrb[0].mxu0
    %v8048 = vadd.f32 %v8000, %v8047
    %v8049 = vpop.f32.mrb[0].mxu0
    %v8050 = vpop.f32.mrb[0].mxu0
    %v8051 = vadd.f32 %v8003, %v8050
    %v8052 = vpop.f32.mrb[0].mxu0
    %8053 = vmatprep.mubr.bf16.mxu0 %v6783
    %8054 = vmatmul.mubr.bf16.gmra.mrb[0].mxu0 %v6782
    %v8055 = vpop.f32.mrb[0].mxu0
    %v8056 = vadd.f32 %v8008, %v8055
    %v8057 = vpop.f32.mrb[0].mxu0
    %v8058 = vpop.f32.mrb[0].mxu0
    %v8059 = vpop.f32.mrb[0].mxu0
    %8060 = vdwg.mxu0
    %8061 = vmatprep.subr.bf16.mxu0 0
    %8062 = vmatpush1.bf16.msra.mxu0 %v7645
    %8063 = vmatprep.subr.bf16.mxu0 0
    %8064 = vmatpush1.bf16.msra.mxu0 %v7646
    %8065 = vmatprep.subr.bf16.mxu0 0
    %8066 = vmatpush1.bf16.msra.mxu0 %v7647
    %8067 = vmatprep.subr.bf16.mxu0 0
    %8068 = vmatpush1.bf16.msra.mxu0 %v7648
    %8069 = vmatprep.subr.bf16.mxu0 0
    %8070 = vmatpush1.bf16.msra.mxu0 %v7649
    %8071 = vmatprep.subr.bf16.mxu0 0
    %8072 = vmatpush1.bf16.msra.mxu0 %v7650
    %8073 = vmatprep.subr.bf16.mxu0 0
    %8074 = vmatpush1.bf16.msra.mxu0 %v7651
    %8075 = vmatprep.subr.bf16.mxu0 0
    %8076 = vmatpush1.bf16.msra.mxu0 %v7652
    %8077 = vmatprep.subr.bf16.mxu0 0
    %8078 = vmatpush1.bf16.msra.mxu0 %v7653
    %8079 = vmatprep.subr.bf16.mxu0 0
    %8080 = vmatpush1.bf16.msra.mxu0 %v7654
    %8081 = vmatprep.subr.bf16.mxu0 0
    %8082 = vmatpush1.bf16.msra.mxu0 %v7655
    %8083 = vmatprep.subr.bf16.mxu0 0
    %8084 = vmatpush1.bf16.msra.mxu0 %v7656
    %8085 = vmatprep.subr.bf16.mxu0 0
    %8086 = vmatpush1.bf16.msra.mxu0 %v7657
    %8087 = vmatprep.subr.bf16.mxu0 0
    %8088 = vmatpush1.bf16.msra.mxu0 %v7658
    %8089 = vmatprep.subr.bf16.mxu0 0
    %8090 = vmatpush1.bf16.msra.mxu0 %v7659
    %8091 = vmatprep.subr.bf16.mxu0 0
    %8092 = vmatpush1.bf16.msra.mxu0 %v7660
    %8093 = vmatprep.mubr.bf16.mxu0 %v6769
    %8094 = vmatmul.mubr.bf16.gmra.mrb[0].mxu0 %v6768
    %v8095 = vpop.f32.mrb[0].mxu0
    %v8096 = vadd.f32 %v8048, %v8095
    %v8097 = vpop.f32.mrb[0].mxu0
    %v8098 = vpop.f32.mrb[0].mxu0
    %v8099 = vadd.f32 %v8051, %v8098
    %v8100 = vpop.f32.mrb[0].mxu0
    %8101 = vmatprep.mubr.bf16.mxu0 %v6785
    %8102 = vmatmul.mubr.bf16.gmra.mrb[0].mxu0 %v6784
    %v8103 = vpop.f32.mrb[0].mxu0
    %v8104 = vadd.f32 %v8056, %v8103
    %v8105 = vpop.f32.mrb[0].mxu0
    %v8106 = vpop.f32.mrb[0].mxu0
    %v8107 = vpop.f32.mrb[0].mxu0
    %8108 = vdwg.mxu0
    %8109 = vmatprep.subr.bf16.mxu0 0
    %8110 = vmatpush1.bf16.msra.mxu0 %v7661
    %8111 = vmatprep.subr.bf16.mxu0 0
    %8112 = vmatpush1.bf16.msra.mxu0 %v7662
    %8113 = vmatprep.subr.bf16.mxu0 0
    %8114 = vmatpush1.bf16.msra.mxu0 %v7663
    %8115 = vmatprep.subr.bf16.mxu0 0
    %8116 = vmatpush1.bf16.msra.mxu0 %v7664
    %8117 = vmatprep.subr.bf16.mxu0 0
    %8118 = vmatpush1.bf16.msra.mxu0 %v7665
    %8119 = vmatprep.subr.bf16.mxu0 0
    %8120 = vmatpush1.bf16.msra.mxu0 %v7666
    %8121 = vmatprep.subr.bf16.mxu0 0
    %8122 = vmatpush1.bf16.msra.mxu0 %v7667
    %8123 = vmatprep.subr.bf16.mxu0 0
    %8124 = vmatpush1.bf16.msra.mxu0 %v7668
    %8125 = vmatprep.subr.bf16.mxu0 0
    %8126 = vmatpush1.bf16.msra.mxu0 %v7669
    %8127 = vmatprep.subr.bf16.mxu0 0
    %8128 = vmatpush1.bf16.msra.mxu0 %v7670
    %8129 = vmatprep.subr.bf16.mxu0 0
    %8130 = vmatpush1.bf16.msra.mxu0 %v7671
    %8131 = vmatprep.subr.bf16.mxu0 0
    %8132 = vmatpush1.bf16.msra.mxu0 %v7672
    %8133 = vmatprep.subr.bf16.mxu0 0
    %8134 = vmatpush1.bf16.msra.mxu0 %v7673
    %8135 = vmatprep.subr.bf16.mxu0 0
    %8136 = vmatpush1.bf16.msra.mxu0 %v7674
    %8137 = vmatprep.subr.bf16.mxu0 0
    %8138 = vmatpush1.bf16.msra.mxu0 %v7675
    %8139 = vmatprep.subr.bf16.mxu0 0
    %8140 = vmatpush1.bf16.msra.mxu0 %v7676
    %8141 = vmatprep.mubr.bf16.mxu0 %v6771
    %8142 = vmatmul.mubr.bf16.gmra.mrb[0].mxu0 %v6770
    %v8143 = vpop.f32.mrb[0].mxu0
    %v8144 = vadd.f32 %v8096, %v8143
    %v8145 = vpop.f32.mrb[0].mxu0
    %v8146 = vpop.f32.mrb[0].mxu0
    %v8147 = vadd.f32 %v8099, %v8146
    %v8148 = vpop.f32.mrb[0].mxu0
    %8149 = vmatprep.mubr.bf16.mxu0 %v6787
    %8150 = vmatmul.mubr.bf16.gmra.mrb[0].mxu0 %v6786
    %v8151 = vpop.f32.mrb[0].mxu0
    %v8152 = vadd.f32 %v8104, %v8151
    %v8153 = vpop.f32.mrb[0].mxu0
    %v8154 = vpop.f32.mrb[0].mxu0
    %v8155 = vpop.f32.mrb[0].mxu0
    %8156 = vdwg.mxu0
    %8157 = vmatprep.subr.bf16.mxu0 0
    %8158 = vmatpush1.bf16.msra.mxu0 %v7677
    %8159 = vmatprep.subr.bf16.mxu0 0
    %8160 = vmatpush1.bf16.msra.mxu0 %v7678
    %8161 = vmatprep.subr.bf16.mxu0 0
    %8162 = vmatpush1.bf16.msra.mxu0 %v7679
    %8163 = vmatprep.subr.bf16.mxu0 0
    %8164 = vmatpush1.bf16.msra.mxu0 %v7680
    %8165 = vmatprep.subr.bf16.mxu0 0
    %8166 = vmatpush1.bf16.msra.mxu0 %v7681
    %8167 = vmatprep.subr.bf16.mxu0 0
    %8168 = vmatpush1.bf16.msra.mxu0 %v7682
    %8169 = vmatprep.subr.bf16.mxu0 0
    %8170 = vmatpush1.bf16.msra.mxu0 %v7683
    %8171 = vmatprep.subr.bf16.mxu0 0
    %8172 = vmatpush1.bf16.msra.mxu0 %v7684
    %8173 = vmatprep.subr.bf16.mxu0 0
    %8174 = vmatpush1.bf16.msra.mxu0 %v7685
    %8175 = vmatprep.subr.bf16.mxu0 0
    %8176 = vmatpush1.bf16.msra.mxu0 %v7686
    %8177 = vmatprep.subr.bf16.mxu0 0
    %8178 = vmatpush1.bf16.msra.mxu0 %v7687
    %8179 = vmatprep.subr.bf16.mxu0 0
    %8180 = vmatpush1.bf16.msra.mxu0 %v7688
    %8181 = vmatprep.subr.bf16.mxu0 0
    %8182 = vmatpush1.bf16.msra.mxu0 %v7689
    %8183 = vmatprep.subr.bf16.mxu0 0
    %8184 = vmatpush1.bf16.msra.mxu0 %v7690
    %8185 = vmatprep.subr.bf16.mxu0 0
    %8186 = vmatpush1.bf16.msra.mxu0 %v7691
    %8187 = vmatprep.subr.bf16.mxu0 0
    %8188 = vmatpush1.bf16.msra.mxu0 %v7692
    %8189 = vmatprep.mubr.bf16.mxu0 %v6773
    %8190 = vmatmul.mubr.bf16.gmra.mrb[0].mxu0 %v6772
    %v8191 = vpop.f32.mrb[0].mxu0
    %v8192 = vadd.f32 %v8144, %v8191
    %v8193 = vpop.f32.mrb[0].mxu0
    %v8194 = vpop.f32.mrb[0].mxu0
    %v8195 = vadd.f32 %v8147, %v8194
    %v8196 = vpop.f32.mrb[0].mxu0
    %8197 = vmatprep.mubr.bf16.mxu0 %v6789
    %8198 = vmatmul.mubr.bf16.gmra.mrb[0].mxu0 %v6788
    %v8199 = vpop.f32.mrb[0].mxu0
    %v8200 = vadd.f32 %v8152, %v8199
    %v8201 = vpop.f32.mrb[0].mxu0
    %v8202 = vpop.f32.mrb[0].mxu0
    %v8203 = vpop.f32.mrb[0].mxu0
    %8204 = vdwg.mxu0
    %v8205 = vadd.f32 %v5445, %v8192
    %v8206 = vadd.f32 %v5446, %v8195
    %v8207 = vadd.f32 %v5447, %v8200
    %v8208 = vld [vmem:[#allocation31] sm:$0x1]
    %v8209 = vld [vmem:[#allocation32] sm:$0x1]
    %8210 = vadd.xlane.f32.xlu0 %v8205
    %v8211 = vpop.xlane.xlu0 %8210
    %8212 = vadd.xlane.f32.xlu0 %v8206
    %v8213 = vpop.xlane.xlu0 %8212
    %v8214 = vsel %vm5395, %v8207, 0.0
    %8215 = vadd.xlane.f32.xlu0 %v8214
    %v8216 = vpop.xlane.xlu0 %8215
    %v8217 = vmul.f32 %v8211, 0.010416667
    %v8218 = vmul.f32 %v8213, 0.010416667
    %v8219 = vmul.f32 %v8216, 0.010416667
    %v8220 = vsub.f32 %v8205, %v8217
    %v8221 = vsub.f32 %v8206, %v8218
    %v8222 = vsub.f32 %v8207, %v8219
    %v8223 = vmul.f32 %v8220, %v1447
    %v8224 = vmul.f32 %v8221, %v1447
    %v8225 = vmul.f32 %v8222, %v1447
    %v8226 = vmul.f32 %v8223, %v8223
    %v8227 = vmul.f32 %v8224, %v8224
    %v8228 = vmul.f32 %v8225, %v8225
    %8229 = vadd.xlane.f32.xlu0 %v8226
    %v8230 = vpop.xlane.xlu0 %8229
    %8231 = vadd.xlane.f32.xlu0 %v8227
    %v8232 = vpop.xlane.xlu0 %8231
    %v8233 = vsel %vm5395, %v8228, 0.0
    %8234 = vadd.xlane.f32.xlu0 %v8233
    %v8235 = vpop.xlane.xlu0 %8234
    %v8236 = vmul.f32 %v8230, 0.010416667
    %v8237 = vmul.f32 %v8232, 0.010416667
    %v8238 = vmul.f32 %v8235, 0.010416667
    %v8239 = vadd.f32 %v8236, 1e-05
    %v8240 = vadd.f32 %v8237, 1e-05
    %v8241 = vadd.f32 %v8238, 1e-05
    %v8242 = vrsqrt.pop %v8239
    %v8243 = vrsqrt.pop %v8240
    %v8244 = vrsqrt.pop %v8241
    %v8245 = vmul.f32 %v8220, %v8242
    %v8246 = vmul.f32 %v8221, %v8243
    %v8247 = vmul.f32 %v8222, %v8244
    %v8249 = vlaneseq
    %v8250 = vshrl.u32 %v8249, 7
    %v8251 = vsub.s32 0, %v8250
    %v8252 = vrot.slane %v8208, %v8251
    %v8254 = vmul.f32 %v8245, %v8252
    %v8255 = vmul.f32 %v8246, %v8252
    %v8256 = vmul.f32 %v8247, %v8252
    %v8258 = vlaneseq
    %v8259 = vshrl.u32 %v8258, 7
    %v8260 = vsub.s32 0, %v8259
    %v8261 = vrot.slane %v8209, %v8260
    %v8263 = vadd.f32 %v8254, %v8261
    %v8264 = vadd.f32 %v8255, %v8261
    %v8265 = vadd.f32 %v8256, %v8261
    %v8266 = vld [vmem:[%s9] sm:$0x3]
    %vm8267 = vcmask 58368
    %v8268 = vsel %vm8267, %v8266, 0.0
    %8269 = vadd.xlane.f32.xlu0 %v8268
    %v8270 = vpop.xlane.xlu0 %8269
    %v8271 = vcvt.f32.s32.to.zero.pseudo %v8270
    %v8272 = vsub.s32 %v8271, 1
    %vm8273 = vcmp.gt.s32.totalorder %v8272, 0
    %v8274 = vsel %vm8273, %v8272, 0
    %v8275 = vlaneseq
    %v8276 = vshrl.u32 %v8275, 7
    %v8277 = vmul.u32 %v8276, 8
    %v8278 = vadd.s32 %v8277, %v8274
    %vm8279 = vcmp.eq.s32.totalorder %v1444, %v8278
    %v8280 = vsel %vm8279, 1, 0
    %v8281 = vcvt.s32.f32 %v8280
    %v8283 = vsel %vm748, %v8281, 0
    %8285 = vmatprep.subr.mxu0 0.0
    %8286 = vmatpush1.msra.mxu0 %v4134
    %8287 = vmatprep.subr.mxu0 0.0
    %8288 = vmatpush1.msra.mxu0 %v4135
    %8289 = vmatprep.subr.mxu0 0.0
    %8290 = vmatpush1.msra.mxu0 0.0
    %8291 = vmatprep.subr.mxu0 0.0
    %8292 = vmatpush1.msra.mxu0 0.0
    %8293 = vmatprep.subr.mxu0 0.0
    %8294 = vmatpush1.msra.mxu0 0.0
    %8295 = vmatprep.subr.mxu0 0.0
    %8296 = vmatpush1.msra.mxu0 0.0
    %8297 = vmatprep.subr.mxu0 0.0
    %8298 = vmatpush1.msra.mxu0 0.0
    %8299 = vmatprep.subr.mxu0 0.0
    %8300 = vmatpush1.msra.mxu0 0.0
    %8301 = vmatprep.subr.mxu0 0.0
    %8302 = vmatpush1.msra.mxu0 0.0
    %8303 = vmatprep.subr.mxu0 0.0
    %8304 = vmatpush1.msra.mxu0 0.0
    %8305 = vmatprep.subr.mxu0 0.0
    %8306 = vmatpush1.msra.mxu0 0.0
    %8307 = vmatprep.subr.mxu0 0.0
    %8308 = vmatpush1.msra.mxu0 0.0
    %8309 = vmatprep.subr.mxu0 0.0
    %8310 = vmatpush1.msra.mxu0 0.0
    %8311 = vmatprep.subr.mxu0 0.0
    %8312 = vmatpush1.msra.mxu0 0.0
    %8313 = vmatprep.subr.mxu0 0.0
    %8314 = vmatpush1.msra.mxu0 0.0
    %8315 = vmatprep.subr.mxu0 0.0
    %8316 = vmatpush1.msra.mxu0 0.0
    %8317 = vmatprep.subr.mxu0 0.0
    %8318 = vmatpush1.msra.mxu0 0.0
    %8319 = vmatprep.subr.mxu0 0.0
    %8320 = vmatpush1.msra.mxu0 0.0
    %8321 = vmatprep.subr.mxu0 0.0
    %8322 = vmatpush1.msra.mxu0 0.0
    %8323 = vmatprep.subr.mxu0 0.0
    %8324 = vmatpush1.msra.mxu0 0.0
    %8325 = vmatprep.subr.mxu0 0.0
    %8326 = vmatpush1.msra.mxu0 0.0
    %8327 = vmatprep.subr.mxu0 0.0
    %8328 = vmatpush1.msra.mxu0 0.0
    %8329 = vmatprep.subr.mxu0 0.0
    %8330 = vmatpush1.msra.mxu0 0.0
    %8331 = vmatprep.subr.mxu0 0.0
    %8332 = vmatpush1.msra.mxu0 0.0
    %8333 = vmatprep.subr.mxu0 0.0
    %8334 = vmatpush1.msra.mxu0 0.0
    %8335 = vmatprep.subr.mxu0 0.0
    %8336 = vmatpush1.msra.mxu0 0.0
    %8337 = vmatprep.subr.mxu0 0.0
    %8338 = vmatpush1.msra.mxu0 0.0
    %8339 = vmatprep.subr.mxu0 0.0
    %8340 = vmatpush1.msra.mxu0 0.0
    %8341 = vmatprep.subr.mxu0 0.0
    %8342 = vmatpush1.msra.mxu0 0.0
    %8343 = vmatprep.subr.mxu0 0.0
    %8344 = vmatpush1.msra.mxu0 0.0
    %8345 = vmatprep.subr.mxu0 0.0
    %8346 = vmatpush1.msra.mxu0 0.0
    %8347 = vmatprep.subr.mxu0 0.0
    %8348 = vmatpush1.msra.mxu0 0.0
    %8349 = vmatprep.mubr.f32.mxu0 0.0
    %8350 = vmatmul.mubr.f32.gmra.mrb[0].mxu0 %v8283
    %v8351 = vpop.f32.mrb[0].mxu0
    %v8352 = vadd.f32 0.0, %v8351
    %v8353 = vpop.f32.mrb[0].mxu0
    %8354 = vdwg.mxu0
    %v8355 = vld [vmem:[%s11] sm:$0x3]
    %vm8356 = vcmask 66560
    %v8357 = vsel %vm8356, %v8355, 0.0
    %8358 = vadd.xlane.f32.xlu0 %v8357
    %v8359 = vpop.xlane.xlu0 %8358
    %v8360 = vcvt.f32.s32.to.zero.pseudo %v8359
    %v8361 = vsub.s32 %v8360, 1
    %vm8362 = vcmp.gt.s32.totalorder %v8361, 0
    %v8363 = vsel %vm8362, %v8361, 0
    %v8364 = vmul.u32 %v8276, 9
    %v8365 = vadd.s32 %v8364, %v8363
    %vm8366 = vcmp.eq.s32.totalorder %v1444, %v8365
    %v8367 = vsel %vm8366, 1, 0
    %v8368 = vcvt.s32.f32 %v8367
    %v8370 = vsel %vm4486, %v8368, 0
    %v8373 = vsel %vm5395, %v8265, 0
    %8375 = vmatprep.subr.mxu0 0.0
    %8376 = vmatpush1.msra.mxu0 %v8263
    %8377 = vmatprep.subr.mxu0 0.0
    %8378 = vmatpush1.msra.mxu0 %v8264
    %8379 = vmatprep.subr.mxu0 0.0
    %8380 = vmatpush1.msra.mxu0 %v8373
    %8381 = vmatprep.subr.mxu0 0.0
    %8382 = vmatpush1.msra.mxu0 0.0
    %8383 = vmatprep.subr.mxu0 0.0
    %8384 = vmatpush1.msra.mxu0 0.0
    %8385 = vmatprep.subr.mxu0 0.0
    %8386 = vmatpush1.msra.mxu0 0.0
    %8387 = vmatprep.subr.mxu0 0.0
    %8388 = vmatpush1.msra.mxu0 0.0
    %8389 = vmatprep.subr.mxu0 0.0
    %8390 = vmatpush1.msra.mxu0 0.0
    %8391 = vmatprep.subr.mxu0 0.0
    %8392 = vmatpush1.msra.mxu0 0.0
    %8393 = vmatprep.subr.mxu0 0.0
    %8394 = vmatpush1.msra.mxu0 0.0
    %8395 = vmatprep.subr.mxu0 0.0
    %8396 = vmatpush1.msra.mxu0 0.0
    %8397 = vmatprep.subr.mxu0 0.0
    %8398 = vmatpush1.msra.mxu0 0.0
    %8399 = vmatprep.subr.mxu0 0.0
    %8400 = vmatpush1.msra.mxu0 0.0
    %8401 = vmatprep.subr.mxu0 0.0
    %8402 = vmatpush1.msra.mxu0 0.0
    %8403 = vmatprep.subr.mxu0 0.0
    %8404 = vmatpush1.msra.mxu0 0.0
    %8405 = vmatprep.subr.mxu0 0.0
    %8406 = vmatpush1.msra.mxu0 0.0
    %8407 = vmatprep.subr.mxu0 0.0
    %8408 = vmatpush1.msra.mxu0 0.0
    %8409 = vmatprep.subr.mxu0 0.0
    %8410 = vmatpush1.msra.mxu0 0.0
    %8411 = vmatprep.subr.mxu0 0.0
    %8412 = vmatpush1.msra.mxu0 0.0
    %8413 = vmatprep.subr.mxu0 0.0
    %8414 = vmatpush1.msra.mxu0 0.0
    %8415 = vmatprep.subr.mxu0 0.0
    %8416 = vmatpush1.msra.mxu0 0.0
    %8417 = vmatprep.subr.mxu0 0.0
    %8418 = vmatpush1.msra.mxu0 0.0
    %8419 = vmatprep.subr.mxu0 0.0
    %8420 = vmatpush1.msra.mxu0 0.0
    %8421 = vmatprep.subr.mxu0 0.0
    %8422 = vmatpush1.msra.mxu0 0.0
    %8423 = vmatprep.subr.mxu0 0.0
    %8424 = vmatpush1.msra.mxu0 0.0
    %8425 = vmatprep.subr.mxu0 0.0
    %8426 = vmatpush1.msra.mxu0 0.0
    %8427 = vmatprep.subr.mxu0 0.0
    %8428 = vmatpush1.msra.mxu0 0.0
    %8429 = vmatprep.subr.mxu0 0.0
    %8430 = vmatpush1.msra.mxu0 0.0
    %8431 = vmatprep.subr.mxu0 0.0
    %8432 = vmatpush1.msra.mxu0 0.0
    %8433 = vmatprep.subr.mxu0 0.0
    %8434 = vmatpush1.msra.mxu0 0.0
    %8435 = vmatprep.subr.mxu0 0.0
    %8436 = vmatpush1.msra.mxu0 0.0
    %8437 = vmatprep.subr.mxu0 0.0
    %8438 = vmatpush1.msra.mxu0 0.0
    %8439 = vmatprep.mubr.f32.mxu0 0.0
    %8440 = vmatmul.mubr.f32.gmra.mrb[0].mxu0 %v8370
    %v8441 = vpop.f32.mrb[0].mxu0
    %v8442 = vadd.f32 0.0, %v8441
    %v8443 = vpop.f32.mrb[0].mxu0
    %8444 = vdwg.mxu0
    %v8445 = vpack.c.bf16 %v8352, %v8352
    %v8446 = vld [vmem:[%s61] sm:$0xf]
    %v8447 = vld [vmem:[%s61 + $0x4] sm:$0xf]
    %v8448 = vld [vmem:[%s61 + $0x8] sm:$0xf]
    %v8449 = vld [vmem:[%s61 + $0xc] sm:$0xf]
    %v8450 = vld [vmem:[%s61 + $0x10] sm:$0xf]
    %v8451 = vld [vmem:[%s61 + $0x14] sm:$0xf]
    %v8452 = vld [vmem:[%s61 + $0x18] sm:$0xf]
    %v8453 = vld [vmem:[%s61 + $0x1c] sm:$0xf]
    %v8454 = vld [vmem:[%s61 + $0x20] sm:$0xf]
    %v8455 = vld [vmem:[%s61 + $0x24] sm:$0xf]
    %v8456 = vld [vmem:[%s61 + $0x28] sm:$0xf]
    %v8457 = vld [vmem:[%s61 + $0x2c] sm:$0xf]
    %v8458 = vld [vmem:[%s61 + $0x30] sm:$0xf]
    %v8459 = vld [vmem:[%s61 + $0x34] sm:$0xf]
    %v8460 = vld [vmem:[%s61 + $0x38] sm:$0xf]
    %v8461 = vld [vmem:[%s61 + $0x3c] sm:$0xf]
    %v8478 = vunpack.c.l.b16 %v8446
    %v8479 = vunpack.c.l.b16 %v8447
    %v8480 = vunpack.c.l.b16 %v8448
    %v8481 = vunpack.c.l.b16 %v8449
    %v8482 = vunpack.c.l.b16 %v8450
    %v8483 = vunpack.c.l.b16 %v8451
    %v8484 = vunpack.c.l.b16 %v8452
    %v8485 = vunpack.c.l.b16 %v8453
    %v8486 = vunpack.c.l.b16 %v8454
    %v8487 = vunpack.c.l.b16 %v8455
    %v8488 = vunpack.c.l.b16 %v8456
    %v8489 = vunpack.c.l.b16 %v8457
    %v8490 = vunpack.c.l.b16 %v8458
    %v8491 = vunpack.c.l.b16 %v8459
    %v8492 = vunpack.c.l.b16 %v8460
    %v8493 = vunpack.c.l.b16 %v8461
    %v8494 = vpack.c.b16 %v8479, %v8478
    %v8495 = vpack.c.b16 %v8481, %v8480
    %v8496 = vpack.c.b16 %v8483, %v8482
    %v8497 = vpack.c.b16 %v8485, %v8484
    %v8498 = vpack.c.b16 %v8487, %v8486
    %v8499 = vpack.c.b16 %v8489, %v8488
    %v8500 = vpack.c.b16 %v8491, %v8490
    %v8501 = vpack.c.b16 %v8493, %v8492
    %8510 = vmatprep.subr.bf16.mxu0 0
    %8511 = vmatpush1.bf16.msra.mxu0 %v8494
    %8512 = vmatprep.subr.bf16.mxu0 0
    %8513 = vmatpush1.bf16.msra.mxu0 %v8495
    %8514 = vmatprep.subr.bf16.mxu0 0
    %8515 = vmatpush1.bf16.msra.mxu0 %v8496
    %8516 = vmatprep.subr.bf16.mxu0 0
    %8517 = vmatpush1.bf16.msra.mxu0 %v8497
    %8518 = vmatprep.subr.bf16.mxu0 0
    %8519 = vmatpush1.bf16.msra.mxu0 %v8498
    %8520 = vmatprep.subr.bf16.mxu0 0
    %8521 = vmatpush1.bf16.msra.mxu0 %v8499
    %8522 = vmatprep.subr.bf16.mxu0 0
    %8523 = vmatpush1.bf16.msra.mxu0 %v8500
    %8524 = vmatprep.subr.bf16.mxu0 0
    %8525 = vmatpush1.bf16.msra.mxu0 %v8501
    %8526 = vmatprep.subr.bf16.mxu0 0
    %8527 = vmatpush1.bf16.msra.mxu0 0
    %8528 = vmatprep.subr.bf16.mxu0 0
    %8529 = vmatpush1.bf16.msra.mxu0 0
    %8530 = vmatprep.subr.bf16.mxu0 0
    %8531 = vmatpush1.bf16.msra.mxu0 0
    %8532 = vmatprep.subr.bf16.mxu0 0
    %8533 = vmatpush1.bf16.msra.mxu0 0
    %8534 = vmatprep.subr.bf16.mxu0 0
    %8535 = vmatpush1.bf16.msra.mxu0 0
    %8536 = vmatprep.subr.bf16.mxu0 0
    %8537 = vmatpush1.bf16.msra.mxu0 0
    %8538 = vmatprep.subr.bf16.mxu0 0
    %8539 = vmatpush1.bf16.msra.mxu0 0
    %8540 = vmatprep.subr.bf16.mxu0 0
    %8541 = vmatpush1.bf16.msra.mxu0 0
    %8542 = vmatprep.mubr.bf16.mxu0 0
    %8543 = vmatmul.mubr.bf16.gmra.mrb[0].mxu0 %v8445
    %v8544 = vpop.f32.mrb[0].mxu0
    %v8545 = vadd.f32 0.0, %v8544
    %v8546 = vpop.f32.mrb[0].mxu0
    %v8547 = vpop.f32.mrb[0].mxu0
    %v8548 = vpop.f32.mrb[0].mxu0
    %8549 = vdwg.mxu0
    %v8550 = vpack.c.bf16 %v8545, %v8545
    %v8551 = vld [vmem:[%s63] sm:$0xff]
    %v8552 = vld [vmem:[%s63 + $0x8] sm:$0xff]
    %v8553 = vld [vmem:[%s63 + $0x10] sm:$0xff]
    %v8554 = vld [vmem:[%s63 + $0x18] sm:$0xff]
    %v8555 = vpack.c.bf16 %v8442, %v8442
    %v8556 = vld [vmem:[#allocation34] sm:$0xff]
    %v8557 = vld [vmem:[#allocation34 + $0x8] sm:$0xff]
    %v8558 = vld [vmem:[#allocation34 + $0x10] sm:$0xff]
    %v8559 = vld [vmem:[#allocation34 + $0x18] sm:$0xff]
    %v8560 = vld [vmem:[#allocation34 + $0x20] sm:$0xff]
    %v8561 = vld [vmem:[#allocation34 + $0x28] sm:$0xff]
    %v8562 = vld [vmem:[#allocation34 + $0x30] sm:$0xff]
    %v8563 = vld [vmem:[#allocation34 + $0x38] sm:$0xff]
    %v8564 = vld [vmem:[#allocation34 + $0x40] sm:$0xff]
    %v8565 = vld [vmem:[#allocation34 + $0x48] sm:$0xff]
    %v8566 = vld [vmem:[#allocation34 + $0x50] sm:$0xff]
    %v8567 = vld [vmem:[#allocation34 + $0x58] sm:$0xff]
    %v8568 = vld [vmem:[#allocation34 + $0x60] sm:$0xff]
    %v8569 = vld [vmem:[#allocation34 + $0x68] sm:$0xff]
    %v8570 = vld [vmem:[#allocation34 + $0x70] sm:$0xff]
    %v8571 = vld [vmem:[#allocation34 + $0x78] sm:$0xff]
    %v8588 = vunpack.c.l.b16 %v8556
    %v8589 = vunpack.c.h.b16 %v8556
    %v8590 = vunpack.c.l.b16 %v8557
    %v8591 = vunpack.c.h.b16 %v8557
    %v8592 = vunpack.c.l.b16 %v8558
    %v8593 = vunpack.c.h.b16 %v8558
    %v8594 = vunpack.c.l.b16 %v8559
    %v8595 = vunpack.c.h.b16 %v8559
    %v8596 = vunpack.c.l.b16 %v8560
    %v8597 = vunpack.c.h.b16 %v8560
    %v8598 = vunpack.c.l.b16 %v8561
    %v8599 = vunpack.c.h.b16 %v8561
    %v8600 = vunpack.c.l.b16 %v8562
    %v8601 = vunpack.c.h.b16 %v8562
    %v8602 = vunpack.c.l.b16 %v8563
    %v8603 = vunpack.c.h.b16 %v8563
    %v8604 = vunpack.c.l.b16 %v8564
    %v8605 = vunpack.c.h.b16 %v8564
    %v8606 = vunpack.c.l.b16 %v8565
    %v8607 = vunpack.c.h.b16 %v8565
    %v8608 = vunpack.c.l.b16 %v8566
    %v8609 = vunpack.c.h.b16 %v8566
    %v8610 = vunpack.c.l.b16 %v8567
    %v8611 = vunpack.c.h.b16 %v8567
    %v8612 = vunpack.c.l.b16 %v8568
    %v8613 = vunpack.c.h.b16 %v8568
    %v8614 = vunpack.c.l.b16 %v8569
    %v8615 = vunpack.c.h.b16 %v8569
    %v8616 = vunpack.c.l.b16 %v8570
    %v8617 = vunpack.c.h.b16 %v8570
    %v8618 = vunpack.c.l.b16 %v8571
    %v8619 = vunpack.c.h.b16 %v8571
    %v8620 = vpack.c.b16 %v8590, %v8588
    %v8621 = vpack.c.b16 %v8591, %v8589
    %v8622 = vpack.c.b16 %v8594, %v8592
    %v8623 = vpack.c.b16 %v8595, %v8593
    %v8624 = vpack.c.b16 %v8598, %v8596
    %v8625 = vpack.c.b16 %v8599, %v8597
    %v8626 = vpack.c.b16 %v8602, %v8600
    %v8627 = vpack.c.b16 %v8603, %v8601
    %v8628 = vpack.c.b16 %v8606, %v8604
    %v8629 = vpack.c.b16 %v8607, %v8605
    %v8630 = vpack.c.b16 %v8610, %v8608
    %v8631 = vpack.c.b16 %v8611, %v8609
    %v8632 = vpack.c.b16 %v8614, %v8612
    %v8633 = vpack.c.b16 %v8615, %v8613
    %v8634 = vpack.c.b16 %v8618, %v8616
    %v8635 = vpack.c.b16 %v8619, %v8617
    %8652 = vmatprep.subr.bf16.mxu0 %v8621
    %8653 = vmatpush1.bf16.msra.mxu0 %v8620
    %8654 = vmatprep.subr.bf16.mxu0 %v8623
    %8655 = vmatpush1.bf16.msra.mxu0 %v8622
    %8656 = vmatprep.subr.bf16.mxu0 %v8625
    %8657 = vmatpush1.bf16.msra.mxu0 %v8624
    %8658 = vmatprep.subr.bf16.mxu0 %v8627
    %8659 = vmatpush1.bf16.msra.mxu0 %v8626
    %8660 = vmatprep.subr.bf16.mxu0 %v8629
    %8661 = vmatpush1.bf16.msra.mxu0 %v8628
    %8662 = vmatprep.subr.bf16.mxu0 %v8631
    %8663 = vmatpush1.bf16.msra.mxu0 %v8630
    %8664 = vmatprep.subr.bf16.mxu0 %v8633
    %8665 = vmatpush1.bf16.msra.mxu0 %v8632
    %8666 = vmatprep.subr.bf16.mxu0 %v8635
    %8667 = vmatpush1.bf16.msra.mxu0 %v8634
    %8668 = vmatprep.subr.bf16.mxu0 0
    %8669 = vmatpush1.bf16.msra.mxu0 0
    %8670 = vmatprep.subr.bf16.mxu0 0
    %8671 = vmatpush1.bf16.msra.mxu0 0
    %8672 = vmatprep.subr.bf16.mxu0 0
    %8673 = vmatpush1.bf16.msra.mxu0 0
    %8674 = vmatprep.subr.bf16.mxu0 0
    %8675 = vmatpush1.bf16.msra.mxu0 0
    %8676 = vmatprep.subr.bf16.mxu0 0
    %8677 = vmatpush1.bf16.msra.mxu0 0
    %8678 = vmatprep.subr.bf16.mxu0 0
    %8679 = vmatpush1.bf16.msra.mxu0 0
    %8680 = vmatprep.subr.bf16.mxu0 0
    %8681 = vmatpush1.bf16.msra.mxu0 0
    %8682 = vmatprep.subr.bf16.mxu0 0
    %8683 = vmatpush1.bf16.msra.mxu0 0
    %8684 = vmatprep.mubr.bf16.mxu0 0
    %8685 = vmatmul.mubr.bf16.gmra.mrb[0].mxu0 %v8555
    %v8686 = vpop.f32.mrb[0].mxu0
    %v8687 = vadd.f32 0.0, %v8686
    %v8688 = vpop.f32.mrb[0].mxu0
    %v8689 = vadd.f32 0.0, %v8688
    %v8690 = vpop.f32.mrb[0].mxu0
    %v8691 = vpop.f32.mrb[0].mxu0
    %8692 = vdwg.mxu0
    %v8697 = vunpack.c.l.b16 %v8551
    %v8698 = vunpack.c.h.b16 %v8551
    %v8699 = vunpack.c.l.b16 %v8552
    %v8700 = vunpack.c.h.b16 %v8552
    %v8701 = vunpack.c.l.b16 %v8553
    %v8702 = vunpack.c.h.b16 %v8553
    %v8703 = vunpack.c.l.b16 %v8554
    %v8704 = vunpack.c.h.b16 %v8554
    %v8705 = vpack.c.b16 %v8699, %v8697
    %v8706 = vpack.c.b16 %v8700, %v8698
    %v8707 = vpack.c.b16 %v8703, %v8701
    %v8708 = vpack.c.b16 %v8704, %v8702
    %v8714 = vsel %vm700, %v8550, 0
    %8716 = vmatprep.subr.bf16.mxu0 %v8706
    %8717 = vmatpush1.bf16.msra.mxu0 %v8705
    %8718 = vmatprep.subr.bf16.mxu0 %v8708
    %8719 = vmatpush1.bf16.msra.mxu0 %v8707
    %8720 = vmatprep.subr.bf16.mxu0 0
    %8721 = vmatpush1.bf16.msra.mxu0 0
    %8722 = vmatprep.subr.bf16.mxu0 0
    %8723 = vmatpush1.bf16.msra.mxu0 0
    %8724 = vmatprep.subr.bf16.mxu0 0
    %8725 = vmatpush1.bf16.msra.mxu0 0
    %8726 = vmatprep.subr.bf16.mxu0 0
    %8727 = vmatpush1.bf16.msra.mxu0 0
    %8728 = vmatprep.subr.bf16.mxu0 0
    %8729 = vmatpush1.bf16.msra.mxu0 0
    %8730 = vmatprep.subr.bf16.mxu0 0
    %8731 = vmatpush1.bf16.msra.mxu0 0
    %8732 = vmatprep.subr.bf16.mxu0 0
    %8733 = vmatpush1.bf16.msra.mxu0 0
    %8734 = vmatprep.subr.bf16.mxu0 0
    %8735 = vmatpush1.bf16.msra.mxu0 0
    %8736 = vmatprep.subr.bf16.mxu0 0
    %8737 = vmatpush1.bf16.msra.mxu0 0
    %8738 = vmatprep.subr.bf16.mxu0 0
    %8739 = vmatpush1.bf16.msra.mxu0 0
    %8740 = vmatprep.subr.bf16.mxu0 0
    %8741 = vmatpush1.bf16.msra.mxu0 0
    %8742 = vmatprep.subr.bf16.mxu0 0
    %8743 = vmatpush1.bf16.msra.mxu0 0
    %8744 = vmatprep.subr.bf16.mxu0 0
    %8745 = vmatpush1.bf16.msra.mxu0 0
    %8746 = vmatprep.subr.bf16.mxu0 0
    %8747 = vmatpush1.bf16.msra.mxu0 0
    %8748 = vmatprep.mubr.bf16.mxu0 0
    %8749 = vmatmul.mubr.bf16.gmra.mrb[0].mxu0 %v8714
    %v8750 = vpop.f32.mrb[0].mxu0
    %v8751 = vadd.f32 %v8687, %v8750
    %v8752 = vpop.f32.mrb[0].mxu0
    %v8753 = vadd.f32 %v8689, %v8752
    %v8754 = vpop.f32.mrb[0].mxu0
    %v8755 = vpop.f32.mrb[0].mxu0
    %8756 = vdwg.mxu0
    %v8757 = vld [vmem:[#allocation35] sm:$0x3]
    %v8759 = vlaneseq
    %v8760 = vshrl.u32 %v8759, 7
    %v8761 = vsub.s32 0, %v8760
    %v8762 = vrot.slane %v8757, %v8761
    %v8763 = vlaneseq
    %v8764 = vshrl.u32 %v8763, 7
    %v8765 = vsub.s32 1, %v8764
    %v8766 = vrot.slane %v8757, %v8765
    %v8769 = vadd.f32 %v8751, %v8762
    %v8770 = vadd.f32 %v8753, %v8766
    %v8773 = vcombine.low %v8769, %v8770
    %v8775 = vunpack.c.l.s4 1983009808
    %v8776 = vunpack.c.0.s8 %v8775
    %v8777 = vlaneseq
    %v8778 = vshrl.u32 %v8777, 7
    %v8779 = vsub.s32 %v8776, %v8778
    %v8780 = vrot.slane %v8773, %v8779
    %8782 = vst [vmem:[#allocation38] sm:$0xf] %v8780
    %v8783 = vxor.u32 %v8769, 2147483648
    %v8784 = vxor.u32 %v8770, 2147483648
    %v8785 = vmul.f32 %v8783, 1.442695
    %v8786 = vpow.pop %v8785
    %v8787 = vmul.f32 %v8784, 1.442695
    %v8788 = vpow.pop %v8787
    %v8789 = vadd.f32 %v8786, 1.0
    %v8790 = vadd.f32 %v8788, 1.0
    %v8791 = vrcp.pop %v8789
    %v8792 = vmul.f32 1.0, %v8791
    %v8793 = vrcp.pop %v8790
    %v8794 = vmul.f32 1.0, %v8793
    %v8797 = vcombine.low %v8792, %v8794
    %v8799 = vunpack.c.l.s4 1983009808
    %v8800 = vunpack.c.0.s8 %v8799
    %v8801 = vlaneseq
    %v8802 = vshrl.u32 %v8801, 7
    %v8803 = vsub.s32 %v8800, %v8802
    %v8804 = vrot.slane %v8797, %v8803
    %8806 = vst [vmem:[#allocation39] sm:$0xf] %v8804
    %v8807 = vld [vmem:[#allocation37] sm:$0xf]
    %v8808 = vmax.f32 %v8769, 0.0
    %v8809 = vmax.f32 %v8770, 0.0
    %v8812 = vunpack.c.l.s4 1983009808
    %v8813 = vunpack.c.0.s8 %v8812
    %v8814 = vlaneseq
    %v8815 = vshrl.u32 %v8814, 7
    %v8816 = vsub.s32 %v8813, %v8815
    %v8817 = vrot.slane %v8807, %v8816
    %v8818 = vcombine.high %v8817, %v8817
    %v8821 = vmul.f32 %v8769, %v8817
    %v8822 = vmul.f32 %v8770, %v8818
    %v8823 = vsub.f32 %v8808, %v8821
    %v8824 = vsub.f32 %v8809, %v8822
    %v8825 = vand.u32 2147483647, %v8769
    %v8826 = vand.u32 2147483647, %v8770
    %v8827 = vsub.f32 0.0, %v8825
    %v8828 = vsub.f32 0.0, %v8826
    %v8829 = vmul.f32 %v8827, 1.442695
    %v8830 = vpow.pop %v8829
    %v8831 = vmul.f32 %v8828, 1.442695
    %v8832 = vpow.pop %v8831
    %v8833 = vadd.f32 %v8830, 1.0
    %v8834 = vlog2.pop %v8833
    %v8835 = vmul.f32 %v8834, 0.6931472
    %v8836 = vmul.f32 -0.5, %v8830
    %v8837 = vadd.f32 %v8836, 1.0
    %v8838 = vmul.f32 %v8837, %v8830
    %v8839 = vand.u32 2147483647, %v8830
    %vm8840 = vcmp.lt.f32.partialorder %v8839, 0.0004427343
    %v8841 = vsel %vm8840, %v8838, %v8835
    %v8842 = vadd.f32 %v8832, 1.0
    %v8843 = vlog2.pop %v8842
    %v8844 = vmul.f32 %v8843, 0.6931472
    %v8845 = vmul.f32 -0.5, %v8832
    %v8846 = vadd.f32 %v8845, 1.0
    %v8847 = vmul.f32 %v8846, %v8832
    %v8848 = vand.u32 2147483647, %v8832
    %vm8849 = vcmp.lt.f32.partialorder %v8848, 0.0004427343
    %v8850 = vsel %vm8849, %v8847, %v8844
    %v8851 = vadd.f32 %v8823, %v8841
    %v8852 = vadd.f32 %v8824, %v8850
    %v8853 = vsel %vm5395, %v8851, 0.0
    %v8854 = vsel %vm5395, %v8852, 0.0
    %v8855 = vadd.f32 %v8853, %v8854
    %8856 = vadd.xlane.f32.xlu0 %v8855
    %v8857 = vpop.xlane.xlu0 %8856
    %v8858 = vrot.slane %v8857, 4
    %v8859 = vadd.f32 %v8857, %v8858
    %v8860 = vrot.slane %v8859, 2
    %v8861 = vadd.f32 %v8859, %v8860
    %v8862 = vrot.slane %v8861, 1
    %v8863 = vadd.f32 %v8861, %v8862
    %s8864 = vtos %v8863
    %v8865 = vrcp.pop 512.0
    %s8866 = vtos %v8865
    %s8867 = smul.f32 %s8864, %s8866
    %v8868 = vstv %s8867
    %vm8869 = vcmask 0
    %8870 = vst.msk [vmem:[#allocation41] sm:$0x1] %vm8869, %v8868
    // Predicated region
    $region234: #{rec_layer_forward.1} parent=1 // pred_check
      _
    $region235: #{rec_layer_forward.1} parent=1 // pred_check_branch
      %8872 = sbr.rel (0) target = $region237
    $region236: #{rec_layer_forward.1} parent=1 // pred_region
      %s8874 = ssub.s32 64, 64
      %8875 = vsyncadd [#allocation4], %s8874
      %s8877 = sshll.u32 [#allocation38], 4
      %s8878 = int_to_ptr.vmem [resolvable:$true] %s8877
      %8880 = dma.vmem_to_hbm [thread:$0]  %s8878, 64, %s71, [#allocation4]
    $region237: #{rec_layer_forward.1} parent=1 // pred_fallthru
      _
    // Predicated region
    $region238: #{rec_layer_forward.1} parent=1 // pred_check
      _
    $region239: #{rec_layer_forward.1} parent=1 // pred_check_branch
      %8882 = sbr.rel (0) target = $region241
    $region240: #{rec_layer_forward.1} parent=1 // pred_region
      %s8884 = ssub.s32 64, 64
      %8885 = vsyncadd [#allocation40], %s8884
      %s8887 = sshll.u32 [#allocation39], 4
      %s8888 = int_to_ptr.vmem [resolvable:$true] %s8887
      %8890 = dma.vmem_to_hbm [thread:$0]  %s8888, 64, %s73, [#allocation40]
    $region241: #{rec_layer_forward.1} parent=1 // pred_fallthru
      _
    // Predicated region
    $region242: #{rec_layer_forward.1} parent=1 // pred_check
      _
    $region243: #{rec_layer_forward.1} parent=1 // pred_check_branch
      %8892 = sbr.rel (0) target = $region245
    $region244: #{rec_layer_forward.1} parent=1 // pred_region
      %s8894 = ssub.s32 16, 16
      %8895 = vsyncadd [#allocation40], %s8894
      %s8897 = sshll.u32 [#allocation41], 4
      %s8898 = int_to_ptr.vmem [resolvable:$true] %s8897
      %8900 = dma.vmem_to_hbm [thread:$0]  %s8898, 16, %s75, [#allocation40]
    $region245: #{rec_layer_forward.1} parent=1 // pred_fallthru
      _
    // Predicated region
    $region246: #{rec_layer_forward.1} parent=1 // pred_check
      _
    $region247: #{rec_layer_forward.1} parent=1 // pred_check_branch
      %8902 = sbr.rel (0) target = $region249
    $region248: #{rec_layer_forward.1} parent=1 // pred_region
      %8903 = dma.done [#allocation4], 64
    $region249: #{rec_layer_forward.1} parent=1 // pred_fallthru
      _
    // Predicated region
    $region250: #{rec_layer_forward.1} parent=1 // pred_check
      _
    $region251: #{rec_layer_forward.1} parent=1 // pred_check_branch
      %8905 = sbr.rel (0) target = $region253
    $region252: #{rec_layer_forward.1} parent=1 // pred_region
      %8906 = dma.done [#allocation40], 64
    $region253: #{rec_layer_forward.1} parent=1 // pred_fallthru
      _
    // Predicated region
    $region254: #{rec_layer_forward.1} parent=1 // pred_check
      _
    $region255: #{rec_layer_forward.1} parent=1 // pred_check_branch
      %8908 = sbr.rel (0) target = $region257
    $region256: #{rec_layer_forward.1} parent=1 // pred_region
      %8909 = dma.done [#allocation40], 16
    $region257: #{rec_layer_forward.1} parent=1 // pred_fallthru
      _
    %8910 = vsyncpa [#allocation3], 1
    %8911 = vsyncpa [#allocation6], 1
    %8912 = vsyncpa [#allocation9], 1
    %8913 = vsyncpa [#allocation12], 1
    %8914 = vsyncpa [#allocation15], 1
    %8915 = vsyncpa [#allocation18], 1
    %8916 = vsyncpa [#allocation21], 1
    %8917 = vsyncpa [#allocation24], 1
    %8918 = vsyncpa [#allocation27], 1
    %8919 = vsyncpa [#allocation30], 1
    %8920 = vsyncpa [#allocation33], 1
    %8921 = vsyncpa [#allocation36], 1
    %8922 = vsyncpa [#allocation4], 1
    %8923 = vsyncpa [#allocation40], 1

</llo_original>
